<compile_context>
chip_gen: v7x
topology: tpu7x:2x2x1
jax: 0.10.0
libtpu: 0.0.40
codegen_flags: <defaults>
</compile_context>

<pallas_src>
import functools

import numpy as np
import jax
import jax.numpy as jnp
from jax.experimental import pallas as pl
from jax.experimental.pallas import tpu as pltpu

N, C, H, W = 2, 64, 16, 16     # batch, channels, spatial (W multiple of 16 -> aligned row shifts)
EMB = 32                       # timestep-embedding channels
GROUPS = 32                    # normalization() -> GroupNorm32(32, C)
EPS = 1e-5


def _silu(v):
    return v * jax.nn.sigmoid(v)


def resblock_kernel(x_ref, emb_ref,
                    g1_ref, b1_ref, w1_ref, wb1_ref,
                    we_ref, eb_ref,
                    g2_ref, b2_ref, w2_ref, wb2_ref,
                    out_ref, *, H, W):
    HW = H * W
    NC = x_ref.shape[-1]                                  # lane-packed N*C

    # Column-validity masks shared by both convs (x coordinate of each flat row).
    xx = jax.lax.broadcasted_iota(jnp.int32, (HW, 1), 0) % W
    ok_left = xx >= 1            # source column x-1 in bounds
    ok_right = xx <= W - 2       # source column x+1 in bounds

    # Even-lane mask for the GroupNorm adjacent-lane pair sum (cpg == 2).
    lane = jax.lax.broadcasted_iota(jnp.int32, (1, NC), 1)
    even_lane = (lane % 2) == 0
    inv_n = 1.0 / float(HW * 2)                           # group size = HW * cpg

    def shift_rows(a, d):
        # s[p] = a[p + d], zero fill past the ends (d is a static Python int).
        if d == 0:
            return a
        z = jnp.zeros((abs(d), a.shape[1]), a.dtype)
        if d > 0:
            return jnp.concatenate([a[d:], z], axis=0)
        return jnp.concatenate([z, a[:a.shape[0] + d]], axis=0)

    def group_norm(hf, gamma, beta):
        # Spatial sums on the VPU, then per-group (pair-of-adjacent-lanes) sums
        # via two XLU lane rotations + select; no MXU round trip.
        s = jnp.sum(hf, axis=0, keepdims=True)            # (1, NC)
        s2 = jnp.sum(hf * hf, axis=0, keepdims=True)      # (1, NC)
        st = jnp.concatenate([s, s2], axis=0)             # (2, NC)
        pair = jnp.where(even_lane,
                         pltpu.roll(st, NC - 1, 1),       # even lane: right neighbor
                         pltpu.roll(st, 1, 1))            # odd lane:  left neighbor
        tot = st + pair                                   # group sums, both lanes
        mean = tot[0:1, :] * inv_n
        var = tot[1:2, :] * inv_n - mean * mean
        inv = jax.lax.rsqrt(var + EPS)
        return (hf - mean) * (inv * gamma) + beta

    def conv3x3(hf, wt_ref, bias):
        # 9 accumulating K=NC dots on shifted/masked views; no im2col patch.
        # Column (+/-1 sublane) shifts + masks in f32, one bf16 cast per column;
        # row shifts (+/-W rows) on bf16 are whole-packed-vreg moves whose
        # zero fill provides the top/bottom padding for free.
        cols = []
        for sx in (-1, 0, 1):
            cs = shift_rows(hf, sx)
            if sx == -1:
                cs = jnp.where(ok_left, cs, 0.0)
            elif sx == 1:
                cs = jnp.where(ok_right, cs, 0.0)
            cols.append(cs.astype(jnp.bfloat16))
        acc = None
        t = 0
        for sy in (-1, 0, 1):
            for ci in range(3):
                d = jnp.dot(shift_rows(cols[ci], sy * W), wt_ref[t],
                            preferred_element_type=jnp.float32)
                acc = d if acc is None else acc + d
                t += 1
        return acc + bias

    # in_layers: GroupNorm -> SiLU -> conv3x3  (input re-read later for the skip;
    # do not keep it live across the conv tap builds)
    h = _silu(group_norm(x_ref[...], g1_ref[...], b1_ref[...]))
    h = conv3x3(h, w1_ref, wb1_ref[...])

    # emb_layers: SiLU -> Linear (block-diag per sample), broadcast over spatial
    emb_out = jnp.dot(_silu(emb_ref[...]), we_ref[...],
                      preferred_element_type=jnp.float32) + eb_ref[...]
    h = h + emb_out

    # out_layers: GroupNorm -> SiLU -> Dropout -> conv3x3
    # TODO(synk): training-mode dropout not implemented (eval semantics = identity).
    h = _silu(group_norm(h, g2_ref[...], b2_ref[...]))
    h = conv3x3(h, w2_ref, wb2_ref[...])

    # skip_connection is Identity because out_channels == channels; re-read the
    # input (cheap vld from the resident VMEM block) instead of holding it live.
    out_ref[...] = x_ref[...] + h


def pack_resblock_params(p, n, c):
    """One-time parameter packing for the lane-packed (HW, n*c) layout."""
    nc = n * c

    def dup_row(v):                                       # (1, c) -> (1, n*c)
        return jnp.tile(v.reshape(1, c), (1, n))

    def blockdiag_conv(wk):                               # (9, c, c) -> (9, nc, nc) bf16
        wbd = jnp.zeros((9, nc, nc), jnp.float32)
        for s in range(n):
            wbd = wbd.at[:, s * c:(s + 1) * c, s * c:(s + 1) * c].set(wk)
        return wbd.astype(jnp.bfloat16)

    def blockdiag_emb(we):                                # (e, c) -> (n*e, n*c) f32
        e = we.shape[0]
        wbd = jnp.zeros((n * e, nc), jnp.float32)
        for s in range(n):
            wbd = wbd.at[s * e:(s + 1) * e, s * c:(s + 1) * c].set(we)
        return wbd

    return dict(
        g1=dup_row(p['g1']), b1=dup_row(p['b1']),
        w1=blockdiag_conv(p['w1']), wb1=dup_row(p['wb1']),
        we=blockdiag_emb(p['we']), eb=dup_row(p['eb']),
        g2=dup_row(p['g2']), b2=dup_row(p['b2']),
        w2=blockdiag_conv(p['w2']), wb2=dup_row(p['wb2']),
    )


@jax.jit
def resblock_pallas(x_nchw, emb, pk):
    n, c, h, w = x_nchw.shape
    hw = h * w
    nc = n * c
    assert c % GROUPS == 0 and c // GROUPS == 2, \
        "lane pair-sum GroupNorm assumes 2 channels per group"

    # NCHW -> lane-packed (HW, N*C): lanes = [sample0 channels | sample1 channels | ...].
    x_flat = jnp.transpose(x_nchw, (2, 3, 0, 1)).reshape(hw, nc)
    emb_flat = emb.reshape(1, -1)                          # (1, N*EMB)

    param_list = [pk['g1'], pk['b1'], pk['w1'], pk['wb1'],
                  pk['we'], pk['eb'],
                  pk['g2'], pk['b2'], pk['w2'], pk['wb2']]

    def _const_spec(arr):
        return pl.BlockSpec(arr.shape, lambda i, _nd=arr.ndim: (0,) * _nd)

    in_specs = [
        pl.BlockSpec((hw, nc), lambda i: (0, 0)),
        pl.BlockSpec((1, emb_flat.shape[1]), lambda i: (0, 0)),
    ] + [_const_spec(a) for a in param_list]

    kernel = functools.partial(resblock_kernel, H=h, W=w)

    out = pl.pallas_call(
        kernel,
        out_shape=jax.ShapeDtypeStruct((hw, nc), jnp.float32),
        grid_spec=pltpu.PrefetchScalarGridSpec(
            num_scalar_prefetch=0,
            grid=(1,),                                    # single lane-dense step
            in_specs=in_specs,
            out_specs=pl.BlockSpec((hw, nc), lambda i: (0, 0)),
        ),
        compiler_params=pltpu.CompilerParams(
            dimension_semantics=("arbitrary",)),
    )(x_flat, emb_flat, *param_list)

    # lane-packed (HW, N*C) -> NCHW
    return jnp.transpose(out.reshape(h, w, n, c), (2, 3, 0, 1))


def resblock_reference(x, emb, p):
    def gn(h_, gamma, beta):
        n_, c_, hh, ww = h_.shape
        hg = h_.reshape(n_, GROUPS, -1)
        mean = hg.mean(-1, keepdims=True)
        var = hg.var(-1, keepdims=True)
        hn = ((hg - mean) / jnp.sqrt(var + EPS)).reshape(n_, c_, hh, ww)
        return hn * gamma.reshape(1, -1, 1, 1) + beta.reshape(1, -1, 1, 1)

    def conv(h_, wk, b):  # wk: (9, Cin, Cout)
        w_oihw = wk.reshape(3, 3, wk.shape[1], wk.shape[2]).transpose(3, 2, 0, 1)
        y = jax.lax.conv_general_dilated(
            h_, w_oihw, (1, 1), 'SAME',
            dimension_numbers=('NCHW', 'OIHW', 'NCHW'))
        return y + b.reshape(1, -1, 1, 1)

    h_ = conv(jax.nn.silu(gn(x, p['g1'], p['b1'])), p['w1'], p['wb1'])
    eo = jax.nn.silu(emb) @ p['we'] + p['eb'].reshape(1, -1)
    h_ = h_ + eo[:, :, None, None]
    h_ = conv(jax.nn.silu(gn(h_, p['g2'], p['b2'])), p['w2'], p['wb2'])
    return x + h_


if __name__ == "__main__":
    key = jax.random.PRNGKey(0)
    ks = jax.random.split(key, 12)

    # deterministic synthetic parameters (shapes from ResBlock.__init__)
    params = {
        'g1': 1.0 + 0.1 * jax.random.normal(ks[0], (1, C), jnp.float32),
        'b1': 0.1 * jax.random.normal(ks[1], (1, C), jnp.float32),
        'w1': jax.random.normal(ks[2], (9, C, C), jnp.float32) / np.sqrt(9 * C),
        'wb1': 0.1 * jax.random.normal(ks[3], (1, C), jnp.float32),
        'we': jax.random.normal(ks[4], (EMB, C), jnp.float32) / np.sqrt(EMB),
        'eb': 0.1 * jax.random.normal(ks[5], (1, C), jnp.float32),
        'g2': 1.0 + 0.1 * jax.random.normal(ks[6], (1, C), jnp.float32),
        'b2': 0.1 * jax.random.normal(ks[7], (1, C), jnp.float32),
        # NOTE: ResBlock zero_module()s this conv; random init here to exercise compute.
        'w2': jax.random.normal(ks[8], (9, C, C), jnp.float32) / np.sqrt(9 * C),
        'wb2': 0.1 * jax.random.normal(ks[9], (1, C), jnp.float32),
    }

    x = jax.random.normal(ks[10], (N, C, H, W), jnp.float32)
    emb = jax.random.normal(ks[11], (N, EMB), jnp.float32)

    packed = pack_resblock_params(params, N, C)           # one-time prep, outside the hot path

    out = jax.block_until_ready(resblock_pallas(x, emb, packed))
    ref = jax.block_until_ready(resblock_reference(x, emb, params))

    # bf16-fed conv matmuls (f32 accumulation) -> tolerance loosened from 1e-3.
    np.testing.assert_allclose(np.asarray(out), np.asarray(ref),
                               atol=3e-2, rtol=3e-2)
    print("KERNEL_OK")
</pallas_src>

<mosaic_0001>
module attributes {stable_mosaic.version = 11 : i64} {
  func.func @resblock_kernel(%arg0: i32, %arg1: memref<256x128xf32, #tpu.memory_space<vmem>>, %arg2: memref<1x64xf32, #tpu.memory_space<vmem>>, %arg3: memref<1x128xf32, #tpu.memory_space<vmem>>, %arg4: memref<1x128xf32, #tpu.memory_space<vmem>>, %arg5: memref<9x128x128xbf16, #tpu.memory_space<vmem>>, %arg6: memref<1x128xf32, #tpu.memory_space<vmem>>, %arg7: memref<64x128xf32, #tpu.memory_space<vmem>>, %arg8: memref<1x128xf32, #tpu.memory_space<vmem>>, %arg9: memref<1x128xf32, #tpu.memory_space<vmem>>, %arg10: memref<1x128xf32, #tpu.memory_space<vmem>>, %arg11: memref<9x128x128xbf16, #tpu.memory_space<vmem>>, %arg12: memref<1x128xf32, #tpu.memory_space<vmem>>, %arg13: memref<256x128xf32, #tpu.memory_space<vmem>>) attributes {dimension_semantics = [#tpu.dimension_semantics<arbitrary>], iteration_bounds = array<i64: 1>, scalar_prefetch = 0 : i64, scratch_operands = 0 : i64, tpu.core_type = #tpu.core_type<tc>, window_params = [{pipeline_mode = #tpu.pipeline_mode<synchronous>, transform_indices = @transform_0, window_bounds = array<i64: 256, 128>}, {pipeline_mode = #tpu.pipeline_mode<synchronous>, transform_indices = @transform_1, window_bounds = array<i64: 1, 64>}, {pipeline_mode = #tpu.pipeline_mode<synchronous>, transform_indices = @transform_2, window_bounds = array<i64: 1, 128>}, {pipeline_mode = #tpu.pipeline_mode<synchronous>, transform_indices = @transform_3, window_bounds = array<i64: 1, 128>}, {pipeline_mode = #tpu.pipeline_mode<synchronous>, transform_indices = @transform_4, window_bounds = array<i64: 9, 128, 128>}, {pipeline_mode = #tpu.pipeline_mode<synchronous>, transform_indices = @transform_5, window_bounds = array<i64: 1, 128>}, {pipeline_mode = #tpu.pipeline_mode<synchronous>, transform_indices = @transform_6, window_bounds = array<i64: 64, 128>}, {pipeline_mode = #tpu.pipeline_mode<synchronous>, transform_indices = @transform_7, window_bounds = array<i64: 1, 128>}, {pipeline_mode = #tpu.pipeline_mode<synchronous>, transform_indices = @transform_8, window_bounds = array<i64: 1, 128>}, {pipeline_mode = #tpu.pipeline_mode<synchronous>, transform_indices = @transform_9, window_bounds = array<i64: 1, 128>}, {pipeline_mode = #tpu.pipeline_mode<synchronous>, transform_indices = @transform_10, window_bounds = array<i64: 9, 128, 128>}, {pipeline_mode = #tpu.pipeline_mode<synchronous>, transform_indices = @transform_11, window_bounds = array<i64: 1, 128>}, {pipeline_mode = #tpu.pipeline_mode<synchronous>, transform_indices = @transform_12, window_bounds = array<i64: 256, 128>}]} {
    %0 = tpu.iota {dimensions = array<i32: 0>} : vector<256x1xi32>
    %c16_i32 = arith.constant 16 : i32
    %c0_i32 = arith.constant 0 : i32
    %1 = arith.cmpi eq, %c16_i32, %c0_i32 : i32
    %c1_i32 = arith.constant 1 : i32
    %2 = arith.select %1, %c1_i32, %c16_i32 : i32
    %3 = vector.broadcast %2 : i32 to vector<256x1xi32>
    %4 = arith.remsi %0, %3 : vector<256x1xi32>
    %c0_i32_0 = arith.constant 0 : i32
    %5 = vector.broadcast %c0_i32_0 : i32 to vector<256x1xi32>
    %6 = arith.cmpi ne, %4, %5 : vector<256x1xi32>
    %c0_i32_1 = arith.constant 0 : i32
    %7 = vector.broadcast %c0_i32_1 : i32 to vector<256x1xi32>
    %8 = arith.cmpi slt, %4, %7 : vector<256x1xi32>
    %c0_i32_2 = arith.constant 0 : i32
    %9 = arith.cmpi slt, %2, %c0_i32_2 : i32
    %10 = vector.broadcast %9 : i1 to vector<256x1xi1>
    %11 = vector.broadcast %10 : vector<256x1xi1> to vector<256x1xi1>
    %12 = arith.xori %8, %11 : vector<256x1xi1>
    %13 = arith.andi %12, %6 : vector<256x1xi1>
    %14 = vector.broadcast %2 : i32 to vector<256x1xi32>
    %15 = arith.addi %4, %14 : vector<256x1xi32>
    %16 = arith.select %13, %15, %4 : vector<256x1xi1>, vector<256x1xi32>
    %c1_i32_3 = arith.constant 1 : i32
    %17 = vector.broadcast %c1_i32_3 : i32 to vector<256x1xi32>
    %18 = arith.cmpi sge, %16, %17 : vector<256x1xi32>
    %c14_i32 = arith.constant 14 : i32
    %19 = vector.broadcast %c14_i32 : i32 to vector<256x1xi32>
    %20 = arith.cmpi sle, %16, %19 : vector<256x1xi32>
    %21 = tpu.iota {dimensions = array<i32: 1>} : vector<1x128xi32>
    %c2_i32 = arith.constant 2 : i32
    %c0_i32_4 = arith.constant 0 : i32
    %22 = arith.cmpi eq, %c2_i32, %c0_i32_4 : i32
    %c1_i32_5 = arith.constant 1 : i32
    %23 = arith.select %22, %c1_i32_5, %c2_i32 : i32
    %24 = vector.broadcast %23 : i32 to vector<1x128xi32>
    %25 = arith.remsi %21, %24 : vector<1x128xi32>
    %c0_i32_6 = arith.constant 0 : i32
    %26 = vector.broadcast %c0_i32_6 : i32 to vector<1x128xi32>
    %27 = arith.cmpi ne, %25, %26 : vector<1x128xi32>
    %c0_i32_7 = arith.constant 0 : i32
    %28 = vector.broadcast %c0_i32_7 : i32 to vector<1x128xi32>
    %29 = arith.cmpi slt, %25, %28 : vector<1x128xi32>
    %c0_i32_8 = arith.constant 0 : i32
    %30 = arith.cmpi slt, %23, %c0_i32_8 : i32
    %31 = vector.broadcast %30 : i1 to vector<1x128xi1>
    %32 = vector.broadcast %31 : vector<1x128xi1> to vector<1x128xi1>
    %33 = arith.xori %29, %32 : vector<1x128xi1>
    %34 = arith.andi %33, %27 : vector<1x128xi1>
    %35 = vector.broadcast %23 : i32 to vector<1x128xi32>
    %36 = arith.addi %25, %35 : vector<1x128xi32>
    %37 = arith.select %34, %36, %25 : vector<1x128xi1>, vector<1x128xi32>
    %c0_i32_9 = arith.constant 0 : i32
    %38 = vector.broadcast %c0_i32_9 : i32 to vector<1x128xi32>
    %39 = arith.cmpi eq, %37, %38 : vector<1x128xi32>
    %c0 = arith.constant 0 : index
    %c0_10 = arith.constant 0 : index
    %40 = vector.load %arg1[%c0, %c0_10] : memref<256x128xf32, #tpu.memory_space<vmem>>, vector<256x128xf32>
    %c0_11 = arith.constant 0 : index
    %c0_12 = arith.constant 0 : index
    %41 = vector.load %arg3[%c0_11, %c0_12] : memref<1x128xf32, #tpu.memory_space<vmem>>, vector<1x128xf32>
    %c0_13 = arith.constant 0 : index
    %c0_14 = arith.constant 0 : index
    %42 = vector.load %arg4[%c0_13, %c0_14] : memref<1x128xf32, #tpu.memory_space<vmem>>, vector<1x128xf32>
    %cst = arith.constant dense<0.000000e+00> : vector<128xf32>
    %43 = vector.multi_reduction <add>, %40, %cst [0] : vector<256x128xf32> to vector<128xf32>
    %44 = vector.shape_cast %43 : vector<128xf32> to vector<1x128xf32>
    %45 = arith.mulf %40, %40 : vector<256x128xf32>
    %cst_15 = arith.constant dense<0.000000e+00> : vector<128xf32>
    %46 = vector.multi_reduction <add>, %45, %cst_15 [0] : vector<256x128xf32> to vector<128xf32>
    %47 = vector.shape_cast %46 : vector<128xf32> to vector<1x128xf32>
    %48 = tpu.concatenate %44, %47 in 0 : vector<1x128xf32>, vector<1x128xf32> -> vector<2x128xf32>
    %c127_i32 = arith.constant 127 : i32
    %49 = tpu.dynamic_rotate %48 by %c127_i32 dim 1 : vector<2x128xf32>, i32 -> vector<2x128xf32>
    %c1_i32_16 = arith.constant 1 : i32
    %50 = tpu.dynamic_rotate %48 by %c1_i32_16 dim 1 : vector<2x128xf32>, i32 -> vector<2x128xf32>
    %51 = vector.shape_cast %39 : vector<1x128xi1> to vector<1x128xi1>
    %52 = vector.broadcast %51 : vector<1x128xi1> to vector<2x128xi1>
    %53 = arith.select %52, %49, %50 : vector<2x128xi1>, vector<2x128xf32>
    %54 = arith.addf %48, %53 : vector<2x128xf32>
    %55 = vector.extract_strided_slice %54 {offsets = [0, 0], sizes = [1, 128], strides = [1, 1]} : vector<2x128xf32> to vector<1x128xf32>
    %cst_17 = arith.constant 0.001953125 : f32
    %56 = vector.broadcast %cst_17 : f32 to vector<1x128xf32>
    %57 = arith.mulf %55, %56 : vector<1x128xf32>
    %58 = vector.extract_strided_slice %54 {offsets = [1, 0], sizes = [1, 128], strides = [1, 1]} : vector<2x128xf32> to vector<1x128xf32>
    %cst_18 = arith.constant 0.001953125 : f32
    %59 = vector.broadcast %cst_18 : f32 to vector<1x128xf32>
    %60 = arith.mulf %58, %59 : vector<1x128xf32>
    %61 = arith.mulf %57, %57 : vector<1x128xf32>
    %62 = arith.subf %60, %61 : vector<1x128xf32>
    %cst_19 = arith.constant 9.99999974E-6 : f32
    %63 = vector.broadcast %cst_19 : f32 to vector<1x128xf32>
    %64 = arith.addf %62, %63 : vector<1x128xf32>
    %65 = math.rsqrt %64 : vector<1x128xf32>
    %66 = vector.broadcast %57 : vector<1x128xf32> to vector<256x128xf32>
    %67 = arith.subf %40, %66 : vector<256x128xf32>
    %68 = arith.mulf %65, %41 : vector<1x128xf32>
    %69 = vector.broadcast %68 : vector<1x128xf32> to vector<256x128xf32>
    %70 = arith.mulf %67, %69 : vector<256x128xf32>
    %71 = vector.broadcast %42 : vector<1x128xf32> to vector<256x128xf32>
    %72 = arith.addf %70, %71 : vector<256x128xf32>
    %73 = arith.negf %72 : vector<256x128xf32>
    %74 = math.exp %73 : vector<256x128xf32>
    %cst_20 = arith.constant 1.000000e+00 : f32
    %75 = vector.broadcast %cst_20 : f32 to vector<256x128xf32>
    %76 = arith.addf %75, %74 : vector<256x128xf32>
    %77 = arith.divf %75, %76 : vector<256x128xf32>
    %78 = arith.mulf %72, %77 : vector<256x128xf32>
    %c0_21 = arith.constant 0 : index
    %c0_22 = arith.constant 0 : index
    %79 = vector.load %arg6[%c0_21, %c0_22] : memref<1x128xf32, #tpu.memory_space<vmem>>, vector<1x128xf32>
    %cst_23 = arith.constant 0.000000e+00 : f32
    %80 = vector.broadcast %cst_23 : f32 to vector<1x128xf32>
    %81 = vector.extract_strided_slice %78 {offsets = [0, 0], sizes = [255, 128], strides = [1, 1]} : vector<256x128xf32> to vector<255x128xf32>
    %82 = tpu.concatenate %80, %81 in 0 : vector<1x128xf32>, vector<255x128xf32> -> vector<256x128xf32>
    %cst_24 = arith.constant 0.000000e+00 : f32
    %83 = vector.shape_cast %18 : vector<256x1xi1> to vector<256x1xi1>
    %84 = vector.broadcast %83 : vector<256x1xi1> to vector<256x128xi1>
    %85 = vector.broadcast %cst_24 : f32 to vector<256x128xf32>
    %86 = arith.select %84, %82, %85 : vector<256x128xi1>, vector<256x128xf32>
    %87 = arith.truncf %86 : vector<256x128xf32> to vector<256x128xbf16>
    %88 = arith.truncf %78 : vector<256x128xf32> to vector<256x128xbf16>
    %cst_25 = arith.constant 0.000000e+00 : f32
    %89 = vector.broadcast %cst_25 : f32 to vector<1x128xf32>
    %90 = vector.extract_strided_slice %78 {offsets = [1, 0], sizes = [255, 128], strides = [1, 1]} : vector<256x128xf32> to vector<255x128xf32>
    %91 = tpu.concatenate %90, %89 in 0 : vector<255x128xf32>, vector<1x128xf32> -> vector<256x128xf32>
    %cst_26 = arith.constant 0.000000e+00 : f32
    %92 = vector.shape_cast %20 : vector<256x1xi1> to vector<256x1xi1>
    %93 = vector.broadcast %92 : vector<256x1xi1> to vector<256x128xi1>
    %94 = vector.broadcast %cst_26 : f32 to vector<256x128xf32>
    %95 = arith.select %93, %91, %94 : vector<256x128xi1>, vector<256x128xf32>
    %96 = arith.truncf %95 : vector<256x128xf32> to vector<256x128xbf16>
    %cst_27 = arith.constant 0.000000e+00 : bf16
    %97 = vector.broadcast %cst_27 : bf16 to vector<16x128xbf16>
    %98 = vector.extract_strided_slice %87 {offsets = [0, 0], sizes = [240, 128], strides = [1, 1]} : vector<256x128xbf16> to vector<240x128xbf16>
    %99 = tpu.concatenate %97, %98 in 0 : vector<16x128xbf16>, vector<240x128xbf16> -> vector<256x128xbf16>
    %c0_28 = arith.constant 0 : index
    %c0_29 = arith.constant 0 : index
    %c0_30 = arith.constant 0 : index
    %100 = vector.load %arg5[%c0_28, %c0_29, %c0_30] : memref<9x128x128xbf16, #tpu.memory_space<vmem>>, vector<1x128x128xbf16>
    %101 = vector.shape_cast %100 : vector<1x128x128xbf16> to vector<128x128xbf16>
    %cst_31 = arith.constant dense<0.000000e+00> : vector<256x128xf32>
    %102 = tpu.matmul %99, %101, %cst_31 {dimension_numbers = #tpu.dot_dimension_numbers<[1], [0], [0], [1], [0, 0, 1, 1], [], []>} : vector<256x128xbf16>, vector<128x128xbf16>, vector<256x128xf32> -> vector<256x128xf32>
    %cst_32 = arith.constant 0.000000e+00 : bf16
    %103 = vector.broadcast %cst_32 : bf16 to vector<16x128xbf16>
    %104 = vector.extract_strided_slice %88 {offsets = [0, 0], sizes = [240, 128], strides = [1, 1]} : vector<256x128xbf16> to vector<240x128xbf16>
    %105 = tpu.concatenate %103, %104 in 0 : vector<16x128xbf16>, vector<240x128xbf16> -> vector<256x128xbf16>
    %c1 = arith.constant 1 : index
    %c0_33 = arith.constant 0 : index
    %c0_34 = arith.constant 0 : index
    %106 = vector.load %arg5[%c1, %c0_33, %c0_34] : memref<9x128x128xbf16, #tpu.memory_space<vmem>>, vector<1x128x128xbf16>
    %107 = vector.shape_cast %106 : vector<1x128x128xbf16> to vector<128x128xbf16>
    %cst_35 = arith.constant dense<0.000000e+00> : vector<256x128xf32>
    %108 = tpu.matmul %105, %107, %cst_35 {dimension_numbers = #tpu.dot_dimension_numbers<[1], [0], [0], [1], [0, 0, 1, 1], [], []>} : vector<256x128xbf16>, vector<128x128xbf16>, vector<256x128xf32> -> vector<256x128xf32>
    %109 = arith.addf %102, %108 : vector<256x128xf32>
    %cst_36 = arith.constant 0.000000e+00 : bf16
    %110 = vector.broadcast %cst_36 : bf16 to vector<16x128xbf16>
    %111 = vector.extract_strided_slice %96 {offsets = [0, 0], sizes = [240, 128], strides = [1, 1]} : vector<256x128xbf16> to vector<240x128xbf16>
    %112 = tpu.concatenate %110, %111 in 0 : vector<16x128xbf16>, vector<240x128xbf16> -> vector<256x128xbf16>
    %c2 = arith.constant 2 : index
    %c0_37 = arith.constant 0 : index
    %c0_38 = arith.constant 0 : index
    %113 = vector.load %arg5[%c2, %c0_37, %c0_38] : memref<9x128x128xbf16, #tpu.memory_space<vmem>>, vector<1x128x128xbf16>
    %114 = vector.shape_cast %113 : vector<1x128x128xbf16> to vector<128x128xbf16>
    %cst_39 = arith.constant dense<0.000000e+00> : vector<256x128xf32>
    %115 = tpu.matmul %112, %114, %cst_39 {dimension_numbers = #tpu.dot_dimension_numbers<[1], [0], [0], [1], [0, 0, 1, 1], [], []>} : vector<256x128xbf16>, vector<128x128xbf16>, vector<256x128xf32> -> vector<256x128xf32>
    %116 = arith.addf %109, %115 : vector<256x128xf32>
    %c3 = arith.constant 3 : index
    %c0_40 = arith.constant 0 : index
    %c0_41 = arith.constant 0 : index
    %117 = vector.load %arg5[%c3, %c0_40, %c0_41] : memref<9x128x128xbf16, #tpu.memory_space<vmem>>, vector<1x128x128xbf16>
    %118 = vector.shape_cast %117 : vector<1x128x128xbf16> to vector<128x128xbf16>
    %cst_42 = arith.constant dense<0.000000e+00> : vector<256x128xf32>
    %119 = tpu.matmul %87, %118, %cst_42 {dimension_numbers = #tpu.dot_dimension_numbers<[1], [0], [0], [1], [0, 0, 1, 1], [], []>} : vector<256x128xbf16>, vector<128x128xbf16>, vector<256x128xf32> -> vector<256x128xf32>
    %120 = arith.addf %116, %119 : vector<256x128xf32>
    %c4 = arith.constant 4 : index
    %c0_43 = arith.constant 0 : index
    %c0_44 = arith.constant 0 : index
    %121 = vector.load %arg5[%c4, %c0_43, %c0_44] : memref<9x128x128xbf16, #tpu.memory_space<vmem>>, vector<1x128x128xbf16>
    %122 = vector.shape_cast %121 : vector<1x128x128xbf16> to vector<128x128xbf16>
    %cst_45 = arith.constant dense<0.000000e+00> : vector<256x128xf32>
    %123 = tpu.matmul %88, %122, %cst_45 {dimension_numbers = #tpu.dot_dimension_numbers<[1], [0], [0], [1], [0, 0, 1, 1], [], []>} : vector<256x128xbf16>, vector<128x128xbf16>, vector<256x128xf32> -> vector<256x128xf32>
    %124 = arith.addf %120, %123 : vector<256x128xf32>
    %c5 = arith.constant 5 : index
    %c0_46 = arith.constant 0 : index
    %c0_47 = arith.constant 0 : index
    %125 = vector.load %arg5[%c5, %c0_46, %c0_47] : memref<9x128x128xbf16, #tpu.memory_space<vmem>>, vector<1x128x128xbf16>
    %126 = vector.shape_cast %125 : vector<1x128x128xbf16> to vector<128x128xbf16>
    %cst_48 = arith.constant dense<0.000000e+00> : vector<256x128xf32>
    %127 = tpu.matmul %96, %126, %cst_48 {dimension_numbers = #tpu.dot_dimension_numbers<[1], [0], [0], [1], [0, 0, 1, 1], [], []>} : vector<256x128xbf16>, vector<128x128xbf16>, vector<256x128xf32> -> vector<256x128xf32>
    %128 = arith.addf %124, %127 : vector<256x128xf32>
    %cst_49 = arith.constant 0.000000e+00 : bf16
    %129 = vector.broadcast %cst_49 : bf16 to vector<16x128xbf16>
    %130 = vector.extract_strided_slice %87 {offsets = [16, 0], sizes = [240, 128], strides = [1, 1]} : vector<256x128xbf16> to vector<240x128xbf16>
    %131 = tpu.concatenate %130, %129 in 0 : vector<240x128xbf16>, vector<16x128xbf16> -> vector<256x128xbf16>
    %c6 = arith.constant 6 : index
    %c0_50 = arith.constant 0 : index
    %c0_51 = arith.constant 0 : index
    %132 = vector.load %arg5[%c6, %c0_50, %c0_51] : memref<9x128x128xbf16, #tpu.memory_space<vmem>>, vector<1x128x128xbf16>
    %133 = vector.shape_cast %132 : vector<1x128x128xbf16> to vector<128x128xbf16>
    %cst_52 = arith.constant dense<0.000000e+00> : vector<256x128xf32>
    %134 = tpu.matmul %131, %133, %cst_52 {dimension_numbers = #tpu.dot_dimension_numbers<[1], [0], [0], [1], [0, 0, 1, 1], [], []>} : vector<256x128xbf16>, vector<128x128xbf16>, vector<256x128xf32> -> vector<256x128xf32>
    %135 = arith.addf %128, %134 : vector<256x128xf32>
    %cst_53 = arith.constant 0.000000e+00 : bf16
    %136 = vector.broadcast %cst_53 : bf16 to vector<16x128xbf16>
    %137 = vector.extract_strided_slice %88 {offsets = [16, 0], sizes = [240, 128], strides = [1, 1]} : vector<256x128xbf16> to vector<240x128xbf16>
    %138 = tpu.concatenate %137, %136 in 0 : vector<240x128xbf16>, vector<16x128xbf16> -> vector<256x128xbf16>
    %c7 = arith.constant 7 : index
    %c0_54 = arith.constant 0 : index
    %c0_55 = arith.constant 0 : index
    %139 = vector.load %arg5[%c7, %c0_54, %c0_55] : memref<9x128x128xbf16, #tpu.memory_space<vmem>>, vector<1x128x128xbf16>
    %140 = vector.shape_cast %139 : vector<1x128x128xbf16> to vector<128x128xbf16>
    %cst_56 = arith.constant dense<0.000000e+00> : vector<256x128xf32>
    %141 = tpu.matmul %138, %140, %cst_56 {dimension_numbers = #tpu.dot_dimension_numbers<[1], [0], [0], [1], [0, 0, 1, 1], [], []>} : vector<256x128xbf16>, vector<128x128xbf16>, vector<256x128xf32> -> vector<256x128xf32>
    %142 = arith.addf %135, %141 : vector<256x128xf32>
    %cst_57 = arith.constant 0.000000e+00 : bf16
    %143 = vector.broadcast %cst_57 : bf16 to vector<16x128xbf16>
    %144 = vector.extract_strided_slice %96 {offsets = [16, 0], sizes = [240, 128], strides = [1, 1]} : vector<256x128xbf16> to vector<240x128xbf16>
    %145 = tpu.concatenate %144, %143 in 0 : vector<240x128xbf16>, vector<16x128xbf16> -> vector<256x128xbf16>
    %c8 = arith.constant 8 : index
    %c0_58 = arith.constant 0 : index
    %c0_59 = arith.constant 0 : index
    %146 = vector.load %arg5[%c8, %c0_58, %c0_59] : memref<9x128x128xbf16, #tpu.memory_space<vmem>>, vector<1x128x128xbf16>
    %147 = vector.shape_cast %146 : vector<1x128x128xbf16> to vector<128x128xbf16>
    %cst_60 = arith.constant dense<0.000000e+00> : vector<256x128xf32>
    %148 = tpu.matmul %145, %147, %cst_60 {dimension_numbers = #tpu.dot_dimension_numbers<[1], [0], [0], [1], [0, 0, 1, 1], [], []>} : vector<256x128xbf16>, vector<128x128xbf16>, vector<256x128xf32> -> vector<256x128xf32>
    %149 = arith.addf %142, %148 : vector<256x128xf32>
    %150 = vector.broadcast %79 : vector<1x128xf32> to vector<256x128xf32>
    %151 = arith.addf %149, %150 : vector<256x128xf32>
    %c0_61 = arith.constant 0 : index
    %c0_62 = arith.constant 0 : index
    %152 = vector.load %arg2[%c0_61, %c0_62] : memref<1x64xf32, #tpu.memory_space<vmem>>, vector<1x64xf32>
    %153 = arith.negf %152 : vector<1x64xf32>
    %154 = math.exp %153 : vector<1x64xf32>
    %cst_63 = arith.constant 1.000000e+00 : f32
    %155 = vector.broadcast %cst_63 : f32 to vector<1x64xf32>
    %156 = arith.addf %155, %154 : vector<1x64xf32>
    %157 = arith.divf %155, %156 : vector<1x64xf32>
    %158 = arith.mulf %152, %157 : vector<1x64xf32>
    %c0_64 = arith.constant 0 : index
    %c0_65 = arith.constant 0 : index
    %159 = vector.load %arg7[%c0_64, %c0_65] : memref<64x128xf32, #tpu.memory_space<vmem>>, vector<64x128xf32>
    %cst_66 = arith.constant dense<0.000000e+00> : vector<1x128xf32>
    %160 = tpu.matmul %158, %159, %cst_66 {dimension_numbers = #tpu.dot_dimension_numbers<[1], [0], [0], [1], [0, 0, 1, 1], [], []>} : vector<1x64xf32>, vector<64x128xf32>, vector<1x128xf32> -> vector<1x128xf32>
    %c0_67 = arith.constant 0 : index
    %c0_68 = arith.constant 0 : index
    %161 = vector.load %arg8[%c0_67, %c0_68] : memref<1x128xf32, #tpu.memory_space<vmem>>, vector<1x128xf32>
    %162 = arith.addf %160, %161 : vector<1x128xf32>
    %163 = vector.broadcast %162 : vector<1x128xf32> to vector<256x128xf32>
    %164 = arith.addf %151, %163 : vector<256x128xf32>
    %c0_69 = arith.constant 0 : index
    %c0_70 = arith.constant 0 : index
    %165 = vector.load %arg9[%c0_69, %c0_70] : memref<1x128xf32, #tpu.memory_space<vmem>>, vector<1x128xf32>
    %c0_71 = arith.constant 0 : index
    %c0_72 = arith.constant 0 : index
    %166 = vector.load %arg10[%c0_71, %c0_72] : memref<1x128xf32, #tpu.memory_space<vmem>>, vector<1x128xf32>
    %cst_73 = arith.constant dense<0.000000e+00> : vector<128xf32>
    %167 = vector.multi_reduction <add>, %164, %cst_73 [0] : vector<256x128xf32> to vector<128xf32>
    %168 = vector.shape_cast %167 : vector<128xf32> to vector<1x128xf32>
    %169 = arith.mulf %164, %164 : vector<256x128xf32>
    %cst_74 = arith.constant dense<0.000000e+00> : vector<128xf32>
    %170 = vector.multi_reduction <add>, %169, %cst_74 [0] : vector<256x128xf32> to vector<128xf32>
    %171 = vector.shape_cast %170 : vector<128xf32> to vector<1x128xf32>
    %172 = tpu.concatenate %168, %171 in 0 : vector<1x128xf32>, vector<1x128xf32> -> vector<2x128xf32>
    %c127_i32_75 = arith.constant 127 : i32
    %173 = tpu.dynamic_rotate %172 by %c127_i32_75 dim 1 : vector<2x128xf32>, i32 -> vector<2x128xf32>
    %c1_i32_76 = arith.constant 1 : i32
    %174 = tpu.dynamic_rotate %172 by %c1_i32_76 dim 1 : vector<2x128xf32>, i32 -> vector<2x128xf32>
    %175 = vector.shape_cast %39 : vector<1x128xi1> to vector<1x128xi1>
    %176 = vector.broadcast %175 : vector<1x128xi1> to vector<2x128xi1>
    %177 = arith.select %176, %173, %174 : vector<2x128xi1>, vector<2x128xf32>
    %178 = arith.addf %172, %177 : vector<2x128xf32>
    %179 = vector.extract_strided_slice %178 {offsets = [0, 0], sizes = [1, 128], strides = [1, 1]} : vector<2x128xf32> to vector<1x128xf32>
    %cst_77 = arith.constant 0.001953125 : f32
    %180 = vector.broadcast %cst_77 : f32 to vector<1x128xf32>
    %181 = arith.mulf %179, %180 : vector<1x128xf32>
    %182 = vector.extract_strided_slice %178 {offsets = [1, 0], sizes = [1, 128], strides = [1, 1]} : vector<2x128xf32> to vector<1x128xf32>
    %cst_78 = arith.constant 0.001953125 : f32
    %183 = vector.broadcast %cst_78 : f32 to vector<1x128xf32>
    %184 = arith.mulf %182, %183 : vector<1x128xf32>
    %185 = arith.mulf %181, %181 : vector<1x128xf32>
    %186 = arith.subf %184, %185 : vector<1x128xf32>
    %cst_79 = arith.constant 9.99999974E-6 : f32
    %187 = vector.broadcast %cst_79 : f32 to vector<1x128xf32>
    %188 = arith.addf %186, %187 : vector<1x128xf32>
    %189 = math.rsqrt %188 : vector<1x128xf32>
    %190 = vector.broadcast %181 : vector<1x128xf32> to vector<256x128xf32>
    %191 = arith.subf %164, %190 : vector<256x128xf32>
    %192 = arith.mulf %189, %165 : vector<1x128xf32>
    %193 = vector.broadcast %192 : vector<1x128xf32> to vector<256x128xf32>
    %194 = arith.mulf %191, %193 : vector<256x128xf32>
    %195 = vector.broadcast %166 : vector<1x128xf32> to vector<256x128xf32>
    %196 = arith.addf %194, %195 : vector<256x128xf32>
    %197 = arith.negf %196 : vector<256x128xf32>
    %198 = math.exp %197 : vector<256x128xf32>
    %cst_80 = arith.constant 1.000000e+00 : f32
    %199 = vector.broadcast %cst_80 : f32 to vector<256x128xf32>
    %200 = arith.addf %199, %198 : vector<256x128xf32>
    %201 = arith.divf %199, %200 : vector<256x128xf32>
    %202 = arith.mulf %196, %201 : vector<256x128xf32>
    %c0_81 = arith.constant 0 : index
    %c0_82 = arith.constant 0 : index
    %203 = vector.load %arg12[%c0_81, %c0_82] : memref<1x128xf32, #tpu.memory_space<vmem>>, vector<1x128xf32>
    %cst_83 = arith.constant 0.000000e+00 : f32
    %204 = vector.broadcast %cst_83 : f32 to vector<1x128xf32>
    %205 = vector.extract_strided_slice %202 {offsets = [0, 0], sizes = [255, 128], strides = [1, 1]} : vector<256x128xf32> to vector<255x128xf32>
    %206 = tpu.concatenate %204, %205 in 0 : vector<1x128xf32>, vector<255x128xf32> -> vector<256x128xf32>
    %cst_84 = arith.constant 0.000000e+00 : f32
    %207 = vector.shape_cast %18 : vector<256x1xi1> to vector<256x1xi1>
    %208 = vector.broadcast %207 : vector<256x1xi1> to vector<256x128xi1>
    %209 = vector.broadcast %cst_84 : f32 to vector<256x128xf32>
    %210 = arith.select %208, %206, %209 : vector<256x128xi1>, vector<256x128xf32>
    %211 = arith.truncf %210 : vector<256x128xf32> to vector<256x128xbf16>
    %212 = arith.truncf %202 : vector<256x128xf32> to vector<256x128xbf16>
    %cst_85 = arith.constant 0.000000e+00 : f32
    %213 = vector.broadcast %cst_85 : f32 to vector<1x128xf32>
    %214 = vector.extract_strided_slice %202 {offsets = [1, 0], sizes = [255, 128], strides = [1, 1]} : vector<256x128xf32> to vector<255x128xf32>
    %215 = tpu.concatenate %214, %213 in 0 : vector<255x128xf32>, vector<1x128xf32> -> vector<256x128xf32>
    %cst_86 = arith.constant 0.000000e+00 : f32
    %216 = vector.shape_cast %20 : vector<256x1xi1> to vector<256x1xi1>
    %217 = vector.broadcast %216 : vector<256x1xi1> to vector<256x128xi1>
    %218 = vector.broadcast %cst_86 : f32 to vector<256x128xf32>
    %219 = arith.select %217, %215, %218 : vector<256x128xi1>, vector<256x128xf32>
    %220 = arith.truncf %219 : vector<256x128xf32> to vector<256x128xbf16>
    %cst_87 = arith.constant 0.000000e+00 : bf16
    %221 = vector.broadcast %cst_87 : bf16 to vector<16x128xbf16>
    %222 = vector.extract_strided_slice %211 {offsets = [0, 0], sizes = [240, 128], strides = [1, 1]} : vector<256x128xbf16> to vector<240x128xbf16>
    %223 = tpu.concatenate %221, %222 in 0 : vector<16x128xbf16>, vector<240x128xbf16> -> vector<256x128xbf16>
    %c0_88 = arith.constant 0 : index
    %c0_89 = arith.constant 0 : index
    %c0_90 = arith.constant 0 : index
    %224 = vector.load %arg11[%c0_88, %c0_89, %c0_90] : memref<9x128x128xbf16, #tpu.memory_space<vmem>>, vector<1x128x128xbf16>
    %225 = vector.shape_cast %224 : vector<1x128x128xbf16> to vector<128x128xbf16>
    %cst_91 = arith.constant dense<0.000000e+00> : vector<256x128xf32>
    %226 = tpu.matmul %223, %225, %cst_91 {dimension_numbers = #tpu.dot_dimension_numbers<[1], [0], [0], [1], [0, 0, 1, 1], [], []>} : vector<256x128xbf16>, vector<128x128xbf16>, vector<256x128xf32> -> vector<256x128xf32>
    %cst_92 = arith.constant 0.000000e+00 : bf16
    %227 = vector.broadcast %cst_92 : bf16 to vector<16x128xbf16>
    %228 = vector.extract_strided_slice %212 {offsets = [0, 0], sizes = [240, 128], strides = [1, 1]} : vector<256x128xbf16> to vector<240x128xbf16>
    %229 = tpu.concatenate %227, %228 in 0 : vector<16x128xbf16>, vector<240x128xbf16> -> vector<256x128xbf16>
    %c1_93 = arith.constant 1 : index
    %c0_94 = arith.constant 0 : index
    %c0_95 = arith.constant 0 : index
    %230 = vector.load %arg11[%c1_93, %c0_94, %c0_95] : memref<9x128x128xbf16, #tpu.memory_space<vmem>>, vector<1x128x128xbf16>
    %231 = vector.shape_cast %230 : vector<1x128x128xbf16> to vector<128x128xbf16>
    %cst_96 = arith.constant dense<0.000000e+00> : vector<256x128xf32>
    %232 = tpu.matmul %229, %231, %cst_96 {dimension_numbers = #tpu.dot_dimension_numbers<[1], [0], [0], [1], [0, 0, 1, 1], [], []>} : vector<256x128xbf16>, vector<128x128xbf16>, vector<256x128xf32> -> vector<256x128xf32>
    %233 = arith.addf %226, %232 : vector<256x128xf32>
    %cst_97 = arith.constant 0.000000e+00 : bf16
    %234 = vector.broadcast %cst_97 : bf16 to vector<16x128xbf16>
    %235 = vector.extract_strided_slice %220 {offsets = [0, 0], sizes = [240, 128], strides = [1, 1]} : vector<256x128xbf16> to vector<240x128xbf16>
    %236 = tpu.concatenate %234, %235 in 0 : vector<16x128xbf16>, vector<240x128xbf16> -> vector<256x128xbf16>
    %c2_98 = arith.constant 2 : index
    %c0_99 = arith.constant 0 : index
    %c0_100 = arith.constant 0 : index
    %237 = vector.load %arg11[%c2_98, %c0_99, %c0_100] : memref<9x128x128xbf16, #tpu.memory_space<vmem>>, vector<1x128x128xbf16>
    %238 = vector.shape_cast %237 : vector<1x128x128xbf16> to vector<128x128xbf16>
    %cst_101 = arith.constant dense<0.000000e+00> : vector<256x128xf32>
    %239 = tpu.matmul %236, %238, %cst_101 {dimension_numbers = #tpu.dot_dimension_numbers<[1], [0], [0], [1], [0, 0, 1, 1], [], []>} : vector<256x128xbf16>, vector<128x128xbf16>, vector<256x128xf32> -> vector<256x128xf32>
    %240 = arith.addf %233, %239 : vector<256x128xf32>
    %c3_102 = arith.constant 3 : index
    %c0_103 = arith.constant 0 : index
    %c0_104 = arith.constant 0 : index
    %241 = vector.load %arg11[%c3_102, %c0_103, %c0_104] : memref<9x128x128xbf16, #tpu.memory_space<vmem>>, vector<1x128x128xbf16>
    %242 = vector.shape_cast %241 : vector<1x128x128xbf16> to vector<128x128xbf16>
    %cst_105 = arith.constant dense<0.000000e+00> : vector<256x128xf32>
    %243 = tpu.matmul %211, %242, %cst_105 {dimension_numbers = #tpu.dot_dimension_numbers<[1], [0], [0], [1], [0, 0, 1, 1], [], []>} : vector<256x128xbf16>, vector<128x128xbf16>, vector<256x128xf32> -> vector<256x128xf32>
    %244 = arith.addf %240, %243 : vector<256x128xf32>
    %c4_106 = arith.constant 4 : index
    %c0_107 = arith.constant 0 : index
    %c0_108 = arith.constant 0 : index
    %245 = vector.load %arg11[%c4_106, %c0_107, %c0_108] : memref<9x128x128xbf16, #tpu.memory_space<vmem>>, vector<1x128x128xbf16>
    %246 = vector.shape_cast %245 : vector<1x128x128xbf16> to vector<128x128xbf16>
    %cst_109 = arith.constant dense<0.000000e+00> : vector<256x128xf32>
    %247 = tpu.matmul %212, %246, %cst_109 {dimension_numbers = #tpu.dot_dimension_numbers<[1], [0], [0], [1], [0, 0, 1, 1], [], []>} : vector<256x128xbf16>, vector<128x128xbf16>, vector<256x128xf32> -> vector<256x128xf32>
    %248 = arith.addf %244, %247 : vector<256x128xf32>
    %c5_110 = arith.constant 5 : index
    %c0_111 = arith.constant 0 : index
    %c0_112 = arith.constant 0 : index
    %249 = vector.load %arg11[%c5_110, %c0_111, %c0_112] : memref<9x128x128xbf16, #tpu.memory_space<vmem>>, vector<1x128x128xbf16>
    %250 = vector.shape_cast %249 : vector<1x128x128xbf16> to vector<128x128xbf16>
    %cst_113 = arith.constant dense<0.000000e+00> : vector<256x128xf32>
    %251 = tpu.matmul %220, %250, %cst_113 {dimension_numbers = #tpu.dot_dimension_numbers<[1], [0], [0], [1], [0, 0, 1, 1], [], []>} : vector<256x128xbf16>, vector<128x128xbf16>, vector<256x128xf32> -> vector<256x128xf32>
    %252 = arith.addf %248, %251 : vector<256x128xf32>
    %cst_114 = arith.constant 0.000000e+00 : bf16
    %253 = vector.broadcast %cst_114 : bf16 to vector<16x128xbf16>
    %254 = vector.extract_strided_slice %211 {offsets = [16, 0], sizes = [240, 128], strides = [1, 1]} : vector<256x128xbf16> to vector<240x128xbf16>
    %255 = tpu.concatenate %254, %253 in 0 : vector<240x128xbf16>, vector<16x128xbf16> -> vector<256x128xbf16>
    %c6_115 = arith.constant 6 : index
    %c0_116 = arith.constant 0 : index
    %c0_117 = arith.constant 0 : index
    %256 = vector.load %arg11[%c6_115, %c0_116, %c0_117] : memref<9x128x128xbf16, #tpu.memory_space<vmem>>, vector<1x128x128xbf16>
    %257 = vector.shape_cast %256 : vector<1x128x128xbf16> to vector<128x128xbf16>
    %cst_118 = arith.constant dense<0.000000e+00> : vector<256x128xf32>
    %258 = tpu.matmul %255, %257, %cst_118 {dimension_numbers = #tpu.dot_dimension_numbers<[1], [0], [0], [1], [0, 0, 1, 1], [], []>} : vector<256x128xbf16>, vector<128x128xbf16>, vector<256x128xf32> -> vector<256x128xf32>
    %259 = arith.addf %252, %258 : vector<256x128xf32>
    %cst_119 = arith.constant 0.000000e+00 : bf16
    %260 = vector.broadcast %cst_119 : bf16 to vector<16x128xbf16>
    %261 = vector.extract_strided_slice %212 {offsets = [16, 0], sizes = [240, 128], strides = [1, 1]} : vector<256x128xbf16> to vector<240x128xbf16>
    %262 = tpu.concatenate %261, %260 in 0 : vector<240x128xbf16>, vector<16x128xbf16> -> vector<256x128xbf16>
    %c7_120 = arith.constant 7 : index
    %c0_121 = arith.constant 0 : index
    %c0_122 = arith.constant 0 : index
    %263 = vector.load %arg11[%c7_120, %c0_121, %c0_122] : memref<9x128x128xbf16, #tpu.memory_space<vmem>>, vector<1x128x128xbf16>
    %264 = vector.shape_cast %263 : vector<1x128x128xbf16> to vector<128x128xbf16>
    %cst_123 = arith.constant dense<0.000000e+00> : vector<256x128xf32>
    %265 = tpu.matmul %262, %264, %cst_123 {dimension_numbers = #tpu.dot_dimension_numbers<[1], [0], [0], [1], [0, 0, 1, 1], [], []>} : vector<256x128xbf16>, vector<128x128xbf16>, vector<256x128xf32> -> vector<256x128xf32>
    %266 = arith.addf %259, %265 : vector<256x128xf32>
    %cst_124 = arith.constant 0.000000e+00 : bf16
    %267 = vector.broadcast %cst_124 : bf16 to vector<16x128xbf16>
    %268 = vector.extract_strided_slice %220 {offsets = [16, 0], sizes = [240, 128], strides = [1, 1]} : vector<256x128xbf16> to vector<240x128xbf16>
    %269 = tpu.concatenate %268, %267 in 0 : vector<240x128xbf16>, vector<16x128xbf16> -> vector<256x128xbf16>
    %c8_125 = arith.constant 8 : index
    %c0_126 = arith.constant 0 : index
    %c0_127 = arith.constant 0 : index
    %270 = vector.load %arg11[%c8_125, %c0_126, %c0_127] : memref<9x128x128xbf16, #tpu.memory_space<vmem>>, vector<1x128x128xbf16>
    %271 = vector.shape_cast %270 : vector<1x128x128xbf16> to vector<128x128xbf16>
    %cst_128 = arith.constant dense<0.000000e+00> : vector<256x128xf32>
    %272 = tpu.matmul %269, %271, %cst_128 {dimension_numbers = #tpu.dot_dimension_numbers<[1], [0], [0], [1], [0, 0, 1, 1], [], []>} : vector<256x128xbf16>, vector<128x128xbf16>, vector<256x128xf32> -> vector<256x128xf32>
    %273 = arith.addf %266, %272 : vector<256x128xf32>
    %274 = vector.broadcast %203 : vector<1x128xf32> to vector<256x128xf32>
    %275 = arith.addf %273, %274 : vector<256x128xf32>
    %c0_129 = arith.constant 0 : index
    %c0_130 = arith.constant 0 : index
    %276 = vector.load %arg1[%c0_129, %c0_130] : memref<256x128xf32, #tpu.memory_space<vmem>>, vector<256x128xf32>
    %277 = arith.addf %276, %275 : vector<256x128xf32>
    %c0_131 = arith.constant 0 : index
    %c0_132 = arith.constant 0 : index
    %278 = vector.load %arg13[%c0_131, %c0_132] : memref<256x128xf32, #tpu.memory_space<vmem>>, vector<256x128xf32>
    tpu.vector_store %arg13[%c0_131, %c0_132], %277 {strides = array<i32>} : memref<256x128xf32, #tpu.memory_space<vmem>>, vector<256x128xf32>,
    return
  }
  func.func @transform_0(%arg0: i32) -> (i32, i32) {
    %c0_i32 = arith.constant 0 : i32
    %c0_i32_0 = arith.constant 0 : i32
    %c0_i32_1 = arith.constant 0 : i32
    return %c0_i32, %c0_i32_0 : i32, i32
  }
  func.func @transform_1(%arg0: i32) -> (i32, i32) {
    %c0_i32 = arith.constant 0 : i32
    %c0_i32_0 = arith.constant 0 : i32
    %c0_i32_1 = arith.constant 0 : i32
    return %c0_i32, %c0_i32_0 : i32, i32
  }
  func.func @transform_2(%arg0: i32) -> (i32, i32) {
    %c0_i32 = arith.constant 0 : i32
    %c0_i32_0 = arith.constant 0 : i32
    %c0_i32_1 = arith.constant 0 : i32
    return %c0_i32, %c0_i32_0 : i32, i32
  }
  func.func @transform_3(%arg0: i32) -> (i32, i32) {
    %c0_i32 = arith.constant 0 : i32
    %c0_i32_0 = arith.constant 0 : i32
    %c0_i32_1 = arith.constant 0 : i32
    return %c0_i32, %c0_i32_0 : i32, i32
  }
  func.func @transform_4(%arg0: i32) -> (i32, i32, i32) {
    %c0_i32 = arith.constant 0 : i32
    %c0_i32_0 = arith.constant 0 : i32
    %c0_i32_1 = arith.constant 0 : i32
    %c0_i32_2 = arith.constant 0 : i32
    return %c0_i32, %c0_i32_0, %c0_i32_1 : i32, i32, i32
  }
  func.func @transform_5(%arg0: i32) -> (i32, i32) {
    %c0_i32 = arith.constant 0 : i32
    %c0_i32_0 = arith.constant 0 : i32
    %c0_i32_1 = arith.constant 0 : i32
    return %c0_i32, %c0_i32_0 : i32, i32
  }
  func.func @transform_6(%arg0: i32) -> (i32, i32) {
    %c0_i32 = arith.constant 0 : i32
    %c0_i32_0 = arith.constant 0 : i32
    %c0_i32_1 = arith.constant 0 : i32
    return %c0_i32, %c0_i32_0 : i32, i32
  }
  func.func @transform_7(%arg0: i32) -> (i32, i32) {
    %c0_i32 = arith.constant 0 : i32
    %c0_i32_0 = arith.constant 0 : i32
    %c0_i32_1 = arith.constant 0 : i32
    return %c0_i32, %c0_i32_0 : i32, i32
  }
  func.func @transform_8(%arg0: i32) -> (i32, i32) {
    %c0_i32 = arith.constant 0 : i32
    %c0_i32_0 = arith.constant 0 : i32
    %c0_i32_1 = arith.constant 0 : i32
    return %c0_i32, %c0_i32_0 : i32, i32
  }
  func.func @transform_9(%arg0: i32) -> (i32, i32) {
    %c0_i32 = arith.constant 0 : i32
    %c0_i32_0 = arith.constant 0 : i32
    %c0_i32_1 = arith.constant 0 : i32
    return %c0_i32, %c0_i32_0 : i32, i32
  }
  func.func @transform_10(%arg0: i32) -> (i32, i32, i32) {
    %c0_i32 = arith.constant 0 : i32
    %c0_i32_0 = arith.constant 0 : i32
    %c0_i32_1 = arith.constant 0 : i32
    %c0_i32_2 = arith.constant 0 : i32
    return %c0_i32, %c0_i32_0, %c0_i32_1 : i32, i32, i32
  }
  func.func @transform_11(%arg0: i32) -> (i32, i32) {
    %c0_i32 = arith.constant 0 : i32
    %c0_i32_0 = arith.constant 0 : i32
    %c0_i32_1 = arith.constant 0 : i32
    return %c0_i32, %c0_i32_0 : i32, i32
  }
  func.func @transform_12(%arg0: i32) -> (i32, i32) {
    %c0_i32 = arith.constant 0 : i32
    %c0_i32_0 = arith.constant 0 : i32
    %c0_i32_1 = arith.constant 0 : i32
    return %c0_i32, %c0_i32_0 : i32, i32
  }
}

</mosaic_0001>

<llo_original>
// kernel: resblock_pallas.1
$region0: #{resblock_pallas.1}
  #allocation0 [shape = 'u32[]', space=smem, size = 0x4, offset = 0x4, fixed_abs, tag = 'smem constant byte address 0x4 - core index']
  #allocation1 [shape = 'u32[144,128]{1,0:T(1,128)}', space=vmem, size = 0x12000, scoped, tag = 'internal scratch']
  %s0 = inlined_call_operand.vmem [shape: f32[256,128], index: 0, kind: input, shape index: {}]
  %s1 = inlined_call_operand.vmem [shape: f32[1,64], index: 1, kind: input, shape index: {}]
  %s2 = inlined_call_operand.vmem [shape: f32[1,128], index: 2, kind: input, shape index: {}]
  %s3 = inlined_call_operand.vmem [shape: f32[1,128], index: 3, kind: input, shape index: {}]
  %s4 = inlined_call_operand.vmem [shape: bf16[9,128,128], index: 4, kind: input, shape index: {}]
  %s5 = inlined_call_operand.vmem [shape: f32[1,128], index: 5, kind: input, shape index: {}]
  %s6 = inlined_call_operand.vmem [shape: f32[64,128], index: 6, kind: input, shape index: {}]
  %s7 = inlined_call_operand.vmem [shape: f32[1,128], index: 7, kind: input, shape index: {}]
  %s8 = inlined_call_operand.vmem [shape: f32[1,128], index: 8, kind: input, shape index: {}]
  %s9 = inlined_call_operand.vmem [shape: f32[1,128], index: 9, kind: input, shape index: {}]
  %s10 = inlined_call_operand.vmem [shape: bf16[9,128,128], index: 10, kind: input, shape index: {}]
  %s11 = inlined_call_operand.vmem [shape: f32[1,128], index: 11, kind: input, shape index: {}]
  %s12 = inlined_call_operand.vmem [shape: f32[256,128], index: 12, kind: output, shape index: {}]
  %s13 = sld [smem:[#allocation0]]
  $region58: #{resblock_pallas.1} parent=0
    _
  %s15 = ssub.s32 1, %s13
  %s16 = scalar_select 0, %s15, %s13
  // Predicated region
  $region2: #{resblock_pallas.1} parent=0 // pred_check
    _
  $region3: #{resblock_pallas.1} parent=0 // pred_check_branch
    %18 = sbr.rel (0) target = $region5
  $region4: #{resblock_pallas.1} parent=0 // pred_region
    _
  $region5: #{resblock_pallas.1} parent=0 // pred_fallthru
    _
  // Predicated region
  $region6: #{resblock_pallas.1} parent=0 // pred_check
    _
  $region7: #{resblock_pallas.1} parent=0 // pred_check_branch
    %20 = sbr.rel (0) target = $region9
  $region8: #{resblock_pallas.1} parent=0 // pred_region
    _
  $region9: #{resblock_pallas.1} parent=0 // pred_fallthru
    _
  // Predicated region
  $region10: #{resblock_pallas.1} parent=0 // pred_check
    _
  $region11: #{resblock_pallas.1} parent=0 // pred_check_branch
    %22 = sbr.rel (0) target = $region13
  $region12: #{resblock_pallas.1} parent=0 // pred_region
    _
  $region13: #{resblock_pallas.1} parent=0 // pred_fallthru
    _
  // Predicated region
  $region14: #{resblock_pallas.1} parent=0 // pred_check
    _
  $region15: #{resblock_pallas.1} parent=0 // pred_check_branch
    %24 = sbr.rel (0) target = $region17
  $region16: #{resblock_pallas.1} parent=0 // pred_region
    _
  $region17: #{resblock_pallas.1} parent=0 // pred_fallthru
    _
  // Predicated region
  $region18: #{resblock_pallas.1} parent=0 // pred_check
    _
  $region19: #{resblock_pallas.1} parent=0 // pred_check_branch
    %26 = sbr.rel (0) target = $region21
  $region20: #{resblock_pallas.1} parent=0 // pred_region
    _
  $region21: #{resblock_pallas.1} parent=0 // pred_fallthru
    _
  // Predicated region
  $region22: #{resblock_pallas.1} parent=0 // pred_check
    _
  $region23: #{resblock_pallas.1} parent=0 // pred_check_branch
    %28 = sbr.rel (0) target = $region25
  $region24: #{resblock_pallas.1} parent=0 // pred_region
    _
  $region25: #{resblock_pallas.1} parent=0 // pred_fallthru
    _
  // Predicated region
  $region26: #{resblock_pallas.1} parent=0 // pred_check
    _
  $region27: #{resblock_pallas.1} parent=0 // pred_check_branch
    %30 = sbr.rel (0) target = $region29
  $region28: #{resblock_pallas.1} parent=0 // pred_region
    _
  $region29: #{resblock_pallas.1} parent=0 // pred_fallthru
    _
  // Predicated region
  $region30: #{resblock_pallas.1} parent=0 // pred_check
    _
  $region31: #{resblock_pallas.1} parent=0 // pred_check_branch
    %32 = sbr.rel (0) target = $region33
  $region32: #{resblock_pallas.1} parent=0 // pred_region
    _
  $region33: #{resblock_pallas.1} parent=0 // pred_fallthru
    _
  // Predicated region
  $region34: #{resblock_pallas.1} parent=0 // pred_check
    _
  $region35: #{resblock_pallas.1} parent=0 // pred_check_branch
    %34 = sbr.rel (0) target = $region37
  $region36: #{resblock_pallas.1} parent=0 // pred_region
    _
  $region37: #{resblock_pallas.1} parent=0 // pred_fallthru
    _
  // Predicated region
  $region38: #{resblock_pallas.1} parent=0 // pred_check
    _
  $region39: #{resblock_pallas.1} parent=0 // pred_check_branch
    %36 = sbr.rel (0) target = $region41
  $region40: #{resblock_pallas.1} parent=0 // pred_region
    _
  $region41: #{resblock_pallas.1} parent=0 // pred_fallthru
    _
  // Predicated region
  $region42: #{resblock_pallas.1} parent=0 // pred_check
    _
  $region43: #{resblock_pallas.1} parent=0 // pred_check_branch
    %38 = sbr.rel (0) target = $region45
  $region44: #{resblock_pallas.1} parent=0 // pred_region
    _
  $region45: #{resblock_pallas.1} parent=0 // pred_fallthru
    _
  // Predicated region
  $region46: #{resblock_pallas.1} parent=0 // pred_check
    _
  $region47: #{resblock_pallas.1} parent=0 // pred_check_branch
    %40 = sbr.rel (0) target = $region49
  $region48: #{resblock_pallas.1} parent=0 // pred_region
    _
  $region49: #{resblock_pallas.1} parent=0 // pred_fallthru
    _
  %v42 = vlaneseq
  %v43 = vshrl.u32 %v42, 7
  %v44 = vadd.s32 %v43, 8
  %v45 = vadd.s32 %v43, 16
  %v46 = vadd.s32 %v43, 24
  %v47 = vadd.s32 %v43, 32
  %v48 = vadd.s32 %v43, 40
  %v49 = vadd.s32 %v43, 48
  %v50 = vadd.s32 %v43, 56
  %v51 = vadd.s32 %v43, 64
  %v52 = vadd.s32 %v43, 72
  %v53 = vadd.s32 %v43, 80
  %v54 = vadd.s32 %v43, 88
  %v55 = vadd.s32 %v43, 96
  %v56 = vadd.s32 %v43, 104
  %v57 = vadd.s32 %v43, 112
  %v58 = vadd.s32 %v43, 120
  %v59 = vadd.s32 %v43, 128
  %v60 = vadd.s32 %v43, 136
  %v61 = vadd.s32 %v43, 144
  %v62 = vadd.s32 %v43, 152
  %v63 = vadd.s32 %v43, 160
  %v64 = vadd.s32 %v43, 168
  %v65 = vadd.s32 %v43, 176
  %v66 = vadd.s32 %v43, 184
  %v67 = vadd.s32 %v43, 192
  %v68 = vadd.s32 %v43, 200
  %v69 = vadd.s32 %v43, 208
  %v70 = vadd.s32 %v43, 216
  %v71 = vadd.s32 %v43, 224
  %v72 = vadd.s32 %v43, 232
  %v73 = vadd.s32 %v43, 240
  %v74 = vadd.s32 %v43, 248
  %vm75 = vcmp.lt.s32.totalorder %v43, 0
  %v76 = vsub.s32 0, %v43
  %v77 = vsel %vm75, %v76, %v43
  %v78 = vshrl.u32 %v77, 4
  %v79 = vand.u32 %v77, 15
  %v80 = vsub.s32 0, %v79
  %v81 = vsel %vm75, %v80, %v79
  %vm82 = vcmp.lt.s32.totalorder %v44, 0
  %v83 = vsub.s32 0, %v44
  %v84 = vsel %vm82, %v83, %v44
  %v85 = vshrl.u32 %v84, 4
  %v86 = vand.u32 %v84, 15
  %v87 = vsub.s32 0, %v86
  %v88 = vsel %vm82, %v87, %v86
  %vm89 = vcmp.lt.s32.totalorder %v45, 0
  %v90 = vsub.s32 0, %v45
  %v91 = vsel %vm89, %v90, %v45
  %v92 = vshrl.u32 %v91, 4
  %v93 = vand.u32 %v91, 15
  %v94 = vsub.s32 0, %v93
  %v95 = vsel %vm89, %v94, %v93
  %vm96 = vcmp.lt.s32.totalorder %v46, 0
  %v97 = vsub.s32 0, %v46
  %v98 = vsel %vm96, %v97, %v46
  %v99 = vshrl.u32 %v98, 4
  %v100 = vand.u32 %v98, 15
  %v101 = vsub.s32 0, %v100
  %v102 = vsel %vm96, %v101, %v100
  %vm103 = vcmp.lt.s32.totalorder %v47, 0
  %v104 = vsub.s32 0, %v47
  %v105 = vsel %vm103, %v104, %v47
  %v106 = vshrl.u32 %v105, 4
  %v107 = vand.u32 %v105, 15
  %v108 = vsub.s32 0, %v107
  %v109 = vsel %vm103, %v108, %v107
  %vm110 = vcmp.lt.s32.totalorder %v48, 0
  %v111 = vsub.s32 0, %v48
  %v112 = vsel %vm110, %v111, %v48
  %v113 = vshrl.u32 %v112, 4
  %v114 = vand.u32 %v112, 15
  %v115 = vsub.s32 0, %v114
  %v116 = vsel %vm110, %v115, %v114
  %vm117 = vcmp.lt.s32.totalorder %v49, 0
  %v118 = vsub.s32 0, %v49
  %v119 = vsel %vm117, %v118, %v49
  %v120 = vshrl.u32 %v119, 4
  %v121 = vand.u32 %v119, 15
  %v122 = vsub.s32 0, %v121
  %v123 = vsel %vm117, %v122, %v121
  %vm124 = vcmp.lt.s32.totalorder %v50, 0
  %v125 = vsub.s32 0, %v50
  %v126 = vsel %vm124, %v125, %v50
  %v127 = vshrl.u32 %v126, 4
  %v128 = vand.u32 %v126, 15
  %v129 = vsub.s32 0, %v128
  %v130 = vsel %vm124, %v129, %v128
  %vm131 = vcmp.lt.s32.totalorder %v51, 0
  %v132 = vsub.s32 0, %v51
  %v133 = vsel %vm131, %v132, %v51
  %v134 = vshrl.u32 %v133, 4
  %v135 = vand.u32 %v133, 15
  %v136 = vsub.s32 0, %v135
  %v137 = vsel %vm131, %v136, %v135
  %vm138 = vcmp.lt.s32.totalorder %v52, 0
  %v139 = vsub.s32 0, %v52
  %v140 = vsel %vm138, %v139, %v52
  %v141 = vshrl.u32 %v140, 4
  %v142 = vand.u32 %v140, 15
  %v143 = vsub.s32 0, %v142
  %v144 = vsel %vm138, %v143, %v142
  %vm145 = vcmp.lt.s32.totalorder %v53, 0
  %v146 = vsub.s32 0, %v53
  %v147 = vsel %vm145, %v146, %v53
  %v148 = vshrl.u32 %v147, 4
  %v149 = vand.u32 %v147, 15
  %v150 = vsub.s32 0, %v149
  %v151 = vsel %vm145, %v150, %v149
  %vm152 = vcmp.lt.s32.totalorder %v54, 0
  %v153 = vsub.s32 0, %v54
  %v154 = vsel %vm152, %v153, %v54
  %v155 = vshrl.u32 %v154, 4
  %v156 = vand.u32 %v154, 15
  %v157 = vsub.s32 0, %v156
  %v158 = vsel %vm152, %v157, %v156
  %vm159 = vcmp.lt.s32.totalorder %v55, 0
  %v160 = vsub.s32 0, %v55
  %v161 = vsel %vm159, %v160, %v55
  %v162 = vshrl.u32 %v161, 4
  %v163 = vand.u32 %v161, 15
  %v164 = vsub.s32 0, %v163
  %v165 = vsel %vm159, %v164, %v163
  %vm166 = vcmp.lt.s32.totalorder %v56, 0
  %v167 = vsub.s32 0, %v56
  %v168 = vsel %vm166, %v167, %v56
  %v169 = vshrl.u32 %v168, 4
  %v170 = vand.u32 %v168, 15
  %v171 = vsub.s32 0, %v170
  %v172 = vsel %vm166, %v171, %v170
  %vm173 = vcmp.lt.s32.totalorder %v57, 0
  %v174 = vsub.s32 0, %v57
  %v175 = vsel %vm173, %v174, %v57
  %v176 = vshrl.u32 %v175, 4
  %v177 = vand.u32 %v175, 15
  %v178 = vsub.s32 0, %v177
  %v179 = vsel %vm173, %v178, %v177
  %vm180 = vcmp.lt.s32.totalorder %v58, 0
  %v181 = vsub.s32 0, %v58
  %v182 = vsel %vm180, %v181, %v58
  %v183 = vshrl.u32 %v182, 4
  %v184 = vand.u32 %v182, 15
  %v185 = vsub.s32 0, %v184
  %v186 = vsel %vm180, %v185, %v184
  %vm187 = vcmp.lt.s32.totalorder %v59, 0
  %v188 = vsub.s32 0, %v59
  %v189 = vsel %vm187, %v188, %v59
  %v190 = vshrl.u32 %v189, 4
  %v191 = vand.u32 %v189, 15
  %v192 = vsub.s32 0, %v191
  %v193 = vsel %vm187, %v192, %v191
  %vm194 = vcmp.lt.s32.totalorder %v60, 0
  %v195 = vsub.s32 0, %v60
  %v196 = vsel %vm194, %v195, %v60
  %v197 = vshrl.u32 %v196, 4
  %v198 = vand.u32 %v196, 15
  %v199 = vsub.s32 0, %v198
  %v200 = vsel %vm194, %v199, %v198
  %vm201 = vcmp.lt.s32.totalorder %v61, 0
  %v202 = vsub.s32 0, %v61
  %v203 = vsel %vm201, %v202, %v61
  %v204 = vshrl.u32 %v203, 4
  %v205 = vand.u32 %v203, 15
  %v206 = vsub.s32 0, %v205
  %v207 = vsel %vm201, %v206, %v205
  %vm208 = vcmp.lt.s32.totalorder %v62, 0
  %v209 = vsub.s32 0, %v62
  %v210 = vsel %vm208, %v209, %v62
  %v211 = vshrl.u32 %v210, 4
  %v212 = vand.u32 %v210, 15
  %v213 = vsub.s32 0, %v212
  %v214 = vsel %vm208, %v213, %v212
  %vm215 = vcmp.lt.s32.totalorder %v63, 0
  %v216 = vsub.s32 0, %v63
  %v217 = vsel %vm215, %v216, %v63
  %v218 = vshrl.u32 %v217, 4
  %v219 = vand.u32 %v217, 15
  %v220 = vsub.s32 0, %v219
  %v221 = vsel %vm215, %v220, %v219
  %vm222 = vcmp.lt.s32.totalorder %v64, 0
  %v223 = vsub.s32 0, %v64
  %v224 = vsel %vm222, %v223, %v64
  %v225 = vshrl.u32 %v224, 4
  %v226 = vand.u32 %v224, 15
  %v227 = vsub.s32 0, %v226
  %v228 = vsel %vm222, %v227, %v226
  %vm229 = vcmp.lt.s32.totalorder %v65, 0
  %v230 = vsub.s32 0, %v65
  %v231 = vsel %vm229, %v230, %v65
  %v232 = vshrl.u32 %v231, 4
  %v233 = vand.u32 %v231, 15
  %v234 = vsub.s32 0, %v233
  %v235 = vsel %vm229, %v234, %v233
  %vm236 = vcmp.lt.s32.totalorder %v66, 0
  %v237 = vsub.s32 0, %v66
  %v238 = vsel %vm236, %v237, %v66
  %v239 = vshrl.u32 %v238, 4
  %v240 = vand.u32 %v238, 15
  %v241 = vsub.s32 0, %v240
  %v242 = vsel %vm236, %v241, %v240
  %vm243 = vcmp.lt.s32.totalorder %v67, 0
  %v244 = vsub.s32 0, %v67
  %v245 = vsel %vm243, %v244, %v67
  %v246 = vshrl.u32 %v245, 4
  %v247 = vand.u32 %v245, 15
  %v248 = vsub.s32 0, %v247
  %v249 = vsel %vm243, %v248, %v247
  %vm250 = vcmp.lt.s32.totalorder %v68, 0
  %v251 = vsub.s32 0, %v68
  %v252 = vsel %vm250, %v251, %v68
  %v253 = vshrl.u32 %v252, 4
  %v254 = vand.u32 %v252, 15
  %v255 = vsub.s32 0, %v254
  %v256 = vsel %vm250, %v255, %v254
  %vm257 = vcmp.lt.s32.totalorder %v69, 0
  %v258 = vsub.s32 0, %v69
  %v259 = vsel %vm257, %v258, %v69
  %v260 = vshrl.u32 %v259, 4
  %v261 = vand.u32 %v259, 15
  %v262 = vsub.s32 0, %v261
  %v263 = vsel %vm257, %v262, %v261
  %vm264 = vcmp.lt.s32.totalorder %v70, 0
  %v265 = vsub.s32 0, %v70
  %v266 = vsel %vm264, %v265, %v70
  %v267 = vshrl.u32 %v266, 4
  %v268 = vand.u32 %v266, 15
  %v269 = vsub.s32 0, %v268
  %v270 = vsel %vm264, %v269, %v268
  %vm271 = vcmp.lt.s32.totalorder %v71, 0
  %v272 = vsub.s32 0, %v71
  %v273 = vsel %vm271, %v272, %v71
  %v274 = vshrl.u32 %v273, 4
  %v275 = vand.u32 %v273, 15
  %v276 = vsub.s32 0, %v275
  %v277 = vsel %vm271, %v276, %v275
  %vm278 = vcmp.lt.s32.totalorder %v72, 0
  %v279 = vsub.s32 0, %v72
  %v280 = vsel %vm278, %v279, %v72
  %v281 = vshrl.u32 %v280, 4
  %v282 = vand.u32 %v280, 15
  %v283 = vsub.s32 0, %v282
  %v284 = vsel %vm278, %v283, %v282
  %vm285 = vcmp.lt.s32.totalorder %v73, 0
  %v286 = vsub.s32 0, %v73
  %v287 = vsel %vm285, %v286, %v73
  %v288 = vshrl.u32 %v287, 4
  %v289 = vand.u32 %v287, 15
  %v290 = vsub.s32 0, %v289
  %v291 = vsel %vm285, %v290, %v289
  %vm292 = vcmp.lt.s32.totalorder %v74, 0
  %v293 = vsub.s32 0, %v74
  %v294 = vsel %vm292, %v293, %v74
  %v295 = vshrl.u32 %v294, 4
  %v296 = vand.u32 %v294, 15
  %v297 = vsub.s32 0, %v296
  %v298 = vsel %vm292, %v297, %v296
  %vm299 = vcmp.ne.s32.totalorder %v81, 0
  %vm300 = vcmp.ne.s32.totalorder %v88, 0
  %vm301 = vcmp.ne.s32.totalorder %v95, 0
  %vm302 = vcmp.ne.s32.totalorder %v102, 0
  %vm303 = vcmp.ne.s32.totalorder %v109, 0
  %vm304 = vcmp.ne.s32.totalorder %v116, 0
  %vm305 = vcmp.ne.s32.totalorder %v123, 0
  %vm306 = vcmp.ne.s32.totalorder %v130, 0
  %vm307 = vcmp.ne.s32.totalorder %v137, 0
  %vm308 = vcmp.ne.s32.totalorder %v144, 0
  %vm309 = vcmp.ne.s32.totalorder %v151, 0
  %vm310 = vcmp.ne.s32.totalorder %v158, 0
  %vm311 = vcmp.ne.s32.totalorder %v165, 0
  %vm312 = vcmp.ne.s32.totalorder %v172, 0
  %vm313 = vcmp.ne.s32.totalorder %v179, 0
  %vm314 = vcmp.ne.s32.totalorder %v186, 0
  %vm315 = vcmp.ne.s32.totalorder %v193, 0
  %vm316 = vcmp.ne.s32.totalorder %v200, 0
  %vm317 = vcmp.ne.s32.totalorder %v207, 0
  %vm318 = vcmp.ne.s32.totalorder %v214, 0
  %vm319 = vcmp.ne.s32.totalorder %v221, 0
  %vm320 = vcmp.ne.s32.totalorder %v228, 0
  %vm321 = vcmp.ne.s32.totalorder %v235, 0
  %vm322 = vcmp.ne.s32.totalorder %v242, 0
  %vm323 = vcmp.ne.s32.totalorder %v249, 0
  %vm324 = vcmp.ne.s32.totalorder %v256, 0
  %vm325 = vcmp.ne.s32.totalorder %v263, 0
  %vm326 = vcmp.ne.s32.totalorder %v270, 0
  %vm327 = vcmp.ne.s32.totalorder %v277, 0
  %vm328 = vcmp.ne.s32.totalorder %v284, 0
  %vm329 = vcmp.ne.s32.totalorder %v291, 0
  %vm330 = vcmp.ne.s32.totalorder %v298, 0
  %vm331 = vcmp.lt.s32.totalorder %v81, 0
  %vm332 = vcmp.lt.s32.totalorder %v88, 0
  %vm333 = vcmp.lt.s32.totalorder %v95, 0
  %vm334 = vcmp.lt.s32.totalorder %v102, 0
  %vm335 = vcmp.lt.s32.totalorder %v109, 0
  %vm336 = vcmp.lt.s32.totalorder %v116, 0
  %vm337 = vcmp.lt.s32.totalorder %v123, 0
  %vm338 = vcmp.lt.s32.totalorder %v130, 0
  %vm339 = vcmp.lt.s32.totalorder %v137, 0
  %vm340 = vcmp.lt.s32.totalorder %v144, 0
  %vm341 = vcmp.lt.s32.totalorder %v151, 0
  %vm342 = vcmp.lt.s32.totalorder %v158, 0
  %vm343 = vcmp.lt.s32.totalorder %v165, 0
  %vm344 = vcmp.lt.s32.totalorder %v172, 0
  %vm345 = vcmp.lt.s32.totalorder %v179, 0
  %vm346 = vcmp.lt.s32.totalorder %v186, 0
  %vm347 = vcmp.lt.s32.totalorder %v193, 0
  %vm348 = vcmp.lt.s32.totalorder %v200, 0
  %vm349 = vcmp.lt.s32.totalorder %v207, 0
  %vm350 = vcmp.lt.s32.totalorder %v214, 0
  %vm351 = vcmp.lt.s32.totalorder %v221, 0
  %vm352 = vcmp.lt.s32.totalorder %v228, 0
  %vm353 = vcmp.lt.s32.totalorder %v235, 0
  %vm354 = vcmp.lt.s32.totalorder %v242, 0
  %vm355 = vcmp.lt.s32.totalorder %v249, 0
  %vm356 = vcmp.lt.s32.totalorder %v256, 0
  %vm357 = vcmp.lt.s32.totalorder %v263, 0
  %vm358 = vcmp.lt.s32.totalorder %v270, 0
  %vm359 = vcmp.lt.s32.totalorder %v277, 0
  %vm360 = vcmp.lt.s32.totalorder %v284, 0
  %vm361 = vcmp.lt.s32.totalorder %v291, 0
  %vm362 = vcmp.lt.s32.totalorder %v298, 0
  %vm363 = vmand %vm331, %vm299
  %vm364 = vmand %vm332, %vm300
  %vm365 = vmand %vm333, %vm301
  %vm366 = vmand %vm334, %vm302
  %vm367 = vmand %vm335, %vm303
  %vm368 = vmand %vm336, %vm304
  %vm369 = vmand %vm337, %vm305
  %vm370 = vmand %vm338, %vm306
  %vm371 = vmand %vm339, %vm307
  %vm372 = vmand %vm340, %vm308
  %vm373 = vmand %vm341, %vm309
  %vm374 = vmand %vm342, %vm310
  %vm375 = vmand %vm343, %vm311
  %vm376 = vmand %vm344, %vm312
  %vm377 = vmand %vm345, %vm313
  %vm378 = vmand %vm346, %vm314
  %vm379 = vmand %vm347, %vm315
  %vm380 = vmand %vm348, %vm316
  %vm381 = vmand %vm349, %vm317
  %vm382 = vmand %vm350, %vm318
  %vm383 = vmand %vm351, %vm319
  %vm384 = vmand %vm352, %vm320
  %vm385 = vmand %vm353, %vm321
  %vm386 = vmand %vm354, %vm322
  %vm387 = vmand %vm355, %vm323
  %vm388 = vmand %vm356, %vm324
  %vm389 = vmand %vm357, %vm325
  %vm390 = vmand %vm358, %vm326
  %vm391 = vmand %vm359, %vm327
  %vm392 = vmand %vm360, %vm328
  %vm393 = vmand %vm361, %vm329
  %vm394 = vmand %vm362, %vm330
  %v395 = vadd.s32 %v81, 16
  %v396 = vadd.s32 %v88, 16
  %v397 = vadd.s32 %v95, 16
  %v398 = vadd.s32 %v102, 16
  %v399 = vadd.s32 %v109, 16
  %v400 = vadd.s32 %v116, 16
  %v401 = vadd.s32 %v123, 16
  %v402 = vadd.s32 %v130, 16
  %v403 = vadd.s32 %v137, 16
  %v404 = vadd.s32 %v144, 16
  %v405 = vadd.s32 %v151, 16
  %v406 = vadd.s32 %v158, 16
  %v407 = vadd.s32 %v165, 16
  %v408 = vadd.s32 %v172, 16
  %v409 = vadd.s32 %v179, 16
  %v410 = vadd.s32 %v186, 16
  %v411 = vadd.s32 %v193, 16
  %v412 = vadd.s32 %v200, 16
  %v413 = vadd.s32 %v207, 16
  %v414 = vadd.s32 %v214, 16
  %v415 = vadd.s32 %v221, 16
  %v416 = vadd.s32 %v228, 16
  %v417 = vadd.s32 %v235, 16
  %v418 = vadd.s32 %v242, 16
  %v419 = vadd.s32 %v249, 16
  %v420 = vadd.s32 %v256, 16
  %v421 = vadd.s32 %v263, 16
  %v422 = vadd.s32 %v270, 16
  %v423 = vadd.s32 %v277, 16
  %v424 = vadd.s32 %v284, 16
  %v425 = vadd.s32 %v291, 16
  %v426 = vadd.s32 %v298, 16
  %v427 = vsel %vm363, %v395, %v81
  %v428 = vsel %vm364, %v396, %v88
  %v429 = vsel %vm365, %v397, %v95
  %v430 = vsel %vm366, %v398, %v102
  %v431 = vsel %vm367, %v399, %v109
  %v432 = vsel %vm368, %v400, %v116
  %v433 = vsel %vm369, %v401, %v123
  %v434 = vsel %vm370, %v402, %v130
  %v435 = vsel %vm371, %v403, %v137
  %v436 = vsel %vm372, %v404, %v144
  %v437 = vsel %vm373, %v405, %v151
  %v438 = vsel %vm374, %v406, %v158
  %v439 = vsel %vm375, %v407, %v165
  %v440 = vsel %vm376, %v408, %v172
  %v441 = vsel %vm377, %v409, %v179
  %v442 = vsel %vm378, %v410, %v186
  %v443 = vsel %vm379, %v411, %v193
  %v444 = vsel %vm380, %v412, %v200
  %v445 = vsel %vm381, %v413, %v207
  %v446 = vsel %vm382, %v414, %v214
  %v447 = vsel %vm383, %v415, %v221
  %v448 = vsel %vm384, %v416, %v228
  %v449 = vsel %vm385, %v417, %v235
  %v450 = vsel %vm386, %v418, %v242
  %v451 = vsel %vm387, %v419, %v249
  %v452 = vsel %vm388, %v420, %v256
  %v453 = vsel %vm389, %v421, %v263
  %v454 = vsel %vm390, %v422, %v270
  %v455 = vsel %vm391, %v423, %v277
  %v456 = vsel %vm392, %v424, %v284
  %v457 = vsel %vm393, %v425, %v291
  %v458 = vsel %vm394, %v426, %v298
  %vm459 = vcmp.ge.s32.totalorder %v427, 1
  %vm460 = vcmp.ge.s32.totalorder %v428, 1
  %vm461 = vcmp.ge.s32.totalorder %v429, 1
  %vm462 = vcmp.ge.s32.totalorder %v430, 1
  %vm463 = vcmp.ge.s32.totalorder %v431, 1
  %vm464 = vcmp.ge.s32.totalorder %v432, 1
  %vm465 = vcmp.ge.s32.totalorder %v433, 1
  %vm466 = vcmp.ge.s32.totalorder %v434, 1
  %vm467 = vcmp.ge.s32.totalorder %v435, 1
  %vm468 = vcmp.ge.s32.totalorder %v436, 1
  %vm469 = vcmp.ge.s32.totalorder %v437, 1
  %vm470 = vcmp.ge.s32.totalorder %v438, 1
  %vm471 = vcmp.ge.s32.totalorder %v439, 1
  %vm472 = vcmp.ge.s32.totalorder %v440, 1
  %vm473 = vcmp.ge.s32.totalorder %v441, 1
  %vm474 = vcmp.ge.s32.totalorder %v442, 1
  %vm475 = vcmp.ge.s32.totalorder %v443, 1
  %vm476 = vcmp.ge.s32.totalorder %v444, 1
  %vm477 = vcmp.ge.s32.totalorder %v445, 1
  %vm478 = vcmp.ge.s32.totalorder %v446, 1
  %vm479 = vcmp.ge.s32.totalorder %v447, 1
  %vm480 = vcmp.ge.s32.totalorder %v448, 1
  %vm481 = vcmp.ge.s32.totalorder %v449, 1
  %vm482 = vcmp.ge.s32.totalorder %v450, 1
  %vm483 = vcmp.ge.s32.totalorder %v451, 1
  %vm484 = vcmp.ge.s32.totalorder %v452, 1
  %vm485 = vcmp.ge.s32.totalorder %v453, 1
  %vm486 = vcmp.ge.s32.totalorder %v454, 1
  %vm487 = vcmp.ge.s32.totalorder %v455, 1
  %vm488 = vcmp.ge.s32.totalorder %v456, 1
  %vm489 = vcmp.ge.s32.totalorder %v457, 1
  %vm490 = vcmp.ge.s32.totalorder %v458, 1
  %vm491 = vcmp.le.s32.totalorder %v427, 14
  %vm492 = vcmp.le.s32.totalorder %v428, 14
  %vm493 = vcmp.le.s32.totalorder %v429, 14
  %vm494 = vcmp.le.s32.totalorder %v430, 14
  %vm495 = vcmp.le.s32.totalorder %v431, 14
  %vm496 = vcmp.le.s32.totalorder %v432, 14
  %vm497 = vcmp.le.s32.totalorder %v433, 14
  %vm498 = vcmp.le.s32.totalorder %v434, 14
  %vm499 = vcmp.le.s32.totalorder %v435, 14
  %vm500 = vcmp.le.s32.totalorder %v436, 14
  %vm501 = vcmp.le.s32.totalorder %v437, 14
  %vm502 = vcmp.le.s32.totalorder %v438, 14
  %vm503 = vcmp.le.s32.totalorder %v439, 14
  %vm504 = vcmp.le.s32.totalorder %v440, 14
  %vm505 = vcmp.le.s32.totalorder %v441, 14
  %vm506 = vcmp.le.s32.totalorder %v442, 14
  %vm507 = vcmp.le.s32.totalorder %v443, 14
  %vm508 = vcmp.le.s32.totalorder %v444, 14
  %vm509 = vcmp.le.s32.totalorder %v445, 14
  %vm510 = vcmp.le.s32.totalorder %v446, 14
  %vm511 = vcmp.le.s32.totalorder %v447, 14
  %vm512 = vcmp.le.s32.totalorder %v448, 14
  %vm513 = vcmp.le.s32.totalorder %v449, 14
  %vm514 = vcmp.le.s32.totalorder %v450, 14
  %vm515 = vcmp.le.s32.totalorder %v451, 14
  %vm516 = vcmp.le.s32.totalorder %v452, 14
  %vm517 = vcmp.le.s32.totalorder %v453, 14
  %vm518 = vcmp.le.s32.totalorder %v454, 14
  %vm519 = vcmp.le.s32.totalorder %v455, 14
  %vm520 = vcmp.le.s32.totalorder %v456, 14
  %vm521 = vcmp.le.s32.totalorder %v457, 14
  %vm522 = vcmp.le.s32.totalorder %v458, 14
  %v523 = vlaneseq
  %v524 = vand.u32 %v523, 127
  %vm525 = vcmp.lt.s32.totalorder %v524, 0
  %v526 = vsub.s32 0, %v524
  %v527 = vsel %vm525, %v526, %v524
  %v528 = vshrl.u32 %v527, 1
  %v529 = vand.u32 %v527, 1
  %v530 = vsub.s32 0, %v529
  %v531 = vsel %vm525, %v530, %v529
  %vm532 = vcmp.ne.s32.totalorder %v531, 0
  %vm533 = vcmp.lt.s32.totalorder %v531, 0
  %vm534 = vmand %vm533, %vm532
  %v535 = vadd.s32 %v531, 2
  %v536 = vsel %vm534, %v535, %v531
  %vm537 = vcmp.eq.s32.totalorder %v536, 0
  %v538 = vld [vmem:[%s0] sm:$0xff]
  %v539 = vld [vmem:[%s0 + $0x8] sm:$0xff]
  %v540 = vld [vmem:[%s0 + $0x10] sm:$0xff]
  %v541 = vld [vmem:[%s0 + $0x18] sm:$0xff]
  %v542 = vld [vmem:[%s0 + $0x20] sm:$0xff]
  %v543 = vld [vmem:[%s0 + $0x28] sm:$0xff]
  %v544 = vld [vmem:[%s0 + $0x30] sm:$0xff]
  %v545 = vld [vmem:[%s0 + $0x38] sm:$0xff]
  %v546 = vld [vmem:[%s0 + $0x40] sm:$0xff]
  %v547 = vld [vmem:[%s0 + $0x48] sm:$0xff]
  %v548 = vld [vmem:[%s0 + $0x50] sm:$0xff]
  %v549 = vld [vmem:[%s0 + $0x58] sm:$0xff]
  %v550 = vld [vmem:[%s0 + $0x60] sm:$0xff]
  %v551 = vld [vmem:[%s0 + $0x68] sm:$0xff]
  %v552 = vld [vmem:[%s0 + $0x70] sm:$0xff]
  %v553 = vld [vmem:[%s0 + $0x78] sm:$0xff]
  %v554 = vld [vmem:[%s0 + $0x80] sm:$0xff]
  %v555 = vld [vmem:[%s0 + $0x88] sm:$0xff]
  %v556 = vld [vmem:[%s0 + $0x90] sm:$0xff]
  %v557 = vld [vmem:[%s0 + $0x98] sm:$0xff]
  %v558 = vld [vmem:[%s0 + $0xa0] sm:$0xff]
  %v559 = vld [vmem:[%s0 + $0xa8] sm:$0xff]
  %v560 = vld [vmem:[%s0 + $0xb0] sm:$0xff]
  %v561 = vld [vmem:[%s0 + $0xb8] sm:$0xff]
  %v562 = vld [vmem:[%s0 + $0xc0] sm:$0xff]
  %v563 = vld [vmem:[%s0 + $0xc8] sm:$0xff]
  %v564 = vld [vmem:[%s0 + $0xd0] sm:$0xff]
  %v565 = vld [vmem:[%s0 + $0xd8] sm:$0xff]
  %v566 = vld [vmem:[%s0 + $0xe0] sm:$0xff]
  %v567 = vld [vmem:[%s0 + $0xe8] sm:$0xff]
  %v568 = vld [vmem:[%s0 + $0xf0] sm:$0xff]
  %v569 = vld [vmem:[%s0 + $0xf8] sm:$0xff]
  %v570 = vld [vmem:[%s2] sm:$0x1]
  %v571 = vld [vmem:[%s3] sm:$0x1]
  %v572 = vadd.f32 %v538, %v539
  %v573 = vadd.f32 %v572, %v540
  %v574 = vadd.f32 %v573, %v541
  %v575 = vadd.f32 %v574, %v542
  %v576 = vadd.f32 %v575, %v543
  %v577 = vadd.f32 %v576, %v544
  %v578 = vadd.f32 %v577, %v545
  %v579 = vadd.f32 %v578, %v546
  %v580 = vadd.f32 %v579, %v547
  %v581 = vadd.f32 %v580, %v548
  %v582 = vadd.f32 %v581, %v549
  %v583 = vadd.f32 %v582, %v550
  %v584 = vadd.f32 %v583, %v551
  %v585 = vadd.f32 %v584, %v552
  %v586 = vadd.f32 %v585, %v553
  %v587 = vadd.f32 %v586, %v554
  %v588 = vadd.f32 %v587, %v555
  %v589 = vadd.f32 %v588, %v556
  %v590 = vadd.f32 %v589, %v557
  %v591 = vadd.f32 %v590, %v558
  %v592 = vadd.f32 %v591, %v559
  %v593 = vadd.f32 %v592, %v560
  %v594 = vadd.f32 %v593, %v561
  %v595 = vadd.f32 %v594, %v562
  %v596 = vadd.f32 %v595, %v563
  %v597 = vadd.f32 %v596, %v564
  %v598 = vadd.f32 %v597, %v565
  %v599 = vadd.f32 %v598, %v566
  %v600 = vadd.f32 %v599, %v567
  %v601 = vadd.f32 %v600, %v568
  %v602 = vadd.f32 %v601, %v569
  %v603 = vrot.slane %v602, 4
  %v604 = vadd.f32 %v602, %v603
  %v605 = vrot.slane %v604, 2
  %v606 = vadd.f32 %v604, %v605
  %v607 = vrot.slane %v606, 1
  %v608 = vadd.f32 %v606, %v607
  %v609 = vmul.f32 %v538, %v538
  %v610 = vmul.f32 %v539, %v539
  %v611 = vmul.f32 %v540, %v540
  %v612 = vmul.f32 %v541, %v541
  %v613 = vmul.f32 %v542, %v542
  %v614 = vmul.f32 %v543, %v543
  %v615 = vmul.f32 %v544, %v544
  %v616 = vmul.f32 %v545, %v545
  %v617 = vmul.f32 %v546, %v546
  %v618 = vmul.f32 %v547, %v547
  %v619 = vmul.f32 %v548, %v548
  %v620 = vmul.f32 %v549, %v549
  %v621 = vmul.f32 %v550, %v550
  %v622 = vmul.f32 %v551, %v551
  %v623 = vmul.f32 %v552, %v552
  %v624 = vmul.f32 %v553, %v553
  %v625 = vmul.f32 %v554, %v554
  %v626 = vmul.f32 %v555, %v555
  %v627 = vmul.f32 %v556, %v556
  %v628 = vmul.f32 %v557, %v557
  %v629 = vmul.f32 %v558, %v558
  %v630 = vmul.f32 %v559, %v559
  %v631 = vmul.f32 %v560, %v560
  %v632 = vmul.f32 %v561, %v561
  %v633 = vmul.f32 %v562, %v562
  %v634 = vmul.f32 %v563, %v563
  %v635 = vmul.f32 %v564, %v564
  %v636 = vmul.f32 %v565, %v565
  %v637 = vmul.f32 %v566, %v566
  %v638 = vmul.f32 %v567, %v567
  %v639 = vmul.f32 %v568, %v568
  %v640 = vmul.f32 %v569, %v569
  %v641 = vadd.f32 %v609, %v610
  %v642 = vadd.f32 %v641, %v611
  %v643 = vadd.f32 %v642, %v612
  %v644 = vadd.f32 %v643, %v613
  %v645 = vadd.f32 %v644, %v614
  %v646 = vadd.f32 %v645, %v615
  %v647 = vadd.f32 %v646, %v616
  %v648 = vadd.f32 %v647, %v617
  %v649 = vadd.f32 %v648, %v618
  %v650 = vadd.f32 %v649, %v619
  %v651 = vadd.f32 %v650, %v620
  %v652 = vadd.f32 %v651, %v621
  %v653 = vadd.f32 %v652, %v622
  %v654 = vadd.f32 %v653, %v623
  %v655 = vadd.f32 %v654, %v624
  %v656 = vadd.f32 %v655, %v625
  %v657 = vadd.f32 %v656, %v626
  %v658 = vadd.f32 %v657, %v627
  %v659 = vadd.f32 %v658, %v628
  %v660 = vadd.f32 %v659, %v629
  %v661 = vadd.f32 %v660, %v630
  %v662 = vadd.f32 %v661, %v631
  %v663 = vadd.f32 %v662, %v632
  %v664 = vadd.f32 %v663, %v633
  %v665 = vadd.f32 %v664, %v634
  %v666 = vadd.f32 %v665, %v635
  %v667 = vadd.f32 %v666, %v636
  %v668 = vadd.f32 %v667, %v637
  %v669 = vadd.f32 %v668, %v638
  %v670 = vadd.f32 %v669, %v639
  %v671 = vadd.f32 %v670, %v640
  %v672 = vrot.slane %v671, 4
  %v673 = vadd.f32 %v671, %v672
  %v674 = vrot.slane %v673, 2
  %v675 = vadd.f32 %v673, %v674
  %v676 = vrot.slane %v675, 1
  %v677 = vadd.f32 %v675, %v676
  %vm678 = vcmask 1040384
  %v679 = vsel %vm678, %v608, %v677
  %680 = vrot.lane.b32.xlu0 %v679, 127
  %v681 = vpop.permute.xlu0 %680
  %682 = vrot.lane.b32.xlu0 %v679, 1
  %v683 = vpop.permute.xlu0 %682
  %v684 = vsel %vm537, 1, 0
  %vm685 = vcmp.eq.s32.totalorder %v684, 1
  %v686 = vsel %vm685, %v681, %v683
  %v687 = vadd.f32 %v679, %v686
  %v688 = vmul.f32 %v687, 0.001953125
  %v689 = vmul.f32 %v688, %v688
  %v691 = vrot.slane %v689, 7
  %v693 = vsub.f32 %v688, %v691
  %v694 = vadd.f32 %v693, 1e-05
  %v695 = vrsqrt.pop %v694
  %v696 = vlaneseq
  %v697 = vshrl.u32 %v696, 7
  %v698 = vsub.s32 0, %v697
  %v699 = vrot.slane %v688, %v698
  %v700 = vsub.f32 %v538, %v699
  %v701 = vsub.f32 %v539, %v699
  %v702 = vsub.f32 %v540, %v699
  %v703 = vsub.f32 %v541, %v699
  %v704 = vsub.f32 %v542, %v699
  %v705 = vsub.f32 %v543, %v699
  %v706 = vsub.f32 %v544, %v699
  %v707 = vsub.f32 %v545, %v699
  %v708 = vsub.f32 %v546, %v699
  %v709 = vsub.f32 %v547, %v699
  %v710 = vsub.f32 %v548, %v699
  %v711 = vsub.f32 %v549, %v699
  %v712 = vsub.f32 %v550, %v699
  %v713 = vsub.f32 %v551, %v699
  %v714 = vsub.f32 %v552, %v699
  %v715 = vsub.f32 %v553, %v699
  %v716 = vsub.f32 %v554, %v699
  %v717 = vsub.f32 %v555, %v699
  %v718 = vsub.f32 %v556, %v699
  %v719 = vsub.f32 %v557, %v699
  %v720 = vsub.f32 %v558, %v699
  %v721 = vsub.f32 %v559, %v699
  %v722 = vsub.f32 %v560, %v699
  %v723 = vsub.f32 %v561, %v699
  %v724 = vsub.f32 %v562, %v699
  %v725 = vsub.f32 %v563, %v699
  %v726 = vsub.f32 %v564, %v699
  %v727 = vsub.f32 %v565, %v699
  %v728 = vsub.f32 %v566, %v699
  %v729 = vsub.f32 %v567, %v699
  %v730 = vsub.f32 %v568, %v699
  %v731 = vsub.f32 %v569, %v699
  %v733 = vlaneseq
  %v734 = vshrl.u32 %v733, 7
  %v735 = vsub.s32 0, %v734
  %v736 = vrot.slane %v570, %v735
  %v738 = vmul.f32 %v695, %v736
  %v739 = vlaneseq
  %v740 = vshrl.u32 %v739, 7
  %v741 = vsub.s32 1, %v740
  %v742 = vrot.slane %v738, %v741
  %v743 = vmul.f32 %v700, %v742
  %v744 = vmul.f32 %v701, %v742
  %v745 = vmul.f32 %v702, %v742
  %v746 = vmul.f32 %v703, %v742
  %v747 = vmul.f32 %v704, %v742
  %v748 = vmul.f32 %v705, %v742
  %v749 = vmul.f32 %v706, %v742
  %v750 = vmul.f32 %v707, %v742
  %v751 = vmul.f32 %v708, %v742
  %v752 = vmul.f32 %v709, %v742
  %v753 = vmul.f32 %v710, %v742
  %v754 = vmul.f32 %v711, %v742
  %v755 = vmul.f32 %v712, %v742
  %v756 = vmul.f32 %v713, %v742
  %v757 = vmul.f32 %v714, %v742
  %v758 = vmul.f32 %v715, %v742
  %v759 = vmul.f32 %v716, %v742
  %v760 = vmul.f32 %v717, %v742
  %v761 = vmul.f32 %v718, %v742
  %v762 = vmul.f32 %v719, %v742
  %v763 = vmul.f32 %v720, %v742
  %v764 = vmul.f32 %v721, %v742
  %v765 = vmul.f32 %v722, %v742
  %v766 = vmul.f32 %v723, %v742
  %v767 = vmul.f32 %v724, %v742
  %v768 = vmul.f32 %v725, %v742
  %v769 = vmul.f32 %v726, %v742
  %v770 = vmul.f32 %v727, %v742
  %v771 = vmul.f32 %v728, %v742
  %v772 = vmul.f32 %v729, %v742
  %v773 = vmul.f32 %v730, %v742
  %v774 = vmul.f32 %v731, %v742
  %v776 = vlaneseq
  %v777 = vshrl.u32 %v776, 7
  %v778 = vsub.s32 0, %v777
  %v779 = vrot.slane %v571, %v778
  %v781 = vadd.f32 %v743, %v779
  %v782 = vadd.f32 %v744, %v779
  %v783 = vadd.f32 %v745, %v779
  %v784 = vadd.f32 %v746, %v779
  %v785 = vadd.f32 %v747, %v779
  %v786 = vadd.f32 %v748, %v779
  %v787 = vadd.f32 %v749, %v779
  %v788 = vadd.f32 %v750, %v779
  %v789 = vadd.f32 %v751, %v779
  %v790 = vadd.f32 %v752, %v779
  %v791 = vadd.f32 %v753, %v779
  %v792 = vadd.f32 %v754, %v779
  %v793 = vadd.f32 %v755, %v779
  %v794 = vadd.f32 %v756, %v779
  %v795 = vadd.f32 %v757, %v779
  %v796 = vadd.f32 %v758, %v779
  %v797 = vadd.f32 %v759, %v779
  %v798 = vadd.f32 %v760, %v779
  %v799 = vadd.f32 %v761, %v779
  %v800 = vadd.f32 %v762, %v779
  %v801 = vadd.f32 %v763, %v779
  %v802 = vadd.f32 %v764, %v779
  %v803 = vadd.f32 %v765, %v779
  %v804 = vadd.f32 %v766, %v779
  %v805 = vadd.f32 %v767, %v779
  %v806 = vadd.f32 %v768, %v779
  %v807 = vadd.f32 %v769, %v779
  %v808 = vadd.f32 %v770, %v779
  %v809 = vadd.f32 %v771, %v779
  %v810 = vadd.f32 %v772, %v779
  %v811 = vadd.f32 %v773, %v779
  %v812 = vadd.f32 %v774, %v779
  %v813 = vxor.u32 %v781, 2147483648
  %v814 = vxor.u32 %v782, 2147483648
  %v815 = vxor.u32 %v783, 2147483648
  %v816 = vxor.u32 %v784, 2147483648
  %v817 = vxor.u32 %v785, 2147483648
  %v818 = vxor.u32 %v786, 2147483648
  %v819 = vxor.u32 %v787, 2147483648
  %v820 = vxor.u32 %v788, 2147483648
  %v821 = vxor.u32 %v789, 2147483648
  %v822 = vxor.u32 %v790, 2147483648
  %v823 = vxor.u32 %v791, 2147483648
  %v824 = vxor.u32 %v792, 2147483648
  %v825 = vxor.u32 %v793, 2147483648
  %v826 = vxor.u32 %v794, 2147483648
  %v827 = vxor.u32 %v795, 2147483648
  %v828 = vxor.u32 %v796, 2147483648
  %v829 = vxor.u32 %v797, 2147483648
  %v830 = vxor.u32 %v798, 2147483648
  %v831 = vxor.u32 %v799, 2147483648
  %v832 = vxor.u32 %v800, 2147483648
  %v833 = vxor.u32 %v801, 2147483648
  %v834 = vxor.u32 %v802, 2147483648
  %v835 = vxor.u32 %v803, 2147483648
  %v836 = vxor.u32 %v804, 2147483648
  %v837 = vxor.u32 %v805, 2147483648
  %v838 = vxor.u32 %v806, 2147483648
  %v839 = vxor.u32 %v807, 2147483648
  %v840 = vxor.u32 %v808, 2147483648
  %v841 = vxor.u32 %v809, 2147483648
  %v842 = vxor.u32 %v810, 2147483648
  %v843 = vxor.u32 %v811, 2147483648
  %v844 = vxor.u32 %v812, 2147483648
  %v845 = vmul.f32 %v813, 1.442695
  %v846 = vpow.pop %v845
  %v847 = vmul.f32 %v814, 1.442695
  %v848 = vpow.pop %v847
  %v849 = vmul.f32 %v815, 1.442695
  %v850 = vpow.pop %v849
  %v851 = vmul.f32 %v816, 1.442695
  %v852 = vpow.pop %v851
  %v853 = vmul.f32 %v817, 1.442695
  %v854 = vpow.pop %v853
  %v855 = vmul.f32 %v818, 1.442695
  %v856 = vpow.pop %v855
  %v857 = vmul.f32 %v819, 1.442695
  %v858 = vpow.pop %v857
  %v859 = vmul.f32 %v820, 1.442695
  %v860 = vpow.pop %v859
  %v861 = vmul.f32 %v821, 1.442695
  %v862 = vpow.pop %v861
  %v863 = vmul.f32 %v822, 1.442695
  %v864 = vpow.pop %v863
  %v865 = vmul.f32 %v823, 1.442695
  %v866 = vpow.pop %v865
  %v867 = vmul.f32 %v824, 1.442695
  %v868 = vpow.pop %v867
  %v869 = vmul.f32 %v825, 1.442695
  %v870 = vpow.pop %v869
  %v871 = vmul.f32 %v826, 1.442695
  %v872 = vpow.pop %v871
  %v873 = vmul.f32 %v827, 1.442695
  %v874 = vpow.pop %v873
  %v875 = vmul.f32 %v828, 1.442695
  %v876 = vpow.pop %v875
  %v877 = vmul.f32 %v829, 1.442695
  %v878 = vpow.pop %v877
  %v879 = vmul.f32 %v830, 1.442695
  %v880 = vpow.pop %v879
  %v881 = vmul.f32 %v831, 1.442695
  %v882 = vpow.pop %v881
  %v883 = vmul.f32 %v832, 1.442695
  %v884 = vpow.pop %v883
  %v885 = vmul.f32 %v833, 1.442695
  %v886 = vpow.pop %v885
  %v887 = vmul.f32 %v834, 1.442695
  %v888 = vpow.pop %v887
  %v889 = vmul.f32 %v835, 1.442695
  %v890 = vpow.pop %v889
  %v891 = vmul.f32 %v836, 1.442695
  %v892 = vpow.pop %v891
  %v893 = vmul.f32 %v837, 1.442695
  %v894 = vpow.pop %v893
  %v895 = vmul.f32 %v838, 1.442695
  %v896 = vpow.pop %v895
  %v897 = vmul.f32 %v839, 1.442695
  %v898 = vpow.pop %v897
  %v899 = vmul.f32 %v840, 1.442695
  %v900 = vpow.pop %v899
  %v901 = vmul.f32 %v841, 1.442695
  %v902 = vpow.pop %v901
  %v903 = vmul.f32 %v842, 1.442695
  %v904 = vpow.pop %v903
  %v905 = vmul.f32 %v843, 1.442695
  %v906 = vpow.pop %v905
  %v907 = vmul.f32 %v844, 1.442695
  %v908 = vpow.pop %v907
  %v909 = vadd.f32 %v846, 1.0
  %v910 = vadd.f32 %v848, 1.0
  %v911 = vadd.f32 %v850, 1.0
  %v912 = vadd.f32 %v852, 1.0
  %v913 = vadd.f32 %v854, 1.0
  %v914 = vadd.f32 %v856, 1.0
  %v915 = vadd.f32 %v858, 1.0
  %v916 = vadd.f32 %v860, 1.0
  %v917 = vadd.f32 %v862, 1.0
  %v918 = vadd.f32 %v864, 1.0
  %v919 = vadd.f32 %v866, 1.0
  %v920 = vadd.f32 %v868, 1.0
  %v921 = vadd.f32 %v870, 1.0
  %v922 = vadd.f32 %v872, 1.0
  %v923 = vadd.f32 %v874, 1.0
  %v924 = vadd.f32 %v876, 1.0
  %v925 = vadd.f32 %v878, 1.0
  %v926 = vadd.f32 %v880, 1.0
  %v927 = vadd.f32 %v882, 1.0
  %v928 = vadd.f32 %v884, 1.0
  %v929 = vadd.f32 %v886, 1.0
  %v930 = vadd.f32 %v888, 1.0
  %v931 = vadd.f32 %v890, 1.0
  %v932 = vadd.f32 %v892, 1.0
  %v933 = vadd.f32 %v894, 1.0
  %v934 = vadd.f32 %v896, 1.0
  %v935 = vadd.f32 %v898, 1.0
  %v936 = vadd.f32 %v900, 1.0
  %v937 = vadd.f32 %v902, 1.0
  %v938 = vadd.f32 %v904, 1.0
  %v939 = vadd.f32 %v906, 1.0
  %v940 = vadd.f32 %v908, 1.0
  %v941 = vrcp.pop %v909
  %v942 = vmul.f32 1.0, %v941
  %v943 = vrcp.pop %v910
  %v944 = vmul.f32 1.0, %v943
  %v945 = vrcp.pop %v911
  %v946 = vmul.f32 1.0, %v945
  %v947 = vrcp.pop %v912
  %v948 = vmul.f32 1.0, %v947
  %v949 = vrcp.pop %v913
  %v950 = vmul.f32 1.0, %v949
  %v951 = vrcp.pop %v914
  %v952 = vmul.f32 1.0, %v951
  %v953 = vrcp.pop %v915
  %v954 = vmul.f32 1.0, %v953
  %v955 = vrcp.pop %v916
  %v956 = vmul.f32 1.0, %v955
  %v957 = vrcp.pop %v917
  %v958 = vmul.f32 1.0, %v957
  %v959 = vrcp.pop %v918
  %v960 = vmul.f32 1.0, %v959
  %v961 = vrcp.pop %v919
  %v962 = vmul.f32 1.0, %v961
  %v963 = vrcp.pop %v920
  %v964 = vmul.f32 1.0, %v963
  %v965 = vrcp.pop %v921
  %v966 = vmul.f32 1.0, %v965
  %v967 = vrcp.pop %v922
  %v968 = vmul.f32 1.0, %v967
  %v969 = vrcp.pop %v923
  %v970 = vmul.f32 1.0, %v969
  %v971 = vrcp.pop %v924
  %v972 = vmul.f32 1.0, %v971
  %v973 = vrcp.pop %v925
  %v974 = vmul.f32 1.0, %v973
  %v975 = vrcp.pop %v926
  %v976 = vmul.f32 1.0, %v975
  %v977 = vrcp.pop %v927
  %v978 = vmul.f32 1.0, %v977
  %v979 = vrcp.pop %v928
  %v980 = vmul.f32 1.0, %v979
  %v981 = vrcp.pop %v929
  %v982 = vmul.f32 1.0, %v981
  %v983 = vrcp.pop %v930
  %v984 = vmul.f32 1.0, %v983
  %v985 = vrcp.pop %v931
  %v986 = vmul.f32 1.0, %v985
  %v987 = vrcp.pop %v932
  %v988 = vmul.f32 1.0, %v987
  %v989 = vrcp.pop %v933
  %v990 = vmul.f32 1.0, %v989
  %v991 = vrcp.pop %v934
  %v992 = vmul.f32 1.0, %v991
  %v993 = vrcp.pop %v935
  %v994 = vmul.f32 1.0, %v993
  %v995 = vrcp.pop %v936
  %v996 = vmul.f32 1.0, %v995
  %v997 = vrcp.pop %v937
  %v998 = vmul.f32 1.0, %v997
  %v999 = vrcp.pop %v938
  %v1000 = vmul.f32 1.0, %v999
  %v1001 = vrcp.pop %v939
  %v1002 = vmul.f32 1.0, %v1001
  %v1003 = vrcp.pop %v940
  %v1004 = vmul.f32 1.0, %v1003
  %v1005 = vmul.f32 %v781, %v942
  %v1006 = vmul.f32 %v782, %v944
  %v1007 = vmul.f32 %v783, %v946
  %v1008 = vmul.f32 %v784, %v948
  %v1009 = vmul.f32 %v785, %v950
  %v1010 = vmul.f32 %v786, %v952
  %v1011 = vmul.f32 %v787, %v954
  %v1012 = vmul.f32 %v788, %v956
  %v1013 = vmul.f32 %v789, %v958
  %v1014 = vmul.f32 %v790, %v960
  %v1015 = vmul.f32 %v791, %v962
  %v1016 = vmul.f32 %v792, %v964
  %v1017 = vmul.f32 %v793, %v966
  %v1018 = vmul.f32 %v794, %v968
  %v1019 = vmul.f32 %v795, %v970
  %v1020 = vmul.f32 %v796, %v972
  %v1021 = vmul.f32 %v797, %v974
  %v1022 = vmul.f32 %v798, %v976
  %v1023 = vmul.f32 %v799, %v978
  %v1024 = vmul.f32 %v800, %v980
  %v1025 = vmul.f32 %v801, %v982
  %v1026 = vmul.f32 %v802, %v984
  %v1027 = vmul.f32 %v803, %v986
  %v1028 = vmul.f32 %v804, %v988
  %v1029 = vmul.f32 %v805, %v990
  %v1030 = vmul.f32 %v806, %v992
  %v1031 = vmul.f32 %v807, %v994
  %v1032 = vmul.f32 %v808, %v996
  %v1033 = vmul.f32 %v809, %v998
  %v1034 = vmul.f32 %v810, %v1000
  %v1035 = vmul.f32 %v811, %v1002
  %v1036 = vmul.f32 %v812, %v1004
  %v1037 = vld [vmem:[%s5] sm:$0x1]
  %v1070 = vrot.slane %v1005, 7
  %v1071 = vrot.slane %v1006, 7
  %v1072 = vsel %vm678, %v1070, %v1071
  %v1073 = vrot.slane %v1007, 7
  %v1074 = vsel %vm678, %v1071, %v1073
  %v1075 = vrot.slane %v1008, 7
  %v1076 = vsel %vm678, %v1073, %v1075
  %v1077 = vrot.slane %v1009, 7
  %v1078 = vsel %vm678, %v1075, %v1077
  %v1079 = vrot.slane %v1010, 7
  %v1080 = vsel %vm678, %v1077, %v1079
  %v1081 = vrot.slane %v1011, 7
  %v1082 = vsel %vm678, %v1079, %v1081
  %v1083 = vrot.slane %v1012, 7
  %v1084 = vsel %vm678, %v1081, %v1083
  %v1085 = vrot.slane %v1013, 7
  %v1086 = vsel %vm678, %v1083, %v1085
  %v1087 = vrot.slane %v1014, 7
  %v1088 = vsel %vm678, %v1085, %v1087
  %v1089 = vrot.slane %v1015, 7
  %v1090 = vsel %vm678, %v1087, %v1089
  %v1091 = vrot.slane %v1016, 7
  %v1092 = vsel %vm678, %v1089, %v1091
  %v1093 = vrot.slane %v1017, 7
  %v1094 = vsel %vm678, %v1091, %v1093
  %v1095 = vrot.slane %v1018, 7
  %v1096 = vsel %vm678, %v1093, %v1095
  %v1097 = vrot.slane %v1019, 7
  %v1098 = vsel %vm678, %v1095, %v1097
  %v1099 = vrot.slane %v1020, 7
  %v1100 = vsel %vm678, %v1097, %v1099
  %v1101 = vrot.slane %v1021, 7
  %v1102 = vsel %vm678, %v1099, %v1101
  %v1103 = vrot.slane %v1022, 7
  %v1104 = vsel %vm678, %v1101, %v1103
  %v1105 = vrot.slane %v1023, 7
  %v1106 = vsel %vm678, %v1103, %v1105
  %v1107 = vrot.slane %v1024, 7
  %v1108 = vsel %vm678, %v1105, %v1107
  %v1109 = vrot.slane %v1025, 7
  %v1110 = vsel %vm678, %v1107, %v1109
  %v1111 = vrot.slane %v1026, 7
  %v1112 = vsel %vm678, %v1109, %v1111
  %v1113 = vrot.slane %v1027, 7
  %v1114 = vsel %vm678, %v1111, %v1113
  %v1115 = vrot.slane %v1028, 7
  %v1116 = vsel %vm678, %v1113, %v1115
  %v1117 = vrot.slane %v1029, 7
  %v1118 = vsel %vm678, %v1115, %v1117
  %v1119 = vrot.slane %v1030, 7
  %v1120 = vsel %vm678, %v1117, %v1119
  %v1121 = vrot.slane %v1031, 7
  %v1122 = vsel %vm678, %v1119, %v1121
  %v1123 = vrot.slane %v1032, 7
  %v1124 = vsel %vm678, %v1121, %v1123
  %v1125 = vrot.slane %v1033, 7
  %v1126 = vsel %vm678, %v1123, %v1125
  %v1127 = vrot.slane %v1034, 7
  %v1128 = vsel %vm678, %v1125, %v1127
  %v1129 = vrot.slane %v1035, 7
  %v1130 = vsel %vm678, %v1127, %v1129
  %v1131 = vrot.slane %v1036, 7
  %v1132 = vsel %vm678, %v1129, %v1131
  %v1165 = vsel %vm678, 0.0, %v1070
  %v1166 = vsel %vm459, 1, 0
  %v1167 = vsel %vm460, 1, 0
  %v1168 = vsel %vm461, 1, 0
  %v1169 = vsel %vm462, 1, 0
  %v1170 = vsel %vm463, 1, 0
  %v1171 = vsel %vm464, 1, 0
  %v1172 = vsel %vm465, 1, 0
  %v1173 = vsel %vm466, 1, 0
  %v1174 = vsel %vm467, 1, 0
  %v1175 = vsel %vm468, 1, 0
  %v1176 = vsel %vm469, 1, 0
  %v1177 = vsel %vm470, 1, 0
  %v1178 = vsel %vm471, 1, 0
  %v1179 = vsel %vm472, 1, 0
  %v1180 = vsel %vm473, 1, 0
  %v1181 = vsel %vm474, 1, 0
  %v1182 = vsel %vm475, 1, 0
  %v1183 = vsel %vm476, 1, 0
  %v1184 = vsel %vm477, 1, 0
  %v1185 = vsel %vm478, 1, 0
  %v1186 = vsel %vm479, 1, 0
  %v1187 = vsel %vm480, 1, 0
  %v1188 = vsel %vm481, 1, 0
  %v1189 = vsel %vm482, 1, 0
  %v1190 = vsel %vm483, 1, 0
  %v1191 = vsel %vm484, 1, 0
  %v1192 = vsel %vm485, 1, 0
  %v1193 = vsel %vm486, 1, 0
  %v1194 = vsel %vm487, 1, 0
  %v1195 = vsel %vm488, 1, 0
  %v1196 = vsel %vm489, 1, 0
  %v1197 = vsel %vm490, 1, 0
  %vm1198 = vcmp.eq.s32.totalorder %v1166, 1
  %vm1199 = vcmp.eq.s32.totalorder %v1167, 1
  %vm1200 = vcmp.eq.s32.totalorder %v1168, 1
  %vm1201 = vcmp.eq.s32.totalorder %v1169, 1
  %vm1202 = vcmp.eq.s32.totalorder %v1170, 1
  %vm1203 = vcmp.eq.s32.totalorder %v1171, 1
  %vm1204 = vcmp.eq.s32.totalorder %v1172, 1
  %vm1205 = vcmp.eq.s32.totalorder %v1173, 1
  %vm1206 = vcmp.eq.s32.totalorder %v1174, 1
  %vm1207 = vcmp.eq.s32.totalorder %v1175, 1
  %vm1208 = vcmp.eq.s32.totalorder %v1176, 1
  %vm1209 = vcmp.eq.s32.totalorder %v1177, 1
  %vm1210 = vcmp.eq.s32.totalorder %v1178, 1
  %vm1211 = vcmp.eq.s32.totalorder %v1179, 1
  %vm1212 = vcmp.eq.s32.totalorder %v1180, 1
  %vm1213 = vcmp.eq.s32.totalorder %v1181, 1
  %vm1214 = vcmp.eq.s32.totalorder %v1182, 1
  %vm1215 = vcmp.eq.s32.totalorder %v1183, 1
  %vm1216 = vcmp.eq.s32.totalorder %v1184, 1
  %vm1217 = vcmp.eq.s32.totalorder %v1185, 1
  %vm1218 = vcmp.eq.s32.totalorder %v1186, 1
  %vm1219 = vcmp.eq.s32.totalorder %v1187, 1
  %vm1220 = vcmp.eq.s32.totalorder %v1188, 1
  %vm1221 = vcmp.eq.s32.totalorder %v1189, 1
  %vm1222 = vcmp.eq.s32.totalorder %v1190, 1
  %vm1223 = vcmp.eq.s32.totalorder %v1191, 1
  %vm1224 = vcmp.eq.s32.totalorder %v1192, 1
  %vm1225 = vcmp.eq.s32.totalorder %v1193, 1
  %vm1226 = vcmp.eq.s32.totalorder %v1194, 1
  %vm1227 = vcmp.eq.s32.totalorder %v1195, 1
  %vm1228 = vcmp.eq.s32.totalorder %v1196, 1
  %vm1229 = vcmp.eq.s32.totalorder %v1197, 1
  %v1230 = vsel %vm1198, %v1165, 0.0
  %v1231 = vsel %vm1199, %v1072, 0.0
  %v1232 = vsel %vm1200, %v1074, 0.0
  %v1233 = vsel %vm1201, %v1076, 0.0
  %v1234 = vsel %vm1202, %v1078, 0.0
  %v1235 = vsel %vm1203, %v1080, 0.0
  %v1236 = vsel %vm1204, %v1082, 0.0
  %v1237 = vsel %vm1205, %v1084, 0.0
  %v1238 = vsel %vm1206, %v1086, 0.0
  %v1239 = vsel %vm1207, %v1088, 0.0
  %v1240 = vsel %vm1208, %v1090, 0.0
  %v1241 = vsel %vm1209, %v1092, 0.0
  %v1242 = vsel %vm1210, %v1094, 0.0
  %v1243 = vsel %vm1211, %v1096, 0.0
  %v1244 = vsel %vm1212, %v1098, 0.0
  %v1245 = vsel %vm1213, %v1100, 0.0
  %v1246 = vsel %vm1214, %v1102, 0.0
  %v1247 = vsel %vm1215, %v1104, 0.0
  %v1248 = vsel %vm1216, %v1106, 0.0
  %v1249 = vsel %vm1217, %v1108, 0.0
  %v1250 = vsel %vm1218, %v1110, 0.0
  %v1251 = vsel %vm1219, %v1112, 0.0
  %v1252 = vsel %vm1220, %v1114, 0.0
  %v1253 = vsel %vm1221, %v1116, 0.0
  %v1254 = vsel %vm1222, %v1118, 0.0
  %v1255 = vsel %vm1223, %v1120, 0.0
  %v1256 = vsel %vm1224, %v1122, 0.0
  %v1257 = vsel %vm1225, %v1124, 0.0
  %v1258 = vsel %vm1226, %v1126, 0.0
  %v1259 = vsel %vm1227, %v1128, 0.0
  %v1260 = vsel %vm1228, %v1130, 0.0
  %v1261 = vsel %vm1229, %v1132, 0.0
  %v1262 = vpack.c.bf16 %v1231, %v1230
  %v1263 = vpack.c.bf16 %v1233, %v1232
  %v1264 = vpack.c.bf16 %v1235, %v1234
  %v1265 = vpack.c.bf16 %v1237, %v1236
  %v1266 = vpack.c.bf16 %v1239, %v1238
  %v1267 = vpack.c.bf16 %v1241, %v1240
  %v1268 = vpack.c.bf16 %v1243, %v1242
  %v1269 = vpack.c.bf16 %v1245, %v1244
  %v1270 = vpack.c.bf16 %v1247, %v1246
  %v1271 = vpack.c.bf16 %v1249, %v1248
  %v1272 = vpack.c.bf16 %v1251, %v1250
  %v1273 = vpack.c.bf16 %v1253, %v1252
  %v1274 = vpack.c.bf16 %v1255, %v1254
  %v1275 = vpack.c.bf16 %v1257, %v1256
  %v1276 = vpack.c.bf16 %v1259, %v1258
  %v1277 = vpack.c.bf16 %v1261, %v1260
  %v1278 = vpack.c.bf16 %v1006, %v1005
  %v1279 = vpack.c.bf16 %v1008, %v1007
  %v1280 = vpack.c.bf16 %v1010, %v1009
  %v1281 = vpack.c.bf16 %v1012, %v1011
  %v1282 = vpack.c.bf16 %v1014, %v1013
  %v1283 = vpack.c.bf16 %v1016, %v1015
  %v1284 = vpack.c.bf16 %v1018, %v1017
  %v1285 = vpack.c.bf16 %v1020, %v1019
  %v1286 = vpack.c.bf16 %v1022, %v1021
  %v1287 = vpack.c.bf16 %v1024, %v1023
  %v1288 = vpack.c.bf16 %v1026, %v1025
  %v1289 = vpack.c.bf16 %v1028, %v1027
  %v1290 = vpack.c.bf16 %v1030, %v1029
  %v1291 = vpack.c.bf16 %v1032, %v1031
  %v1292 = vpack.c.bf16 %v1034, %v1033
  %v1293 = vpack.c.bf16 %v1036, %v1035
  %vm1294 = vcmask 1046528
  %v1295 = vrot.slane %v1005, 1
  %v1296 = vrot.slane %v1006, 1
  %v1297 = vsel %vm1294, %v1295, %v1296
  %v1298 = vrot.slane %v1007, 1
  %v1299 = vsel %vm1294, %v1296, %v1298
  %v1300 = vrot.slane %v1008, 1
  %v1301 = vsel %vm1294, %v1298, %v1300
  %v1302 = vrot.slane %v1009, 1
  %v1303 = vsel %vm1294, %v1300, %v1302
  %v1304 = vrot.slane %v1010, 1
  %v1305 = vsel %vm1294, %v1302, %v1304
  %v1306 = vrot.slane %v1011, 1
  %v1307 = vsel %vm1294, %v1304, %v1306
  %v1308 = vrot.slane %v1012, 1
  %v1309 = vsel %vm1294, %v1306, %v1308
  %v1310 = vrot.slane %v1013, 1
  %v1311 = vsel %vm1294, %v1308, %v1310
  %v1312 = vrot.slane %v1014, 1
  %v1313 = vsel %vm1294, %v1310, %v1312
  %v1314 = vrot.slane %v1015, 1
  %v1315 = vsel %vm1294, %v1312, %v1314
  %v1316 = vrot.slane %v1016, 1
  %v1317 = vsel %vm1294, %v1314, %v1316
  %v1318 = vrot.slane %v1017, 1
  %v1319 = vsel %vm1294, %v1316, %v1318
  %v1320 = vrot.slane %v1018, 1
  %v1321 = vsel %vm1294, %v1318, %v1320
  %v1322 = vrot.slane %v1019, 1
  %v1323 = vsel %vm1294, %v1320, %v1322
  %v1324 = vrot.slane %v1020, 1
  %v1325 = vsel %vm1294, %v1322, %v1324
  %v1326 = vrot.slane %v1021, 1
  %v1327 = vsel %vm1294, %v1324, %v1326
  %v1328 = vrot.slane %v1022, 1
  %v1329 = vsel %vm1294, %v1326, %v1328
  %v1330 = vrot.slane %v1023, 1
  %v1331 = vsel %vm1294, %v1328, %v1330
  %v1332 = vrot.slane %v1024, 1
  %v1333 = vsel %vm1294, %v1330, %v1332
  %v1334 = vrot.slane %v1025, 1
  %v1335 = vsel %vm1294, %v1332, %v1334
  %v1336 = vrot.slane %v1026, 1
  %v1337 = vsel %vm1294, %v1334, %v1336
  %v1338 = vrot.slane %v1027, 1
  %v1339 = vsel %vm1294, %v1336, %v1338
  %v1340 = vrot.slane %v1028, 1
  %v1341 = vsel %vm1294, %v1338, %v1340
  %v1342 = vrot.slane %v1029, 1
  %v1343 = vsel %vm1294, %v1340, %v1342
  %v1344 = vrot.slane %v1030, 1
  %v1345 = vsel %vm1294, %v1342, %v1344
  %v1346 = vrot.slane %v1031, 1
  %v1347 = vsel %vm1294, %v1344, %v1346
  %v1348 = vrot.slane %v1032, 1
  %v1349 = vsel %vm1294, %v1346, %v1348
  %v1350 = vrot.slane %v1033, 1
  %v1351 = vsel %vm1294, %v1348, %v1350
  %v1352 = vrot.slane %v1034, 1
  %v1353 = vsel %vm1294, %v1350, %v1352
  %v1354 = vrot.slane %v1035, 1
  %v1355 = vsel %vm1294, %v1352, %v1354
  %v1356 = vrot.slane %v1036, 1
  %v1357 = vsel %vm1294, %v1354, %v1356
  %v1390 = vsel %vm1294, %v1356, 0.0
  %v1391 = vsel %vm491, 1, 0
  %v1392 = vsel %vm492, 1, 0
  %v1393 = vsel %vm493, 1, 0
  %v1394 = vsel %vm494, 1, 0
  %v1395 = vsel %vm495, 1, 0
  %v1396 = vsel %vm496, 1, 0
  %v1397 = vsel %vm497, 1, 0
  %v1398 = vsel %vm498, 1, 0
  %v1399 = vsel %vm499, 1, 0
  %v1400 = vsel %vm500, 1, 0
  %v1401 = vsel %vm501, 1, 0
  %v1402 = vsel %vm502, 1, 0
  %v1403 = vsel %vm503, 1, 0
  %v1404 = vsel %vm504, 1, 0
  %v1405 = vsel %vm505, 1, 0
  %v1406 = vsel %vm506, 1, 0
  %v1407 = vsel %vm507, 1, 0
  %v1408 = vsel %vm508, 1, 0
  %v1409 = vsel %vm509, 1, 0
  %v1410 = vsel %vm510, 1, 0
  %v1411 = vsel %vm511, 1, 0
  %v1412 = vsel %vm512, 1, 0
  %v1413 = vsel %vm513, 1, 0
  %v1414 = vsel %vm514, 1, 0
  %v1415 = vsel %vm515, 1, 0
  %v1416 = vsel %vm516, 1, 0
  %v1417 = vsel %vm517, 1, 0
  %v1418 = vsel %vm518, 1, 0
  %v1419 = vsel %vm519, 1, 0
  %v1420 = vsel %vm520, 1, 0
  %v1421 = vsel %vm521, 1, 0
  %v1422 = vsel %vm522, 1, 0
  %vm1423 = vcmp.eq.s32.totalorder %v1391, 1
  %vm1424 = vcmp.eq.s32.totalorder %v1392, 1
  %vm1425 = vcmp.eq.s32.totalorder %v1393, 1
  %vm1426 = vcmp.eq.s32.totalorder %v1394, 1
  %vm1427 = vcmp.eq.s32.totalorder %v1395, 1
  %vm1428 = vcmp.eq.s32.totalorder %v1396, 1
  %vm1429 = vcmp.eq.s32.totalorder %v1397, 1
  %vm1430 = vcmp.eq.s32.totalorder %v1398, 1
  %vm1431 = vcmp.eq.s32.totalorder %v1399, 1
  %vm1432 = vcmp.eq.s32.totalorder %v1400, 1
  %vm1433 = vcmp.eq.s32.totalorder %v1401, 1
  %vm1434 = vcmp.eq.s32.totalorder %v1402, 1
  %vm1435 = vcmp.eq.s32.totalorder %v1403, 1
  %vm1436 = vcmp.eq.s32.totalorder %v1404, 1
  %vm1437 = vcmp.eq.s32.totalorder %v1405, 1
  %vm1438 = vcmp.eq.s32.totalorder %v1406, 1
  %vm1439 = vcmp.eq.s32.totalorder %v1407, 1
  %vm1440 = vcmp.eq.s32.totalorder %v1408, 1
  %vm1441 = vcmp.eq.s32.totalorder %v1409, 1
  %vm1442 = vcmp.eq.s32.totalorder %v1410, 1
  %vm1443 = vcmp.eq.s32.totalorder %v1411, 1
  %vm1444 = vcmp.eq.s32.totalorder %v1412, 1
  %vm1445 = vcmp.eq.s32.totalorder %v1413, 1
  %vm1446 = vcmp.eq.s32.totalorder %v1414, 1
  %vm1447 = vcmp.eq.s32.totalorder %v1415, 1
  %vm1448 = vcmp.eq.s32.totalorder %v1416, 1
  %vm1449 = vcmp.eq.s32.totalorder %v1417, 1
  %vm1450 = vcmp.eq.s32.totalorder %v1418, 1
  %vm1451 = vcmp.eq.s32.totalorder %v1419, 1
  %vm1452 = vcmp.eq.s32.totalorder %v1420, 1
  %vm1453 = vcmp.eq.s32.totalorder %v1421, 1
  %vm1454 = vcmp.eq.s32.totalorder %v1422, 1
  %v1455 = vsel %vm1423, %v1297, 0.0
  %v1456 = vsel %vm1424, %v1299, 0.0
  %v1457 = vsel %vm1425, %v1301, 0.0
  %v1458 = vsel %vm1426, %v1303, 0.0
  %v1459 = vsel %vm1427, %v1305, 0.0
  %v1460 = vsel %vm1428, %v1307, 0.0
  %v1461 = vsel %vm1429, %v1309, 0.0
  %v1462 = vsel %vm1430, %v1311, 0.0
  %v1463 = vsel %vm1431, %v1313, 0.0
  %v1464 = vsel %vm1432, %v1315, 0.0
  %v1465 = vsel %vm1433, %v1317, 0.0
  %v1466 = vsel %vm1434, %v1319, 0.0
  %v1467 = vsel %vm1435, %v1321, 0.0
  %v1468 = vsel %vm1436, %v1323, 0.0
  %v1469 = vsel %vm1437, %v1325, 0.0
  %v1470 = vsel %vm1438, %v1327, 0.0
  %v1471 = vsel %vm1439, %v1329, 0.0
  %v1472 = vsel %vm1440, %v1331, 0.0
  %v1473 = vsel %vm1441, %v1333, 0.0
  %v1474 = vsel %vm1442, %v1335, 0.0
  %v1475 = vsel %vm1443, %v1337, 0.0
  %v1476 = vsel %vm1444, %v1339, 0.0
  %v1477 = vsel %vm1445, %v1341, 0.0
  %v1478 = vsel %vm1446, %v1343, 0.0
  %v1479 = vsel %vm1447, %v1345, 0.0
  %v1480 = vsel %vm1448, %v1347, 0.0
  %v1481 = vsel %vm1449, %v1349, 0.0
  %v1482 = vsel %vm1450, %v1351, 0.0
  %v1483 = vsel %vm1451, %v1353, 0.0
  %v1484 = vsel %vm1452, %v1355, 0.0
  %v1485 = vsel %vm1453, %v1357, 0.0
  %v1486 = vsel %vm1454, %v1390, 0.0
  %v1487 = vpack.c.bf16 %v1456, %v1455
  %v1488 = vpack.c.bf16 %v1458, %v1457
  %v1489 = vpack.c.bf16 %v1460, %v1459
  %v1490 = vpack.c.bf16 %v1462, %v1461
  %v1491 = vpack.c.bf16 %v1464, %v1463
  %v1492 = vpack.c.bf16 %v1466, %v1465
  %v1493 = vpack.c.bf16 %v1468, %v1467
  %v1494 = vpack.c.bf16 %v1470, %v1469
  %v1495 = vpack.c.bf16 %v1472, %v1471
  %v1496 = vpack.c.bf16 %v1474, %v1473
  %v1497 = vpack.c.bf16 %v1476, %v1475
  %v1498 = vpack.c.bf16 %v1478, %v1477
  %v1499 = vpack.c.bf16 %v1480, %v1479
  %v1500 = vpack.c.bf16 %v1482, %v1481
  %v1501 = vpack.c.bf16 %v1484, %v1483
  %v1502 = vpack.c.bf16 %v1486, %v1485
  %v1503 = vld [vmem:[%s4] sm:$0xf]
  %v1504 = vld [vmem:[%s4 + $0x4] sm:$0xf]
  %v1505 = vld [vmem:[%s4 + $0x8] sm:$0xf]
  %v1506 = vld [vmem:[%s4 + $0xc] sm:$0xf]
  %v1507 = vld [vmem:[%s4 + $0x10] sm:$0xf]
  %v1508 = vld [vmem:[%s4 + $0x14] sm:$0xf]
  %v1509 = vld [vmem:[%s4 + $0x18] sm:$0xf]
  %v1510 = vld [vmem:[%s4 + $0x1c] sm:$0xf]
  %v1511 = vld [vmem:[%s4 + $0x20] sm:$0xf]
  %v1512 = vld [vmem:[%s4 + $0x24] sm:$0xf]
  %v1513 = vld [vmem:[%s4 + $0x28] sm:$0xf]
  %v1514 = vld [vmem:[%s4 + $0x2c] sm:$0xf]
  %v1515 = vld [vmem:[%s4 + $0x30] sm:$0xf]
  %v1516 = vld [vmem:[%s4 + $0x34] sm:$0xf]
  %v1517 = vld [vmem:[%s4 + $0x38] sm:$0xf]
  %v1518 = vld [vmem:[%s4 + $0x3c] sm:$0xf]
  %s1519 = scalar_lea.vmem %s4, 64
  %v1520 = vld [vmem:[%s1519] sm:$0xf]
  %v1521 = vld [vmem:[%s1519 + $0x4] sm:$0xf]
  %v1522 = vld [vmem:[%s1519 + $0x8] sm:$0xf]
  %v1523 = vld [vmem:[%s1519 + $0xc] sm:$0xf]
  %v1524 = vld [vmem:[%s1519 + $0x10] sm:$0xf]
  %v1525 = vld [vmem:[%s1519 + $0x14] sm:$0xf]
  %v1526 = vld [vmem:[%s1519 + $0x18] sm:$0xf]
  %v1527 = vld [vmem:[%s1519 + $0x1c] sm:$0xf]
  %v1528 = vld [vmem:[%s1519 + $0x20] sm:$0xf]
  %v1529 = vld [vmem:[%s1519 + $0x24] sm:$0xf]
  %v1530 = vld [vmem:[%s1519 + $0x28] sm:$0xf]
  %v1531 = vld [vmem:[%s1519 + $0x2c] sm:$0xf]
  %v1532 = vld [vmem:[%s1519 + $0x30] sm:$0xf]
  %v1533 = vld [vmem:[%s1519 + $0x34] sm:$0xf]
  %v1534 = vld [vmem:[%s1519 + $0x38] sm:$0xf]
  %v1535 = vld [vmem:[%s1519 + $0x3c] sm:$0xf]
  %v1552 = vunpack.c.l.b16 %v1520
  %v1553 = vunpack.c.l.b16 %v1521
  %v1554 = vunpack.c.l.b16 %v1522
  %v1555 = vunpack.c.l.b16 %v1523
  %v1556 = vunpack.c.l.b16 %v1524
  %v1557 = vunpack.c.l.b16 %v1525
  %v1558 = vunpack.c.l.b16 %v1526
  %v1559 = vunpack.c.l.b16 %v1527
  %v1560 = vunpack.c.l.b16 %v1528
  %v1561 = vunpack.c.l.b16 %v1529
  %v1562 = vunpack.c.l.b16 %v1530
  %v1563 = vunpack.c.l.b16 %v1531
  %v1564 = vunpack.c.l.b16 %v1532
  %v1565 = vunpack.c.l.b16 %v1533
  %v1566 = vunpack.c.l.b16 %v1534
  %v1567 = vunpack.c.l.b16 %v1535
  %v1568 = vpack.c.b16 %v1553, %v1552
  %v1569 = vpack.c.b16 %v1555, %v1554
  %v1570 = vpack.c.b16 %v1557, %v1556
  %v1571 = vpack.c.b16 %v1559, %v1558
  %v1572 = vpack.c.b16 %v1561, %v1560
  %v1573 = vpack.c.b16 %v1563, %v1562
  %v1574 = vpack.c.b16 %v1565, %v1564
  %v1575 = vpack.c.b16 %v1567, %v1566
  %1584 = vmatprep.subr.bf16.mxu0 0
  %1585 = vmatpush1.bf16.msra.mxu0 %v1568
  %1586 = vmatprep.subr.bf16.mxu0 0
  %1587 = vmatpush1.bf16.msra.mxu0 %v1569
  %1588 = vmatprep.subr.bf16.mxu0 0
  %1589 = vmatpush1.bf16.msra.mxu0 %v1570
  %1590 = vmatprep.subr.bf16.mxu0 0
  %1591 = vmatpush1.bf16.msra.mxu0 %v1571
  %1592 = vmatprep.subr.bf16.mxu0 0
  %1593 = vmatpush1.bf16.msra.mxu0 %v1572
  %1594 = vmatprep.subr.bf16.mxu0 0
  %1595 = vmatpush1.bf16.msra.mxu0 %v1573
  %1596 = vmatprep.subr.bf16.mxu0 0
  %1597 = vmatpush1.bf16.msra.mxu0 %v1574
  %1598 = vmatprep.subr.bf16.mxu0 0
  %1599 = vmatpush1.bf16.msra.mxu0 %v1575
  %1600 = vmatprep.subr.bf16.mxu0 0
  %1601 = vmatpush1.bf16.msra.mxu0 0
  %1602 = vmatprep.subr.bf16.mxu0 0
  %1603 = vmatpush1.bf16.msra.mxu0 0
  %1604 = vmatprep.subr.bf16.mxu0 0
  %1605 = vmatpush1.bf16.msra.mxu0 0
  %1606 = vmatprep.subr.bf16.mxu0 0
  %1607 = vmatpush1.bf16.msra.mxu0 0
  %1608 = vmatprep.subr.bf16.mxu0 0
  %1609 = vmatpush1.bf16.msra.mxu0 0
  %1610 = vmatprep.subr.bf16.mxu0 0
  %1611 = vmatpush1.bf16.msra.mxu0 0
  %1612 = vmatprep.subr.bf16.mxu0 0
  %1613 = vmatpush1.bf16.msra.mxu0 0
  %1614 = vmatprep.subr.bf16.mxu0 0
  %1615 = vmatpush1.bf16.msra.mxu0 0
  %1616 = vmatprep.mubr.bf16.mxu0 0
  %1617 = vmatmul.mubr.bf16.gmra.mrb[0].mxu0 0
  %v1618 = vpop.f32.mrb[0].mxu0
  %v1619 = vadd.f32 0.0, %v1618
  %v1620 = vpop.f32.mrb[0].mxu0
  %v1621 = vpop.f32.mrb[0].mxu0
  %v1622 = vadd.f32 0.0, %v1621
  %v1623 = vpop.f32.mrb[0].mxu0
  %1624 = vmatprep.mubr.bf16.mxu0 0
  %1625 = vmatmul.mubr.bf16.gmra.mrb[0].mxu0 %v1278
  %v1626 = vpop.f32.mrb[0].mxu0
  %v1627 = vadd.f32 0.0, %v1626
  %v1628 = vpop.f32.mrb[0].mxu0
  %v1629 = vpop.f32.mrb[0].mxu0
  %v1630 = vadd.f32 0.0, %v1629
  %v1631 = vpop.f32.mrb[0].mxu0
  %1632 = vmatprep.mubr.bf16.mxu0 0
  %1633 = vmatmul.mubr.bf16.gmra.mrb[0].mxu0 %v1279
  %v1634 = vpop.f32.mrb[0].mxu0
  %v1635 = vadd.f32 0.0, %v1634
  %v1636 = vpop.f32.mrb[0].mxu0
  %v1637 = vpop.f32.mrb[0].mxu0
  %v1638 = vadd.f32 0.0, %v1637
  %v1639 = vpop.f32.mrb[0].mxu0
  %1640 = vmatprep.mubr.bf16.mxu0 0
  %1641 = vmatmul.mubr.bf16.gmra.mrb[0].mxu0 %v1280
  %v1642 = vpop.f32.mrb[0].mxu0
  %v1643 = vadd.f32 0.0, %v1642
  %v1644 = vpop.f32.mrb[0].mxu0
  %v1645 = vpop.f32.mrb[0].mxu0
  %v1646 = vadd.f32 0.0, %v1645
  %v1647 = vpop.f32.mrb[0].mxu0
  %1648 = vmatprep.mubr.bf16.mxu0 0
  %1649 = vmatmul.mubr.bf16.gmra.mrb[0].mxu0 %v1281
  %v1650 = vpop.f32.mrb[0].mxu0
  %v1651 = vadd.f32 0.0, %v1650
  %v1652 = vpop.f32.mrb[0].mxu0
  %v1653 = vpop.f32.mrb[0].mxu0
  %v1654 = vadd.f32 0.0, %v1653
  %v1655 = vpop.f32.mrb[0].mxu0
  %1656 = vmatprep.mubr.bf16.mxu0 0
  %1657 = vmatmul.mubr.bf16.gmra.mrb[0].mxu0 %v1282
  %v1658 = vpop.f32.mrb[0].mxu0
  %v1659 = vadd.f32 0.0, %v1658
  %v1660 = vpop.f32.mrb[0].mxu0
  %v1661 = vpop.f32.mrb[0].mxu0
  %v1662 = vadd.f32 0.0, %v1661
  %v1663 = vpop.f32.mrb[0].mxu0
  %1664 = vmatprep.mubr.bf16.mxu0 0
  %1665 = vmatmul.mubr.bf16.gmra.mrb[0].mxu0 %v1283
  %v1666 = vpop.f32.mrb[0].mxu0
  %v1667 = vadd.f32 0.0, %v1666
  %v1668 = vpop.f32.mrb[0].mxu0
  %v1669 = vpop.f32.mrb[0].mxu0
  %v1670 = vadd.f32 0.0, %v1669
  %v1671 = vpop.f32.mrb[0].mxu0
  %1672 = vmatprep.mubr.bf16.mxu0 0
  %1673 = vmatmul.mubr.bf16.gmra.mrb[0].mxu0 %v1284
  %v1674 = vpop.f32.mrb[0].mxu0
  %v1675 = vadd.f32 0.0, %v1674
  %v1676 = vpop.f32.mrb[0].mxu0
  %v1677 = vpop.f32.mrb[0].mxu0
  %v1678 = vadd.f32 0.0, %v1677
  %v1679 = vpop.f32.mrb[0].mxu0
  %1680 = vmatprep.mubr.bf16.mxu0 0
  %1681 = vmatmul.mubr.bf16.gmra.mrb[0].mxu0 %v1285
  %v1682 = vpop.f32.mrb[0].mxu0
  %v1683 = vadd.f32 0.0, %v1682
  %v1684 = vpop.f32.mrb[0].mxu0
  %v1685 = vpop.f32.mrb[0].mxu0
  %v1686 = vadd.f32 0.0, %v1685
  %v1687 = vpop.f32.mrb[0].mxu0
  %1688 = vmatprep.mubr.bf16.mxu0 0
  %1689 = vmatmul.mubr.bf16.gmra.mrb[0].mxu0 %v1286
  %v1690 = vpop.f32.mrb[0].mxu0
  %v1691 = vadd.f32 0.0, %v1690
  %v1692 = vpop.f32.mrb[0].mxu0
  %v1693 = vpop.f32.mrb[0].mxu0
  %v1694 = vadd.f32 0.0, %v1693
  %v1695 = vpop.f32.mrb[0].mxu0
  %1696 = vmatprep.mubr.bf16.mxu0 0
  %1697 = vmatmul.mubr.bf16.gmra.mrb[0].mxu0 %v1287
  %v1698 = vpop.f32.mrb[0].mxu0
  %v1699 = vadd.f32 0.0, %v1698
  %v1700 = vpop.f32.mrb[0].mxu0
  %v1701 = vpop.f32.mrb[0].mxu0
  %v1702 = vadd.f32 0.0, %v1701
  %v1703 = vpop.f32.mrb[0].mxu0
  %1704 = vmatprep.mubr.bf16.mxu0 0
  %1705 = vmatmul.mubr.bf16.gmra.mrb[0].mxu0 %v1288
  %v1706 = vpop.f32.mrb[0].mxu0
  %v1707 = vadd.f32 0.0, %v1706
  %v1708 = vpop.f32.mrb[0].mxu0
  %v1709 = vpop.f32.mrb[0].mxu0
  %v1710 = vadd.f32 0.0, %v1709
  %v1711 = vpop.f32.mrb[0].mxu0
  %1712 = vmatprep.mubr.bf16.mxu0 0
  %1713 = vmatmul.mubr.bf16.gmra.mrb[0].mxu0 %v1289
  %v1714 = vpop.f32.mrb[0].mxu0
  %v1715 = vadd.f32 0.0, %v1714
  %v1716 = vpop.f32.mrb[0].mxu0
  %v1717 = vpop.f32.mrb[0].mxu0
  %v1718 = vadd.f32 0.0, %v1717
  %v1719 = vpop.f32.mrb[0].mxu0
  %1720 = vmatprep.mubr.bf16.mxu0 0
  %1721 = vmatmul.mubr.bf16.gmra.mrb[0].mxu0 %v1290
  %v1722 = vpop.f32.mrb[0].mxu0
  %v1723 = vadd.f32 0.0, %v1722
  %v1724 = vpop.f32.mrb[0].mxu0
  %v1725 = vpop.f32.mrb[0].mxu0
  %v1726 = vadd.f32 0.0, %v1725
  %v1727 = vpop.f32.mrb[0].mxu0
  %1728 = vmatprep.mubr.bf16.mxu0 0
  %1729 = vmatmul.mubr.bf16.gmra.mrb[0].mxu0 %v1291
  %v1730 = vpop.f32.mrb[0].mxu0
  %v1731 = vadd.f32 0.0, %v1730
  %v1732 = vpop.f32.mrb[0].mxu0
  %v1733 = vpop.f32.mrb[0].mxu0
  %v1734 = vadd.f32 0.0, %v1733
  %v1735 = vpop.f32.mrb[0].mxu0
  %1736 = vmatprep.mubr.bf16.mxu0 0
  %1737 = vmatmul.mubr.bf16.gmra.mrb[0].mxu0 %v1292
  %v1738 = vpop.f32.mrb[0].mxu0
  %v1739 = vadd.f32 0.0, %v1738
  %v1740 = vpop.f32.mrb[0].mxu0
  %v1741 = vpop.f32.mrb[0].mxu0
  %v1742 = vadd.f32 0.0, %v1741
  %v1743 = vpop.f32.mrb[0].mxu0
  %1744 = vdwg.mxu0
  %v1761 = vunpack.c.l.b16 %v1503
  %v1762 = vunpack.c.l.b16 %v1504
  %v1763 = vunpack.c.l.b16 %v1505
  %v1764 = vunpack.c.l.b16 %v1506
  %v1765 = vunpack.c.l.b16 %v1507
  %v1766 = vunpack.c.l.b16 %v1508
  %v1767 = vunpack.c.l.b16 %v1509
  %v1768 = vunpack.c.l.b16 %v1510
  %v1769 = vunpack.c.l.b16 %v1511
  %v1770 = vunpack.c.l.b16 %v1512
  %v1771 = vunpack.c.l.b16 %v1513
  %v1772 = vunpack.c.l.b16 %v1514
  %v1773 = vunpack.c.l.b16 %v1515
  %v1774 = vunpack.c.l.b16 %v1516
  %v1775 = vunpack.c.l.b16 %v1517
  %v1776 = vunpack.c.l.b16 %v1518
  %v1777 = vpack.c.b16 %v1762, %v1761
  %v1778 = vpack.c.b16 %v1764, %v1763
  %v1779 = vpack.c.b16 %v1766, %v1765
  %v1780 = vpack.c.b16 %v1768, %v1767
  %v1781 = vpack.c.b16 %v1770, %v1769
  %v1782 = vpack.c.b16 %v1772, %v1771
  %v1783 = vpack.c.b16 %v1774, %v1773
  %v1784 = vpack.c.b16 %v1776, %v1775
  %1793 = vmatprep.subr.bf16.mxu0 0
  %1794 = vmatpush1.bf16.msra.mxu0 %v1777
  %1795 = vmatprep.subr.bf16.mxu0 0
  %1796 = vmatpush1.bf16.msra.mxu0 %v1778
  %1797 = vmatprep.subr.bf16.mxu0 0
  %1798 = vmatpush1.bf16.msra.mxu0 %v1779
  %1799 = vmatprep.subr.bf16.mxu0 0
  %1800 = vmatpush1.bf16.msra.mxu0 %v1780
  %1801 = vmatprep.subr.bf16.mxu0 0
  %1802 = vmatpush1.bf16.msra.mxu0 %v1781
  %1803 = vmatprep.subr.bf16.mxu0 0
  %1804 = vmatpush1.bf16.msra.mxu0 %v1782
  %1805 = vmatprep.subr.bf16.mxu0 0
  %1806 = vmatpush1.bf16.msra.mxu0 %v1783
  %1807 = vmatprep.subr.bf16.mxu0 0
  %1808 = vmatpush1.bf16.msra.mxu0 %v1784
  %1809 = vmatprep.subr.bf16.mxu0 0
  %1810 = vmatpush1.bf16.msra.mxu0 0
  %1811 = vmatprep.subr.bf16.mxu0 0
  %1812 = vmatpush1.bf16.msra.mxu0 0
  %1813 = vmatprep.subr.bf16.mxu0 0
  %1814 = vmatpush1.bf16.msra.mxu0 0
  %1815 = vmatprep.subr.bf16.mxu0 0
  %1816 = vmatpush1.bf16.msra.mxu0 0
  %1817 = vmatprep.subr.bf16.mxu0 0
  %1818 = vmatpush1.bf16.msra.mxu0 0
  %1819 = vmatprep.subr.bf16.mxu0 0
  %1820 = vmatpush1.bf16.msra.mxu0 0
  %1821 = vmatprep.subr.bf16.mxu0 0
  %1822 = vmatpush1.bf16.msra.mxu0 0
  %1823 = vmatprep.subr.bf16.mxu0 0
  %1824 = vmatpush1.bf16.msra.mxu0 0
  %1825 = vmatprep.mubr.bf16.mxu0 0
  %1826 = vmatmul.mubr.bf16.gmra.mrb[0].mxu0 0
  %v1827 = vpop.f32.mrb[0].mxu0
  %v1828 = vadd.f32 %v1619, %v1827
  %v1829 = vpop.f32.mrb[0].mxu0
  %v1830 = vpop.f32.mrb[0].mxu0
  %v1831 = vadd.f32 %v1622, %v1830
  %v1832 = vpop.f32.mrb[0].mxu0
  %1833 = vmatprep.mubr.bf16.mxu0 0
  %1834 = vmatmul.mubr.bf16.gmra.mrb[0].mxu0 %v1262
  %v1835 = vpop.f32.mrb[0].mxu0
  %v1836 = vadd.f32 %v1627, %v1835
  %v1837 = vpop.f32.mrb[0].mxu0
  %v1838 = vpop.f32.mrb[0].mxu0
  %v1839 = vadd.f32 %v1630, %v1838
  %v1840 = vpop.f32.mrb[0].mxu0
  %1841 = vmatprep.mubr.bf16.mxu0 0
  %1842 = vmatmul.mubr.bf16.gmra.mrb[0].mxu0 %v1263
  %v1843 = vpop.f32.mrb[0].mxu0
  %v1844 = vadd.f32 %v1635, %v1843
  %v1845 = vpop.f32.mrb[0].mxu0
  %v1846 = vpop.f32.mrb[0].mxu0
  %v1847 = vadd.f32 %v1638, %v1846
  %v1848 = vpop.f32.mrb[0].mxu0
  %1849 = vmatprep.mubr.bf16.mxu0 0
  %1850 = vmatmul.mubr.bf16.gmra.mrb[0].mxu0 %v1264
  %v1851 = vpop.f32.mrb[0].mxu0
  %v1852 = vadd.f32 %v1643, %v1851
  %v1853 = vpop.f32.mrb[0].mxu0
  %v1854 = vpop.f32.mrb[0].mxu0
  %v1855 = vadd.f32 %v1646, %v1854
  %v1856 = vpop.f32.mrb[0].mxu0
  %1857 = vmatprep.mubr.bf16.mxu0 0
  %1858 = vmatmul.mubr.bf16.gmra.mrb[0].mxu0 %v1265
  %v1859 = vpop.f32.mrb[0].mxu0
  %v1860 = vadd.f32 %v1651, %v1859
  %v1861 = vpop.f32.mrb[0].mxu0
  %v1862 = vpop.f32.mrb[0].mxu0
  %v1863 = vadd.f32 %v1654, %v1862
  %v1864 = vpop.f32.mrb[0].mxu0
  %1865 = vmatprep.mubr.bf16.mxu0 0
  %1866 = vmatmul.mubr.bf16.gmra.mrb[0].mxu0 %v1266
  %v1867 = vpop.f32.mrb[0].mxu0
  %v1868 = vadd.f32 %v1659, %v1867
  %v1869 = vpop.f32.mrb[0].mxu0
  %v1870 = vpop.f32.mrb[0].mxu0
  %v1871 = vadd.f32 %v1662, %v1870
  %v1872 = vpop.f32.mrb[0].mxu0
  %1873 = vmatprep.mubr.bf16.mxu0 0
  %1874 = vmatmul.mubr.bf16.gmra.mrb[0].mxu0 %v1267
  %v1875 = vpop.f32.mrb[0].mxu0
  %v1876 = vadd.f32 %v1667, %v1875
  %v1877 = vpop.f32.mrb[0].mxu0
  %v1878 = vpop.f32.mrb[0].mxu0
  %v1879 = vadd.f32 %v1670, %v1878
  %v1880 = vpop.f32.mrb[0].mxu0
  %1881 = vmatprep.mubr.bf16.mxu0 0
  %1882 = vmatmul.mubr.bf16.gmra.mrb[0].mxu0 %v1268
  %v1883 = vpop.f32.mrb[0].mxu0
  %v1884 = vadd.f32 %v1675, %v1883
  %v1885 = vpop.f32.mrb[0].mxu0
  %v1886 = vpop.f32.mrb[0].mxu0
  %v1887 = vadd.f32 %v1678, %v1886
  %v1888 = vpop.f32.mrb[0].mxu0
  %1889 = vmatprep.mubr.bf16.mxu0 0
  %1890 = vmatmul.mubr.bf16.gmra.mrb[0].mxu0 %v1269
  %v1891 = vpop.f32.mrb[0].mxu0
  %v1892 = vadd.f32 %v1683, %v1891
  %v1893 = vpop.f32.mrb[0].mxu0
  %v1894 = vpop.f32.mrb[0].mxu0
  %v1895 = vadd.f32 %v1686, %v1894
  %v1896 = vpop.f32.mrb[0].mxu0
  %1897 = vmatprep.mubr.bf16.mxu0 0
  %1898 = vmatmul.mubr.bf16.gmra.mrb[0].mxu0 %v1270
  %v1899 = vpop.f32.mrb[0].mxu0
  %v1900 = vadd.f32 %v1691, %v1899
  %v1901 = vpop.f32.mrb[0].mxu0
  %v1902 = vpop.f32.mrb[0].mxu0
  %v1903 = vadd.f32 %v1694, %v1902
  %v1904 = vpop.f32.mrb[0].mxu0
  %1905 = vmatprep.mubr.bf16.mxu0 0
  %1906 = vmatmul.mubr.bf16.gmra.mrb[0].mxu0 %v1271
  %v1907 = vpop.f32.mrb[0].mxu0
  %v1908 = vadd.f32 %v1699, %v1907
  %v1909 = vpop.f32.mrb[0].mxu0
  %v1910 = vpop.f32.mrb[0].mxu0
  %v1911 = vadd.f32 %v1702, %v1910
  %v1912 = vpop.f32.mrb[0].mxu0
  %1913 = vmatprep.mubr.bf16.mxu0 0
  %1914 = vmatmul.mubr.bf16.gmra.mrb[0].mxu0 %v1272
  %v1915 = vpop.f32.mrb[0].mxu0
  %v1916 = vadd.f32 %v1707, %v1915
  %v1917 = vpop.f32.mrb[0].mxu0
  %v1918 = vpop.f32.mrb[0].mxu0
  %v1919 = vadd.f32 %v1710, %v1918
  %v1920 = vpop.f32.mrb[0].mxu0
  %1921 = vmatprep.mubr.bf16.mxu0 0
  %1922 = vmatmul.mubr.bf16.gmra.mrb[0].mxu0 %v1273
  %v1923 = vpop.f32.mrb[0].mxu0
  %v1924 = vadd.f32 %v1715, %v1923
  %v1925 = vpop.f32.mrb[0].mxu0
  %v1926 = vpop.f32.mrb[0].mxu0
  %v1927 = vadd.f32 %v1718, %v1926
  %v1928 = vpop.f32.mrb[0].mxu0
  %1929 = vmatprep.mubr.bf16.mxu0 0
  %1930 = vmatmul.mubr.bf16.gmra.mrb[0].mxu0 %v1274
  %v1931 = vpop.f32.mrb[0].mxu0
  %v1932 = vadd.f32 %v1723, %v1931
  %v1933 = vpop.f32.mrb[0].mxu0
  %v1934 = vpop.f32.mrb[0].mxu0
  %v1935 = vadd.f32 %v1726, %v1934
  %v1936 = vpop.f32.mrb[0].mxu0
  %1937 = vmatprep.mubr.bf16.mxu0 0
  %1938 = vmatmul.mubr.bf16.gmra.mrb[0].mxu0 %v1275
  %v1939 = vpop.f32.mrb[0].mxu0
  %v1940 = vadd.f32 %v1731, %v1939
  %v1941 = vpop.f32.mrb[0].mxu0
  %v1942 = vpop.f32.mrb[0].mxu0
  %v1943 = vadd.f32 %v1734, %v1942
  %v1944 = vpop.f32.mrb[0].mxu0
  %1945 = vmatprep.mubr.bf16.mxu0 0
  %1946 = vmatmul.mubr.bf16.gmra.mrb[0].mxu0 %v1276
  %v1947 = vpop.f32.mrb[0].mxu0
  %v1948 = vadd.f32 %v1739, %v1947
  %v1949 = vpop.f32.mrb[0].mxu0
  %v1950 = vpop.f32.mrb[0].mxu0
  %v1951 = vadd.f32 %v1742, %v1950
  %v1952 = vpop.f32.mrb[0].mxu0
  %1953 = vdwg.mxu0
  %s1954 = scalar_lea.vmem %s4, 128
  %v1955 = vld [vmem:[%s1954] sm:$0xf]
  %v1956 = vld [vmem:[%s1954 + $0x4] sm:$0xf]
  %v1957 = vld [vmem:[%s1954 + $0x8] sm:$0xf]
  %v1958 = vld [vmem:[%s1954 + $0xc] sm:$0xf]
  %v1959 = vld [vmem:[%s1954 + $0x10] sm:$0xf]
  %v1960 = vld [vmem:[%s1954 + $0x14] sm:$0xf]
  %v1961 = vld [vmem:[%s1954 + $0x18] sm:$0xf]
  %v1962 = vld [vmem:[%s1954 + $0x1c] sm:$0xf]
  %v1963 = vld [vmem:[%s1954 + $0x20] sm:$0xf]
  %v1964 = vld [vmem:[%s1954 + $0x24] sm:$0xf]
  %v1965 = vld [vmem:[%s1954 + $0x28] sm:$0xf]
  %v1966 = vld [vmem:[%s1954 + $0x2c] sm:$0xf]
  %v1967 = vld [vmem:[%s1954 + $0x30] sm:$0xf]
  %v1968 = vld [vmem:[%s1954 + $0x34] sm:$0xf]
  %v1969 = vld [vmem:[%s1954 + $0x38] sm:$0xf]
  %v1970 = vld [vmem:[%s1954 + $0x3c] sm:$0xf]
  %v1987 = vunpack.c.l.b16 %v1955
  %v1988 = vunpack.c.l.b16 %v1956
  %v1989 = vunpack.c.l.b16 %v1957
  %v1990 = vunpack.c.l.b16 %v1958
  %v1991 = vunpack.c.l.b16 %v1959
  %v1992 = vunpack.c.l.b16 %v1960
  %v1993 = vunpack.c.l.b16 %v1961
  %v1994 = vunpack.c.l.b16 %v1962
  %v1995 = vunpack.c.l.b16 %v1963
  %v1996 = vunpack.c.l.b16 %v1964
  %v1997 = vunpack.c.l.b16 %v1965
  %v1998 = vunpack.c.l.b16 %v1966
  %v1999 = vunpack.c.l.b16 %v1967
  %v2000 = vunpack.c.l.b16 %v1968
  %v2001 = vunpack.c.l.b16 %v1969
  %v2002 = vunpack.c.l.b16 %v1970
  %v2003 = vpack.c.b16 %v1988, %v1987
  %v2004 = vpack.c.b16 %v1990, %v1989
  %v2005 = vpack.c.b16 %v1992, %v1991
  %v2006 = vpack.c.b16 %v1994, %v1993
  %v2007 = vpack.c.b16 %v1996, %v1995
  %v2008 = vpack.c.b16 %v1998, %v1997
  %v2009 = vpack.c.b16 %v2000, %v1999
  %v2010 = vpack.c.b16 %v2002, %v2001
  %2019 = vmatprep.subr.bf16.mxu0 0
  %2020 = vmatpush1.bf16.msra.mxu0 %v2003
  %2021 = vmatprep.subr.bf16.mxu0 0
  %2022 = vmatpush1.bf16.msra.mxu0 %v2004
  %2023 = vmatprep.subr.bf16.mxu0 0
  %2024 = vmatpush1.bf16.msra.mxu0 %v2005
  %2025 = vmatprep.subr.bf16.mxu0 0
  %2026 = vmatpush1.bf16.msra.mxu0 %v2006
  %2027 = vmatprep.subr.bf16.mxu0 0
  %2028 = vmatpush1.bf16.msra.mxu0 %v2007
  %2029 = vmatprep.subr.bf16.mxu0 0
  %2030 = vmatpush1.bf16.msra.mxu0 %v2008
  %2031 = vmatprep.subr.bf16.mxu0 0
  %2032 = vmatpush1.bf16.msra.mxu0 %v2009
  %2033 = vmatprep.subr.bf16.mxu0 0
  %2034 = vmatpush1.bf16.msra.mxu0 %v2010
  %2035 = vmatprep.subr.bf16.mxu0 0
  %2036 = vmatpush1.bf16.msra.mxu0 0
  %2037 = vmatprep.subr.bf16.mxu0 0
  %2038 = vmatpush1.bf16.msra.mxu0 0
  %2039 = vmatprep.subr.bf16.mxu0 0
  %2040 = vmatpush1.bf16.msra.mxu0 0
  %2041 = vmatprep.subr.bf16.mxu0 0
  %2042 = vmatpush1.bf16.msra.mxu0 0
  %2043 = vmatprep.subr.bf16.mxu0 0
  %2044 = vmatpush1.bf16.msra.mxu0 0
  %2045 = vmatprep.subr.bf16.mxu0 0
  %2046 = vmatpush1.bf16.msra.mxu0 0
  %2047 = vmatprep.subr.bf16.mxu0 0
  %2048 = vmatpush1.bf16.msra.mxu0 0
  %2049 = vmatprep.subr.bf16.mxu0 0
  %2050 = vmatpush1.bf16.msra.mxu0 0
  %2051 = vmatprep.mubr.bf16.mxu0 0
  %2052 = vmatmul.mubr.bf16.gmra.mrb[0].mxu0 0
  %v2053 = vpop.f32.mrb[0].mxu0
  %v2054 = vadd.f32 0.0, %v2053
  %v2055 = vpop.f32.mrb[0].mxu0
  %v2056 = vpop.f32.mrb[0].mxu0
  %v2057 = vadd.f32 0.0, %v2056
  %v2058 = vpop.f32.mrb[0].mxu0
  %2059 = vmatprep.mubr.bf16.mxu0 0
  %2060 = vmatmul.mubr.bf16.gmra.mrb[0].mxu0 %v1487
  %v2061 = vpop.f32.mrb[0].mxu0
  %v2062 = vadd.f32 0.0, %v2061
  %v2063 = vpop.f32.mrb[0].mxu0
  %v2064 = vpop.f32.mrb[0].mxu0
  %v2065 = vadd.f32 0.0, %v2064
  %v2066 = vpop.f32.mrb[0].mxu0
  %2067 = vmatprep.mubr.bf16.mxu0 0
  %2068 = vmatmul.mubr.bf16.gmra.mrb[0].mxu0 %v1488
  %v2069 = vpop.f32.mrb[0].mxu0
  %v2070 = vadd.f32 0.0, %v2069
  %v2071 = vpop.f32.mrb[0].mxu0
  %v2072 = vpop.f32.mrb[0].mxu0
  %v2073 = vadd.f32 0.0, %v2072
  %v2074 = vpop.f32.mrb[0].mxu0
  %2075 = vmatprep.mubr.bf16.mxu0 0
  %2076 = vmatmul.mubr.bf16.gmra.mrb[0].mxu0 %v1489
  %v2077 = vpop.f32.mrb[0].mxu0
  %v2078 = vadd.f32 0.0, %v2077
  %v2079 = vpop.f32.mrb[0].mxu0
  %v2080 = vpop.f32.mrb[0].mxu0
  %v2081 = vadd.f32 0.0, %v2080
  %v2082 = vpop.f32.mrb[0].mxu0
  %2083 = vmatprep.mubr.bf16.mxu0 0
  %2084 = vmatmul.mubr.bf16.gmra.mrb[0].mxu0 %v1490
  %v2085 = vpop.f32.mrb[0].mxu0
  %v2086 = vadd.f32 0.0, %v2085
  %v2087 = vpop.f32.mrb[0].mxu0
  %v2088 = vpop.f32.mrb[0].mxu0
  %v2089 = vadd.f32 0.0, %v2088
  %v2090 = vpop.f32.mrb[0].mxu0
  %2091 = vmatprep.mubr.bf16.mxu0 0
  %2092 = vmatmul.mubr.bf16.gmra.mrb[0].mxu0 %v1491
  %v2093 = vpop.f32.mrb[0].mxu0
  %v2094 = vadd.f32 0.0, %v2093
  %v2095 = vpop.f32.mrb[0].mxu0
  %v2096 = vpop.f32.mrb[0].mxu0
  %v2097 = vadd.f32 0.0, %v2096
  %v2098 = vpop.f32.mrb[0].mxu0
  %2099 = vmatprep.mubr.bf16.mxu0 0
  %2100 = vmatmul.mubr.bf16.gmra.mrb[0].mxu0 %v1492
  %v2101 = vpop.f32.mrb[0].mxu0
  %v2102 = vadd.f32 0.0, %v2101
  %v2103 = vpop.f32.mrb[0].mxu0
  %v2104 = vpop.f32.mrb[0].mxu0
  %v2105 = vadd.f32 0.0, %v2104
  %v2106 = vpop.f32.mrb[0].mxu0
  %2107 = vmatprep.mubr.bf16.mxu0 0
  %2108 = vmatmul.mubr.bf16.gmra.mrb[0].mxu0 %v1493
  %v2109 = vpop.f32.mrb[0].mxu0
  %v2110 = vadd.f32 0.0, %v2109
  %v2111 = vpop.f32.mrb[0].mxu0
  %v2112 = vpop.f32.mrb[0].mxu0
  %v2113 = vadd.f32 0.0, %v2112
  %v2114 = vpop.f32.mrb[0].mxu0
  %2115 = vmatprep.mubr.bf16.mxu0 0
  %2116 = vmatmul.mubr.bf16.gmra.mrb[0].mxu0 %v1494
  %v2117 = vpop.f32.mrb[0].mxu0
  %v2118 = vadd.f32 0.0, %v2117
  %v2119 = vpop.f32.mrb[0].mxu0
  %v2120 = vpop.f32.mrb[0].mxu0
  %v2121 = vadd.f32 0.0, %v2120
  %v2122 = vpop.f32.mrb[0].mxu0
  %2123 = vmatprep.mubr.bf16.mxu0 0
  %2124 = vmatmul.mubr.bf16.gmra.mrb[0].mxu0 %v1495
  %v2125 = vpop.f32.mrb[0].mxu0
  %v2126 = vadd.f32 0.0, %v2125
  %v2127 = vpop.f32.mrb[0].mxu0
  %v2128 = vpop.f32.mrb[0].mxu0
  %v2129 = vadd.f32 0.0, %v2128
  %v2130 = vpop.f32.mrb[0].mxu0
  %2131 = vmatprep.mubr.bf16.mxu0 0
  %2132 = vmatmul.mubr.bf16.gmra.mrb[0].mxu0 %v1496
  %v2133 = vpop.f32.mrb[0].mxu0
  %v2134 = vadd.f32 0.0, %v2133
  %v2135 = vpop.f32.mrb[0].mxu0
  %v2136 = vpop.f32.mrb[0].mxu0
  %v2137 = vadd.f32 0.0, %v2136
  %v2138 = vpop.f32.mrb[0].mxu0
  %2139 = vmatprep.mubr.bf16.mxu0 0
  %2140 = vmatmul.mubr.bf16.gmra.mrb[0].mxu0 %v1497
  %v2141 = vpop.f32.mrb[0].mxu0
  %v2142 = vadd.f32 0.0, %v2141
  %v2143 = vpop.f32.mrb[0].mxu0
  %v2144 = vpop.f32.mrb[0].mxu0
  %v2145 = vadd.f32 0.0, %v2144
  %v2146 = vpop.f32.mrb[0].mxu0
  %2147 = vmatprep.mubr.bf16.mxu0 0
  %2148 = vmatmul.mubr.bf16.gmra.mrb[0].mxu0 %v1498
  %v2149 = vpop.f32.mrb[0].mxu0
  %v2150 = vadd.f32 0.0, %v2149
  %v2151 = vpop.f32.mrb[0].mxu0
  %v2152 = vpop.f32.mrb[0].mxu0
  %v2153 = vadd.f32 0.0, %v2152
  %v2154 = vpop.f32.mrb[0].mxu0
  %2155 = vmatprep.mubr.bf16.mxu0 0
  %2156 = vmatmul.mubr.bf16.gmra.mrb[0].mxu0 %v1499
  %v2157 = vpop.f32.mrb[0].mxu0
  %v2158 = vadd.f32 0.0, %v2157
  %v2159 = vpop.f32.mrb[0].mxu0
  %v2160 = vpop.f32.mrb[0].mxu0
  %v2161 = vadd.f32 0.0, %v2160
  %v2162 = vpop.f32.mrb[0].mxu0
  %2163 = vmatprep.mubr.bf16.mxu0 0
  %2164 = vmatmul.mubr.bf16.gmra.mrb[0].mxu0 %v1500
  %v2165 = vpop.f32.mrb[0].mxu0
  %v2166 = vadd.f32 0.0, %v2165
  %v2167 = vpop.f32.mrb[0].mxu0
  %v2168 = vpop.f32.mrb[0].mxu0
  %v2169 = vadd.f32 0.0, %v2168
  %v2170 = vpop.f32.mrb[0].mxu0
  %2171 = vmatprep.mubr.bf16.mxu0 0
  %2172 = vmatmul.mubr.bf16.gmra.mrb[0].mxu0 %v1501
  %v2173 = vpop.f32.mrb[0].mxu0
  %v2174 = vadd.f32 0.0, %v2173
  %v2175 = vpop.f32.mrb[0].mxu0
  %v2176 = vpop.f32.mrb[0].mxu0
  %v2177 = vadd.f32 0.0, %v2176
  %v2178 = vpop.f32.mrb[0].mxu0
  %2179 = vdwg.mxu0
  %v2180 = vadd.f32 %v1828, %v2054
  %v2181 = vadd.f32 %v1831, %v2057
  %v2182 = vadd.f32 %v1836, %v2062
  %v2183 = vadd.f32 %v1839, %v2065
  %v2184 = vadd.f32 %v1844, %v2070
  %v2185 = vadd.f32 %v1847, %v2073
  %v2186 = vadd.f32 %v1852, %v2078
  %v2187 = vadd.f32 %v1855, %v2081
  %v2188 = vadd.f32 %v1860, %v2086
  %v2189 = vadd.f32 %v1863, %v2089
  %v2190 = vadd.f32 %v1868, %v2094
  %v2191 = vadd.f32 %v1871, %v2097
  %v2192 = vadd.f32 %v1876, %v2102
  %v2193 = vadd.f32 %v1879, %v2105
  %v2194 = vadd.f32 %v1884, %v2110
  %v2195 = vadd.f32 %v1887, %v2113
  %v2196 = vadd.f32 %v1892, %v2118
  %v2197 = vadd.f32 %v1895, %v2121
  %v2198 = vadd.f32 %v1900, %v2126
  %v2199 = vadd.f32 %v1903, %v2129
  %v2200 = vadd.f32 %v1908, %v2134
  %v2201 = vadd.f32 %v1911, %v2137
  %v2202 = vadd.f32 %v1916, %v2142
  %v2203 = vadd.f32 %v1919, %v2145
  %v2204 = vadd.f32 %v1924, %v2150
  %v2205 = vadd.f32 %v1927, %v2153
  %v2206 = vadd.f32 %v1932, %v2158
  %v2207 = vadd.f32 %v1935, %v2161
  %v2208 = vadd.f32 %v1940, %v2166
  %v2209 = vadd.f32 %v1943, %v2169
  %v2210 = vadd.f32 %v1948, %v2174
  %v2211 = vadd.f32 %v1951, %v2177
  %s2212 = scalar_lea.vmem %s4, 192
  %v2213 = vld [vmem:[%s2212] sm:$0xf]
  %v2214 = vld [vmem:[%s2212 + $0x4] sm:$0xf]
  %v2215 = vld [vmem:[%s2212 + $0x8] sm:$0xf]
  %v2216 = vld [vmem:[%s2212 + $0xc] sm:$0xf]
  %v2217 = vld [vmem:[%s2212 + $0x10] sm:$0xf]
  %v2218 = vld [vmem:[%s2212 + $0x14] sm:$0xf]
  %v2219 = vld [vmem:[%s2212 + $0x18] sm:$0xf]
  %v2220 = vld [vmem:[%s2212 + $0x1c] sm:$0xf]
  %v2221 = vld [vmem:[%s2212 + $0x20] sm:$0xf]
  %v2222 = vld [vmem:[%s2212 + $0x24] sm:$0xf]
  %v2223 = vld [vmem:[%s2212 + $0x28] sm:$0xf]
  %v2224 = vld [vmem:[%s2212 + $0x2c] sm:$0xf]
  %v2225 = vld [vmem:[%s2212 + $0x30] sm:$0xf]
  %v2226 = vld [vmem:[%s2212 + $0x34] sm:$0xf]
  %v2227 = vld [vmem:[%s2212 + $0x38] sm:$0xf]
  %v2228 = vld [vmem:[%s2212 + $0x3c] sm:$0xf]
  %v2245 = vunpack.c.l.b16 %v2213
  %v2246 = vunpack.c.l.b16 %v2214
  %v2247 = vunpack.c.l.b16 %v2215
  %v2248 = vunpack.c.l.b16 %v2216
  %v2249 = vunpack.c.l.b16 %v2217
  %v2250 = vunpack.c.l.b16 %v2218
  %v2251 = vunpack.c.l.b16 %v2219
  %v2252 = vunpack.c.l.b16 %v2220
  %v2253 = vunpack.c.l.b16 %v2221
  %v2254 = vunpack.c.l.b16 %v2222
  %v2255 = vunpack.c.l.b16 %v2223
  %v2256 = vunpack.c.l.b16 %v2224
  %v2257 = vunpack.c.l.b16 %v2225
  %v2258 = vunpack.c.l.b16 %v2226
  %v2259 = vunpack.c.l.b16 %v2227
  %v2260 = vunpack.c.l.b16 %v2228
  %v2261 = vpack.c.b16 %v2246, %v2245
  %v2262 = vpack.c.b16 %v2248, %v2247
  %v2263 = vpack.c.b16 %v2250, %v2249
  %v2264 = vpack.c.b16 %v2252, %v2251
  %v2265 = vpack.c.b16 %v2254, %v2253
  %v2266 = vpack.c.b16 %v2256, %v2255
  %v2267 = vpack.c.b16 %v2258, %v2257
  %v2268 = vpack.c.b16 %v2260, %v2259
  %2277 = vmatprep.subr.bf16.mxu0 0
  %2278 = vmatpush1.bf16.msra.mxu0 %v2261
  %2279 = vmatprep.subr.bf16.mxu0 0
  %2280 = vmatpush1.bf16.msra.mxu0 %v2262
  %2281 = vmatprep.subr.bf16.mxu0 0
  %2282 = vmatpush1.bf16.msra.mxu0 %v2263
  %2283 = vmatprep.subr.bf16.mxu0 0
  %2284 = vmatpush1.bf16.msra.mxu0 %v2264
  %2285 = vmatprep.subr.bf16.mxu0 0
  %2286 = vmatpush1.bf16.msra.mxu0 %v2265
  %2287 = vmatprep.subr.bf16.mxu0 0
  %2288 = vmatpush1.bf16.msra.mxu0 %v2266
  %2289 = vmatprep.subr.bf16.mxu0 0
  %2290 = vmatpush1.bf16.msra.mxu0 %v2267
  %2291 = vmatprep.subr.bf16.mxu0 0
  %2292 = vmatpush1.bf16.msra.mxu0 %v2268
  %2293 = vmatprep.subr.bf16.mxu0 0
  %2294 = vmatpush1.bf16.msra.mxu0 0
  %2295 = vmatprep.subr.bf16.mxu0 0
  %2296 = vmatpush1.bf16.msra.mxu0 0
  %2297 = vmatprep.subr.bf16.mxu0 0
  %2298 = vmatpush1.bf16.msra.mxu0 0
  %2299 = vmatprep.subr.bf16.mxu0 0
  %2300 = vmatpush1.bf16.msra.mxu0 0
  %2301 = vmatprep.subr.bf16.mxu0 0
  %2302 = vmatpush1.bf16.msra.mxu0 0
  %2303 = vmatprep.subr.bf16.mxu0 0
  %2304 = vmatpush1.bf16.msra.mxu0 0
  %2305 = vmatprep.subr.bf16.mxu0 0
  %2306 = vmatpush1.bf16.msra.mxu0 0
  %2307 = vmatprep.subr.bf16.mxu0 0
  %2308 = vmatpush1.bf16.msra.mxu0 0
  %2309 = vmatprep.mubr.bf16.mxu0 0
  %2310 = vmatmul.mubr.bf16.gmra.mrb[0].mxu0 %v1262
  %v2311 = vpop.f32.mrb[0].mxu0
  %v2312 = vadd.f32 0.0, %v2311
  %v2313 = vpop.f32.mrb[0].mxu0
  %v2314 = vpop.f32.mrb[0].mxu0
  %v2315 = vadd.f32 0.0, %v2314
  %v2316 = vpop.f32.mrb[0].mxu0
  %2317 = vmatprep.mubr.bf16.mxu0 0
  %2318 = vmatmul.mubr.bf16.gmra.mrb[0].mxu0 %v1263
  %v2319 = vpop.f32.mrb[0].mxu0
  %v2320 = vadd.f32 0.0, %v2319
  %v2321 = vpop.f32.mrb[0].mxu0
  %v2322 = vpop.f32.mrb[0].mxu0
  %v2323 = vadd.f32 0.0, %v2322
  %v2324 = vpop.f32.mrb[0].mxu0
  %2325 = vmatprep.mubr.bf16.mxu0 0
  %2326 = vmatmul.mubr.bf16.gmra.mrb[0].mxu0 %v1264
  %v2327 = vpop.f32.mrb[0].mxu0
  %v2328 = vadd.f32 0.0, %v2327
  %v2329 = vpop.f32.mrb[0].mxu0
  %v2330 = vpop.f32.mrb[0].mxu0
  %v2331 = vadd.f32 0.0, %v2330
  %v2332 = vpop.f32.mrb[0].mxu0
  %2333 = vmatprep.mubr.bf16.mxu0 0
  %2334 = vmatmul.mubr.bf16.gmra.mrb[0].mxu0 %v1265
  %v2335 = vpop.f32.mrb[0].mxu0
  %v2336 = vadd.f32 0.0, %v2335
  %v2337 = vpop.f32.mrb[0].mxu0
  %v2338 = vpop.f32.mrb[0].mxu0
  %v2339 = vadd.f32 0.0, %v2338
  %v2340 = vpop.f32.mrb[0].mxu0
  %2341 = vmatprep.mubr.bf16.mxu0 0
  %2342 = vmatmul.mubr.bf16.gmra.mrb[0].mxu0 %v1266
  %v2343 = vpop.f32.mrb[0].mxu0
  %v2344 = vadd.f32 0.0, %v2343
  %v2345 = vpop.f32.mrb[0].mxu0
  %v2346 = vpop.f32.mrb[0].mxu0
  %v2347 = vadd.f32 0.0, %v2346
  %v2348 = vpop.f32.mrb[0].mxu0
  %2349 = vmatprep.mubr.bf16.mxu0 0
  %2350 = vmatmul.mubr.bf16.gmra.mrb[0].mxu0 %v1267
  %v2351 = vpop.f32.mrb[0].mxu0
  %v2352 = vadd.f32 0.0, %v2351
  %v2353 = vpop.f32.mrb[0].mxu0
  %v2354 = vpop.f32.mrb[0].mxu0
  %v2355 = vadd.f32 0.0, %v2354
  %v2356 = vpop.f32.mrb[0].mxu0
  %2357 = vmatprep.mubr.bf16.mxu0 0
  %2358 = vmatmul.mubr.bf16.gmra.mrb[0].mxu0 %v1268
  %v2359 = vpop.f32.mrb[0].mxu0
  %v2360 = vadd.f32 0.0, %v2359
  %v2361 = vpop.f32.mrb[0].mxu0
  %v2362 = vpop.f32.mrb[0].mxu0
  %v2363 = vadd.f32 0.0, %v2362
  %v2364 = vpop.f32.mrb[0].mxu0
  %2365 = vmatprep.mubr.bf16.mxu0 0
  %2366 = vmatmul.mubr.bf16.gmra.mrb[0].mxu0 %v1269
  %v2367 = vpop.f32.mrb[0].mxu0
  %v2368 = vadd.f32 0.0, %v2367
  %v2369 = vpop.f32.mrb[0].mxu0
  %v2370 = vpop.f32.mrb[0].mxu0
  %v2371 = vadd.f32 0.0, %v2370
  %v2372 = vpop.f32.mrb[0].mxu0
  %2373 = vmatprep.mubr.bf16.mxu0 0
  %2374 = vmatmul.mubr.bf16.gmra.mrb[0].mxu0 %v1270
  %v2375 = vpop.f32.mrb[0].mxu0
  %v2376 = vadd.f32 0.0, %v2375
  %v2377 = vpop.f32.mrb[0].mxu0
  %v2378 = vpop.f32.mrb[0].mxu0
  %v2379 = vadd.f32 0.0, %v2378
  %v2380 = vpop.f32.mrb[0].mxu0
  %2381 = vmatprep.mubr.bf16.mxu0 0
  %2382 = vmatmul.mubr.bf16.gmra.mrb[0].mxu0 %v1271
  %v2383 = vpop.f32.mrb[0].mxu0
  %v2384 = vadd.f32 0.0, %v2383
  %v2385 = vpop.f32.mrb[0].mxu0
  %v2386 = vpop.f32.mrb[0].mxu0
  %v2387 = vadd.f32 0.0, %v2386
  %v2388 = vpop.f32.mrb[0].mxu0
  %2389 = vmatprep.mubr.bf16.mxu0 0
  %2390 = vmatmul.mubr.bf16.gmra.mrb[0].mxu0 %v1272
  %v2391 = vpop.f32.mrb[0].mxu0
  %v2392 = vadd.f32 0.0, %v2391
  %v2393 = vpop.f32.mrb[0].mxu0
  %v2394 = vpop.f32.mrb[0].mxu0
  %v2395 = vadd.f32 0.0, %v2394
  %v2396 = vpop.f32.mrb[0].mxu0
  %2397 = vmatprep.mubr.bf16.mxu0 0
  %2398 = vmatmul.mubr.bf16.gmra.mrb[0].mxu0 %v1273
  %v2399 = vpop.f32.mrb[0].mxu0
  %v2400 = vadd.f32 0.0, %v2399
  %v2401 = vpop.f32.mrb[0].mxu0
  %v2402 = vpop.f32.mrb[0].mxu0
  %v2403 = vadd.f32 0.0, %v2402
  %v2404 = vpop.f32.mrb[0].mxu0
  %2405 = vmatprep.mubr.bf16.mxu0 0
  %2406 = vmatmul.mubr.bf16.gmra.mrb[0].mxu0 %v1274
  %v2407 = vpop.f32.mrb[0].mxu0
  %v2408 = vadd.f32 0.0, %v2407
  %v2409 = vpop.f32.mrb[0].mxu0
  %v2410 = vpop.f32.mrb[0].mxu0
  %v2411 = vadd.f32 0.0, %v2410
  %v2412 = vpop.f32.mrb[0].mxu0
  %2413 = vmatprep.mubr.bf16.mxu0 0
  %2414 = vmatmul.mubr.bf16.gmra.mrb[0].mxu0 %v1275
  %v2415 = vpop.f32.mrb[0].mxu0
  %v2416 = vadd.f32 0.0, %v2415
  %v2417 = vpop.f32.mrb[0].mxu0
  %v2418 = vpop.f32.mrb[0].mxu0
  %v2419 = vadd.f32 0.0, %v2418
  %v2420 = vpop.f32.mrb[0].mxu0
  %2421 = vmatprep.mubr.bf16.mxu0 0
  %2422 = vmatmul.mubr.bf16.gmra.mrb[0].mxu0 %v1276
  %v2423 = vpop.f32.mrb[0].mxu0
  %v2424 = vadd.f32 0.0, %v2423
  %v2425 = vpop.f32.mrb[0].mxu0
  %v2426 = vpop.f32.mrb[0].mxu0
  %v2427 = vadd.f32 0.0, %v2426
  %v2428 = vpop.f32.mrb[0].mxu0
  %2429 = vmatprep.mubr.bf16.mxu0 0
  %2430 = vmatmul.mubr.bf16.gmra.mrb[0].mxu0 %v1277
  %v2431 = vpop.f32.mrb[0].mxu0
  %v2432 = vadd.f32 0.0, %v2431
  %v2433 = vpop.f32.mrb[0].mxu0
  %v2434 = vpop.f32.mrb[0].mxu0
  %v2435 = vadd.f32 0.0, %v2434
  %v2436 = vpop.f32.mrb[0].mxu0
  %2437 = vdwg.mxu0
  %v2438 = vadd.f32 %v2180, %v2312
  %v2439 = vadd.f32 %v2181, %v2315
  %v2440 = vadd.f32 %v2182, %v2320
  %v2441 = vadd.f32 %v2183, %v2323
  %v2442 = vadd.f32 %v2184, %v2328
  %v2443 = vadd.f32 %v2185, %v2331
  %v2444 = vadd.f32 %v2186, %v2336
  %v2445 = vadd.f32 %v2187, %v2339
  %v2446 = vadd.f32 %v2188, %v2344
  %v2447 = vadd.f32 %v2189, %v2347
  %v2448 = vadd.f32 %v2190, %v2352
  %v2449 = vadd.f32 %v2191, %v2355
  %v2450 = vadd.f32 %v2192, %v2360
  %v2451 = vadd.f32 %v2193, %v2363
  %v2452 = vadd.f32 %v2194, %v2368
  %v2453 = vadd.f32 %v2195, %v2371
  %v2454 = vadd.f32 %v2196, %v2376
  %v2455 = vadd.f32 %v2197, %v2379
  %v2456 = vadd.f32 %v2198, %v2384
  %v2457 = vadd.f32 %v2199, %v2387
  %v2458 = vadd.f32 %v2200, %v2392
  %v2459 = vadd.f32 %v2201, %v2395
  %v2460 = vadd.f32 %v2202, %v2400
  %v2461 = vadd.f32 %v2203, %v2403
  %v2462 = vadd.f32 %v2204, %v2408
  %v2463 = vadd.f32 %v2205, %v2411
  %v2464 = vadd.f32 %v2206, %v2416
  %v2465 = vadd.f32 %v2207, %v2419
  %v2466 = vadd.f32 %v2208, %v2424
  %v2467 = vadd.f32 %v2209, %v2427
  %v2468 = vadd.f32 %v2210, %v2432
  %v2469 = vadd.f32 %v2211, %v2435
  %s2470 = scalar_lea.vmem %s4, 256
  %v2471 = vld [vmem:[%s2470] sm:$0xf]
  %v2472 = vld [vmem:[%s2470 + $0x4] sm:$0xf]
  %v2473 = vld [vmem:[%s2470 + $0x8] sm:$0xf]
  %v2474 = vld [vmem:[%s2470 + $0xc] sm:$0xf]
  %v2475 = vld [vmem:[%s2470 + $0x10] sm:$0xf]
  %v2476 = vld [vmem:[%s2470 + $0x14] sm:$0xf]
  %v2477 = vld [vmem:[%s2470 + $0x18] sm:$0xf]
  %v2478 = vld [vmem:[%s2470 + $0x1c] sm:$0xf]
  %v2479 = vld [vmem:[%s2470 + $0x20] sm:$0xf]
  %v2480 = vld [vmem:[%s2470 + $0x24] sm:$0xf]
  %v2481 = vld [vmem:[%s2470 + $0x28] sm:$0xf]
  %v2482 = vld [vmem:[%s2470 + $0x2c] sm:$0xf]
  %v2483 = vld [vmem:[%s2470 + $0x30] sm:$0xf]
  %v2484 = vld [vmem:[%s2470 + $0x34] sm:$0xf]
  %v2485 = vld [vmem:[%s2470 + $0x38] sm:$0xf]
  %v2486 = vld [vmem:[%s2470 + $0x3c] sm:$0xf]
  %v2503 = vunpack.c.l.b16 %v2471
  %v2504 = vunpack.c.l.b16 %v2472
  %v2505 = vunpack.c.l.b16 %v2473
  %v2506 = vunpack.c.l.b16 %v2474
  %v2507 = vunpack.c.l.b16 %v2475
  %v2508 = vunpack.c.l.b16 %v2476
  %v2509 = vunpack.c.l.b16 %v2477
  %v2510 = vunpack.c.l.b16 %v2478
  %v2511 = vunpack.c.l.b16 %v2479
  %v2512 = vunpack.c.l.b16 %v2480
  %v2513 = vunpack.c.l.b16 %v2481
  %v2514 = vunpack.c.l.b16 %v2482
  %v2515 = vunpack.c.l.b16 %v2483
  %v2516 = vunpack.c.l.b16 %v2484
  %v2517 = vunpack.c.l.b16 %v2485
  %v2518 = vunpack.c.l.b16 %v2486
  %v2519 = vpack.c.b16 %v2504, %v2503
  %v2520 = vpack.c.b16 %v2506, %v2505
  %v2521 = vpack.c.b16 %v2508, %v2507
  %v2522 = vpack.c.b16 %v2510, %v2509
  %v2523 = vpack.c.b16 %v2512, %v2511
  %v2524 = vpack.c.b16 %v2514, %v2513
  %v2525 = vpack.c.b16 %v2516, %v2515
  %v2526 = vpack.c.b16 %v2518, %v2517
  %2535 = vmatprep.subr.bf16.mxu0 0
  %2536 = vmatpush1.bf16.msra.mxu0 %v2519
  %2537 = vmatprep.subr.bf16.mxu0 0
  %2538 = vmatpush1.bf16.msra.mxu0 %v2520
  %2539 = vmatprep.subr.bf16.mxu0 0
  %2540 = vmatpush1.bf16.msra.mxu0 %v2521
  %2541 = vmatprep.subr.bf16.mxu0 0
  %2542 = vmatpush1.bf16.msra.mxu0 %v2522
  %2543 = vmatprep.subr.bf16.mxu0 0
  %2544 = vmatpush1.bf16.msra.mxu0 %v2523
  %2545 = vmatprep.subr.bf16.mxu0 0
  %2546 = vmatpush1.bf16.msra.mxu0 %v2524
  %2547 = vmatprep.subr.bf16.mxu0 0
  %2548 = vmatpush1.bf16.msra.mxu0 %v2525
  %2549 = vmatprep.subr.bf16.mxu0 0
  %2550 = vmatpush1.bf16.msra.mxu0 %v2526
  %2551 = vmatprep.subr.bf16.mxu0 0
  %2552 = vmatpush1.bf16.msra.mxu0 0
  %2553 = vmatprep.subr.bf16.mxu0 0
  %2554 = vmatpush1.bf16.msra.mxu0 0
  %2555 = vmatprep.subr.bf16.mxu0 0
  %2556 = vmatpush1.bf16.msra.mxu0 0
  %2557 = vmatprep.subr.bf16.mxu0 0
  %2558 = vmatpush1.bf16.msra.mxu0 0
  %2559 = vmatprep.subr.bf16.mxu0 0
  %2560 = vmatpush1.bf16.msra.mxu0 0
  %2561 = vmatprep.subr.bf16.mxu0 0
  %2562 = vmatpush1.bf16.msra.mxu0 0
  %2563 = vmatprep.subr.bf16.mxu0 0
  %2564 = vmatpush1.bf16.msra.mxu0 0
  %2565 = vmatprep.subr.bf16.mxu0 0
  %2566 = vmatpush1.bf16.msra.mxu0 0
  %2567 = vmatprep.mubr.bf16.mxu0 0
  %2568 = vmatmul.mubr.bf16.gmra.mrb[0].mxu0 %v1278
  %v2569 = vpop.f32.mrb[0].mxu0
  %v2570 = vadd.f32 0.0, %v2569
  %v2571 = vpop.f32.mrb[0].mxu0
  %v2572 = vpop.f32.mrb[0].mxu0
  %v2573 = vadd.f32 0.0, %v2572
  %v2574 = vpop.f32.mrb[0].mxu0
  %2575 = vmatprep.mubr.bf16.mxu0 0
  %2576 = vmatmul.mubr.bf16.gmra.mrb[0].mxu0 %v1279
  %v2577 = vpop.f32.mrb[0].mxu0
  %v2578 = vadd.f32 0.0, %v2577
  %v2579 = vpop.f32.mrb[0].mxu0
  %v2580 = vpop.f32.mrb[0].mxu0
  %v2581 = vadd.f32 0.0, %v2580
  %v2582 = vpop.f32.mrb[0].mxu0
  %2583 = vmatprep.mubr.bf16.mxu0 0
  %2584 = vmatmul.mubr.bf16.gmra.mrb[0].mxu0 %v1280
  %v2585 = vpop.f32.mrb[0].mxu0
  %v2586 = vadd.f32 0.0, %v2585
  %v2587 = vpop.f32.mrb[0].mxu0
  %v2588 = vpop.f32.mrb[0].mxu0
  %v2589 = vadd.f32 0.0, %v2588
  %v2590 = vpop.f32.mrb[0].mxu0
  %2591 = vmatprep.mubr.bf16.mxu0 0
  %2592 = vmatmul.mubr.bf16.gmra.mrb[0].mxu0 %v1281
  %v2593 = vpop.f32.mrb[0].mxu0
  %v2594 = vadd.f32 0.0, %v2593
  %v2595 = vpop.f32.mrb[0].mxu0
  %v2596 = vpop.f32.mrb[0].mxu0
  %v2597 = vadd.f32 0.0, %v2596
  %v2598 = vpop.f32.mrb[0].mxu0
  %2599 = vmatprep.mubr.bf16.mxu0 0
  %2600 = vmatmul.mubr.bf16.gmra.mrb[0].mxu0 %v1282
  %v2601 = vpop.f32.mrb[0].mxu0
  %v2602 = vadd.f32 0.0, %v2601
  %v2603 = vpop.f32.mrb[0].mxu0
  %v2604 = vpop.f32.mrb[0].mxu0
  %v2605 = vadd.f32 0.0, %v2604
  %v2606 = vpop.f32.mrb[0].mxu0
  %2607 = vmatprep.mubr.bf16.mxu0 0
  %2608 = vmatmul.mubr.bf16.gmra.mrb[0].mxu0 %v1283
  %v2609 = vpop.f32.mrb[0].mxu0
  %v2610 = vadd.f32 0.0, %v2609
  %v2611 = vpop.f32.mrb[0].mxu0
  %v2612 = vpop.f32.mrb[0].mxu0
  %v2613 = vadd.f32 0.0, %v2612
  %v2614 = vpop.f32.mrb[0].mxu0
  %2615 = vmatprep.mubr.bf16.mxu0 0
  %2616 = vmatmul.mubr.bf16.gmra.mrb[0].mxu0 %v1284
  %v2617 = vpop.f32.mrb[0].mxu0
  %v2618 = vadd.f32 0.0, %v2617
  %v2619 = vpop.f32.mrb[0].mxu0
  %v2620 = vpop.f32.mrb[0].mxu0
  %v2621 = vadd.f32 0.0, %v2620
  %v2622 = vpop.f32.mrb[0].mxu0
  %2623 = vmatprep.mubr.bf16.mxu0 0
  %2624 = vmatmul.mubr.bf16.gmra.mrb[0].mxu0 %v1285
  %v2625 = vpop.f32.mrb[0].mxu0
  %v2626 = vadd.f32 0.0, %v2625
  %v2627 = vpop.f32.mrb[0].mxu0
  %v2628 = vpop.f32.mrb[0].mxu0
  %v2629 = vadd.f32 0.0, %v2628
  %v2630 = vpop.f32.mrb[0].mxu0
  %2631 = vmatprep.mubr.bf16.mxu0 0
  %2632 = vmatmul.mubr.bf16.gmra.mrb[0].mxu0 %v1286
  %v2633 = vpop.f32.mrb[0].mxu0
  %v2634 = vadd.f32 0.0, %v2633
  %v2635 = vpop.f32.mrb[0].mxu0
  %v2636 = vpop.f32.mrb[0].mxu0
  %v2637 = vadd.f32 0.0, %v2636
  %v2638 = vpop.f32.mrb[0].mxu0
  %2639 = vmatprep.mubr.bf16.mxu0 0
  %2640 = vmatmul.mubr.bf16.gmra.mrb[0].mxu0 %v1287
  %v2641 = vpop.f32.mrb[0].mxu0
  %v2642 = vadd.f32 0.0, %v2641
  %v2643 = vpop.f32.mrb[0].mxu0
  %v2644 = vpop.f32.mrb[0].mxu0
  %v2645 = vadd.f32 0.0, %v2644
  %v2646 = vpop.f32.mrb[0].mxu0
  %2647 = vmatprep.mubr.bf16.mxu0 0
  %2648 = vmatmul.mubr.bf16.gmra.mrb[0].mxu0 %v1288
  %v2649 = vpop.f32.mrb[0].mxu0
  %v2650 = vadd.f32 0.0, %v2649
  %v2651 = vpop.f32.mrb[0].mxu0
  %v2652 = vpop.f32.mrb[0].mxu0
  %v2653 = vadd.f32 0.0, %v2652
  %v2654 = vpop.f32.mrb[0].mxu0
  %2655 = vmatprep.mubr.bf16.mxu0 0
  %2656 = vmatmul.mubr.bf16.gmra.mrb[0].mxu0 %v1289
  %v2657 = vpop.f32.mrb[0].mxu0
  %v2658 = vadd.f32 0.0, %v2657
  %v2659 = vpop.f32.mrb[0].mxu0
  %v2660 = vpop.f32.mrb[0].mxu0
  %v2661 = vadd.f32 0.0, %v2660
  %v2662 = vpop.f32.mrb[0].mxu0
  %2663 = vmatprep.mubr.bf16.mxu0 0
  %2664 = vmatmul.mubr.bf16.gmra.mrb[0].mxu0 %v1290
  %v2665 = vpop.f32.mrb[0].mxu0
  %v2666 = vadd.f32 0.0, %v2665
  %v2667 = vpop.f32.mrb[0].mxu0
  %v2668 = vpop.f32.mrb[0].mxu0
  %v2669 = vadd.f32 0.0, %v2668
  %v2670 = vpop.f32.mrb[0].mxu0
  %2671 = vmatprep.mubr.bf16.mxu0 0
  %2672 = vmatmul.mubr.bf16.gmra.mrb[0].mxu0 %v1291
  %v2673 = vpop.f32.mrb[0].mxu0
  %v2674 = vadd.f32 0.0, %v2673
  %v2675 = vpop.f32.mrb[0].mxu0
  %v2676 = vpop.f32.mrb[0].mxu0
  %v2677 = vadd.f32 0.0, %v2676
  %v2678 = vpop.f32.mrb[0].mxu0
  %2679 = vmatprep.mubr.bf16.mxu0 0
  %2680 = vmatmul.mubr.bf16.gmra.mrb[0].mxu0 %v1292
  %v2681 = vpop.f32.mrb[0].mxu0
  %v2682 = vadd.f32 0.0, %v2681
  %v2683 = vpop.f32.mrb[0].mxu0
  %v2684 = vpop.f32.mrb[0].mxu0
  %v2685 = vadd.f32 0.0, %v2684
  %v2686 = vpop.f32.mrb[0].mxu0
  %2687 = vmatprep.mubr.bf16.mxu0 0
  %2688 = vmatmul.mubr.bf16.gmra.mrb[0].mxu0 %v1293
  %v2689 = vpop.f32.mrb[0].mxu0
  %v2690 = vadd.f32 0.0, %v2689
  %v2691 = vpop.f32.mrb[0].mxu0
  %v2692 = vpop.f32.mrb[0].mxu0
  %v2693 = vadd.f32 0.0, %v2692
  %v2694 = vpop.f32.mrb[0].mxu0
  %2695 = vdwg.mxu0
  %v2696 = vadd.f32 %v2438, %v2570
  %v2697 = vadd.f32 %v2439, %v2573
  %v2698 = vadd.f32 %v2440, %v2578
  %v2699 = vadd.f32 %v2441, %v2581
  %v2700 = vadd.f32 %v2442, %v2586
  %v2701 = vadd.f32 %v2443, %v2589
  %v2702 = vadd.f32 %v2444, %v2594
  %v2703 = vadd.f32 %v2445, %v2597
  %v2704 = vadd.f32 %v2446, %v2602
  %v2705 = vadd.f32 %v2447, %v2605
  %v2706 = vadd.f32 %v2448, %v2610
  %v2707 = vadd.f32 %v2449, %v2613
  %v2708 = vadd.f32 %v2450, %v2618
  %v2709 = vadd.f32 %v2451, %v2621
  %v2710 = vadd.f32 %v2452, %v2626
  %v2711 = vadd.f32 %v2453, %v2629
  %v2712 = vadd.f32 %v2454, %v2634
  %v2713 = vadd.f32 %v2455, %v2637
  %v2714 = vadd.f32 %v2456, %v2642
  %v2715 = vadd.f32 %v2457, %v2645
  %v2716 = vadd.f32 %v2458, %v2650
  %v2717 = vadd.f32 %v2459, %v2653
  %v2718 = vadd.f32 %v2460, %v2658
  %v2719 = vadd.f32 %v2461, %v2661
  %v2720 = vadd.f32 %v2462, %v2666
  %v2721 = vadd.f32 %v2463, %v2669
  %v2722 = vadd.f32 %v2464, %v2674
  %v2723 = vadd.f32 %v2465, %v2677
  %v2724 = vadd.f32 %v2466, %v2682
  %v2725 = vadd.f32 %v2467, %v2685
  %v2726 = vadd.f32 %v2468, %v2690
  %v2727 = vadd.f32 %v2469, %v2693
  %s2728 = scalar_lea.vmem %s4, 320
  %v2729 = vld [vmem:[%s2728] sm:$0xf]
  %v2730 = vld [vmem:[%s2728 + $0x4] sm:$0xf]
  %v2731 = vld [vmem:[%s2728 + $0x8] sm:$0xf]
  %v2732 = vld [vmem:[%s2728 + $0xc] sm:$0xf]
  %v2733 = vld [vmem:[%s2728 + $0x10] sm:$0xf]
  %v2734 = vld [vmem:[%s2728 + $0x14] sm:$0xf]
  %v2735 = vld [vmem:[%s2728 + $0x18] sm:$0xf]
  %v2736 = vld [vmem:[%s2728 + $0x1c] sm:$0xf]
  %v2737 = vld [vmem:[%s2728 + $0x20] sm:$0xf]
  %v2738 = vld [vmem:[%s2728 + $0x24] sm:$0xf]
  %v2739 = vld [vmem:[%s2728 + $0x28] sm:$0xf]
  %v2740 = vld [vmem:[%s2728 + $0x2c] sm:$0xf]
  %v2741 = vld [vmem:[%s2728 + $0x30] sm:$0xf]
  %v2742 = vld [vmem:[%s2728 + $0x34] sm:$0xf]
  %v2743 = vld [vmem:[%s2728 + $0x38] sm:$0xf]
  %v2744 = vld [vmem:[%s2728 + $0x3c] sm:$0xf]
  %v2761 = vunpack.c.l.b16 %v2729
  %v2762 = vunpack.c.l.b16 %v2730
  %v2763 = vunpack.c.l.b16 %v2731
  %v2764 = vunpack.c.l.b16 %v2732
  %v2765 = vunpack.c.l.b16 %v2733
  %v2766 = vunpack.c.l.b16 %v2734
  %v2767 = vunpack.c.l.b16 %v2735
  %v2768 = vunpack.c.l.b16 %v2736
  %v2769 = vunpack.c.l.b16 %v2737
  %v2770 = vunpack.c.l.b16 %v2738
  %v2771 = vunpack.c.l.b16 %v2739
  %v2772 = vunpack.c.l.b16 %v2740
  %v2773 = vunpack.c.l.b16 %v2741
  %v2774 = vunpack.c.l.b16 %v2742
  %v2775 = vunpack.c.l.b16 %v2743
  %v2776 = vunpack.c.l.b16 %v2744
  %v2777 = vpack.c.b16 %v2762, %v2761
  %v2778 = vpack.c.b16 %v2764, %v2763
  %v2779 = vpack.c.b16 %v2766, %v2765
  %v2780 = vpack.c.b16 %v2768, %v2767
  %v2781 = vpack.c.b16 %v2770, %v2769
  %v2782 = vpack.c.b16 %v2772, %v2771
  %v2783 = vpack.c.b16 %v2774, %v2773
  %v2784 = vpack.c.b16 %v2776, %v2775
  %2793 = vmatprep.subr.bf16.mxu0 0
  %2794 = vmatpush1.bf16.msra.mxu0 %v2777
  %2795 = vmatprep.subr.bf16.mxu0 0
  %2796 = vmatpush1.bf16.msra.mxu0 %v2778
  %2797 = vmatprep.subr.bf16.mxu0 0
  %2798 = vmatpush1.bf16.msra.mxu0 %v2779
  %2799 = vmatprep.subr.bf16.mxu0 0
  %2800 = vmatpush1.bf16.msra.mxu0 %v2780
  %2801 = vmatprep.subr.bf16.mxu0 0
  %2802 = vmatpush1.bf16.msra.mxu0 %v2781
  %2803 = vmatprep.subr.bf16.mxu0 0
  %2804 = vmatpush1.bf16.msra.mxu0 %v2782
  %2805 = vmatprep.subr.bf16.mxu0 0
  %2806 = vmatpush1.bf16.msra.mxu0 %v2783
  %2807 = vmatprep.subr.bf16.mxu0 0
  %2808 = vmatpush1.bf16.msra.mxu0 %v2784
  %2809 = vmatprep.subr.bf16.mxu0 0
  %2810 = vmatpush1.bf16.msra.mxu0 0
  %2811 = vmatprep.subr.bf16.mxu0 0
  %2812 = vmatpush1.bf16.msra.mxu0 0
  %2813 = vmatprep.subr.bf16.mxu0 0
  %2814 = vmatpush1.bf16.msra.mxu0 0
  %2815 = vmatprep.subr.bf16.mxu0 0
  %2816 = vmatpush1.bf16.msra.mxu0 0
  %2817 = vmatprep.subr.bf16.mxu0 0
  %2818 = vmatpush1.bf16.msra.mxu0 0
  %2819 = vmatprep.subr.bf16.mxu0 0
  %2820 = vmatpush1.bf16.msra.mxu0 0
  %2821 = vmatprep.subr.bf16.mxu0 0
  %2822 = vmatpush1.bf16.msra.mxu0 0
  %2823 = vmatprep.subr.bf16.mxu0 0
  %2824 = vmatpush1.bf16.msra.mxu0 0
  %2825 = vmatprep.mubr.bf16.mxu0 0
  %2826 = vmatmul.mubr.bf16.gmra.mrb[0].mxu0 %v1487
  %v2827 = vpop.f32.mrb[0].mxu0
  %v2828 = vadd.f32 0.0, %v2827
  %v2829 = vpop.f32.mrb[0].mxu0
  %v2830 = vpop.f32.mrb[0].mxu0
  %v2831 = vadd.f32 0.0, %v2830
  %v2832 = vpop.f32.mrb[0].mxu0
  %2833 = vmatprep.mubr.bf16.mxu0 0
  %2834 = vmatmul.mubr.bf16.gmra.mrb[0].mxu0 %v1488
  %v2835 = vpop.f32.mrb[0].mxu0
  %v2836 = vadd.f32 0.0, %v2835
  %v2837 = vpop.f32.mrb[0].mxu0
  %v2838 = vpop.f32.mrb[0].mxu0
  %v2839 = vadd.f32 0.0, %v2838
  %v2840 = vpop.f32.mrb[0].mxu0
  %2841 = vmatprep.mubr.bf16.mxu0 0
  %2842 = vmatmul.mubr.bf16.gmra.mrb[0].mxu0 %v1489
  %v2843 = vpop.f32.mrb[0].mxu0
  %v2844 = vadd.f32 0.0, %v2843
  %v2845 = vpop.f32.mrb[0].mxu0
  %v2846 = vpop.f32.mrb[0].mxu0
  %v2847 = vadd.f32 0.0, %v2846
  %v2848 = vpop.f32.mrb[0].mxu0
  %2849 = vmatprep.mubr.bf16.mxu0 0
  %2850 = vmatmul.mubr.bf16.gmra.mrb[0].mxu0 %v1490
  %v2851 = vpop.f32.mrb[0].mxu0
  %v2852 = vadd.f32 0.0, %v2851
  %v2853 = vpop.f32.mrb[0].mxu0
  %v2854 = vpop.f32.mrb[0].mxu0
  %v2855 = vadd.f32 0.0, %v2854
  %v2856 = vpop.f32.mrb[0].mxu0
  %2857 = vmatprep.mubr.bf16.mxu0 0
  %2858 = vmatmul.mubr.bf16.gmra.mrb[0].mxu0 %v1491
  %v2859 = vpop.f32.mrb[0].mxu0
  %v2860 = vadd.f32 0.0, %v2859
  %v2861 = vpop.f32.mrb[0].mxu0
  %v2862 = vpop.f32.mrb[0].mxu0
  %v2863 = vadd.f32 0.0, %v2862
  %v2864 = vpop.f32.mrb[0].mxu0
  %2865 = vmatprep.mubr.bf16.mxu0 0
  %2866 = vmatmul.mubr.bf16.gmra.mrb[0].mxu0 %v1492
  %v2867 = vpop.f32.mrb[0].mxu0
  %v2868 = vadd.f32 0.0, %v2867
  %v2869 = vpop.f32.mrb[0].mxu0
  %v2870 = vpop.f32.mrb[0].mxu0
  %v2871 = vadd.f32 0.0, %v2870
  %v2872 = vpop.f32.mrb[0].mxu0
  %2873 = vmatprep.mubr.bf16.mxu0 0
  %2874 = vmatmul.mubr.bf16.gmra.mrb[0].mxu0 %v1493
  %v2875 = vpop.f32.mrb[0].mxu0
  %v2876 = vadd.f32 0.0, %v2875
  %v2877 = vpop.f32.mrb[0].mxu0
  %v2878 = vpop.f32.mrb[0].mxu0
  %v2879 = vadd.f32 0.0, %v2878
  %v2880 = vpop.f32.mrb[0].mxu0
  %2881 = vmatprep.mubr.bf16.mxu0 0
  %2882 = vmatmul.mubr.bf16.gmra.mrb[0].mxu0 %v1494
  %v2883 = vpop.f32.mrb[0].mxu0
  %v2884 = vadd.f32 0.0, %v2883
  %v2885 = vpop.f32.mrb[0].mxu0
  %v2886 = vpop.f32.mrb[0].mxu0
  %v2887 = vadd.f32 0.0, %v2886
  %v2888 = vpop.f32.mrb[0].mxu0
  %2889 = vmatprep.mubr.bf16.mxu0 0
  %2890 = vmatmul.mubr.bf16.gmra.mrb[0].mxu0 %v1495
  %v2891 = vpop.f32.mrb[0].mxu0
  %v2892 = vadd.f32 0.0, %v2891
  %v2893 = vpop.f32.mrb[0].mxu0
  %v2894 = vpop.f32.mrb[0].mxu0
  %v2895 = vadd.f32 0.0, %v2894
  %v2896 = vpop.f32.mrb[0].mxu0
  %2897 = vmatprep.mubr.bf16.mxu0 0
  %2898 = vmatmul.mubr.bf16.gmra.mrb[0].mxu0 %v1496
  %v2899 = vpop.f32.mrb[0].mxu0
  %v2900 = vadd.f32 0.0, %v2899
  %v2901 = vpop.f32.mrb[0].mxu0
  %v2902 = vpop.f32.mrb[0].mxu0
  %v2903 = vadd.f32 0.0, %v2902
  %v2904 = vpop.f32.mrb[0].mxu0
  %2905 = vmatprep.mubr.bf16.mxu0 0
  %2906 = vmatmul.mubr.bf16.gmra.mrb[0].mxu0 %v1497
  %v2907 = vpop.f32.mrb[0].mxu0
  %v2908 = vadd.f32 0.0, %v2907
  %v2909 = vpop.f32.mrb[0].mxu0
  %v2910 = vpop.f32.mrb[0].mxu0
  %v2911 = vadd.f32 0.0, %v2910
  %v2912 = vpop.f32.mrb[0].mxu0
  %2913 = vmatprep.mubr.bf16.mxu0 0
  %2914 = vmatmul.mubr.bf16.gmra.mrb[0].mxu0 %v1498
  %v2915 = vpop.f32.mrb[0].mxu0
  %v2916 = vadd.f32 0.0, %v2915
  %v2917 = vpop.f32.mrb[0].mxu0
  %v2918 = vpop.f32.mrb[0].mxu0
  %v2919 = vadd.f32 0.0, %v2918
  %v2920 = vpop.f32.mrb[0].mxu0
  %2921 = vmatprep.mubr.bf16.mxu0 0
  %2922 = vmatmul.mubr.bf16.gmra.mrb[0].mxu0 %v1499
  %v2923 = vpop.f32.mrb[0].mxu0
  %v2924 = vadd.f32 0.0, %v2923
  %v2925 = vpop.f32.mrb[0].mxu0
  %v2926 = vpop.f32.mrb[0].mxu0
  %v2927 = vadd.f32 0.0, %v2926
  %v2928 = vpop.f32.mrb[0].mxu0
  %2929 = vmatprep.mubr.bf16.mxu0 0
  %2930 = vmatmul.mubr.bf16.gmra.mrb[0].mxu0 %v1500
  %v2931 = vpop.f32.mrb[0].mxu0
  %v2932 = vadd.f32 0.0, %v2931
  %v2933 = vpop.f32.mrb[0].mxu0
  %v2934 = vpop.f32.mrb[0].mxu0
  %v2935 = vadd.f32 0.0, %v2934
  %v2936 = vpop.f32.mrb[0].mxu0
  %2937 = vmatprep.mubr.bf16.mxu0 0
  %2938 = vmatmul.mubr.bf16.gmra.mrb[0].mxu0 %v1501
  %v2939 = vpop.f32.mrb[0].mxu0
  %v2940 = vadd.f32 0.0, %v2939
  %v2941 = vpop.f32.mrb[0].mxu0
  %v2942 = vpop.f32.mrb[0].mxu0
  %v2943 = vadd.f32 0.0, %v2942
  %v2944 = vpop.f32.mrb[0].mxu0
  %2945 = vmatprep.mubr.bf16.mxu0 0
  %2946 = vmatmul.mubr.bf16.gmra.mrb[0].mxu0 %v1502
  %v2947 = vpop.f32.mrb[0].mxu0
  %v2948 = vadd.f32 0.0, %v2947
  %v2949 = vpop.f32.mrb[0].mxu0
  %v2950 = vpop.f32.mrb[0].mxu0
  %v2951 = vadd.f32 0.0, %v2950
  %v2952 = vpop.f32.mrb[0].mxu0
  %2953 = vdwg.mxu0
  %v2954 = vadd.f32 %v2696, %v2828
  %v2955 = vadd.f32 %v2697, %v2831
  %v2956 = vadd.f32 %v2698, %v2836
  %v2957 = vadd.f32 %v2699, %v2839
  %v2958 = vadd.f32 %v2700, %v2844
  %v2959 = vadd.f32 %v2701, %v2847
  %v2960 = vadd.f32 %v2702, %v2852
  %v2961 = vadd.f32 %v2703, %v2855
  %v2962 = vadd.f32 %v2704, %v2860
  %v2963 = vadd.f32 %v2705, %v2863
  %v2964 = vadd.f32 %v2706, %v2868
  %v2965 = vadd.f32 %v2707, %v2871
  %v2966 = vadd.f32 %v2708, %v2876
  %v2967 = vadd.f32 %v2709, %v2879
  %v2968 = vadd.f32 %v2710, %v2884
  %v2969 = vadd.f32 %v2711, %v2887
  %v2970 = vadd.f32 %v2712, %v2892
  %v2971 = vadd.f32 %v2713, %v2895
  %v2972 = vadd.f32 %v2714, %v2900
  %v2973 = vadd.f32 %v2715, %v2903
  %v2974 = vadd.f32 %v2716, %v2908
  %v2975 = vadd.f32 %v2717, %v2911
  %v2976 = vadd.f32 %v2718, %v2916
  %v2977 = vadd.f32 %v2719, %v2919
  %v2978 = vadd.f32 %v2720, %v2924
  %v2979 = vadd.f32 %v2721, %v2927
  %v2980 = vadd.f32 %v2722, %v2932
  %v2981 = vadd.f32 %v2723, %v2935
  %v2982 = vadd.f32 %v2724, %v2940
  %v2983 = vadd.f32 %v2725, %v2943
  %v2984 = vadd.f32 %v2726, %v2948
  %v2985 = vadd.f32 %v2727, %v2951
  %s2986 = scalar_lea.vmem %s4, 384
  %v2987 = vld [vmem:[%s2986] sm:$0xf]
  %v2988 = vld [vmem:[%s2986 + $0x4] sm:$0xf]
  %v2989 = vld [vmem:[%s2986 + $0x8] sm:$0xf]
  %v2990 = vld [vmem:[%s2986 + $0xc] sm:$0xf]
  %v2991 = vld [vmem:[%s2986 + $0x10] sm:$0xf]
  %v2992 = vld [vmem:[%s2986 + $0x14] sm:$0xf]
  %v2993 = vld [vmem:[%s2986 + $0x18] sm:$0xf]
  %v2994 = vld [vmem:[%s2986 + $0x1c] sm:$0xf]
  %v2995 = vld [vmem:[%s2986 + $0x20] sm:$0xf]
  %v2996 = vld [vmem:[%s2986 + $0x24] sm:$0xf]
  %v2997 = vld [vmem:[%s2986 + $0x28] sm:$0xf]
  %v2998 = vld [vmem:[%s2986 + $0x2c] sm:$0xf]
  %v2999 = vld [vmem:[%s2986 + $0x30] sm:$0xf]
  %v3000 = vld [vmem:[%s2986 + $0x34] sm:$0xf]
  %v3001 = vld [vmem:[%s2986 + $0x38] sm:$0xf]
  %v3002 = vld [vmem:[%s2986 + $0x3c] sm:$0xf]
  %v3019 = vunpack.c.l.b16 %v2987
  %v3020 = vunpack.c.l.b16 %v2988
  %v3021 = vunpack.c.l.b16 %v2989
  %v3022 = vunpack.c.l.b16 %v2990
  %v3023 = vunpack.c.l.b16 %v2991
  %v3024 = vunpack.c.l.b16 %v2992
  %v3025 = vunpack.c.l.b16 %v2993
  %v3026 = vunpack.c.l.b16 %v2994
  %v3027 = vunpack.c.l.b16 %v2995
  %v3028 = vunpack.c.l.b16 %v2996
  %v3029 = vunpack.c.l.b16 %v2997
  %v3030 = vunpack.c.l.b16 %v2998
  %v3031 = vunpack.c.l.b16 %v2999
  %v3032 = vunpack.c.l.b16 %v3000
  %v3033 = vunpack.c.l.b16 %v3001
  %v3034 = vunpack.c.l.b16 %v3002
  %v3035 = vpack.c.b16 %v3020, %v3019
  %v3036 = vpack.c.b16 %v3022, %v3021
  %v3037 = vpack.c.b16 %v3024, %v3023
  %v3038 = vpack.c.b16 %v3026, %v3025
  %v3039 = vpack.c.b16 %v3028, %v3027
  %v3040 = vpack.c.b16 %v3030, %v3029
  %v3041 = vpack.c.b16 %v3032, %v3031
  %v3042 = vpack.c.b16 %v3034, %v3033
  %3051 = vmatprep.subr.bf16.mxu0 0
  %3052 = vmatpush1.bf16.msra.mxu0 %v3035
  %3053 = vmatprep.subr.bf16.mxu0 0
  %3054 = vmatpush1.bf16.msra.mxu0 %v3036
  %3055 = vmatprep.subr.bf16.mxu0 0
  %3056 = vmatpush1.bf16.msra.mxu0 %v3037
  %3057 = vmatprep.subr.bf16.mxu0 0
  %3058 = vmatpush1.bf16.msra.mxu0 %v3038
  %3059 = vmatprep.subr.bf16.mxu0 0
  %3060 = vmatpush1.bf16.msra.mxu0 %v3039
  %3061 = vmatprep.subr.bf16.mxu0 0
  %3062 = vmatpush1.bf16.msra.mxu0 %v3040
  %3063 = vmatprep.subr.bf16.mxu0 0
  %3064 = vmatpush1.bf16.msra.mxu0 %v3041
  %3065 = vmatprep.subr.bf16.mxu0 0
  %3066 = vmatpush1.bf16.msra.mxu0 %v3042
  %3067 = vmatprep.subr.bf16.mxu0 0
  %3068 = vmatpush1.bf16.msra.mxu0 0
  %3069 = vmatprep.subr.bf16.mxu0 0
  %3070 = vmatpush1.bf16.msra.mxu0 0
  %3071 = vmatprep.subr.bf16.mxu0 0
  %3072 = vmatpush1.bf16.msra.mxu0 0
  %3073 = vmatprep.subr.bf16.mxu0 0
  %3074 = vmatpush1.bf16.msra.mxu0 0
  %3075 = vmatprep.subr.bf16.mxu0 0
  %3076 = vmatpush1.bf16.msra.mxu0 0
  %3077 = vmatprep.subr.bf16.mxu0 0
  %3078 = vmatpush1.bf16.msra.mxu0 0
  %3079 = vmatprep.subr.bf16.mxu0 0
  %3080 = vmatpush1.bf16.msra.mxu0 0
  %3081 = vmatprep.subr.bf16.mxu0 0
  %3082 = vmatpush1.bf16.msra.mxu0 0
  %3083 = vmatprep.mubr.bf16.mxu0 0
  %3084 = vmatmul.mubr.bf16.gmra.mrb[0].mxu0 %v1263
  %v3085 = vpop.f32.mrb[0].mxu0
  %v3086 = vadd.f32 0.0, %v3085
  %v3087 = vpop.f32.mrb[0].mxu0
  %v3088 = vpop.f32.mrb[0].mxu0
  %v3089 = vadd.f32 0.0, %v3088
  %v3090 = vpop.f32.mrb[0].mxu0
  %3091 = vmatprep.mubr.bf16.mxu0 0
  %3092 = vmatmul.mubr.bf16.gmra.mrb[0].mxu0 %v1264
  %v3093 = vpop.f32.mrb[0].mxu0
  %v3094 = vadd.f32 0.0, %v3093
  %v3095 = vpop.f32.mrb[0].mxu0
  %v3096 = vpop.f32.mrb[0].mxu0
  %v3097 = vadd.f32 0.0, %v3096
  %v3098 = vpop.f32.mrb[0].mxu0
  %3099 = vmatprep.mubr.bf16.mxu0 0
  %3100 = vmatmul.mubr.bf16.gmra.mrb[0].mxu0 %v1265
  %v3101 = vpop.f32.mrb[0].mxu0
  %v3102 = vadd.f32 0.0, %v3101
  %v3103 = vpop.f32.mrb[0].mxu0
  %v3104 = vpop.f32.mrb[0].mxu0
  %v3105 = vadd.f32 0.0, %v3104
  %v3106 = vpop.f32.mrb[0].mxu0
  %3107 = vmatprep.mubr.bf16.mxu0 0
  %3108 = vmatmul.mubr.bf16.gmra.mrb[0].mxu0 %v1266
  %v3109 = vpop.f32.mrb[0].mxu0
  %v3110 = vadd.f32 0.0, %v3109
  %v3111 = vpop.f32.mrb[0].mxu0
  %v3112 = vpop.f32.mrb[0].mxu0
  %v3113 = vadd.f32 0.0, %v3112
  %v3114 = vpop.f32.mrb[0].mxu0
  %3115 = vmatprep.mubr.bf16.mxu0 0
  %3116 = vmatmul.mubr.bf16.gmra.mrb[0].mxu0 %v1267
  %v3117 = vpop.f32.mrb[0].mxu0
  %v3118 = vadd.f32 0.0, %v3117
  %v3119 = vpop.f32.mrb[0].mxu0
  %v3120 = vpop.f32.mrb[0].mxu0
  %v3121 = vadd.f32 0.0, %v3120
  %v3122 = vpop.f32.mrb[0].mxu0
  %3123 = vmatprep.mubr.bf16.mxu0 0
  %3124 = vmatmul.mubr.bf16.gmra.mrb[0].mxu0 %v1268
  %v3125 = vpop.f32.mrb[0].mxu0
  %v3126 = vadd.f32 0.0, %v3125
  %v3127 = vpop.f32.mrb[0].mxu0
  %v3128 = vpop.f32.mrb[0].mxu0
  %v3129 = vadd.f32 0.0, %v3128
  %v3130 = vpop.f32.mrb[0].mxu0
  %3131 = vmatprep.mubr.bf16.mxu0 0
  %3132 = vmatmul.mubr.bf16.gmra.mrb[0].mxu0 %v1269
  %v3133 = vpop.f32.mrb[0].mxu0
  %v3134 = vadd.f32 0.0, %v3133
  %v3135 = vpop.f32.mrb[0].mxu0
  %v3136 = vpop.f32.mrb[0].mxu0
  %v3137 = vadd.f32 0.0, %v3136
  %v3138 = vpop.f32.mrb[0].mxu0
  %3139 = vmatprep.mubr.bf16.mxu0 0
  %3140 = vmatmul.mubr.bf16.gmra.mrb[0].mxu0 %v1270
  %v3141 = vpop.f32.mrb[0].mxu0
  %v3142 = vadd.f32 0.0, %v3141
  %v3143 = vpop.f32.mrb[0].mxu0
  %v3144 = vpop.f32.mrb[0].mxu0
  %v3145 = vadd.f32 0.0, %v3144
  %v3146 = vpop.f32.mrb[0].mxu0
  %3147 = vmatprep.mubr.bf16.mxu0 0
  %3148 = vmatmul.mubr.bf16.gmra.mrb[0].mxu0 %v1271
  %v3149 = vpop.f32.mrb[0].mxu0
  %v3150 = vadd.f32 0.0, %v3149
  %v3151 = vpop.f32.mrb[0].mxu0
  %v3152 = vpop.f32.mrb[0].mxu0
  %v3153 = vadd.f32 0.0, %v3152
  %v3154 = vpop.f32.mrb[0].mxu0
  %3155 = vmatprep.mubr.bf16.mxu0 0
  %3156 = vmatmul.mubr.bf16.gmra.mrb[0].mxu0 %v1272
  %v3157 = vpop.f32.mrb[0].mxu0
  %v3158 = vadd.f32 0.0, %v3157
  %v3159 = vpop.f32.mrb[0].mxu0
  %v3160 = vpop.f32.mrb[0].mxu0
  %v3161 = vadd.f32 0.0, %v3160
  %v3162 = vpop.f32.mrb[0].mxu0
  %3163 = vmatprep.mubr.bf16.mxu0 0
  %3164 = vmatmul.mubr.bf16.gmra.mrb[0].mxu0 %v1273
  %v3165 = vpop.f32.mrb[0].mxu0
  %v3166 = vadd.f32 0.0, %v3165
  %v3167 = vpop.f32.mrb[0].mxu0
  %v3168 = vpop.f32.mrb[0].mxu0
  %v3169 = vadd.f32 0.0, %v3168
  %v3170 = vpop.f32.mrb[0].mxu0
  %3171 = vmatprep.mubr.bf16.mxu0 0
  %3172 = vmatmul.mubr.bf16.gmra.mrb[0].mxu0 %v1274
  %v3173 = vpop.f32.mrb[0].mxu0
  %v3174 = vadd.f32 0.0, %v3173
  %v3175 = vpop.f32.mrb[0].mxu0
  %v3176 = vpop.f32.mrb[0].mxu0
  %v3177 = vadd.f32 0.0, %v3176
  %v3178 = vpop.f32.mrb[0].mxu0
  %3179 = vmatprep.mubr.bf16.mxu0 0
  %3180 = vmatmul.mubr.bf16.gmra.mrb[0].mxu0 %v1275
  %v3181 = vpop.f32.mrb[0].mxu0
  %v3182 = vadd.f32 0.0, %v3181
  %v3183 = vpop.f32.mrb[0].mxu0
  %v3184 = vpop.f32.mrb[0].mxu0
  %v3185 = vadd.f32 0.0, %v3184
  %v3186 = vpop.f32.mrb[0].mxu0
  %3187 = vmatprep.mubr.bf16.mxu0 0
  %3188 = vmatmul.mubr.bf16.gmra.mrb[0].mxu0 %v1276
  %v3189 = vpop.f32.mrb[0].mxu0
  %v3190 = vadd.f32 0.0, %v3189
  %v3191 = vpop.f32.mrb[0].mxu0
  %v3192 = vpop.f32.mrb[0].mxu0
  %v3193 = vadd.f32 0.0, %v3192
  %v3194 = vpop.f32.mrb[0].mxu0
  %3195 = vmatprep.mubr.bf16.mxu0 0
  %3196 = vmatmul.mubr.bf16.gmra.mrb[0].mxu0 %v1277
  %v3197 = vpop.f32.mrb[0].mxu0
  %v3198 = vadd.f32 0.0, %v3197
  %v3199 = vpop.f32.mrb[0].mxu0
  %v3200 = vpop.f32.mrb[0].mxu0
  %v3201 = vadd.f32 0.0, %v3200
  %v3202 = vpop.f32.mrb[0].mxu0
  %3203 = vmatprep.mubr.bf16.mxu0 0
  %3204 = vmatmul.mubr.bf16.gmra.mrb[0].mxu0 0
  %v3205 = vpop.f32.mrb[0].mxu0
  %v3206 = vadd.f32 0.0, %v3205
  %v3207 = vpop.f32.mrb[0].mxu0
  %v3208 = vpop.f32.mrb[0].mxu0
  %v3209 = vadd.f32 0.0, %v3208
  %v3210 = vpop.f32.mrb[0].mxu0
  %3211 = vdwg.mxu0
  %v3212 = vadd.f32 %v2954, %v3086
  %v3213 = vadd.f32 %v2955, %v3089
  %v3214 = vadd.f32 %v2956, %v3094
  %v3215 = vadd.f32 %v2957, %v3097
  %v3216 = vadd.f32 %v2958, %v3102
  %v3217 = vadd.f32 %v2959, %v3105
  %v3218 = vadd.f32 %v2960, %v3110
  %v3219 = vadd.f32 %v2961, %v3113
  %v3220 = vadd.f32 %v2962, %v3118
  %v3221 = vadd.f32 %v2963, %v3121
  %v3222 = vadd.f32 %v2964, %v3126
  %v3223 = vadd.f32 %v2965, %v3129
  %v3224 = vadd.f32 %v2966, %v3134
  %v3225 = vadd.f32 %v2967, %v3137
  %v3226 = vadd.f32 %v2968, %v3142
  %v3227 = vadd.f32 %v2969, %v3145
  %v3228 = vadd.f32 %v2970, %v3150
  %v3229 = vadd.f32 %v2971, %v3153
  %v3230 = vadd.f32 %v2972, %v3158
  %v3231 = vadd.f32 %v2973, %v3161
  %v3232 = vadd.f32 %v2974, %v3166
  %v3233 = vadd.f32 %v2975, %v3169
  %v3234 = vadd.f32 %v2976, %v3174
  %v3235 = vadd.f32 %v2977, %v3177
  %v3236 = vadd.f32 %v2978, %v3182
  %v3237 = vadd.f32 %v2979, %v3185
  %v3238 = vadd.f32 %v2980, %v3190
  %v3239 = vadd.f32 %v2981, %v3193
  %v3240 = vadd.f32 %v2982, %v3198
  %v3241 = vadd.f32 %v2983, %v3201
  %v3242 = vadd.f32 %v2984, %v3206
  %v3243 = vadd.f32 %v2985, %v3209
  %s3244 = scalar_lea.vmem %s4, 448
  %v3245 = vld [vmem:[%s3244] sm:$0xf]
  %v3246 = vld [vmem:[%s3244 + $0x4] sm:$0xf]
  %v3247 = vld [vmem:[%s3244 + $0x8] sm:$0xf]
  %v3248 = vld [vmem:[%s3244 + $0xc] sm:$0xf]
  %v3249 = vld [vmem:[%s3244 + $0x10] sm:$0xf]
  %v3250 = vld [vmem:[%s3244 + $0x14] sm:$0xf]
  %v3251 = vld [vmem:[%s3244 + $0x18] sm:$0xf]
  %v3252 = vld [vmem:[%s3244 + $0x1c] sm:$0xf]
  %v3253 = vld [vmem:[%s3244 + $0x20] sm:$0xf]
  %v3254 = vld [vmem:[%s3244 + $0x24] sm:$0xf]
  %v3255 = vld [vmem:[%s3244 + $0x28] sm:$0xf]
  %v3256 = vld [vmem:[%s3244 + $0x2c] sm:$0xf]
  %v3257 = vld [vmem:[%s3244 + $0x30] sm:$0xf]
  %v3258 = vld [vmem:[%s3244 + $0x34] sm:$0xf]
  %v3259 = vld [vmem:[%s3244 + $0x38] sm:$0xf]
  %v3260 = vld [vmem:[%s3244 + $0x3c] sm:$0xf]
  %v3277 = vunpack.c.l.b16 %v3245
  %v3278 = vunpack.c.l.b16 %v3246
  %v3279 = vunpack.c.l.b16 %v3247
  %v3280 = vunpack.c.l.b16 %v3248
  %v3281 = vunpack.c.l.b16 %v3249
  %v3282 = vunpack.c.l.b16 %v3250
  %v3283 = vunpack.c.l.b16 %v3251
  %v3284 = vunpack.c.l.b16 %v3252
  %v3285 = vunpack.c.l.b16 %v3253
  %v3286 = vunpack.c.l.b16 %v3254
  %v3287 = vunpack.c.l.b16 %v3255
  %v3288 = vunpack.c.l.b16 %v3256
  %v3289 = vunpack.c.l.b16 %v3257
  %v3290 = vunpack.c.l.b16 %v3258
  %v3291 = vunpack.c.l.b16 %v3259
  %v3292 = vunpack.c.l.b16 %v3260
  %v3293 = vpack.c.b16 %v3278, %v3277
  %v3294 = vpack.c.b16 %v3280, %v3279
  %v3295 = vpack.c.b16 %v3282, %v3281
  %v3296 = vpack.c.b16 %v3284, %v3283
  %v3297 = vpack.c.b16 %v3286, %v3285
  %v3298 = vpack.c.b16 %v3288, %v3287
  %v3299 = vpack.c.b16 %v3290, %v3289
  %v3300 = vpack.c.b16 %v3292, %v3291
  %3309 = vmatprep.subr.bf16.mxu0 0
  %3310 = vmatpush1.bf16.msra.mxu0 %v3293
  %3311 = vmatprep.subr.bf16.mxu0 0
  %3312 = vmatpush1.bf16.msra.mxu0 %v3294
  %3313 = vmatprep.subr.bf16.mxu0 0
  %3314 = vmatpush1.bf16.msra.mxu0 %v3295
  %3315 = vmatprep.subr.bf16.mxu0 0
  %3316 = vmatpush1.bf16.msra.mxu0 %v3296
  %3317 = vmatprep.subr.bf16.mxu0 0
  %3318 = vmatpush1.bf16.msra.mxu0 %v3297
  %3319 = vmatprep.subr.bf16.mxu0 0
  %3320 = vmatpush1.bf16.msra.mxu0 %v3298
  %3321 = vmatprep.subr.bf16.mxu0 0
  %3322 = vmatpush1.bf16.msra.mxu0 %v3299
  %3323 = vmatprep.subr.bf16.mxu0 0
  %3324 = vmatpush1.bf16.msra.mxu0 %v3300
  %3325 = vmatprep.subr.bf16.mxu0 0
  %3326 = vmatpush1.bf16.msra.mxu0 0
  %3327 = vmatprep.subr.bf16.mxu0 0
  %3328 = vmatpush1.bf16.msra.mxu0 0
  %3329 = vmatprep.subr.bf16.mxu0 0
  %3330 = vmatpush1.bf16.msra.mxu0 0
  %3331 = vmatprep.subr.bf16.mxu0 0
  %3332 = vmatpush1.bf16.msra.mxu0 0
  %3333 = vmatprep.subr.bf16.mxu0 0
  %3334 = vmatpush1.bf16.msra.mxu0 0
  %3335 = vmatprep.subr.bf16.mxu0 0
  %3336 = vmatpush1.bf16.msra.mxu0 0
  %3337 = vmatprep.subr.bf16.mxu0 0
  %3338 = vmatpush1.bf16.msra.mxu0 0
  %3339 = vmatprep.subr.bf16.mxu0 0
  %3340 = vmatpush1.bf16.msra.mxu0 0
  %3341 = vmatprep.mubr.bf16.mxu0 0
  %3342 = vmatmul.mubr.bf16.gmra.mrb[0].mxu0 %v1279
  %v3343 = vpop.f32.mrb[0].mxu0
  %v3344 = vadd.f32 0.0, %v3343
  %v3345 = vpop.f32.mrb[0].mxu0
  %v3346 = vpop.f32.mrb[0].mxu0
  %v3347 = vadd.f32 0.0, %v3346
  %v3348 = vpop.f32.mrb[0].mxu0
  %3349 = vmatprep.mubr.bf16.mxu0 0
  %3350 = vmatmul.mubr.bf16.gmra.mrb[0].mxu0 %v1280
  %v3351 = vpop.f32.mrb[0].mxu0
  %v3352 = vadd.f32 0.0, %v3351
  %v3353 = vpop.f32.mrb[0].mxu0
  %v3354 = vpop.f32.mrb[0].mxu0
  %v3355 = vadd.f32 0.0, %v3354
  %v3356 = vpop.f32.mrb[0].mxu0
  %3357 = vmatprep.mubr.bf16.mxu0 0
  %3358 = vmatmul.mubr.bf16.gmra.mrb[0].mxu0 %v1281
  %v3359 = vpop.f32.mrb[0].mxu0
  %v3360 = vadd.f32 0.0, %v3359
  %v3361 = vpop.f32.mrb[0].mxu0
  %v3362 = vpop.f32.mrb[0].mxu0
  %v3363 = vadd.f32 0.0, %v3362
  %v3364 = vpop.f32.mrb[0].mxu0
  %3365 = vmatprep.mubr.bf16.mxu0 0
  %3366 = vmatmul.mubr.bf16.gmra.mrb[0].mxu0 %v1282
  %v3367 = vpop.f32.mrb[0].mxu0
  %v3368 = vadd.f32 0.0, %v3367
  %v3369 = vpop.f32.mrb[0].mxu0
  %v3370 = vpop.f32.mrb[0].mxu0
  %v3371 = vadd.f32 0.0, %v3370
  %v3372 = vpop.f32.mrb[0].mxu0
  %3373 = vmatprep.mubr.bf16.mxu0 0
  %3374 = vmatmul.mubr.bf16.gmra.mrb[0].mxu0 %v1283
  %v3375 = vpop.f32.mrb[0].mxu0
  %v3376 = vadd.f32 0.0, %v3375
  %v3377 = vpop.f32.mrb[0].mxu0
  %v3378 = vpop.f32.mrb[0].mxu0
  %v3379 = vadd.f32 0.0, %v3378
  %v3380 = vpop.f32.mrb[0].mxu0
  %3381 = vmatprep.mubr.bf16.mxu0 0
  %3382 = vmatmul.mubr.bf16.gmra.mrb[0].mxu0 %v1284
  %v3383 = vpop.f32.mrb[0].mxu0
  %v3384 = vadd.f32 0.0, %v3383
  %v3385 = vpop.f32.mrb[0].mxu0
  %v3386 = vpop.f32.mrb[0].mxu0
  %v3387 = vadd.f32 0.0, %v3386
  %v3388 = vpop.f32.mrb[0].mxu0
  %3389 = vmatprep.mubr.bf16.mxu0 0
  %3390 = vmatmul.mubr.bf16.gmra.mrb[0].mxu0 %v1285
  %v3391 = vpop.f32.mrb[0].mxu0
  %v3392 = vadd.f32 0.0, %v3391
  %v3393 = vpop.f32.mrb[0].mxu0
  %v3394 = vpop.f32.mrb[0].mxu0
  %v3395 = vadd.f32 0.0, %v3394
  %v3396 = vpop.f32.mrb[0].mxu0
  %3397 = vmatprep.mubr.bf16.mxu0 0
  %3398 = vmatmul.mubr.bf16.gmra.mrb[0].mxu0 %v1286
  %v3399 = vpop.f32.mrb[0].mxu0
  %v3400 = vadd.f32 0.0, %v3399
  %v3401 = vpop.f32.mrb[0].mxu0
  %v3402 = vpop.f32.mrb[0].mxu0
  %v3403 = vadd.f32 0.0, %v3402
  %v3404 = vpop.f32.mrb[0].mxu0
  %3405 = vmatprep.mubr.bf16.mxu0 0
  %3406 = vmatmul.mubr.bf16.gmra.mrb[0].mxu0 %v1287
  %v3407 = vpop.f32.mrb[0].mxu0
  %v3408 = vadd.f32 0.0, %v3407
  %v3409 = vpop.f32.mrb[0].mxu0
  %v3410 = vpop.f32.mrb[0].mxu0
  %v3411 = vadd.f32 0.0, %v3410
  %v3412 = vpop.f32.mrb[0].mxu0
  %3413 = vmatprep.mubr.bf16.mxu0 0
  %3414 = vmatmul.mubr.bf16.gmra.mrb[0].mxu0 %v1288
  %v3415 = vpop.f32.mrb[0].mxu0
  %v3416 = vadd.f32 0.0, %v3415
  %v3417 = vpop.f32.mrb[0].mxu0
  %v3418 = vpop.f32.mrb[0].mxu0
  %v3419 = vadd.f32 0.0, %v3418
  %v3420 = vpop.f32.mrb[0].mxu0
  %3421 = vmatprep.mubr.bf16.mxu0 0
  %3422 = vmatmul.mubr.bf16.gmra.mrb[0].mxu0 %v1289
  %v3423 = vpop.f32.mrb[0].mxu0
  %v3424 = vadd.f32 0.0, %v3423
  %v3425 = vpop.f32.mrb[0].mxu0
  %v3426 = vpop.f32.mrb[0].mxu0
  %v3427 = vadd.f32 0.0, %v3426
  %v3428 = vpop.f32.mrb[0].mxu0
  %3429 = vmatprep.mubr.bf16.mxu0 0
  %3430 = vmatmul.mubr.bf16.gmra.mrb[0].mxu0 %v1290
  %v3431 = vpop.f32.mrb[0].mxu0
  %v3432 = vadd.f32 0.0, %v3431
  %v3433 = vpop.f32.mrb[0].mxu0
  %v3434 = vpop.f32.mrb[0].mxu0
  %v3435 = vadd.f32 0.0, %v3434
  %v3436 = vpop.f32.mrb[0].mxu0
  %3437 = vmatprep.mubr.bf16.mxu0 0
  %3438 = vmatmul.mubr.bf16.gmra.mrb[0].mxu0 %v1291
  %v3439 = vpop.f32.mrb[0].mxu0
  %v3440 = vadd.f32 0.0, %v3439
  %v3441 = vpop.f32.mrb[0].mxu0
  %v3442 = vpop.f32.mrb[0].mxu0
  %v3443 = vadd.f32 0.0, %v3442
  %v3444 = vpop.f32.mrb[0].mxu0
  %3445 = vmatprep.mubr.bf16.mxu0 0
  %3446 = vmatmul.mubr.bf16.gmra.mrb[0].mxu0 %v1292
  %v3447 = vpop.f32.mrb[0].mxu0
  %v3448 = vadd.f32 0.0, %v3447
  %v3449 = vpop.f32.mrb[0].mxu0
  %v3450 = vpop.f32.mrb[0].mxu0
  %v3451 = vadd.f32 0.0, %v3450
  %v3452 = vpop.f32.mrb[0].mxu0
  %3453 = vmatprep.mubr.bf16.mxu0 0
  %3454 = vmatmul.mubr.bf16.gmra.mrb[0].mxu0 %v1293
  %v3455 = vpop.f32.mrb[0].mxu0
  %v3456 = vadd.f32 0.0, %v3455
  %v3457 = vpop.f32.mrb[0].mxu0
  %v3458 = vpop.f32.mrb[0].mxu0
  %v3459 = vadd.f32 0.0, %v3458
  %v3460 = vpop.f32.mrb[0].mxu0
  %3461 = vmatprep.mubr.bf16.mxu0 0
  %3462 = vmatmul.mubr.bf16.gmra.mrb[0].mxu0 0
  %v3463 = vpop.f32.mrb[0].mxu0
  %v3464 = vadd.f32 0.0, %v3463
  %v3465 = vpop.f32.mrb[0].mxu0
  %v3466 = vpop.f32.mrb[0].mxu0
  %v3467 = vadd.f32 0.0, %v3466
  %v3468 = vpop.f32.mrb[0].mxu0
  %3469 = vdwg.mxu0
  %v3470 = vadd.f32 %v3212, %v3344
  %v3471 = vadd.f32 %v3213, %v3347
  %v3472 = vadd.f32 %v3214, %v3352
  %v3473 = vadd.f32 %v3215, %v3355
  %v3474 = vadd.f32 %v3216, %v3360
  %v3475 = vadd.f32 %v3217, %v3363
  %v3476 = vadd.f32 %v3218, %v3368
  %v3477 = vadd.f32 %v3219, %v3371
  %v3478 = vadd.f32 %v3220, %v3376
  %v3479 = vadd.f32 %v3221, %v3379
  %v3480 = vadd.f32 %v3222, %v3384
  %v3481 = vadd.f32 %v3223, %v3387
  %v3482 = vadd.f32 %v3224, %v3392
  %v3483 = vadd.f32 %v3225, %v3395
  %v3484 = vadd.f32 %v3226, %v3400
  %v3485 = vadd.f32 %v3227, %v3403
  %v3486 = vadd.f32 %v3228, %v3408
  %v3487 = vadd.f32 %v3229, %v3411
  %v3488 = vadd.f32 %v3230, %v3416
  %v3489 = vadd.f32 %v3231, %v3419
  %v3490 = vadd.f32 %v3232, %v3424
  %v3491 = vadd.f32 %v3233, %v3427
  %v3492 = vadd.f32 %v3234, %v3432
  %v3493 = vadd.f32 %v3235, %v3435
  %v3494 = vadd.f32 %v3236, %v3440
  %v3495 = vadd.f32 %v3237, %v3443
  %v3496 = vadd.f32 %v3238, %v3448
  %v3497 = vadd.f32 %v3239, %v3451
  %v3498 = vadd.f32 %v3240, %v3456
  %v3499 = vadd.f32 %v3241, %v3459
  %v3500 = vadd.f32 %v3242, %v3464
  %v3501 = vadd.f32 %v3243, %v3467
  %s3502 = scalar_lea.vmem %s4, 512
  %v3503 = vld [vmem:[%s3502] sm:$0xf]
  %v3504 = vld [vmem:[%s3502 + $0x4] sm:$0xf]
  %v3505 = vld [vmem:[%s3502 + $0x8] sm:$0xf]
  %v3506 = vld [vmem:[%s3502 + $0xc] sm:$0xf]
  %v3507 = vld [vmem:[%s3502 + $0x10] sm:$0xf]
  %v3508 = vld [vmem:[%s3502 + $0x14] sm:$0xf]
  %v3509 = vld [vmem:[%s3502 + $0x18] sm:$0xf]
  %v3510 = vld [vmem:[%s3502 + $0x1c] sm:$0xf]
  %v3511 = vld [vmem:[%s3502 + $0x20] sm:$0xf]
  %v3512 = vld [vmem:[%s3502 + $0x24] sm:$0xf]
  %v3513 = vld [vmem:[%s3502 + $0x28] sm:$0xf]
  %v3514 = vld [vmem:[%s3502 + $0x2c] sm:$0xf]
  %v3515 = vld [vmem:[%s3502 + $0x30] sm:$0xf]
  %v3516 = vld [vmem:[%s3502 + $0x34] sm:$0xf]
  %v3517 = vld [vmem:[%s3502 + $0x38] sm:$0xf]
  %v3518 = vld [vmem:[%s3502 + $0x3c] sm:$0xf]
  %v3535 = vunpack.c.l.b16 %v3503
  %v3536 = vunpack.c.l.b16 %v3504
  %v3537 = vunpack.c.l.b16 %v3505
  %v3538 = vunpack.c.l.b16 %v3506
  %v3539 = vunpack.c.l.b16 %v3507
  %v3540 = vunpack.c.l.b16 %v3508
  %v3541 = vunpack.c.l.b16 %v3509
  %v3542 = vunpack.c.l.b16 %v3510
  %v3543 = vunpack.c.l.b16 %v3511
  %v3544 = vunpack.c.l.b16 %v3512
  %v3545 = vunpack.c.l.b16 %v3513
  %v3546 = vunpack.c.l.b16 %v3514
  %v3547 = vunpack.c.l.b16 %v3515
  %v3548 = vunpack.c.l.b16 %v3516
  %v3549 = vunpack.c.l.b16 %v3517
  %v3550 = vunpack.c.l.b16 %v3518
  %v3551 = vpack.c.b16 %v3536, %v3535
  %v3552 = vpack.c.b16 %v3538, %v3537
  %v3553 = vpack.c.b16 %v3540, %v3539
  %v3554 = vpack.c.b16 %v3542, %v3541
  %v3555 = vpack.c.b16 %v3544, %v3543
  %v3556 = vpack.c.b16 %v3546, %v3545
  %v3557 = vpack.c.b16 %v3548, %v3547
  %v3558 = vpack.c.b16 %v3550, %v3549
  %3567 = vmatprep.subr.bf16.mxu0 0
  %3568 = vmatpush1.bf16.msra.mxu0 %v3551
  %3569 = vmatprep.subr.bf16.mxu0 0
  %3570 = vmatpush1.bf16.msra.mxu0 %v3552
  %3571 = vmatprep.subr.bf16.mxu0 0
  %3572 = vmatpush1.bf16.msra.mxu0 %v3553
  %3573 = vmatprep.subr.bf16.mxu0 0
  %3574 = vmatpush1.bf16.msra.mxu0 %v3554
  %3575 = vmatprep.subr.bf16.mxu0 0
  %3576 = vmatpush1.bf16.msra.mxu0 %v3555
  %3577 = vmatprep.subr.bf16.mxu0 0
  %3578 = vmatpush1.bf16.msra.mxu0 %v3556
  %3579 = vmatprep.subr.bf16.mxu0 0
  %3580 = vmatpush1.bf16.msra.mxu0 %v3557
  %3581 = vmatprep.subr.bf16.mxu0 0
  %3582 = vmatpush1.bf16.msra.mxu0 %v3558
  %3583 = vmatprep.subr.bf16.mxu0 0
  %3584 = vmatpush1.bf16.msra.mxu0 0
  %3585 = vmatprep.subr.bf16.mxu0 0
  %3586 = vmatpush1.bf16.msra.mxu0 0
  %3587 = vmatprep.subr.bf16.mxu0 0
  %3588 = vmatpush1.bf16.msra.mxu0 0
  %3589 = vmatprep.subr.bf16.mxu0 0
  %3590 = vmatpush1.bf16.msra.mxu0 0
  %3591 = vmatprep.subr.bf16.mxu0 0
  %3592 = vmatpush1.bf16.msra.mxu0 0
  %3593 = vmatprep.subr.bf16.mxu0 0
  %3594 = vmatpush1.bf16.msra.mxu0 0
  %3595 = vmatprep.subr.bf16.mxu0 0
  %3596 = vmatpush1.bf16.msra.mxu0 0
  %3597 = vmatprep.subr.bf16.mxu0 0
  %3598 = vmatpush1.bf16.msra.mxu0 0
  %3599 = vmatprep.mubr.bf16.mxu0 0
  %3600 = vmatmul.mubr.bf16.gmra.mrb[0].mxu0 %v1488
  %v3601 = vpop.f32.mrb[0].mxu0
  %v3602 = vadd.f32 0.0, %v3601
  %v3603 = vpop.f32.mrb[0].mxu0
  %v3604 = vpop.f32.mrb[0].mxu0
  %v3605 = vadd.f32 0.0, %v3604
  %v3606 = vpop.f32.mrb[0].mxu0
  %3607 = vmatprep.mubr.bf16.mxu0 0
  %3608 = vmatmul.mubr.bf16.gmra.mrb[0].mxu0 %v1489
  %v3609 = vpop.f32.mrb[0].mxu0
  %v3610 = vadd.f32 0.0, %v3609
  %v3611 = vpop.f32.mrb[0].mxu0
  %v3612 = vpop.f32.mrb[0].mxu0
  %v3613 = vadd.f32 0.0, %v3612
  %v3614 = vpop.f32.mrb[0].mxu0
  %3615 = vmatprep.mubr.bf16.mxu0 0
  %3616 = vmatmul.mubr.bf16.gmra.mrb[0].mxu0 %v1490
  %v3617 = vpop.f32.mrb[0].mxu0
  %v3618 = vadd.f32 0.0, %v3617
  %v3619 = vpop.f32.mrb[0].mxu0
  %v3620 = vpop.f32.mrb[0].mxu0
  %v3621 = vadd.f32 0.0, %v3620
  %v3622 = vpop.f32.mrb[0].mxu0
  %3623 = vmatprep.mubr.bf16.mxu0 0
  %3624 = vmatmul.mubr.bf16.gmra.mrb[0].mxu0 %v1491
  %v3625 = vpop.f32.mrb[0].mxu0
  %v3626 = vadd.f32 0.0, %v3625
  %v3627 = vpop.f32.mrb[0].mxu0
  %v3628 = vpop.f32.mrb[0].mxu0
  %v3629 = vadd.f32 0.0, %v3628
  %v3630 = vpop.f32.mrb[0].mxu0
  %3631 = vmatprep.mubr.bf16.mxu0 0
  %3632 = vmatmul.mubr.bf16.gmra.mrb[0].mxu0 %v1492
  %v3633 = vpop.f32.mrb[0].mxu0
  %v3634 = vadd.f32 0.0, %v3633
  %v3635 = vpop.f32.mrb[0].mxu0
  %v3636 = vpop.f32.mrb[0].mxu0
  %v3637 = vadd.f32 0.0, %v3636
  %v3638 = vpop.f32.mrb[0].mxu0
  %3639 = vmatprep.mubr.bf16.mxu0 0
  %3640 = vmatmul.mubr.bf16.gmra.mrb[0].mxu0 %v1493
  %v3641 = vpop.f32.mrb[0].mxu0
  %v3642 = vadd.f32 0.0, %v3641
  %v3643 = vpop.f32.mrb[0].mxu0
  %v3644 = vpop.f32.mrb[0].mxu0
  %v3645 = vadd.f32 0.0, %v3644
  %v3646 = vpop.f32.mrb[0].mxu0
  %3647 = vmatprep.mubr.bf16.mxu0 0
  %3648 = vmatmul.mubr.bf16.gmra.mrb[0].mxu0 %v1494
  %v3649 = vpop.f32.mrb[0].mxu0
  %v3650 = vadd.f32 0.0, %v3649
  %v3651 = vpop.f32.mrb[0].mxu0
  %v3652 = vpop.f32.mrb[0].mxu0
  %v3653 = vadd.f32 0.0, %v3652
  %v3654 = vpop.f32.mrb[0].mxu0
  %3655 = vmatprep.mubr.bf16.mxu0 0
  %3656 = vmatmul.mubr.bf16.gmra.mrb[0].mxu0 %v1495
  %v3657 = vpop.f32.mrb[0].mxu0
  %v3658 = vadd.f32 0.0, %v3657
  %v3659 = vpop.f32.mrb[0].mxu0
  %v3660 = vpop.f32.mrb[0].mxu0
  %v3661 = vadd.f32 0.0, %v3660
  %v3662 = vpop.f32.mrb[0].mxu0
  %3663 = vmatprep.mubr.bf16.mxu0 0
  %3664 = vmatmul.mubr.bf16.gmra.mrb[0].mxu0 %v1496
  %v3665 = vpop.f32.mrb[0].mxu0
  %v3666 = vadd.f32 0.0, %v3665
  %v3667 = vpop.f32.mrb[0].mxu0
  %v3668 = vpop.f32.mrb[0].mxu0
  %v3669 = vadd.f32 0.0, %v3668
  %v3670 = vpop.f32.mrb[0].mxu0
  %3671 = vmatprep.mubr.bf16.mxu0 0
  %3672 = vmatmul.mubr.bf16.gmra.mrb[0].mxu0 %v1497
  %v3673 = vpop.f32.mrb[0].mxu0
  %v3674 = vadd.f32 0.0, %v3673
  %v3675 = vpop.f32.mrb[0].mxu0
  %v3676 = vpop.f32.mrb[0].mxu0
  %v3677 = vadd.f32 0.0, %v3676
  %v3678 = vpop.f32.mrb[0].mxu0
  %3679 = vmatprep.mubr.bf16.mxu0 0
  %3680 = vmatmul.mubr.bf16.gmra.mrb[0].mxu0 %v1498
  %v3681 = vpop.f32.mrb[0].mxu0
  %v3682 = vadd.f32 0.0, %v3681
  %v3683 = vpop.f32.mrb[0].mxu0
  %v3684 = vpop.f32.mrb[0].mxu0
  %v3685 = vadd.f32 0.0, %v3684
  %v3686 = vpop.f32.mrb[0].mxu0
  %3687 = vmatprep.mubr.bf16.mxu0 0
  %3688 = vmatmul.mubr.bf16.gmra.mrb[0].mxu0 %v1499
  %v3689 = vpop.f32.mrb[0].mxu0
  %v3690 = vadd.f32 0.0, %v3689
  %v3691 = vpop.f32.mrb[0].mxu0
  %v3692 = vpop.f32.mrb[0].mxu0
  %v3693 = vadd.f32 0.0, %v3692
  %v3694 = vpop.f32.mrb[0].mxu0
  %3695 = vmatprep.mubr.bf16.mxu0 0
  %3696 = vmatmul.mubr.bf16.gmra.mrb[0].mxu0 %v1500
  %v3697 = vpop.f32.mrb[0].mxu0
  %v3698 = vadd.f32 0.0, %v3697
  %v3699 = vpop.f32.mrb[0].mxu0
  %v3700 = vpop.f32.mrb[0].mxu0
  %v3701 = vadd.f32 0.0, %v3700
  %v3702 = vpop.f32.mrb[0].mxu0
  %3703 = vmatprep.mubr.bf16.mxu0 0
  %3704 = vmatmul.mubr.bf16.gmra.mrb[0].mxu0 %v1501
  %v3705 = vpop.f32.mrb[0].mxu0
  %v3706 = vadd.f32 0.0, %v3705
  %v3707 = vpop.f32.mrb[0].mxu0
  %v3708 = vpop.f32.mrb[0].mxu0
  %v3709 = vadd.f32 0.0, %v3708
  %v3710 = vpop.f32.mrb[0].mxu0
  %3711 = vmatprep.mubr.bf16.mxu0 0
  %3712 = vmatmul.mubr.bf16.gmra.mrb[0].mxu0 %v1502
  %v3713 = vpop.f32.mrb[0].mxu0
  %v3714 = vadd.f32 0.0, %v3713
  %v3715 = vpop.f32.mrb[0].mxu0
  %v3716 = vpop.f32.mrb[0].mxu0
  %v3717 = vadd.f32 0.0, %v3716
  %v3718 = vpop.f32.mrb[0].mxu0
  %3719 = vmatprep.mubr.bf16.mxu0 0
  %3720 = vmatmul.mubr.bf16.gmra.mrb[0].mxu0 0
  %v3721 = vpop.f32.mrb[0].mxu0
  %v3722 = vadd.f32 0.0, %v3721
  %v3723 = vpop.f32.mrb[0].mxu0
  %v3724 = vpop.f32.mrb[0].mxu0
  %v3725 = vadd.f32 0.0, %v3724
  %v3726 = vpop.f32.mrb[0].mxu0
  %3727 = vdwg.mxu0
  %v3728 = vadd.f32 %v3470, %v3602
  %v3729 = vadd.f32 %v3471, %v3605
  %v3730 = vadd.f32 %v3472, %v3610
  %v3731 = vadd.f32 %v3473, %v3613
  %v3732 = vadd.f32 %v3474, %v3618
  %v3733 = vadd.f32 %v3475, %v3621
  %v3734 = vadd.f32 %v3476, %v3626
  %v3735 = vadd.f32 %v3477, %v3629
  %v3736 = vadd.f32 %v3478, %v3634
  %v3737 = vadd.f32 %v3479, %v3637
  %v3738 = vadd.f32 %v3480, %v3642
  %v3739 = vadd.f32 %v3481, %v3645
  %v3740 = vadd.f32 %v3482, %v3650
  %v3741 = vadd.f32 %v3483, %v3653
  %v3742 = vadd.f32 %v3484, %v3658
  %v3743 = vadd.f32 %v3485, %v3661
  %v3744 = vadd.f32 %v3486, %v3666
  %v3745 = vadd.f32 %v3487, %v3669
  %v3746 = vadd.f32 %v3488, %v3674
  %v3747 = vadd.f32 %v3489, %v3677
  %v3748 = vadd.f32 %v3490, %v3682
  %v3749 = vadd.f32 %v3491, %v3685
  %v3750 = vadd.f32 %v3492, %v3690
  %v3751 = vadd.f32 %v3493, %v3693
  %v3752 = vadd.f32 %v3494, %v3698
  %v3753 = vadd.f32 %v3495, %v3701
  %v3754 = vadd.f32 %v3496, %v3706
  %v3755 = vadd.f32 %v3497, %v3709
  %v3756 = vadd.f32 %v3498, %v3714
  %v3757 = vadd.f32 %v3499, %v3717
  %v3758 = vadd.f32 %v3500, %v3722
  %v3759 = vadd.f32 %v3501, %v3725
  %v3761 = vlaneseq
  %v3762 = vshrl.u32 %v3761, 7
  %v3763 = vsub.s32 0, %v3762
  %v3764 = vrot.slane %v1037, %v3763
  %v3766 = vadd.f32 %v3728, %v3764
  %v3767 = vadd.f32 %v3729, %v3764
  %v3768 = vadd.f32 %v3730, %v3764
  %v3769 = vadd.f32 %v3731, %v3764
  %v3770 = vadd.f32 %v3732, %v3764
  %v3771 = vadd.f32 %v3733, %v3764
  %v3772 = vadd.f32 %v3734, %v3764
  %v3773 = vadd.f32 %v3735, %v3764
  %v3774 = vadd.f32 %v3736, %v3764
  %v3775 = vadd.f32 %v3737, %v3764
  %v3776 = vadd.f32 %v3738, %v3764
  %v3777 = vadd.f32 %v3739, %v3764
  %v3778 = vadd.f32 %v3740, %v3764
  %v3779 = vadd.f32 %v3741, %v3764
  %v3780 = vadd.f32 %v3742, %v3764
  %v3781 = vadd.f32 %v3743, %v3764
  %v3782 = vadd.f32 %v3744, %v3764
  %v3783 = vadd.f32 %v3745, %v3764
  %v3784 = vadd.f32 %v3746, %v3764
  %v3785 = vadd.f32 %v3747, %v3764
  %v3786 = vadd.f32 %v3748, %v3764
  %v3787 = vadd.f32 %v3749, %v3764
  %v3788 = vadd.f32 %v3750, %v3764
  %v3789 = vadd.f32 %v3751, %v3764
  %v3790 = vadd.f32 %v3752, %v3764
  %v3791 = vadd.f32 %v3753, %v3764
  %v3792 = vadd.f32 %v3754, %v3764
  %v3793 = vadd.f32 %v3755, %v3764
  %v3794 = vadd.f32 %v3756, %v3764
  %v3795 = vadd.f32 %v3757, %v3764
  %v3796 = vadd.f32 %v3758, %v3764
  %v3797 = vadd.f32 %v3759, %v3764
  %v3798 = vld [vmem:[%s1] sm:$0x1]
  %v3799 = vxor.u32 %v3798, 2147483648
  %v3800 = vmul.f32 %v3799, 1.442695
  %v3801 = vpow.pop %v3800
  %v3802 = vadd.f32 %v3801, 1.0
  %v3803 = vrcp.pop %v3802
  %v3804 = vmul.f32 1.0, %v3803
  %v3805 = vmul.f32 %v3798, %v3804
  %v3806 = vld [vmem:[%s6] sm:$0xff]
  %v3807 = vld [vmem:[%s6 + $0x8] sm:$0xff]
  %v3808 = vld [vmem:[%s6 + $0x10] sm:$0xff]
  %v3809 = vld [vmem:[%s6 + $0x18] sm:$0xff]
  %v3810 = vld [vmem:[%s6 + $0x20] sm:$0xff]
  %v3811 = vld [vmem:[%s6 + $0x28] sm:$0xff]
  %v3812 = vld [vmem:[%s6 + $0x30] sm:$0xff]
  %v3813 = vld [vmem:[%s6 + $0x38] sm:$0xff]
  %v3814 = vld [vmem:[%s7] sm:$0x1]
  %vm3815 = vcmask 523264
  %v3817 = vsel %vm3815, %v3805, 0
  %3819 = vmatprep.subr.mxu0 0.0
  %3820 = vmatpush1.msra.mxu0 %v3806
  %3821 = vmatprep.subr.mxu0 0.0
  %3822 = vmatpush1.msra.mxu0 %v3807
  %3823 = vmatprep.subr.mxu0 0.0
  %3824 = vmatpush1.msra.mxu0 %v3808
  %3825 = vmatprep.subr.mxu0 0.0
  %3826 = vmatpush1.msra.mxu0 %v3809
  %3827 = vmatprep.subr.mxu0 0.0
  %3828 = vmatpush1.msra.mxu0 %v3810
  %3829 = vmatprep.subr.mxu0 0.0
  %3830 = vmatpush1.msra.mxu0 %v3811
  %3831 = vmatprep.subr.mxu0 0.0
  %3832 = vmatpush1.msra.mxu0 %v3812
  %3833 = vmatprep.subr.mxu0 0.0
  %3834 = vmatpush1.msra.mxu0 %v3813
  %3835 = vmatprep.subr.mxu0 0.0
  %3836 = vmatpush1.msra.mxu0 0.0
  %3837 = vmatprep.subr.mxu0 0.0
  %3838 = vmatpush1.msra.mxu0 0.0
  %3839 = vmatprep.subr.mxu0 0.0
  %3840 = vmatpush1.msra.mxu0 0.0
  %3841 = vmatprep.subr.mxu0 0.0
  %3842 = vmatpush1.msra.mxu0 0.0
  %3843 = vmatprep.subr.mxu0 0.0
  %3844 = vmatpush1.msra.mxu0 0.0
  %3845 = vmatprep.subr.mxu0 0.0
  %3846 = vmatpush1.msra.mxu0 0.0
  %3847 = vmatprep.subr.mxu0 0.0
  %3848 = vmatpush1.msra.mxu0 0.0
  %3849 = vmatprep.subr.mxu0 0.0
  %3850 = vmatpush1.msra.mxu0 0.0
  %3851 = vmatprep.subr.mxu0 0.0
  %3852 = vmatpush1.msra.mxu0 0.0
  %3853 = vmatprep.subr.mxu0 0.0
  %3854 = vmatpush1.msra.mxu0 0.0
  %3855 = vmatprep.subr.mxu0 0.0
  %3856 = vmatpush1.msra.mxu0 0.0
  %3857 = vmatprep.subr.mxu0 0.0
  %3858 = vmatpush1.msra.mxu0 0.0
  %3859 = vmatprep.subr.mxu0 0.0
  %3860 = vmatpush1.msra.mxu0 0.0
  %3861 = vmatprep.subr.mxu0 0.0
  %3862 = vmatpush1.msra.mxu0 0.0
  %3863 = vmatprep.subr.mxu0 0.0
  %3864 = vmatpush1.msra.mxu0 0.0
  %3865 = vmatprep.subr.mxu0 0.0
  %3866 = vmatpush1.msra.mxu0 0.0
  %3867 = vmatprep.subr.mxu0 0.0
  %3868 = vmatpush1.msra.mxu0 0.0
  %3869 = vmatprep.subr.mxu0 0.0
  %3870 = vmatpush1.msra.mxu0 0.0
  %3871 = vmatprep.subr.mxu0 0.0
  %3872 = vmatpush1.msra.mxu0 0.0
  %3873 = vmatprep.subr.mxu0 0.0
  %3874 = vmatpush1.msra.mxu0 0.0
  %3875 = vmatprep.subr.mxu0 0.0
  %3876 = vmatpush1.msra.mxu0 0.0
  %3877 = vmatprep.subr.mxu0 0.0
  %3878 = vmatpush1.msra.mxu0 0.0
  %3879 = vmatprep.subr.mxu0 0.0
  %3880 = vmatpush1.msra.mxu0 0.0
  %3881 = vmatprep.subr.mxu0 0.0
  %3882 = vmatpush1.msra.mxu0 0.0
  %3883 = vmatprep.mubr.f32.mxu0 0.0
  %3884 = vmatmul.mubr.f32.gmra.mrb[0].mxu0 %v3817
  %v3885 = vpop.f32.mrb[0].mxu0
  %v3886 = vadd.f32 %v3814, %v3885
  %v3887 = vpop.f32.mrb[0].mxu0
  %3888 = vdwg.mxu0
  %v3889 = vlaneseq
  %v3890 = vshrl.u32 %v3889, 7
  %v3891 = vsub.s32 0, %v3890
  %v3892 = vrot.slane %v3886, %v3891
  %v3893 = vadd.f32 %v3766, %v3892
  %v3894 = vadd.f32 %v3767, %v3892
  %v3895 = vadd.f32 %v3768, %v3892
  %v3896 = vadd.f32 %v3769, %v3892
  %v3897 = vadd.f32 %v3770, %v3892
  %v3898 = vadd.f32 %v3771, %v3892
  %v3899 = vadd.f32 %v3772, %v3892
  %v3900 = vadd.f32 %v3773, %v3892
  %v3901 = vadd.f32 %v3774, %v3892
  %v3902 = vadd.f32 %v3775, %v3892
  %v3903 = vadd.f32 %v3776, %v3892
  %v3904 = vadd.f32 %v3777, %v3892
  %v3905 = vadd.f32 %v3778, %v3892
  %v3906 = vadd.f32 %v3779, %v3892
  %v3907 = vadd.f32 %v3780, %v3892
  %v3908 = vadd.f32 %v3781, %v3892
  %v3909 = vadd.f32 %v3782, %v3892
  %v3910 = vadd.f32 %v3783, %v3892
  %v3911 = vadd.f32 %v3784, %v3892
  %v3912 = vadd.f32 %v3785, %v3892
  %v3913 = vadd.f32 %v3786, %v3892
  %v3914 = vadd.f32 %v3787, %v3892
  %v3915 = vadd.f32 %v3788, %v3892
  %v3916 = vadd.f32 %v3789, %v3892
  %v3917 = vadd.f32 %v3790, %v3892
  %v3918 = vadd.f32 %v3791, %v3892
  %v3919 = vadd.f32 %v3792, %v3892
  %v3920 = vadd.f32 %v3793, %v3892
  %v3921 = vadd.f32 %v3794, %v3892
  %v3922 = vadd.f32 %v3795, %v3892
  %v3923 = vadd.f32 %v3796, %v3892
  %v3924 = vadd.f32 %v3797, %v3892
  %v3925 = vld [vmem:[%s8] sm:$0x1]
  %v3926 = vld [vmem:[%s9] sm:$0x1]
  %v3927 = vadd.f32 %v3893, %v3894
  %v3928 = vadd.f32 %v3927, %v3895
  %v3929 = vadd.f32 %v3928, %v3896
  %v3930 = vadd.f32 %v3929, %v3897
  %v3931 = vadd.f32 %v3930, %v3898
  %v3932 = vadd.f32 %v3931, %v3899
  %v3933 = vadd.f32 %v3932, %v3900
  %v3934 = vadd.f32 %v3933, %v3901
  %v3935 = vadd.f32 %v3934, %v3902
  %v3936 = vadd.f32 %v3935, %v3903
  %v3937 = vadd.f32 %v3936, %v3904
  %v3938 = vadd.f32 %v3937, %v3905
  %v3939 = vadd.f32 %v3938, %v3906
  %v3940 = vadd.f32 %v3939, %v3907
  %v3941 = vadd.f32 %v3940, %v3908
  %v3942 = vadd.f32 %v3941, %v3909
  %v3943 = vadd.f32 %v3942, %v3910
  %v3944 = vadd.f32 %v3943, %v3911
  %v3945 = vadd.f32 %v3944, %v3912
  %v3946 = vadd.f32 %v3945, %v3913
  %v3947 = vadd.f32 %v3946, %v3914
  %v3948 = vadd.f32 %v3947, %v3915
  %v3949 = vadd.f32 %v3948, %v3916
  %v3950 = vadd.f32 %v3949, %v3917
  %v3951 = vadd.f32 %v3950, %v3918
  %v3952 = vadd.f32 %v3951, %v3919
  %v3953 = vadd.f32 %v3952, %v3920
  %v3954 = vadd.f32 %v3953, %v3921
  %v3955 = vadd.f32 %v3954, %v3922
  %v3956 = vadd.f32 %v3955, %v3923
  %v3957 = vadd.f32 %v3956, %v3924
  %v3958 = vrot.slane %v3957, 4
  %v3959 = vadd.f32 %v3957, %v3958
  %v3960 = vrot.slane %v3959, 2
  %v3961 = vadd.f32 %v3959, %v3960
  %v3962 = vrot.slane %v3961, 1
  %v3963 = vadd.f32 %v3961, %v3962
  %v3964 = vmul.f32 %v3893, %v3893
  %v3965 = vmul.f32 %v3894, %v3894
  %v3966 = vmul.f32 %v3895, %v3895
  %v3967 = vmul.f32 %v3896, %v3896
  %v3968 = vmul.f32 %v3897, %v3897
  %v3969 = vmul.f32 %v3898, %v3898
  %v3970 = vmul.f32 %v3899, %v3899
  %v3971 = vmul.f32 %v3900, %v3900
  %v3972 = vmul.f32 %v3901, %v3901
  %v3973 = vmul.f32 %v3902, %v3902
  %v3974 = vmul.f32 %v3903, %v3903
  %v3975 = vmul.f32 %v3904, %v3904
  %v3976 = vmul.f32 %v3905, %v3905
  %v3977 = vmul.f32 %v3906, %v3906
  %v3978 = vmul.f32 %v3907, %v3907
  %v3979 = vmul.f32 %v3908, %v3908
  %v3980 = vmul.f32 %v3909, %v3909
  %v3981 = vmul.f32 %v3910, %v3910
  %v3982 = vmul.f32 %v3911, %v3911
  %v3983 = vmul.f32 %v3912, %v3912
  %v3984 = vmul.f32 %v3913, %v3913
  %v3985 = vmul.f32 %v3914, %v3914
  %v3986 = vmul.f32 %v3915, %v3915
  %v3987 = vmul.f32 %v3916, %v3916
  %v3988 = vmul.f32 %v3917, %v3917
  %v3989 = vmul.f32 %v3918, %v3918
  %v3990 = vmul.f32 %v3919, %v3919
  %v3991 = vmul.f32 %v3920, %v3920
  %v3992 = vmul.f32 %v3921, %v3921
  %v3993 = vmul.f32 %v3922, %v3922
  %v3994 = vmul.f32 %v3923, %v3923
  %v3995 = vmul.f32 %v3924, %v3924
  %v3996 = vadd.f32 %v3964, %v3965
  %v3997 = vadd.f32 %v3996, %v3966
  %v3998 = vadd.f32 %v3997, %v3967
  %v3999 = vadd.f32 %v3998, %v3968
  %v4000 = vadd.f32 %v3999, %v3969
  %v4001 = vadd.f32 %v4000, %v3970
  %v4002 = vadd.f32 %v4001, %v3971
  %v4003 = vadd.f32 %v4002, %v3972
  %v4004 = vadd.f32 %v4003, %v3973
  %v4005 = vadd.f32 %v4004, %v3974
  %v4006 = vadd.f32 %v4005, %v3975
  %v4007 = vadd.f32 %v4006, %v3976
  %v4008 = vadd.f32 %v4007, %v3977
  %v4009 = vadd.f32 %v4008, %v3978
  %v4010 = vadd.f32 %v4009, %v3979
  %v4011 = vadd.f32 %v4010, %v3980
  %v4012 = vadd.f32 %v4011, %v3981
  %v4013 = vadd.f32 %v4012, %v3982
  %v4014 = vadd.f32 %v4013, %v3983
  %v4015 = vadd.f32 %v4014, %v3984
  %v4016 = vadd.f32 %v4015, %v3985
  %v4017 = vadd.f32 %v4016, %v3986
  %v4018 = vadd.f32 %v4017, %v3987
  %v4019 = vadd.f32 %v4018, %v3988
  %v4020 = vadd.f32 %v4019, %v3989
  %v4021 = vadd.f32 %v4020, %v3990
  %v4022 = vadd.f32 %v4021, %v3991
  %v4023 = vadd.f32 %v4022, %v3992
  %v4024 = vadd.f32 %v4023, %v3993
  %v4025 = vadd.f32 %v4024, %v3994
  %v4026 = vadd.f32 %v4025, %v3995
  %v4027 = vrot.slane %v4026, 4
  %v4028 = vadd.f32 %v4026, %v4027
  %v4029 = vrot.slane %v4028, 2
  %v4030 = vadd.f32 %v4028, %v4029
  %v4031 = vrot.slane %v4030, 1
  %v4032 = vadd.f32 %v4030, %v4031
  %v4033 = vsel %vm678, %v3963, %v4032
  %4034 = vrot.lane.b32.xlu0 %v4033, 127
  %v4035 = vpop.permute.xlu0 %4034
  %4036 = vrot.lane.b32.xlu0 %v4033, 1
  %v4037 = vpop.permute.xlu0 %4036
  %v4038 = vsel %vm685, %v4035, %v4037
  %v4039 = vadd.f32 %v4033, %v4038
  %v4040 = vmul.f32 %v4039, 0.001953125
  %v4041 = vmul.f32 %v4040, %v4040
  %v4043 = vrot.slane %v4041, 7
  %v4045 = vsub.f32 %v4040, %v4043
  %v4046 = vadd.f32 %v4045, 1e-05
  %v4047 = vrsqrt.pop %v4046
  %v4048 = vlaneseq
  %v4049 = vshrl.u32 %v4048, 7
  %v4050 = vsub.s32 0, %v4049
  %v4051 = vrot.slane %v4040, %v4050
  %v4052 = vsub.f32 %v3893, %v4051
  %v4053 = vsub.f32 %v3894, %v4051
  %v4054 = vsub.f32 %v3895, %v4051
  %v4055 = vsub.f32 %v3896, %v4051
  %v4056 = vsub.f32 %v3897, %v4051
  %v4057 = vsub.f32 %v3898, %v4051
  %v4058 = vsub.f32 %v3899, %v4051
  %v4059 = vsub.f32 %v3900, %v4051
  %v4060 = vsub.f32 %v3901, %v4051
  %v4061 = vsub.f32 %v3902, %v4051
  %v4062 = vsub.f32 %v3903, %v4051
  %v4063 = vsub.f32 %v3904, %v4051
  %v4064 = vsub.f32 %v3905, %v4051
  %v4065 = vsub.f32 %v3906, %v4051
  %v4066 = vsub.f32 %v3907, %v4051
  %v4067 = vsub.f32 %v3908, %v4051
  %v4068 = vsub.f32 %v3909, %v4051
  %v4069 = vsub.f32 %v3910, %v4051
  %v4070 = vsub.f32 %v3911, %v4051
  %v4071 = vsub.f32 %v3912, %v4051
  %v4072 = vsub.f32 %v3913, %v4051
  %v4073 = vsub.f32 %v3914, %v4051
  %v4074 = vsub.f32 %v3915, %v4051
  %v4075 = vsub.f32 %v3916, %v4051
  %v4076 = vsub.f32 %v3917, %v4051
  %v4077 = vsub.f32 %v3918, %v4051
  %v4078 = vsub.f32 %v3919, %v4051
  %v4079 = vsub.f32 %v3920, %v4051
  %v4080 = vsub.f32 %v3921, %v4051
  %v4081 = vsub.f32 %v3922, %v4051
  %v4082 = vsub.f32 %v3923, %v4051
  %v4083 = vsub.f32 %v3924, %v4051
  %v4085 = vlaneseq
  %v4086 = vshrl.u32 %v4085, 7
  %v4087 = vsub.s32 0, %v4086
  %v4088 = vrot.slane %v3925, %v4087
  %v4090 = vmul.f32 %v4047, %v4088
  %v4091 = vlaneseq
  %v4092 = vshrl.u32 %v4091, 7
  %v4093 = vsub.s32 1, %v4092
  %v4094 = vrot.slane %v4090, %v4093
  %v4095 = vmul.f32 %v4052, %v4094
  %v4096 = vmul.f32 %v4053, %v4094
  %v4097 = vmul.f32 %v4054, %v4094
  %v4098 = vmul.f32 %v4055, %v4094
  %v4099 = vmul.f32 %v4056, %v4094
  %v4100 = vmul.f32 %v4057, %v4094
  %v4101 = vmul.f32 %v4058, %v4094
  %v4102 = vmul.f32 %v4059, %v4094
  %v4103 = vmul.f32 %v4060, %v4094
  %v4104 = vmul.f32 %v4061, %v4094
  %v4105 = vmul.f32 %v4062, %v4094
  %v4106 = vmul.f32 %v4063, %v4094
  %v4107 = vmul.f32 %v4064, %v4094
  %v4108 = vmul.f32 %v4065, %v4094
  %v4109 = vmul.f32 %v4066, %v4094
  %v4110 = vmul.f32 %v4067, %v4094
  %v4111 = vmul.f32 %v4068, %v4094
  %v4112 = vmul.f32 %v4069, %v4094
  %v4113 = vmul.f32 %v4070, %v4094
  %v4114 = vmul.f32 %v4071, %v4094
  %v4115 = vmul.f32 %v4072, %v4094
  %v4116 = vmul.f32 %v4073, %v4094
  %v4117 = vmul.f32 %v4074, %v4094
  %v4118 = vmul.f32 %v4075, %v4094
  %v4119 = vmul.f32 %v4076, %v4094
  %v4120 = vmul.f32 %v4077, %v4094
  %v4121 = vmul.f32 %v4078, %v4094
  %v4122 = vmul.f32 %v4079, %v4094
  %v4123 = vmul.f32 %v4080, %v4094
  %v4124 = vmul.f32 %v4081, %v4094
  %v4125 = vmul.f32 %v4082, %v4094
  %v4126 = vmul.f32 %v4083, %v4094
  %v4128 = vlaneseq
  %v4129 = vshrl.u32 %v4128, 7
  %v4130 = vsub.s32 0, %v4129
  %v4131 = vrot.slane %v3926, %v4130
  %v4133 = vadd.f32 %v4095, %v4131
  %v4134 = vadd.f32 %v4096, %v4131
  %v4135 = vadd.f32 %v4097, %v4131
  %v4136 = vadd.f32 %v4098, %v4131
  %v4137 = vadd.f32 %v4099, %v4131
  %v4138 = vadd.f32 %v4100, %v4131
  %v4139 = vadd.f32 %v4101, %v4131
  %v4140 = vadd.f32 %v4102, %v4131
  %v4141 = vadd.f32 %v4103, %v4131
  %v4142 = vadd.f32 %v4104, %v4131
  %v4143 = vadd.f32 %v4105, %v4131
  %v4144 = vadd.f32 %v4106, %v4131
  %v4145 = vadd.f32 %v4107, %v4131
  %v4146 = vadd.f32 %v4108, %v4131
  %v4147 = vadd.f32 %v4109, %v4131
  %v4148 = vadd.f32 %v4110, %v4131
  %v4149 = vadd.f32 %v4111, %v4131
  %v4150 = vadd.f32 %v4112, %v4131
  %v4151 = vadd.f32 %v4113, %v4131
  %v4152 = vadd.f32 %v4114, %v4131
  %v4153 = vadd.f32 %v4115, %v4131
  %v4154 = vadd.f32 %v4116, %v4131
  %v4155 = vadd.f32 %v4117, %v4131
  %v4156 = vadd.f32 %v4118, %v4131
  %v4157 = vadd.f32 %v4119, %v4131
  %v4158 = vadd.f32 %v4120, %v4131
  %v4159 = vadd.f32 %v4121, %v4131
  %v4160 = vadd.f32 %v4122, %v4131
  %v4161 = vadd.f32 %v4123, %v4131
  %v4162 = vadd.f32 %v4124, %v4131
  %v4163 = vadd.f32 %v4125, %v4131
  %v4164 = vadd.f32 %v4126, %v4131
  %v4165 = vxor.u32 %v4133, 2147483648
  %v4166 = vxor.u32 %v4134, 2147483648
  %v4167 = vxor.u32 %v4135, 2147483648
  %v4168 = vxor.u32 %v4136, 2147483648
  %v4169 = vxor.u32 %v4137, 2147483648
  %v4170 = vxor.u32 %v4138, 2147483648
  %v4171 = vxor.u32 %v4139, 2147483648
  %v4172 = vxor.u32 %v4140, 2147483648
  %v4173 = vxor.u32 %v4141, 2147483648
  %v4174 = vxor.u32 %v4142, 2147483648
  %v4175 = vxor.u32 %v4143, 2147483648
  %v4176 = vxor.u32 %v4144, 2147483648
  %v4177 = vxor.u32 %v4145, 2147483648
  %v4178 = vxor.u32 %v4146, 2147483648
  %v4179 = vxor.u32 %v4147, 2147483648
  %v4180 = vxor.u32 %v4148, 2147483648
  %v4181 = vxor.u32 %v4149, 2147483648
  %v4182 = vxor.u32 %v4150, 2147483648
  %v4183 = vxor.u32 %v4151, 2147483648
  %v4184 = vxor.u32 %v4152, 2147483648
  %v4185 = vxor.u32 %v4153, 2147483648
  %v4186 = vxor.u32 %v4154, 2147483648
  %v4187 = vxor.u32 %v4155, 2147483648
  %v4188 = vxor.u32 %v4156, 2147483648
  %v4189 = vxor.u32 %v4157, 2147483648
  %v4190 = vxor.u32 %v4158, 2147483648
  %v4191 = vxor.u32 %v4159, 2147483648
  %v4192 = vxor.u32 %v4160, 2147483648
  %v4193 = vxor.u32 %v4161, 2147483648
  %v4194 = vxor.u32 %v4162, 2147483648
  %v4195 = vxor.u32 %v4163, 2147483648
  %v4196 = vxor.u32 %v4164, 2147483648
  %v4197 = vmul.f32 %v4165, 1.442695
  %v4198 = vpow.pop %v4197
  %v4199 = vmul.f32 %v4166, 1.442695
  %v4200 = vpow.pop %v4199
  %v4201 = vmul.f32 %v4167, 1.442695
  %v4202 = vpow.pop %v4201
  %v4203 = vmul.f32 %v4168, 1.442695
  %v4204 = vpow.pop %v4203
  %v4205 = vmul.f32 %v4169, 1.442695
  %v4206 = vpow.pop %v4205
  %v4207 = vmul.f32 %v4170, 1.442695
  %v4208 = vpow.pop %v4207
  %v4209 = vmul.f32 %v4171, 1.442695
  %v4210 = vpow.pop %v4209
  %v4211 = vmul.f32 %v4172, 1.442695
  %v4212 = vpow.pop %v4211
  %v4213 = vmul.f32 %v4173, 1.442695
  %v4214 = vpow.pop %v4213
  %v4215 = vmul.f32 %v4174, 1.442695
  %v4216 = vpow.pop %v4215
  %v4217 = vmul.f32 %v4175, 1.442695
  %v4218 = vpow.pop %v4217
  %v4219 = vmul.f32 %v4176, 1.442695
  %v4220 = vpow.pop %v4219
  %v4221 = vmul.f32 %v4177, 1.442695
  %v4222 = vpow.pop %v4221
  %v4223 = vmul.f32 %v4178, 1.442695
  %v4224 = vpow.pop %v4223
  %v4225 = vmul.f32 %v4179, 1.442695
  %v4226 = vpow.pop %v4225
  %v4227 = vmul.f32 %v4180, 1.442695
  %v4228 = vpow.pop %v4227
  %v4229 = vmul.f32 %v4181, 1.442695
  %v4230 = vpow.pop %v4229
  %v4231 = vmul.f32 %v4182, 1.442695
  %v4232 = vpow.pop %v4231
  %v4233 = vmul.f32 %v4183, 1.442695
  %v4234 = vpow.pop %v4233
  %v4235 = vmul.f32 %v4184, 1.442695
  %v4236 = vpow.pop %v4235
  %v4237 = vmul.f32 %v4185, 1.442695
  %v4238 = vpow.pop %v4237
  %v4239 = vmul.f32 %v4186, 1.442695
  %v4240 = vpow.pop %v4239
  %v4241 = vmul.f32 %v4187, 1.442695
  %v4242 = vpow.pop %v4241
  %v4243 = vmul.f32 %v4188, 1.442695
  %v4244 = vpow.pop %v4243
  %v4245 = vmul.f32 %v4189, 1.442695
  %v4246 = vpow.pop %v4245
  %v4247 = vmul.f32 %v4190, 1.442695
  %v4248 = vpow.pop %v4247
  %v4249 = vmul.f32 %v4191, 1.442695
  %v4250 = vpow.pop %v4249
  %v4251 = vmul.f32 %v4192, 1.442695
  %v4252 = vpow.pop %v4251
  %v4253 = vmul.f32 %v4193, 1.442695
  %v4254 = vpow.pop %v4253
  %v4255 = vmul.f32 %v4194, 1.442695
  %v4256 = vpow.pop %v4255
  %v4257 = vmul.f32 %v4195, 1.442695
  %v4258 = vpow.pop %v4257
  %v4259 = vmul.f32 %v4196, 1.442695
  %v4260 = vpow.pop %v4259
  %v4261 = vadd.f32 %v4198, 1.0
  %v4262 = vadd.f32 %v4200, 1.0
  %v4263 = vadd.f32 %v4202, 1.0
  %v4264 = vadd.f32 %v4204, 1.0
  %v4265 = vadd.f32 %v4206, 1.0
  %v4266 = vadd.f32 %v4208, 1.0
  %v4267 = vadd.f32 %v4210, 1.0
  %v4268 = vadd.f32 %v4212, 1.0
  %v4269 = vadd.f32 %v4214, 1.0
  %v4270 = vadd.f32 %v4216, 1.0
  %v4271 = vadd.f32 %v4218, 1.0
  %v4272 = vadd.f32 %v4220, 1.0
  %v4273 = vadd.f32 %v4222, 1.0
  %v4274 = vadd.f32 %v4224, 1.0
  %v4275 = vadd.f32 %v4226, 1.0
  %v4276 = vadd.f32 %v4228, 1.0
  %v4277 = vadd.f32 %v4230, 1.0
  %v4278 = vadd.f32 %v4232, 1.0
  %v4279 = vadd.f32 %v4234, 1.0
  %v4280 = vadd.f32 %v4236, 1.0
  %v4281 = vadd.f32 %v4238, 1.0
  %v4282 = vadd.f32 %v4240, 1.0
  %v4283 = vadd.f32 %v4242, 1.0
  %v4284 = vadd.f32 %v4244, 1.0
  %v4285 = vadd.f32 %v4246, 1.0
  %v4286 = vadd.f32 %v4248, 1.0
  %v4287 = vadd.f32 %v4250, 1.0
  %v4288 = vadd.f32 %v4252, 1.0
  %v4289 = vadd.f32 %v4254, 1.0
  %v4290 = vadd.f32 %v4256, 1.0
  %v4291 = vadd.f32 %v4258, 1.0
  %v4292 = vadd.f32 %v4260, 1.0
  %v4293 = vrcp.pop %v4261
  %v4294 = vmul.f32 1.0, %v4293
  %v4295 = vrcp.pop %v4262
  %v4296 = vmul.f32 1.0, %v4295
  %v4297 = vrcp.pop %v4263
  %v4298 = vmul.f32 1.0, %v4297
  %v4299 = vrcp.pop %v4264
  %v4300 = vmul.f32 1.0, %v4299
  %v4301 = vrcp.pop %v4265
  %v4302 = vmul.f32 1.0, %v4301
  %v4303 = vrcp.pop %v4266
  %v4304 = vmul.f32 1.0, %v4303
  %v4305 = vrcp.pop %v4267
  %v4306 = vmul.f32 1.0, %v4305
  %v4307 = vrcp.pop %v4268
  %v4308 = vmul.f32 1.0, %v4307
  %v4309 = vrcp.pop %v4269
  %v4310 = vmul.f32 1.0, %v4309
  %v4311 = vrcp.pop %v4270
  %v4312 = vmul.f32 1.0, %v4311
  %v4313 = vrcp.pop %v4271
  %v4314 = vmul.f32 1.0, %v4313
  %v4315 = vrcp.pop %v4272
  %v4316 = vmul.f32 1.0, %v4315
  %v4317 = vrcp.pop %v4273
  %v4318 = vmul.f32 1.0, %v4317
  %v4319 = vrcp.pop %v4274
  %v4320 = vmul.f32 1.0, %v4319
  %v4321 = vrcp.pop %v4275
  %v4322 = vmul.f32 1.0, %v4321
  %v4323 = vrcp.pop %v4276
  %v4324 = vmul.f32 1.0, %v4323
  %v4325 = vrcp.pop %v4277
  %v4326 = vmul.f32 1.0, %v4325
  %v4327 = vrcp.pop %v4278
  %v4328 = vmul.f32 1.0, %v4327
  %v4329 = vrcp.pop %v4279
  %v4330 = vmul.f32 1.0, %v4329
  %v4331 = vrcp.pop %v4280
  %v4332 = vmul.f32 1.0, %v4331
  %v4333 = vrcp.pop %v4281
  %v4334 = vmul.f32 1.0, %v4333
  %v4335 = vrcp.pop %v4282
  %v4336 = vmul.f32 1.0, %v4335
  %v4337 = vrcp.pop %v4283
  %v4338 = vmul.f32 1.0, %v4337
  %v4339 = vrcp.pop %v4284
  %v4340 = vmul.f32 1.0, %v4339
  %v4341 = vrcp.pop %v4285
  %v4342 = vmul.f32 1.0, %v4341
  %v4343 = vrcp.pop %v4286
  %v4344 = vmul.f32 1.0, %v4343
  %v4345 = vrcp.pop %v4287
  %v4346 = vmul.f32 1.0, %v4345
  %v4347 = vrcp.pop %v4288
  %v4348 = vmul.f32 1.0, %v4347
  %v4349 = vrcp.pop %v4289
  %v4350 = vmul.f32 1.0, %v4349
  %v4351 = vrcp.pop %v4290
  %v4352 = vmul.f32 1.0, %v4351
  %v4353 = vrcp.pop %v4291
  %v4354 = vmul.f32 1.0, %v4353
  %v4355 = vrcp.pop %v4292
  %v4356 = vmul.f32 1.0, %v4355
  %v4357 = vmul.f32 %v4133, %v4294
  %v4358 = vmul.f32 %v4134, %v4296
  %v4359 = vmul.f32 %v4135, %v4298
  %v4360 = vmul.f32 %v4136, %v4300
  %v4361 = vmul.f32 %v4137, %v4302
  %v4362 = vmul.f32 %v4138, %v4304
  %v4363 = vmul.f32 %v4139, %v4306
  %v4364 = vmul.f32 %v4140, %v4308
  %v4365 = vmul.f32 %v4141, %v4310
  %v4366 = vmul.f32 %v4142, %v4312
  %v4367 = vmul.f32 %v4143, %v4314
  %v4368 = vmul.f32 %v4144, %v4316
  %v4369 = vmul.f32 %v4145, %v4318
  %v4370 = vmul.f32 %v4146, %v4320
  %v4371 = vmul.f32 %v4147, %v4322
  %v4372 = vmul.f32 %v4148, %v4324
  %v4373 = vmul.f32 %v4149, %v4326
  %v4374 = vmul.f32 %v4150, %v4328
  %v4375 = vmul.f32 %v4151, %v4330
  %v4376 = vmul.f32 %v4152, %v4332
  %v4377 = vmul.f32 %v4153, %v4334
  %v4378 = vmul.f32 %v4154, %v4336
  %v4379 = vmul.f32 %v4155, %v4338
  %v4380 = vmul.f32 %v4156, %v4340
  %v4381 = vmul.f32 %v4157, %v4342
  %v4382 = vmul.f32 %v4158, %v4344
  %v4383 = vmul.f32 %v4159, %v4346
  %v4384 = vmul.f32 %v4160, %v4348
  %v4385 = vmul.f32 %v4161, %v4350
  %v4386 = vmul.f32 %v4162, %v4352
  %v4387 = vmul.f32 %v4163, %v4354
  %v4388 = vmul.f32 %v4164, %v4356
  %v4389 = vld [vmem:[%s11] sm:$0x1]
  %v4422 = vrot.slane %v4357, 7
  %v4423 = vrot.slane %v4358, 7
  %v4424 = vsel %vm678, %v4422, %v4423
  %v4425 = vrot.slane %v4359, 7
  %v4426 = vsel %vm678, %v4423, %v4425
  %v4427 = vrot.slane %v4360, 7
  %v4428 = vsel %vm678, %v4425, %v4427
  %v4429 = vrot.slane %v4361, 7
  %v4430 = vsel %vm678, %v4427, %v4429
  %v4431 = vrot.slane %v4362, 7
  %v4432 = vsel %vm678, %v4429, %v4431
  %v4433 = vrot.slane %v4363, 7
  %v4434 = vsel %vm678, %v4431, %v4433
  %v4435 = vrot.slane %v4364, 7
  %v4436 = vsel %vm678, %v4433, %v4435
  %v4437 = vrot.slane %v4365, 7
  %v4438 = vsel %vm678, %v4435, %v4437
  %v4439 = vrot.slane %v4366, 7
  %v4440 = vsel %vm678, %v4437, %v4439
  %v4441 = vrot.slane %v4367, 7
  %v4442 = vsel %vm678, %v4439, %v4441
  %v4443 = vrot.slane %v4368, 7
  %v4444 = vsel %vm678, %v4441, %v4443
  %v4445 = vrot.slane %v4369, 7
  %v4446 = vsel %vm678, %v4443, %v4445
  %v4447 = vrot.slane %v4370, 7
  %v4448 = vsel %vm678, %v4445, %v4447
  %v4449 = vrot.slane %v4371, 7
  %v4450 = vsel %vm678, %v4447, %v4449
  %v4451 = vrot.slane %v4372, 7
  %v4452 = vsel %vm678, %v4449, %v4451
  %v4453 = vrot.slane %v4373, 7
  %v4454 = vsel %vm678, %v4451, %v4453
  %v4455 = vrot.slane %v4374, 7
  %v4456 = vsel %vm678, %v4453, %v4455
  %v4457 = vrot.slane %v4375, 7
  %v4458 = vsel %vm678, %v4455, %v4457
  %v4459 = vrot.slane %v4376, 7
  %v4460 = vsel %vm678, %v4457, %v4459
  %v4461 = vrot.slane %v4377, 7
  %v4462 = vsel %vm678, %v4459, %v4461
  %v4463 = vrot.slane %v4378, 7
  %v4464 = vsel %vm678, %v4461, %v4463
  %v4465 = vrot.slane %v4379, 7
  %v4466 = vsel %vm678, %v4463, %v4465
  %v4467 = vrot.slane %v4380, 7
  %v4468 = vsel %vm678, %v4465, %v4467
  %v4469 = vrot.slane %v4381, 7
  %v4470 = vsel %vm678, %v4467, %v4469
  %v4471 = vrot.slane %v4382, 7
  %v4472 = vsel %vm678, %v4469, %v4471
  %v4473 = vrot.slane %v4383, 7
  %v4474 = vsel %vm678, %v4471, %v4473
  %v4475 = vrot.slane %v4384, 7
  %v4476 = vsel %vm678, %v4473, %v4475
  %v4477 = vrot.slane %v4385, 7
  %v4478 = vsel %vm678, %v4475, %v4477
  %v4479 = vrot.slane %v4386, 7
  %v4480 = vsel %vm678, %v4477, %v4479
  %v4481 = vrot.slane %v4387, 7
  %v4482 = vsel %vm678, %v4479, %v4481
  %v4483 = vrot.slane %v4388, 7
  %v4484 = vsel %vm678, %v4481, %v4483
  %v4517 = vsel %vm678, 0.0, %v4422
  %v4518 = vsel %vm1198, %v4517, 0.0
  %v4519 = vsel %vm1199, %v4424, 0.0
  %v4520 = vsel %vm1200, %v4426, 0.0
  %v4521 = vsel %vm1201, %v4428, 0.0
  %v4522 = vsel %vm1202, %v4430, 0.0
  %v4523 = vsel %vm1203, %v4432, 0.0
  %v4524 = vsel %vm1204, %v4434, 0.0
  %v4525 = vsel %vm1205, %v4436, 0.0
  %v4526 = vsel %vm1206, %v4438, 0.0
  %v4527 = vsel %vm1207, %v4440, 0.0
  %v4528 = vsel %vm1208, %v4442, 0.0
  %v4529 = vsel %vm1209, %v4444, 0.0
  %v4530 = vsel %vm1210, %v4446, 0.0
  %v4531 = vsel %vm1211, %v4448, 0.0
  %v4532 = vsel %vm1212, %v4450, 0.0
  %v4533 = vsel %vm1213, %v4452, 0.0
  %v4534 = vsel %vm1214, %v4454, 0.0
  %v4535 = vsel %vm1215, %v4456, 0.0
  %v4536 = vsel %vm1216, %v4458, 0.0
  %v4537 = vsel %vm1217, %v4460, 0.0
  %v4538 = vsel %vm1218, %v4462, 0.0
  %v4539 = vsel %vm1219, %v4464, 0.0
  %v4540 = vsel %vm1220, %v4466, 0.0
  %v4541 = vsel %vm1221, %v4468, 0.0
  %v4542 = vsel %vm1222, %v4470, 0.0
  %v4543 = vsel %vm1223, %v4472, 0.0
  %v4544 = vsel %vm1224, %v4474, 0.0
  %v4545 = vsel %vm1225, %v4476, 0.0
  %v4546 = vsel %vm1226, %v4478, 0.0
  %v4547 = vsel %vm1227, %v4480, 0.0
  %v4548 = vsel %vm1228, %v4482, 0.0
  %v4549 = vsel %vm1229, %v4484, 0.0
  %v4550 = vpack.c.bf16 %v4519, %v4518
  %v4551 = vpack.c.bf16 %v4521, %v4520
  %v4552 = vpack.c.bf16 %v4523, %v4522
  %v4553 = vpack.c.bf16 %v4525, %v4524
  %v4554 = vpack.c.bf16 %v4527, %v4526
  %v4555 = vpack.c.bf16 %v4529, %v4528
  %v4556 = vpack.c.bf16 %v4531, %v4530
  %v4557 = vpack.c.bf16 %v4533, %v4532
  %v4558 = vpack.c.bf16 %v4535, %v4534
  %v4559 = vpack.c.bf16 %v4537, %v4536
  %v4560 = vpack.c.bf16 %v4539, %v4538
  %v4561 = vpack.c.bf16 %v4541, %v4540
  %v4562 = vpack.c.bf16 %v4543, %v4542
  %v4563 = vpack.c.bf16 %v4545, %v4544
  %v4564 = vpack.c.bf16 %v4547, %v4546
  %v4565 = vpack.c.bf16 %v4549, %v4548
  %v4566 = vpack.c.bf16 %v4358, %v4357
  %v4567 = vpack.c.bf16 %v4360, %v4359
  %v4568 = vpack.c.bf16 %v4362, %v4361
  %v4569 = vpack.c.bf16 %v4364, %v4363
  %v4570 = vpack.c.bf16 %v4366, %v4365
  %v4571 = vpack.c.bf16 %v4368, %v4367
  %v4572 = vpack.c.bf16 %v4370, %v4369
  %v4573 = vpack.c.bf16 %v4372, %v4371
  %v4574 = vpack.c.bf16 %v4374, %v4373
  %v4575 = vpack.c.bf16 %v4376, %v4375
  %v4576 = vpack.c.bf16 %v4378, %v4377
  %v4577 = vpack.c.bf16 %v4380, %v4379
  %v4578 = vpack.c.bf16 %v4382, %v4381
  %v4579 = vpack.c.bf16 %v4384, %v4383
  %v4580 = vpack.c.bf16 %v4386, %v4385
  %v4581 = vpack.c.bf16 %v4388, %v4387
  %v4582 = vrot.slane %v4357, 1
  %v4583 = vrot.slane %v4358, 1
  %v4584 = vsel %vm1294, %v4582, %v4583
  %v4585 = vrot.slane %v4359, 1
  %v4586 = vsel %vm1294, %v4583, %v4585
  %v4587 = vrot.slane %v4360, 1
  %v4588 = vsel %vm1294, %v4585, %v4587
  %v4589 = vrot.slane %v4361, 1
  %v4590 = vsel %vm1294, %v4587, %v4589
  %v4591 = vrot.slane %v4362, 1
  %v4592 = vsel %vm1294, %v4589, %v4591
  %v4593 = vrot.slane %v4363, 1
  %v4594 = vsel %vm1294, %v4591, %v4593
  %v4595 = vrot.slane %v4364, 1
  %v4596 = vsel %vm1294, %v4593, %v4595
  %v4597 = vrot.slane %v4365, 1
  %v4598 = vsel %vm1294, %v4595, %v4597
  %v4599 = vrot.slane %v4366, 1
  %v4600 = vsel %vm1294, %v4597, %v4599
  %v4601 = vrot.slane %v4367, 1
  %v4602 = vsel %vm1294, %v4599, %v4601
  %v4603 = vrot.slane %v4368, 1
  %v4604 = vsel %vm1294, %v4601, %v4603
  %v4605 = vrot.slane %v4369, 1
  %v4606 = vsel %vm1294, %v4603, %v4605
  %v4607 = vrot.slane %v4370, 1
  %v4608 = vsel %vm1294, %v4605, %v4607
  %v4609 = vrot.slane %v4371, 1
  %v4610 = vsel %vm1294, %v4607, %v4609
  %v4611 = vrot.slane %v4372, 1
  %v4612 = vsel %vm1294, %v4609, %v4611
  %v4613 = vrot.slane %v4373, 1
  %v4614 = vsel %vm1294, %v4611, %v4613
  %v4615 = vrot.slane %v4374, 1
  %v4616 = vsel %vm1294, %v4613, %v4615
  %v4617 = vrot.slane %v4375, 1
  %v4618 = vsel %vm1294, %v4615, %v4617
  %v4619 = vrot.slane %v4376, 1
  %v4620 = vsel %vm1294, %v4617, %v4619
  %v4621 = vrot.slane %v4377, 1
  %v4622 = vsel %vm1294, %v4619, %v4621
  %v4623 = vrot.slane %v4378, 1
  %v4624 = vsel %vm1294, %v4621, %v4623
  %v4625 = vrot.slane %v4379, 1
  %v4626 = vsel %vm1294, %v4623, %v4625
  %v4627 = vrot.slane %v4380, 1
  %v4628 = vsel %vm1294, %v4625, %v4627
  %v4629 = vrot.slane %v4381, 1
  %v4630 = vsel %vm1294, %v4627, %v4629
  %v4631 = vrot.slane %v4382, 1
  %v4632 = vsel %vm1294, %v4629, %v4631
  %v4633 = vrot.slane %v4383, 1
  %v4634 = vsel %vm1294, %v4631, %v4633
  %v4635 = vrot.slane %v4384, 1
  %v4636 = vsel %vm1294, %v4633, %v4635
  %v4637 = vrot.slane %v4385, 1
  %v4638 = vsel %vm1294, %v4635, %v4637
  %v4639 = vrot.slane %v4386, 1
  %v4640 = vsel %vm1294, %v4637, %v4639
  %v4641 = vrot.slane %v4387, 1
  %v4642 = vsel %vm1294, %v4639, %v4641
  %v4643 = vrot.slane %v4388, 1
  %v4644 = vsel %vm1294, %v4641, %v4643
  %v4677 = vsel %vm1294, %v4643, 0.0
  %v4678 = vsel %vm1423, %v4584, 0.0
  %v4679 = vsel %vm1424, %v4586, 0.0
  %v4680 = vsel %vm1425, %v4588, 0.0
  %v4681 = vsel %vm1426, %v4590, 0.0
  %v4682 = vsel %vm1427, %v4592, 0.0
  %v4683 = vsel %vm1428, %v4594, 0.0
  %v4684 = vsel %vm1429, %v4596, 0.0
  %v4685 = vsel %vm1430, %v4598, 0.0
  %v4686 = vsel %vm1431, %v4600, 0.0
  %v4687 = vsel %vm1432, %v4602, 0.0
  %v4688 = vsel %vm1433, %v4604, 0.0
  %v4689 = vsel %vm1434, %v4606, 0.0
  %v4690 = vsel %vm1435, %v4608, 0.0
  %v4691 = vsel %vm1436, %v4610, 0.0
  %v4692 = vsel %vm1437, %v4612, 0.0
  %v4693 = vsel %vm1438, %v4614, 0.0
  %v4694 = vsel %vm1439, %v4616, 0.0
  %v4695 = vsel %vm1440, %v4618, 0.0
  %v4696 = vsel %vm1441, %v4620, 0.0
  %v4697 = vsel %vm1442, %v4622, 0.0
  %v4698 = vsel %vm1443, %v4624, 0.0
  %v4699 = vsel %vm1444, %v4626, 0.0
  %v4700 = vsel %vm1445, %v4628, 0.0
  %v4701 = vsel %vm1446, %v4630, 0.0
  %v4702 = vsel %vm1447, %v4632, 0.0
  %v4703 = vsel %vm1448, %v4634, 0.0
  %v4704 = vsel %vm1449, %v4636, 0.0
  %v4705 = vsel %vm1450, %v4638, 0.0
  %v4706 = vsel %vm1451, %v4640, 0.0
  %v4707 = vsel %vm1452, %v4642, 0.0
  %v4708 = vsel %vm1453, %v4644, 0.0
  %v4709 = vsel %vm1454, %v4677, 0.0
  %v4710 = vpack.c.bf16 %v4679, %v4678
  %v4711 = vpack.c.bf16 %v4681, %v4680
  %v4712 = vpack.c.bf16 %v4683, %v4682
  %v4713 = vpack.c.bf16 %v4685, %v4684
  %v4714 = vpack.c.bf16 %v4687, %v4686
  %v4715 = vpack.c.bf16 %v4689, %v4688
  %v4716 = vpack.c.bf16 %v4691, %v4690
  %v4717 = vpack.c.bf16 %v4693, %v4692
  %v4718 = vpack.c.bf16 %v4695, %v4694
  %v4719 = vpack.c.bf16 %v4697, %v4696
  %v4720 = vpack.c.bf16 %v4699, %v4698
  %v4721 = vpack.c.bf16 %v4701, %v4700
  %v4722 = vpack.c.bf16 %v4703, %v4702
  %v4723 = vpack.c.bf16 %v4705, %v4704
  %v4724 = vpack.c.bf16 %v4707, %v4706
  %v4725 = vpack.c.bf16 %v4709, %v4708
  %v4726 = vld [vmem:[%s10] sm:$0xf]
  %v4727 = vld [vmem:[%s10 + $0x4] sm:$0xf]
  %v4728 = vld [vmem:[%s10 + $0x8] sm:$0xf]
  %v4729 = vld [vmem:[%s10 + $0xc] sm:$0xf]
  %v4730 = vld [vmem:[%s10 + $0x10] sm:$0xf]
  %v4731 = vld [vmem:[%s10 + $0x14] sm:$0xf]
  %v4732 = vld [vmem:[%s10 + $0x18] sm:$0xf]
  %v4733 = vld [vmem:[%s10 + $0x1c] sm:$0xf]
  %v4734 = vld [vmem:[%s10 + $0x20] sm:$0xf]
  %v4735 = vld [vmem:[%s10 + $0x24] sm:$0xf]
  %v4736 = vld [vmem:[%s10 + $0x28] sm:$0xf]
  %v4737 = vld [vmem:[%s10 + $0x2c] sm:$0xf]
  %v4738 = vld [vmem:[%s10 + $0x30] sm:$0xf]
  %v4739 = vld [vmem:[%s10 + $0x34] sm:$0xf]
  %v4740 = vld [vmem:[%s10 + $0x38] sm:$0xf]
  %v4741 = vld [vmem:[%s10 + $0x3c] sm:$0xf]
  %s4742 = scalar_lea.vmem %s10, 64
  %v4743 = vld [vmem:[%s4742] sm:$0xf]
  %v4744 = vld [vmem:[%s4742 + $0x4] sm:$0xf]
  %v4745 = vld [vmem:[%s4742 + $0x8] sm:$0xf]
  %v4746 = vld [vmem:[%s4742 + $0xc] sm:$0xf]
  %v4747 = vld [vmem:[%s4742 + $0x10] sm:$0xf]
  %v4748 = vld [vmem:[%s4742 + $0x14] sm:$0xf]
  %v4749 = vld [vmem:[%s4742 + $0x18] sm:$0xf]
  %v4750 = vld [vmem:[%s4742 + $0x1c] sm:$0xf]
  %v4751 = vld [vmem:[%s4742 + $0x20] sm:$0xf]
  %v4752 = vld [vmem:[%s4742 + $0x24] sm:$0xf]
  %v4753 = vld [vmem:[%s4742 + $0x28] sm:$0xf]
  %v4754 = vld [vmem:[%s4742 + $0x2c] sm:$0xf]
  %v4755 = vld [vmem:[%s4742 + $0x30] sm:$0xf]
  %v4756 = vld [vmem:[%s4742 + $0x34] sm:$0xf]
  %v4757 = vld [vmem:[%s4742 + $0x38] sm:$0xf]
  %v4758 = vld [vmem:[%s4742 + $0x3c] sm:$0xf]
  %v4775 = vunpack.c.l.b16 %v4743
  %v4776 = vunpack.c.l.b16 %v4744
  %v4777 = vunpack.c.l.b16 %v4745
  %v4778 = vunpack.c.l.b16 %v4746
  %v4779 = vunpack.c.l.b16 %v4747
  %v4780 = vunpack.c.l.b16 %v4748
  %v4781 = vunpack.c.l.b16 %v4749
  %v4782 = vunpack.c.l.b16 %v4750
  %v4783 = vunpack.c.l.b16 %v4751
  %v4784 = vunpack.c.l.b16 %v4752
  %v4785 = vunpack.c.l.b16 %v4753
  %v4786 = vunpack.c.l.b16 %v4754
  %v4787 = vunpack.c.l.b16 %v4755
  %v4788 = vunpack.c.l.b16 %v4756
  %v4789 = vunpack.c.l.b16 %v4757
  %v4790 = vunpack.c.l.b16 %v4758
  %v4791 = vpack.c.b16 %v4776, %v4775
  %v4792 = vpack.c.b16 %v4778, %v4777
  %v4793 = vpack.c.b16 %v4780, %v4779
  %v4794 = vpack.c.b16 %v4782, %v4781
  %v4795 = vpack.c.b16 %v4784, %v4783
  %v4796 = vpack.c.b16 %v4786, %v4785
  %v4797 = vpack.c.b16 %v4788, %v4787
  %v4798 = vpack.c.b16 %v4790, %v4789
  %4807 = vmatprep.subr.bf16.mxu0 0
  %4808 = vmatpush1.bf16.msra.mxu0 %v4791
  %4809 = vmatprep.subr.bf16.mxu0 0
  %4810 = vmatpush1.bf16.msra.mxu0 %v4792
  %4811 = vmatprep.subr.bf16.mxu0 0
  %4812 = vmatpush1.bf16.msra.mxu0 %v4793
  %4813 = vmatprep.subr.bf16.mxu0 0
  %4814 = vmatpush1.bf16.msra.mxu0 %v4794
  %4815 = vmatprep.subr.bf16.mxu0 0
  %4816 = vmatpush1.bf16.msra.mxu0 %v4795
  %4817 = vmatprep.subr.bf16.mxu0 0
  %4818 = vmatpush1.bf16.msra.mxu0 %v4796
  %4819 = vmatprep.subr.bf16.mxu0 0
  %4820 = vmatpush1.bf16.msra.mxu0 %v4797
  %4821 = vmatprep.subr.bf16.mxu0 0
  %4822 = vmatpush1.bf16.msra.mxu0 %v4798
  %4823 = vmatprep.subr.bf16.mxu0 0
  %4824 = vmatpush1.bf16.msra.mxu0 0
  %4825 = vmatprep.subr.bf16.mxu0 0
  %4826 = vmatpush1.bf16.msra.mxu0 0
  %4827 = vmatprep.subr.bf16.mxu0 0
  %4828 = vmatpush1.bf16.msra.mxu0 0
  %4829 = vmatprep.subr.bf16.mxu0 0
  %4830 = vmatpush1.bf16.msra.mxu0 0
  %4831 = vmatprep.subr.bf16.mxu0 0
  %4832 = vmatpush1.bf16.msra.mxu0 0
  %4833 = vmatprep.subr.bf16.mxu0 0
  %4834 = vmatpush1.bf16.msra.mxu0 0
  %4835 = vmatprep.subr.bf16.mxu0 0
  %4836 = vmatpush1.bf16.msra.mxu0 0
  %4837 = vmatprep.subr.bf16.mxu0 0
  %4838 = vmatpush1.bf16.msra.mxu0 0
  %4839 = vmatprep.mubr.bf16.mxu0 0
  %4840 = vmatmul.mubr.bf16.gmra.mrb[0].mxu0 0
  %v4841 = vpop.f32.mrb[0].mxu0
  %v4842 = vadd.f32 0.0, %v4841
  %v4843 = vpop.f32.mrb[0].mxu0
  %v4844 = vpop.f32.mrb[0].mxu0
  %v4845 = vadd.f32 0.0, %v4844
  %v4846 = vpop.f32.mrb[0].mxu0
  %4847 = vmatprep.mubr.bf16.mxu0 0
  %4848 = vmatmul.mubr.bf16.gmra.mrb[0].mxu0 %v4566
  %v4849 = vpop.f32.mrb[0].mxu0
  %v4850 = vadd.f32 0.0, %v4849
  %v4851 = vpop.f32.mrb[0].mxu0
  %v4852 = vpop.f32.mrb[0].mxu0
  %v4853 = vadd.f32 0.0, %v4852
  %v4854 = vpop.f32.mrb[0].mxu0
  %4855 = vmatprep.mubr.bf16.mxu0 0
  %4856 = vmatmul.mubr.bf16.gmra.mrb[0].mxu0 %v4567
  %v4857 = vpop.f32.mrb[0].mxu0
  %v4858 = vadd.f32 0.0, %v4857
  %v4859 = vpop.f32.mrb[0].mxu0
  %v4860 = vpop.f32.mrb[0].mxu0
  %v4861 = vadd.f32 0.0, %v4860
  %v4862 = vpop.f32.mrb[0].mxu0
  %4863 = vmatprep.mubr.bf16.mxu0 0
  %4864 = vmatmul.mubr.bf16.gmra.mrb[0].mxu0 %v4568
  %v4865 = vpop.f32.mrb[0].mxu0
  %v4866 = vadd.f32 0.0, %v4865
  %v4867 = vpop.f32.mrb[0].mxu0
  %v4868 = vpop.f32.mrb[0].mxu0
  %v4869 = vadd.f32 0.0, %v4868
  %v4870 = vpop.f32.mrb[0].mxu0
  %4871 = vmatprep.mubr.bf16.mxu0 0
  %4872 = vmatmul.mubr.bf16.gmra.mrb[0].mxu0 %v4569
  %v4873 = vpop.f32.mrb[0].mxu0
  %v4874 = vadd.f32 0.0, %v4873
  %v4875 = vpop.f32.mrb[0].mxu0
  %v4876 = vpop.f32.mrb[0].mxu0
  %v4877 = vadd.f32 0.0, %v4876
  %v4878 = vpop.f32.mrb[0].mxu0
  %4879 = vmatprep.mubr.bf16.mxu0 0
  %4880 = vmatmul.mubr.bf16.gmra.mrb[0].mxu0 %v4570
  %v4881 = vpop.f32.mrb[0].mxu0
  %v4882 = vadd.f32 0.0, %v4881
  %v4883 = vpop.f32.mrb[0].mxu0
  %v4884 = vpop.f32.mrb[0].mxu0
  %v4885 = vadd.f32 0.0, %v4884
  %v4886 = vpop.f32.mrb[0].mxu0
  %4887 = vmatprep.mubr.bf16.mxu0 0
  %4888 = vmatmul.mubr.bf16.gmra.mrb[0].mxu0 %v4571
  %v4889 = vpop.f32.mrb[0].mxu0
  %v4890 = vadd.f32 0.0, %v4889
  %v4891 = vpop.f32.mrb[0].mxu0
  %v4892 = vpop.f32.mrb[0].mxu0
  %v4893 = vadd.f32 0.0, %v4892
  %v4894 = vpop.f32.mrb[0].mxu0
  %4895 = vmatprep.mubr.bf16.mxu0 0
  %4896 = vmatmul.mubr.bf16.gmra.mrb[0].mxu0 %v4572
  %v4897 = vpop.f32.mrb[0].mxu0
  %v4898 = vadd.f32 0.0, %v4897
  %v4899 = vpop.f32.mrb[0].mxu0
  %v4900 = vpop.f32.mrb[0].mxu0
  %v4901 = vadd.f32 0.0, %v4900
  %v4902 = vpop.f32.mrb[0].mxu0
  %4903 = vmatprep.mubr.bf16.mxu0 0
  %4904 = vmatmul.mubr.bf16.gmra.mrb[0].mxu0 %v4573
  %v4905 = vpop.f32.mrb[0].mxu0
  %v4906 = vadd.f32 0.0, %v4905
  %v4907 = vpop.f32.mrb[0].mxu0
  %v4908 = vpop.f32.mrb[0].mxu0
  %v4909 = vadd.f32 0.0, %v4908
  %v4910 = vpop.f32.mrb[0].mxu0
  %4911 = vmatprep.mubr.bf16.mxu0 0
  %4912 = vmatmul.mubr.bf16.gmra.mrb[0].mxu0 %v4574
  %v4913 = vpop.f32.mrb[0].mxu0
  %v4914 = vadd.f32 0.0, %v4913
  %v4915 = vpop.f32.mrb[0].mxu0
  %v4916 = vpop.f32.mrb[0].mxu0
  %v4917 = vadd.f32 0.0, %v4916
  %v4918 = vpop.f32.mrb[0].mxu0
  %4919 = vmatprep.mubr.bf16.mxu0 0
  %4920 = vmatmul.mubr.bf16.gmra.mrb[0].mxu0 %v4575
  %v4921 = vpop.f32.mrb[0].mxu0
  %v4922 = vadd.f32 0.0, %v4921
  %v4923 = vpop.f32.mrb[0].mxu0
  %v4924 = vpop.f32.mrb[0].mxu0
  %v4925 = vadd.f32 0.0, %v4924
  %v4926 = vpop.f32.mrb[0].mxu0
  %4927 = vmatprep.mubr.bf16.mxu0 0
  %4928 = vmatmul.mubr.bf16.gmra.mrb[0].mxu0 %v4576
  %v4929 = vpop.f32.mrb[0].mxu0
  %v4930 = vadd.f32 0.0, %v4929
  %v4931 = vpop.f32.mrb[0].mxu0
  %v4932 = vpop.f32.mrb[0].mxu0
  %v4933 = vadd.f32 0.0, %v4932
  %v4934 = vpop.f32.mrb[0].mxu0
  %4935 = vmatprep.mubr.bf16.mxu0 0
  %4936 = vmatmul.mubr.bf16.gmra.mrb[0].mxu0 %v4577
  %v4937 = vpop.f32.mrb[0].mxu0
  %v4938 = vadd.f32 0.0, %v4937
  %v4939 = vpop.f32.mrb[0].mxu0
  %v4940 = vpop.f32.mrb[0].mxu0
  %v4941 = vadd.f32 0.0, %v4940
  %v4942 = vpop.f32.mrb[0].mxu0
  %4943 = vmatprep.mubr.bf16.mxu0 0
  %4944 = vmatmul.mubr.bf16.gmra.mrb[0].mxu0 %v4578
  %v4945 = vpop.f32.mrb[0].mxu0
  %v4946 = vadd.f32 0.0, %v4945
  %v4947 = vpop.f32.mrb[0].mxu0
  %v4948 = vpop.f32.mrb[0].mxu0
  %v4949 = vadd.f32 0.0, %v4948
  %v4950 = vpop.f32.mrb[0].mxu0
  %4951 = vmatprep.mubr.bf16.mxu0 0
  %4952 = vmatmul.mubr.bf16.gmra.mrb[0].mxu0 %v4579
  %v4953 = vpop.f32.mrb[0].mxu0
  %v4954 = vadd.f32 0.0, %v4953
  %v4955 = vpop.f32.mrb[0].mxu0
  %v4956 = vpop.f32.mrb[0].mxu0
  %v4957 = vadd.f32 0.0, %v4956
  %v4958 = vpop.f32.mrb[0].mxu0
  %4959 = vmatprep.mubr.bf16.mxu0 0
  %4960 = vmatmul.mubr.bf16.gmra.mrb[0].mxu0 %v4580
  %v4961 = vpop.f32.mrb[0].mxu0
  %v4962 = vadd.f32 0.0, %v4961
  %v4963 = vpop.f32.mrb[0].mxu0
  %v4964 = vpop.f32.mrb[0].mxu0
  %v4965 = vadd.f32 0.0, %v4964
  %v4966 = vpop.f32.mrb[0].mxu0
  %4967 = vdwg.mxu0
  %v4984 = vunpack.c.l.b16 %v4726
  %v4985 = vunpack.c.l.b16 %v4727
  %v4986 = vunpack.c.l.b16 %v4728
  %v4987 = vunpack.c.l.b16 %v4729
  %v4988 = vunpack.c.l.b16 %v4730
  %v4989 = vunpack.c.l.b16 %v4731
  %v4990 = vunpack.c.l.b16 %v4732
  %v4991 = vunpack.c.l.b16 %v4733
  %v4992 = vunpack.c.l.b16 %v4734
  %v4993 = vunpack.c.l.b16 %v4735
  %v4994 = vunpack.c.l.b16 %v4736
  %v4995 = vunpack.c.l.b16 %v4737
  %v4996 = vunpack.c.l.b16 %v4738
  %v4997 = vunpack.c.l.b16 %v4739
  %v4998 = vunpack.c.l.b16 %v4740
  %v4999 = vunpack.c.l.b16 %v4741
  %v5000 = vpack.c.b16 %v4985, %v4984
  %v5001 = vpack.c.b16 %v4987, %v4986
  %v5002 = vpack.c.b16 %v4989, %v4988
  %v5003 = vpack.c.b16 %v4991, %v4990
  %v5004 = vpack.c.b16 %v4993, %v4992
  %v5005 = vpack.c.b16 %v4995, %v4994
  %v5006 = vpack.c.b16 %v4997, %v4996
  %v5007 = vpack.c.b16 %v4999, %v4998
  %5016 = vmatprep.subr.bf16.mxu0 0
  %5017 = vmatpush1.bf16.msra.mxu0 %v5000
  %5018 = vmatprep.subr.bf16.mxu0 0
  %5019 = vmatpush1.bf16.msra.mxu0 %v5001
  %5020 = vmatprep.subr.bf16.mxu0 0
  %5021 = vmatpush1.bf16.msra.mxu0 %v5002
  %5022 = vmatprep.subr.bf16.mxu0 0
  %5023 = vmatpush1.bf16.msra.mxu0 %v5003
  %5024 = vmatprep.subr.bf16.mxu0 0
  %5025 = vmatpush1.bf16.msra.mxu0 %v5004
  %5026 = vmatprep.subr.bf16.mxu0 0
  %5027 = vmatpush1.bf16.msra.mxu0 %v5005
  %5028 = vmatprep.subr.bf16.mxu0 0
  %5029 = vmatpush1.bf16.msra.mxu0 %v5006
  %5030 = vmatprep.subr.bf16.mxu0 0
  %5031 = vmatpush1.bf16.msra.mxu0 %v5007
  %5032 = vmatprep.subr.bf16.mxu0 0
  %5033 = vmatpush1.bf16.msra.mxu0 0
  %5034 = vmatprep.subr.bf16.mxu0 0
  %5035 = vmatpush1.bf16.msra.mxu0 0
  %5036 = vmatprep.subr.bf16.mxu0 0
  %5037 = vmatpush1.bf16.msra.mxu0 0
  %5038 = vmatprep.subr.bf16.mxu0 0
  %5039 = vmatpush1.bf16.msra.mxu0 0
  %5040 = vmatprep.subr.bf16.mxu0 0
  %5041 = vmatpush1.bf16.msra.mxu0 0
  %5042 = vmatprep.subr.bf16.mxu0 0
  %5043 = vmatpush1.bf16.msra.mxu0 0
  %5044 = vmatprep.subr.bf16.mxu0 0
  %5045 = vmatpush1.bf16.msra.mxu0 0
  %5046 = vmatprep.subr.bf16.mxu0 0
  %5047 = vmatpush1.bf16.msra.mxu0 0
  %5048 = vmatprep.mubr.bf16.mxu0 0
  %5049 = vmatmul.mubr.bf16.gmra.mrb[0].mxu0 0
  %v5050 = vpop.f32.mrb[0].mxu0
  %v5051 = vadd.f32 %v4842, %v5050
  %v5052 = vpop.f32.mrb[0].mxu0
  %v5053 = vpop.f32.mrb[0].mxu0
  %v5054 = vadd.f32 %v4845, %v5053
  %v5055 = vpop.f32.mrb[0].mxu0
  %5056 = vmatprep.mubr.bf16.mxu0 0
  %5057 = vmatmul.mubr.bf16.gmra.mrb[0].mxu0 %v4550
  %v5058 = vpop.f32.mrb[0].mxu0
  %v5059 = vadd.f32 %v4850, %v5058
  %v5060 = vpop.f32.mrb[0].mxu0
  %v5061 = vpop.f32.mrb[0].mxu0
  %v5062 = vadd.f32 %v4853, %v5061
  %v5063 = vpop.f32.mrb[0].mxu0
  %5064 = vmatprep.mubr.bf16.mxu0 0
  %5065 = vmatmul.mubr.bf16.gmra.mrb[0].mxu0 %v4551
  %v5066 = vpop.f32.mrb[0].mxu0
  %v5067 = vadd.f32 %v4858, %v5066
  %v5068 = vpop.f32.mrb[0].mxu0
  %v5069 = vpop.f32.mrb[0].mxu0
  %v5070 = vadd.f32 %v4861, %v5069
  %v5071 = vpop.f32.mrb[0].mxu0
  %5072 = vmatprep.mubr.bf16.mxu0 0
  %5073 = vmatmul.mubr.bf16.gmra.mrb[0].mxu0 %v4552
  %v5074 = vpop.f32.mrb[0].mxu0
  %v5075 = vadd.f32 %v4866, %v5074
  %v5076 = vpop.f32.mrb[0].mxu0
  %v5077 = vpop.f32.mrb[0].mxu0
  %v5078 = vadd.f32 %v4869, %v5077
  %v5079 = vpop.f32.mrb[0].mxu0
  %5080 = vmatprep.mubr.bf16.mxu0 0
  %5081 = vmatmul.mubr.bf16.gmra.mrb[0].mxu0 %v4553
  %v5082 = vpop.f32.mrb[0].mxu0
  %v5083 = vadd.f32 %v4874, %v5082
  %v5084 = vpop.f32.mrb[0].mxu0
  %v5085 = vpop.f32.mrb[0].mxu0
  %v5086 = vadd.f32 %v4877, %v5085
  %v5087 = vpop.f32.mrb[0].mxu0
  %5088 = vmatprep.mubr.bf16.mxu0 0
  %5089 = vmatmul.mubr.bf16.gmra.mrb[0].mxu0 %v4554
  %v5090 = vpop.f32.mrb[0].mxu0
  %v5091 = vadd.f32 %v4882, %v5090
  %v5092 = vpop.f32.mrb[0].mxu0
  %v5093 = vpop.f32.mrb[0].mxu0
  %v5094 = vadd.f32 %v4885, %v5093
  %v5095 = vpop.f32.mrb[0].mxu0
  %5096 = vmatprep.mubr.bf16.mxu0 0
  %5097 = vmatmul.mubr.bf16.gmra.mrb[0].mxu0 %v4555
  %v5098 = vpop.f32.mrb[0].mxu0
  %v5099 = vadd.f32 %v4890, %v5098
  %v5100 = vpop.f32.mrb[0].mxu0
  %v5101 = vpop.f32.mrb[0].mxu0
  %v5102 = vadd.f32 %v4893, %v5101
  %v5103 = vpop.f32.mrb[0].mxu0
  %5104 = vmatprep.mubr.bf16.mxu0 0
  %5105 = vmatmul.mubr.bf16.gmra.mrb[0].mxu0 %v4556
  %v5106 = vpop.f32.mrb[0].mxu0
  %v5107 = vadd.f32 %v4898, %v5106
  %v5108 = vpop.f32.mrb[0].mxu0
  %v5109 = vpop.f32.mrb[0].mxu0
  %v5110 = vadd.f32 %v4901, %v5109
  %v5111 = vpop.f32.mrb[0].mxu0
  %5112 = vmatprep.mubr.bf16.mxu0 0
  %5113 = vmatmul.mubr.bf16.gmra.mrb[0].mxu0 %v4557
  %v5114 = vpop.f32.mrb[0].mxu0
  %v5115 = vadd.f32 %v4906, %v5114
  %v5116 = vpop.f32.mrb[0].mxu0
  %v5117 = vpop.f32.mrb[0].mxu0
  %v5118 = vadd.f32 %v4909, %v5117
  %v5119 = vpop.f32.mrb[0].mxu0
  %5120 = vmatprep.mubr.bf16.mxu0 0
  %5121 = vmatmul.mubr.bf16.gmra.mrb[0].mxu0 %v4558
  %v5122 = vpop.f32.mrb[0].mxu0
  %v5123 = vadd.f32 %v4914, %v5122
  %v5124 = vpop.f32.mrb[0].mxu0
  %v5125 = vpop.f32.mrb[0].mxu0
  %v5126 = vadd.f32 %v4917, %v5125
  %v5127 = vpop.f32.mrb[0].mxu0
  %5128 = vmatprep.mubr.bf16.mxu0 0
  %5129 = vmatmul.mubr.bf16.gmra.mrb[0].mxu0 %v4559
  %v5130 = vpop.f32.mrb[0].mxu0
  %v5131 = vadd.f32 %v4922, %v5130
  %v5132 = vpop.f32.mrb[0].mxu0
  %v5133 = vpop.f32.mrb[0].mxu0
  %v5134 = vadd.f32 %v4925, %v5133
  %v5135 = vpop.f32.mrb[0].mxu0
  %5136 = vmatprep.mubr.bf16.mxu0 0
  %5137 = vmatmul.mubr.bf16.gmra.mrb[0].mxu0 %v4560
  %v5138 = vpop.f32.mrb[0].mxu0
  %v5139 = vadd.f32 %v4930, %v5138
  %v5140 = vpop.f32.mrb[0].mxu0
  %v5141 = vpop.f32.mrb[0].mxu0
  %v5142 = vadd.f32 %v4933, %v5141
  %v5143 = vpop.f32.mrb[0].mxu0
  %5144 = vmatprep.mubr.bf16.mxu0 0
  %5145 = vmatmul.mubr.bf16.gmra.mrb[0].mxu0 %v4561
  %v5146 = vpop.f32.mrb[0].mxu0
  %v5147 = vadd.f32 %v4938, %v5146
  %v5148 = vpop.f32.mrb[0].mxu0
  %v5149 = vpop.f32.mrb[0].mxu0
  %v5150 = vadd.f32 %v4941, %v5149
  %v5151 = vpop.f32.mrb[0].mxu0
  %5152 = vmatprep.mubr.bf16.mxu0 0
  %5153 = vmatmul.mubr.bf16.gmra.mrb[0].mxu0 %v4562
  %v5154 = vpop.f32.mrb[0].mxu0
  %v5155 = vadd.f32 %v4946, %v5154
  %v5156 = vpop.f32.mrb[0].mxu0
  %v5157 = vpop.f32.mrb[0].mxu0
  %v5158 = vadd.f32 %v4949, %v5157
  %v5159 = vpop.f32.mrb[0].mxu0
  %5160 = vmatprep.mubr.bf16.mxu0 0
  %5161 = vmatmul.mubr.bf16.gmra.mrb[0].mxu0 %v4563
  %v5162 = vpop.f32.mrb[0].mxu0
  %v5163 = vadd.f32 %v4954, %v5162
  %v5164 = vpop.f32.mrb[0].mxu0
  %v5165 = vpop.f32.mrb[0].mxu0
  %v5166 = vadd.f32 %v4957, %v5165
  %v5167 = vpop.f32.mrb[0].mxu0
  %5168 = vmatprep.mubr.bf16.mxu0 0
  %5169 = vmatmul.mubr.bf16.gmra.mrb[0].mxu0 %v4564
  %v5170 = vpop.f32.mrb[0].mxu0
  %v5171 = vadd.f32 %v4962, %v5170
  %v5172 = vpop.f32.mrb[0].mxu0
  %v5173 = vpop.f32.mrb[0].mxu0
  %v5174 = vadd.f32 %v4965, %v5173
  %v5175 = vpop.f32.mrb[0].mxu0
  %5176 = vdwg.mxu0
  %s5177 = scalar_lea.vmem %s10, 128
  %v5178 = vld [vmem:[%s5177] sm:$0xf]
  %v5179 = vld [vmem:[%s5177 + $0x4] sm:$0xf]
  %v5180 = vld [vmem:[%s5177 + $0x8] sm:$0xf]
  %v5181 = vld [vmem:[%s5177 + $0xc] sm:$0xf]
  %v5182 = vld [vmem:[%s5177 + $0x10] sm:$0xf]
  %v5183 = vld [vmem:[%s5177 + $0x14] sm:$0xf]
  %v5184 = vld [vmem:[%s5177 + $0x18] sm:$0xf]
  %v5185 = vld [vmem:[%s5177 + $0x1c] sm:$0xf]
  %v5186 = vld [vmem:[%s5177 + $0x20] sm:$0xf]
  %v5187 = vld [vmem:[%s5177 + $0x24] sm:$0xf]
  %v5188 = vld [vmem:[%s5177 + $0x28] sm:$0xf]
  %v5189 = vld [vmem:[%s5177 + $0x2c] sm:$0xf]
  %v5190 = vld [vmem:[%s5177 + $0x30] sm:$0xf]
  %v5191 = vld [vmem:[%s5177 + $0x34] sm:$0xf]
  %v5192 = vld [vmem:[%s5177 + $0x38] sm:$0xf]
  %v5193 = vld [vmem:[%s5177 + $0x3c] sm:$0xf]
  %v5210 = vunpack.c.l.b16 %v5178
  %v5211 = vunpack.c.l.b16 %v5179
  %v5212 = vunpack.c.l.b16 %v5180
  %v5213 = vunpack.c.l.b16 %v5181
  %v5214 = vunpack.c.l.b16 %v5182
  %v5215 = vunpack.c.l.b16 %v5183
  %v5216 = vunpack.c.l.b16 %v5184
  %v5217 = vunpack.c.l.b16 %v5185
  %v5218 = vunpack.c.l.b16 %v5186
  %v5219 = vunpack.c.l.b16 %v5187
  %v5220 = vunpack.c.l.b16 %v5188
  %v5221 = vunpack.c.l.b16 %v5189
  %v5222 = vunpack.c.l.b16 %v5190
  %v5223 = vunpack.c.l.b16 %v5191
  %v5224 = vunpack.c.l.b16 %v5192
  %v5225 = vunpack.c.l.b16 %v5193
  %v5226 = vpack.c.b16 %v5211, %v5210
  %v5227 = vpack.c.b16 %v5213, %v5212
  %v5228 = vpack.c.b16 %v5215, %v5214
  %v5229 = vpack.c.b16 %v5217, %v5216
  %v5230 = vpack.c.b16 %v5219, %v5218
  %v5231 = vpack.c.b16 %v5221, %v5220
  %v5232 = vpack.c.b16 %v5223, %v5222
  %v5233 = vpack.c.b16 %v5225, %v5224
  %5242 = vmatprep.subr.bf16.mxu0 0
  %5243 = vmatpush1.bf16.msra.mxu0 %v5226
  %5244 = vmatprep.subr.bf16.mxu0 0
  %5245 = vmatpush1.bf16.msra.mxu0 %v5227
  %5246 = vmatprep.subr.bf16.mxu0 0
  %5247 = vmatpush1.bf16.msra.mxu0 %v5228
  %5248 = vmatprep.subr.bf16.mxu0 0
  %5249 = vmatpush1.bf16.msra.mxu0 %v5229
  %5250 = vmatprep.subr.bf16.mxu0 0
  %5251 = vmatpush1.bf16.msra.mxu0 %v5230
  %5252 = vmatprep.subr.bf16.mxu0 0
  %5253 = vmatpush1.bf16.msra.mxu0 %v5231
  %5254 = vmatprep.subr.bf16.mxu0 0
  %5255 = vmatpush1.bf16.msra.mxu0 %v5232
  %5256 = vmatprep.subr.bf16.mxu0 0
  %5257 = vmatpush1.bf16.msra.mxu0 %v5233
  %5258 = vmatprep.subr.bf16.mxu0 0
  %5259 = vmatpush1.bf16.msra.mxu0 0
  %5260 = vmatprep.subr.bf16.mxu0 0
  %5261 = vmatpush1.bf16.msra.mxu0 0
  %5262 = vmatprep.subr.bf16.mxu0 0
  %5263 = vmatpush1.bf16.msra.mxu0 0
  %5264 = vmatprep.subr.bf16.mxu0 0
  %5265 = vmatpush1.bf16.msra.mxu0 0
  %5266 = vmatprep.subr.bf16.mxu0 0
  %5267 = vmatpush1.bf16.msra.mxu0 0
  %5268 = vmatprep.subr.bf16.mxu0 0
  %5269 = vmatpush1.bf16.msra.mxu0 0
  %5270 = vmatprep.subr.bf16.mxu0 0
  %5271 = vmatpush1.bf16.msra.mxu0 0
  %5272 = vmatprep.subr.bf16.mxu0 0
  %5273 = vmatpush1.bf16.msra.mxu0 0
  %5274 = vmatprep.mubr.bf16.mxu0 0
  %5275 = vmatmul.mubr.bf16.gmra.mrb[0].mxu0 0
  %v5276 = vpop.f32.mrb[0].mxu0
  %v5277 = vadd.f32 0.0, %v5276
  %v5278 = vpop.f32.mrb[0].mxu0
  %v5279 = vpop.f32.mrb[0].mxu0
  %v5280 = vadd.f32 0.0, %v5279
  %v5281 = vpop.f32.mrb[0].mxu0
  %5282 = vmatprep.mubr.bf16.mxu0 0
  %5283 = vmatmul.mubr.bf16.gmra.mrb[0].mxu0 %v4710
  %v5284 = vpop.f32.mrb[0].mxu0
  %v5285 = vadd.f32 0.0, %v5284
  %v5286 = vpop.f32.mrb[0].mxu0
  %v5287 = vpop.f32.mrb[0].mxu0
  %v5288 = vadd.f32 0.0, %v5287
  %v5289 = vpop.f32.mrb[0].mxu0
  %5290 = vmatprep.mubr.bf16.mxu0 0
  %5291 = vmatmul.mubr.bf16.gmra.mrb[0].mxu0 %v4711
  %v5292 = vpop.f32.mrb[0].mxu0
  %v5293 = vadd.f32 0.0, %v5292
  %v5294 = vpop.f32.mrb[0].mxu0
  %v5295 = vpop.f32.mrb[0].mxu0
  %v5296 = vadd.f32 0.0, %v5295
  %v5297 = vpop.f32.mrb[0].mxu0
  %5298 = vmatprep.mubr.bf16.mxu0 0
  %5299 = vmatmul.mubr.bf16.gmra.mrb[0].mxu0 %v4712
  %v5300 = vpop.f32.mrb[0].mxu0
  %v5301 = vadd.f32 0.0, %v5300
  %v5302 = vpop.f32.mrb[0].mxu0
  %v5303 = vpop.f32.mrb[0].mxu0
  %v5304 = vadd.f32 0.0, %v5303
  %v5305 = vpop.f32.mrb[0].mxu0
  %5306 = vmatprep.mubr.bf16.mxu0 0
  %5307 = vmatmul.mubr.bf16.gmra.mrb[0].mxu0 %v4713
  %v5308 = vpop.f32.mrb[0].mxu0
  %v5309 = vadd.f32 0.0, %v5308
  %v5310 = vpop.f32.mrb[0].mxu0
  %v5311 = vpop.f32.mrb[0].mxu0
  %v5312 = vadd.f32 0.0, %v5311
  %v5313 = vpop.f32.mrb[0].mxu0
  %5314 = vmatprep.mubr.bf16.mxu0 0
  %5315 = vmatmul.mubr.bf16.gmra.mrb[0].mxu0 %v4714
  %v5316 = vpop.f32.mrb[0].mxu0
  %v5317 = vadd.f32 0.0, %v5316
  %v5318 = vpop.f32.mrb[0].mxu0
  %v5319 = vpop.f32.mrb[0].mxu0
  %v5320 = vadd.f32 0.0, %v5319
  %v5321 = vpop.f32.mrb[0].mxu0
  %5322 = vmatprep.mubr.bf16.mxu0 0
  %5323 = vmatmul.mubr.bf16.gmra.mrb[0].mxu0 %v4715
  %v5324 = vpop.f32.mrb[0].mxu0
  %v5325 = vadd.f32 0.0, %v5324
  %v5326 = vpop.f32.mrb[0].mxu0
  %v5327 = vpop.f32.mrb[0].mxu0
  %v5328 = vadd.f32 0.0, %v5327
  %v5329 = vpop.f32.mrb[0].mxu0
  %5330 = vmatprep.mubr.bf16.mxu0 0
  %5331 = vmatmul.mubr.bf16.gmra.mrb[0].mxu0 %v4716
  %v5332 = vpop.f32.mrb[0].mxu0
  %v5333 = vadd.f32 0.0, %v5332
  %v5334 = vpop.f32.mrb[0].mxu0
  %v5335 = vpop.f32.mrb[0].mxu0
  %v5336 = vadd.f32 0.0, %v5335
  %v5337 = vpop.f32.mrb[0].mxu0
  %5338 = vmatprep.mubr.bf16.mxu0 0
  %5339 = vmatmul.mubr.bf16.gmra.mrb[0].mxu0 %v4717
  %v5340 = vpop.f32.mrb[0].mxu0
  %v5341 = vadd.f32 0.0, %v5340
  %v5342 = vpop.f32.mrb[0].mxu0
  %v5343 = vpop.f32.mrb[0].mxu0
  %v5344 = vadd.f32 0.0, %v5343
  %v5345 = vpop.f32.mrb[0].mxu0
  %5346 = vmatprep.mubr.bf16.mxu0 0
  %5347 = vmatmul.mubr.bf16.gmra.mrb[0].mxu0 %v4718
  %v5348 = vpop.f32.mrb[0].mxu0
  %v5349 = vadd.f32 0.0, %v5348
  %v5350 = vpop.f32.mrb[0].mxu0
  %v5351 = vpop.f32.mrb[0].mxu0
  %v5352 = vadd.f32 0.0, %v5351
  %v5353 = vpop.f32.mrb[0].mxu0
  %5354 = vmatprep.mubr.bf16.mxu0 0
  %5355 = vmatmul.mubr.bf16.gmra.mrb[0].mxu0 %v4719
  %v5356 = vpop.f32.mrb[0].mxu0
  %v5357 = vadd.f32 0.0, %v5356
  %v5358 = vpop.f32.mrb[0].mxu0
  %v5359 = vpop.f32.mrb[0].mxu0
  %v5360 = vadd.f32 0.0, %v5359
  %v5361 = vpop.f32.mrb[0].mxu0
  %5362 = vmatprep.mubr.bf16.mxu0 0
  %5363 = vmatmul.mubr.bf16.gmra.mrb[0].mxu0 %v4720
  %v5364 = vpop.f32.mrb[0].mxu0
  %v5365 = vadd.f32 0.0, %v5364
  %v5366 = vpop.f32.mrb[0].mxu0
  %v5367 = vpop.f32.mrb[0].mxu0
  %v5368 = vadd.f32 0.0, %v5367
  %v5369 = vpop.f32.mrb[0].mxu0
  %5370 = vmatprep.mubr.bf16.mxu0 0
  %5371 = vmatmul.mubr.bf16.gmra.mrb[0].mxu0 %v4721
  %v5372 = vpop.f32.mrb[0].mxu0
  %v5373 = vadd.f32 0.0, %v5372
  %v5374 = vpop.f32.mrb[0].mxu0
  %v5375 = vpop.f32.mrb[0].mxu0
  %v5376 = vadd.f32 0.0, %v5375
  %v5377 = vpop.f32.mrb[0].mxu0
  %5378 = vmatprep.mubr.bf16.mxu0 0
  %5379 = vmatmul.mubr.bf16.gmra.mrb[0].mxu0 %v4722
  %v5380 = vpop.f32.mrb[0].mxu0
  %v5381 = vadd.f32 0.0, %v5380
  %v5382 = vpop.f32.mrb[0].mxu0
  %v5383 = vpop.f32.mrb[0].mxu0
  %v5384 = vadd.f32 0.0, %v5383
  %v5385 = vpop.f32.mrb[0].mxu0
  %5386 = vmatprep.mubr.bf16.mxu0 0
  %5387 = vmatmul.mubr.bf16.gmra.mrb[0].mxu0 %v4723
  %v5388 = vpop.f32.mrb[0].mxu0
  %v5389 = vadd.f32 0.0, %v5388
  %v5390 = vpop.f32.mrb[0].mxu0
  %v5391 = vpop.f32.mrb[0].mxu0
  %v5392 = vadd.f32 0.0, %v5391
  %v5393 = vpop.f32.mrb[0].mxu0
  %5394 = vmatprep.mubr.bf16.mxu0 0
  %5395 = vmatmul.mubr.bf16.gmra.mrb[0].mxu0 %v4724
  %v5396 = vpop.f32.mrb[0].mxu0
  %v5397 = vadd.f32 0.0, %v5396
  %v5398 = vpop.f32.mrb[0].mxu0
  %v5399 = vpop.f32.mrb[0].mxu0
  %v5400 = vadd.f32 0.0, %v5399
  %v5401 = vpop.f32.mrb[0].mxu0
  %5402 = vdwg.mxu0
  %v5403 = vadd.f32 %v5051, %v5277
  %v5404 = vadd.f32 %v5054, %v5280
  %v5405 = vadd.f32 %v5059, %v5285
  %v5406 = vadd.f32 %v5062, %v5288
  %v5407 = vadd.f32 %v5067, %v5293
  %v5408 = vadd.f32 %v5070, %v5296
  %v5409 = vadd.f32 %v5075, %v5301
  %v5410 = vadd.f32 %v5078, %v5304
  %v5411 = vadd.f32 %v5083, %v5309
  %v5412 = vadd.f32 %v5086, %v5312
  %v5413 = vadd.f32 %v5091, %v5317
  %v5414 = vadd.f32 %v5094, %v5320
  %v5415 = vadd.f32 %v5099, %v5325
  %v5416 = vadd.f32 %v5102, %v5328
  %v5417 = vadd.f32 %v5107, %v5333
  %v5418 = vadd.f32 %v5110, %v5336
  %v5419 = vadd.f32 %v5115, %v5341
  %v5420 = vadd.f32 %v5118, %v5344
  %v5421 = vadd.f32 %v5123, %v5349
  %v5422 = vadd.f32 %v5126, %v5352
  %v5423 = vadd.f32 %v5131, %v5357
  %v5424 = vadd.f32 %v5134, %v5360
  %v5425 = vadd.f32 %v5139, %v5365
  %v5426 = vadd.f32 %v5142, %v5368
  %v5427 = vadd.f32 %v5147, %v5373
  %v5428 = vadd.f32 %v5150, %v5376
  %v5429 = vadd.f32 %v5155, %v5381
  %v5430 = vadd.f32 %v5158, %v5384
  %v5431 = vadd.f32 %v5163, %v5389
  %v5432 = vadd.f32 %v5166, %v5392
  %v5433 = vadd.f32 %v5171, %v5397
  %v5434 = vadd.f32 %v5174, %v5400
  %s5435 = scalar_lea.vmem %s10, 192
  %v5436 = vld [vmem:[%s5435] sm:$0xf]
  %v5437 = vld [vmem:[%s5435 + $0x4] sm:$0xf]
  %v5438 = vld [vmem:[%s5435 + $0x8] sm:$0xf]
  %v5439 = vld [vmem:[%s5435 + $0xc] sm:$0xf]
  %v5440 = vld [vmem:[%s5435 + $0x10] sm:$0xf]
  %v5441 = vld [vmem:[%s5435 + $0x14] sm:$0xf]
  %v5442 = vld [vmem:[%s5435 + $0x18] sm:$0xf]
  %v5443 = vld [vmem:[%s5435 + $0x1c] sm:$0xf]
  %v5444 = vld [vmem:[%s5435 + $0x20] sm:$0xf]
  %v5445 = vld [vmem:[%s5435 + $0x24] sm:$0xf]
  %v5446 = vld [vmem:[%s5435 + $0x28] sm:$0xf]
  %v5447 = vld [vmem:[%s5435 + $0x2c] sm:$0xf]
  %v5448 = vld [vmem:[%s5435 + $0x30] sm:$0xf]
  %v5449 = vld [vmem:[%s5435 + $0x34] sm:$0xf]
  %v5450 = vld [vmem:[%s5435 + $0x38] sm:$0xf]
  %v5451 = vld [vmem:[%s5435 + $0x3c] sm:$0xf]
  %v5468 = vunpack.c.l.b16 %v5436
  %v5469 = vunpack.c.l.b16 %v5437
  %v5470 = vunpack.c.l.b16 %v5438
  %v5471 = vunpack.c.l.b16 %v5439
  %v5472 = vunpack.c.l.b16 %v5440
  %v5473 = vunpack.c.l.b16 %v5441
  %v5474 = vunpack.c.l.b16 %v5442
  %v5475 = vunpack.c.l.b16 %v5443
  %v5476 = vunpack.c.l.b16 %v5444
  %v5477 = vunpack.c.l.b16 %v5445
  %v5478 = vunpack.c.l.b16 %v5446
  %v5479 = vunpack.c.l.b16 %v5447
  %v5480 = vunpack.c.l.b16 %v5448
  %v5481 = vunpack.c.l.b16 %v5449
  %v5482 = vunpack.c.l.b16 %v5450
  %v5483 = vunpack.c.l.b16 %v5451
  %v5484 = vpack.c.b16 %v5469, %v5468
  %v5485 = vpack.c.b16 %v5471, %v5470
  %v5486 = vpack.c.b16 %v5473, %v5472
  %v5487 = vpack.c.b16 %v5475, %v5474
  %v5488 = vpack.c.b16 %v5477, %v5476
  %v5489 = vpack.c.b16 %v5479, %v5478
  %v5490 = vpack.c.b16 %v5481, %v5480
  %v5491 = vpack.c.b16 %v5483, %v5482
  %5500 = vmatprep.subr.bf16.mxu0 0
  %5501 = vmatpush1.bf16.msra.mxu0 %v5484
  %5502 = vmatprep.subr.bf16.mxu0 0
  %5503 = vmatpush1.bf16.msra.mxu0 %v5485
  %5504 = vmatprep.subr.bf16.mxu0 0
  %5505 = vmatpush1.bf16.msra.mxu0 %v5486
  %5506 = vmatprep.subr.bf16.mxu0 0
  %5507 = vmatpush1.bf16.msra.mxu0 %v5487
  %5508 = vmatprep.subr.bf16.mxu0 0
  %5509 = vmatpush1.bf16.msra.mxu0 %v5488
  %5510 = vmatprep.subr.bf16.mxu0 0
  %5511 = vmatpush1.bf16.msra.mxu0 %v5489
  %5512 = vmatprep.subr.bf16.mxu0 0
  %5513 = vmatpush1.bf16.msra.mxu0 %v5490
  %5514 = vmatprep.subr.bf16.mxu0 0
  %5515 = vmatpush1.bf16.msra.mxu0 %v5491
  %5516 = vmatprep.subr.bf16.mxu0 0
  %5517 = vmatpush1.bf16.msra.mxu0 0
  %5518 = vmatprep.subr.bf16.mxu0 0
  %5519 = vmatpush1.bf16.msra.mxu0 0
  %5520 = vmatprep.subr.bf16.mxu0 0
  %5521 = vmatpush1.bf16.msra.mxu0 0
  %5522 = vmatprep.subr.bf16.mxu0 0
  %5523 = vmatpush1.bf16.msra.mxu0 0
  %5524 = vmatprep.subr.bf16.mxu0 0
  %5525 = vmatpush1.bf16.msra.mxu0 0
  %5526 = vmatprep.subr.bf16.mxu0 0
  %5527 = vmatpush1.bf16.msra.mxu0 0
  %5528 = vmatprep.subr.bf16.mxu0 0
  %5529 = vmatpush1.bf16.msra.mxu0 0
  %5530 = vmatprep.subr.bf16.mxu0 0
  %5531 = vmatpush1.bf16.msra.mxu0 0
  %5532 = vmatprep.mubr.bf16.mxu0 0
  %5533 = vmatmul.mubr.bf16.gmra.mrb[0].mxu0 %v4550
  %v5534 = vpop.f32.mrb[0].mxu0
  %v5535 = vadd.f32 0.0, %v5534
  %v5536 = vpop.f32.mrb[0].mxu0
  %v5537 = vpop.f32.mrb[0].mxu0
  %v5538 = vadd.f32 0.0, %v5537
  %v5539 = vpop.f32.mrb[0].mxu0
  %5540 = vmatprep.mubr.bf16.mxu0 0
  %5541 = vmatmul.mubr.bf16.gmra.mrb[0].mxu0 %v4551
  %v5542 = vpop.f32.mrb[0].mxu0
  %v5543 = vadd.f32 0.0, %v5542
  %v5544 = vpop.f32.mrb[0].mxu0
  %v5545 = vpop.f32.mrb[0].mxu0
  %v5546 = vadd.f32 0.0, %v5545
  %v5547 = vpop.f32.mrb[0].mxu0
  %5548 = vmatprep.mubr.bf16.mxu0 0
  %5549 = vmatmul.mubr.bf16.gmra.mrb[0].mxu0 %v4552
  %v5550 = vpop.f32.mrb[0].mxu0
  %v5551 = vadd.f32 0.0, %v5550
  %v5552 = vpop.f32.mrb[0].mxu0
  %v5553 = vpop.f32.mrb[0].mxu0
  %v5554 = vadd.f32 0.0, %v5553
  %v5555 = vpop.f32.mrb[0].mxu0
  %5556 = vmatprep.mubr.bf16.mxu0 0
  %5557 = vmatmul.mubr.bf16.gmra.mrb[0].mxu0 %v4553
  %v5558 = vpop.f32.mrb[0].mxu0
  %v5559 = vadd.f32 0.0, %v5558
  %v5560 = vpop.f32.mrb[0].mxu0
  %v5561 = vpop.f32.mrb[0].mxu0
  %v5562 = vadd.f32 0.0, %v5561
  %v5563 = vpop.f32.mrb[0].mxu0
  %5564 = vmatprep.mubr.bf16.mxu0 0
  %5565 = vmatmul.mubr.bf16.gmra.mrb[0].mxu0 %v4554
  %v5566 = vpop.f32.mrb[0].mxu0
  %v5567 = vadd.f32 0.0, %v5566
  %v5568 = vpop.f32.mrb[0].mxu0
  %v5569 = vpop.f32.mrb[0].mxu0
  %v5570 = vadd.f32 0.0, %v5569
  %v5571 = vpop.f32.mrb[0].mxu0
  %5572 = vmatprep.mubr.bf16.mxu0 0
  %5573 = vmatmul.mubr.bf16.gmra.mrb[0].mxu0 %v4555
  %v5574 = vpop.f32.mrb[0].mxu0
  %v5575 = vadd.f32 0.0, %v5574
  %v5576 = vpop.f32.mrb[0].mxu0
  %v5577 = vpop.f32.mrb[0].mxu0
  %v5578 = vadd.f32 0.0, %v5577
  %v5579 = vpop.f32.mrb[0].mxu0
  %5580 = vmatprep.mubr.bf16.mxu0 0
  %5581 = vmatmul.mubr.bf16.gmra.mrb[0].mxu0 %v4556
  %v5582 = vpop.f32.mrb[0].mxu0
  %v5583 = vadd.f32 0.0, %v5582
  %v5584 = vpop.f32.mrb[0].mxu0
  %v5585 = vpop.f32.mrb[0].mxu0
  %v5586 = vadd.f32 0.0, %v5585
  %v5587 = vpop.f32.mrb[0].mxu0
  %5588 = vmatprep.mubr.bf16.mxu0 0
  %5589 = vmatmul.mubr.bf16.gmra.mrb[0].mxu0 %v4557
  %v5590 = vpop.f32.mrb[0].mxu0
  %v5591 = vadd.f32 0.0, %v5590
  %v5592 = vpop.f32.mrb[0].mxu0
  %v5593 = vpop.f32.mrb[0].mxu0
  %v5594 = vadd.f32 0.0, %v5593
  %v5595 = vpop.f32.mrb[0].mxu0
  %5596 = vmatprep.mubr.bf16.mxu0 0
  %5597 = vmatmul.mubr.bf16.gmra.mrb[0].mxu0 %v4558
  %v5598 = vpop.f32.mrb[0].mxu0
  %v5599 = vadd.f32 0.0, %v5598
  %v5600 = vpop.f32.mrb[0].mxu0
  %v5601 = vpop.f32.mrb[0].mxu0
  %v5602 = vadd.f32 0.0, %v5601
  %v5603 = vpop.f32.mrb[0].mxu0
  %5604 = vmatprep.mubr.bf16.mxu0 0
  %5605 = vmatmul.mubr.bf16.gmra.mrb[0].mxu0 %v4559
  %v5606 = vpop.f32.mrb[0].mxu0
  %v5607 = vadd.f32 0.0, %v5606
  %v5608 = vpop.f32.mrb[0].mxu0
  %v5609 = vpop.f32.mrb[0].mxu0
  %v5610 = vadd.f32 0.0, %v5609
  %v5611 = vpop.f32.mrb[0].mxu0
  %5612 = vmatprep.mubr.bf16.mxu0 0
  %5613 = vmatmul.mubr.bf16.gmra.mrb[0].mxu0 %v4560
  %v5614 = vpop.f32.mrb[0].mxu0
  %v5615 = vadd.f32 0.0, %v5614
  %v5616 = vpop.f32.mrb[0].mxu0
  %v5617 = vpop.f32.mrb[0].mxu0
  %v5618 = vadd.f32 0.0, %v5617
  %v5619 = vpop.f32.mrb[0].mxu0
  %5620 = vmatprep.mubr.bf16.mxu0 0
  %5621 = vmatmul.mubr.bf16.gmra.mrb[0].mxu0 %v4561
  %v5622 = vpop.f32.mrb[0].mxu0
  %v5623 = vadd.f32 0.0, %v5622
  %v5624 = vpop.f32.mrb[0].mxu0
  %v5625 = vpop.f32.mrb[0].mxu0
  %v5626 = vadd.f32 0.0, %v5625
  %v5627 = vpop.f32.mrb[0].mxu0
  %5628 = vmatprep.mubr.bf16.mxu0 0
  %5629 = vmatmul.mubr.bf16.gmra.mrb[0].mxu0 %v4562
  %v5630 = vpop.f32.mrb[0].mxu0
  %v5631 = vadd.f32 0.0, %v5630
  %v5632 = vpop.f32.mrb[0].mxu0
  %v5633 = vpop.f32.mrb[0].mxu0
  %v5634 = vadd.f32 0.0, %v5633
  %v5635 = vpop.f32.mrb[0].mxu0
  %5636 = vmatprep.mubr.bf16.mxu0 0
  %5637 = vmatmul.mubr.bf16.gmra.mrb[0].mxu0 %v4563
  %v5638 = vpop.f32.mrb[0].mxu0
  %v5639 = vadd.f32 0.0, %v5638
  %v5640 = vpop.f32.mrb[0].mxu0
  %v5641 = vpop.f32.mrb[0].mxu0
  %v5642 = vadd.f32 0.0, %v5641
  %v5643 = vpop.f32.mrb[0].mxu0
  %5644 = vmatprep.mubr.bf16.mxu0 0
  %5645 = vmatmul.mubr.bf16.gmra.mrb[0].mxu0 %v4564
  %v5646 = vpop.f32.mrb[0].mxu0
  %v5647 = vadd.f32 0.0, %v5646
  %v5648 = vpop.f32.mrb[0].mxu0
  %v5649 = vpop.f32.mrb[0].mxu0
  %v5650 = vadd.f32 0.0, %v5649
  %v5651 = vpop.f32.mrb[0].mxu0
  %5652 = vmatprep.mubr.bf16.mxu0 0
  %5653 = vmatmul.mubr.bf16.gmra.mrb[0].mxu0 %v4565
  %v5654 = vpop.f32.mrb[0].mxu0
  %v5655 = vadd.f32 0.0, %v5654
  %v5656 = vpop.f32.mrb[0].mxu0
  %v5657 = vpop.f32.mrb[0].mxu0
  %v5658 = vadd.f32 0.0, %v5657
  %v5659 = vpop.f32.mrb[0].mxu0
  %5660 = vdwg.mxu0
  %v5661 = vadd.f32 %v5403, %v5535
  %v5662 = vadd.f32 %v5404, %v5538
  %v5663 = vadd.f32 %v5405, %v5543
  %v5664 = vadd.f32 %v5406, %v5546
  %v5665 = vadd.f32 %v5407, %v5551
  %v5666 = vadd.f32 %v5408, %v5554
  %v5667 = vadd.f32 %v5409, %v5559
  %v5668 = vadd.f32 %v5410, %v5562
  %v5669 = vadd.f32 %v5411, %v5567
  %v5670 = vadd.f32 %v5412, %v5570
  %v5671 = vadd.f32 %v5413, %v5575
  %v5672 = vadd.f32 %v5414, %v5578
  %v5673 = vadd.f32 %v5415, %v5583
  %v5674 = vadd.f32 %v5416, %v5586
  %v5675 = vadd.f32 %v5417, %v5591
  %v5676 = vadd.f32 %v5418, %v5594
  %v5677 = vadd.f32 %v5419, %v5599
  %v5678 = vadd.f32 %v5420, %v5602
  %v5679 = vadd.f32 %v5421, %v5607
  %v5680 = vadd.f32 %v5422, %v5610
  %v5681 = vadd.f32 %v5423, %v5615
  %v5682 = vadd.f32 %v5424, %v5618
  %v5683 = vadd.f32 %v5425, %v5623
  %v5684 = vadd.f32 %v5426, %v5626
  %v5685 = vadd.f32 %v5427, %v5631
  %v5686 = vadd.f32 %v5428, %v5634
  %v5687 = vadd.f32 %v5429, %v5639
  %v5688 = vadd.f32 %v5430, %v5642
  %v5689 = vadd.f32 %v5431, %v5647
  %v5690 = vadd.f32 %v5432, %v5650
  %v5691 = vadd.f32 %v5433, %v5655
  %v5692 = vadd.f32 %v5434, %v5658
  %s5693 = scalar_lea.vmem %s10, 256
  %v5694 = vld [vmem:[%s5693] sm:$0xf]
  %v5695 = vld [vmem:[%s5693 + $0x4] sm:$0xf]
  %v5696 = vld [vmem:[%s5693 + $0x8] sm:$0xf]
  %v5697 = vld [vmem:[%s5693 + $0xc] sm:$0xf]
  %v5698 = vld [vmem:[%s5693 + $0x10] sm:$0xf]
  %v5699 = vld [vmem:[%s5693 + $0x14] sm:$0xf]
  %v5700 = vld [vmem:[%s5693 + $0x18] sm:$0xf]
  %v5701 = vld [vmem:[%s5693 + $0x1c] sm:$0xf]
  %v5702 = vld [vmem:[%s5693 + $0x20] sm:$0xf]
  %v5703 = vld [vmem:[%s5693 + $0x24] sm:$0xf]
  %v5704 = vld [vmem:[%s5693 + $0x28] sm:$0xf]
  %v5705 = vld [vmem:[%s5693 + $0x2c] sm:$0xf]
  %v5706 = vld [vmem:[%s5693 + $0x30] sm:$0xf]
  %v5707 = vld [vmem:[%s5693 + $0x34] sm:$0xf]
  %v5708 = vld [vmem:[%s5693 + $0x38] sm:$0xf]
  %v5709 = vld [vmem:[%s5693 + $0x3c] sm:$0xf]
  %v5726 = vunpack.c.l.b16 %v5694
  %v5727 = vunpack.c.l.b16 %v5695
  %v5728 = vunpack.c.l.b16 %v5696
  %v5729 = vunpack.c.l.b16 %v5697
  %v5730 = vunpack.c.l.b16 %v5698
  %v5731 = vunpack.c.l.b16 %v5699
  %v5732 = vunpack.c.l.b16 %v5700
  %v5733 = vunpack.c.l.b16 %v5701
  %v5734 = vunpack.c.l.b16 %v5702
  %v5735 = vunpack.c.l.b16 %v5703
  %v5736 = vunpack.c.l.b16 %v5704
  %v5737 = vunpack.c.l.b16 %v5705
  %v5738 = vunpack.c.l.b16 %v5706
  %v5739 = vunpack.c.l.b16 %v5707
  %v5740 = vunpack.c.l.b16 %v5708
  %v5741 = vunpack.c.l.b16 %v5709
  %v5742 = vpack.c.b16 %v5727, %v5726
  %v5743 = vpack.c.b16 %v5729, %v5728
  %v5744 = vpack.c.b16 %v5731, %v5730
  %v5745 = vpack.c.b16 %v5733, %v5732
  %v5746 = vpack.c.b16 %v5735, %v5734
  %v5747 = vpack.c.b16 %v5737, %v5736
  %v5748 = vpack.c.b16 %v5739, %v5738
  %v5749 = vpack.c.b16 %v5741, %v5740
  %5758 = vmatprep.subr.bf16.mxu0 0
  %5759 = vmatpush1.bf16.msra.mxu0 %v5742
  %5760 = vmatprep.subr.bf16.mxu0 0
  %5761 = vmatpush1.bf16.msra.mxu0 %v5743
  %5762 = vmatprep.subr.bf16.mxu0 0
  %5763 = vmatpush1.bf16.msra.mxu0 %v5744
  %5764 = vmatprep.subr.bf16.mxu0 0
  %5765 = vmatpush1.bf16.msra.mxu0 %v5745
  %5766 = vmatprep.subr.bf16.mxu0 0
  %5767 = vmatpush1.bf16.msra.mxu0 %v5746
  %5768 = vmatprep.subr.bf16.mxu0 0
  %5769 = vmatpush1.bf16.msra.mxu0 %v5747
  %5770 = vmatprep.subr.bf16.mxu0 0
  %5771 = vmatpush1.bf16.msra.mxu0 %v5748
  %5772 = vmatprep.subr.bf16.mxu0 0
  %5773 = vmatpush1.bf16.msra.mxu0 %v5749
  %5774 = vmatprep.subr.bf16.mxu0 0
  %5775 = vmatpush1.bf16.msra.mxu0 0
  %5776 = vmatprep.subr.bf16.mxu0 0
  %5777 = vmatpush1.bf16.msra.mxu0 0
  %5778 = vmatprep.subr.bf16.mxu0 0
  %5779 = vmatpush1.bf16.msra.mxu0 0
  %5780 = vmatprep.subr.bf16.mxu0 0
  %5781 = vmatpush1.bf16.msra.mxu0 0
  %5782 = vmatprep.subr.bf16.mxu0 0
  %5783 = vmatpush1.bf16.msra.mxu0 0
  %5784 = vmatprep.subr.bf16.mxu0 0
  %5785 = vmatpush1.bf16.msra.mxu0 0
  %5786 = vmatprep.subr.bf16.mxu0 0
  %5787 = vmatpush1.bf16.msra.mxu0 0
  %5788 = vmatprep.subr.bf16.mxu0 0
  %5789 = vmatpush1.bf16.msra.mxu0 0
  %5790 = vmatprep.mubr.bf16.mxu0 0
  %5791 = vmatmul.mubr.bf16.gmra.mrb[0].mxu0 %v4566
  %v5792 = vpop.f32.mrb[0].mxu0
  %v5793 = vadd.f32 0.0, %v5792
  %v5794 = vpop.f32.mrb[0].mxu0
  %v5795 = vpop.f32.mrb[0].mxu0
  %v5796 = vadd.f32 0.0, %v5795
  %v5797 = vpop.f32.mrb[0].mxu0
  %5798 = vmatprep.mubr.bf16.mxu0 0
  %5799 = vmatmul.mubr.bf16.gmra.mrb[0].mxu0 %v4567
  %v5800 = vpop.f32.mrb[0].mxu0
  %v5801 = vadd.f32 0.0, %v5800
  %v5802 = vpop.f32.mrb[0].mxu0
  %v5803 = vpop.f32.mrb[0].mxu0
  %v5804 = vadd.f32 0.0, %v5803
  %v5805 = vpop.f32.mrb[0].mxu0
  %5806 = vmatprep.mubr.bf16.mxu0 0
  %5807 = vmatmul.mubr.bf16.gmra.mrb[0].mxu0 %v4568
  %v5808 = vpop.f32.mrb[0].mxu0
  %v5809 = vadd.f32 0.0, %v5808
  %v5810 = vpop.f32.mrb[0].mxu0
  %v5811 = vpop.f32.mrb[0].mxu0
  %v5812 = vadd.f32 0.0, %v5811
  %v5813 = vpop.f32.mrb[0].mxu0
  %5814 = vmatprep.mubr.bf16.mxu0 0
  %5815 = vmatmul.mubr.bf16.gmra.mrb[0].mxu0 %v4569
  %v5816 = vpop.f32.mrb[0].mxu0
  %v5817 = vadd.f32 0.0, %v5816
  %v5818 = vpop.f32.mrb[0].mxu0
  %v5819 = vpop.f32.mrb[0].mxu0
  %v5820 = vadd.f32 0.0, %v5819
  %v5821 = vpop.f32.mrb[0].mxu0
  %5822 = vmatprep.mubr.bf16.mxu0 0
  %5823 = vmatmul.mubr.bf16.gmra.mrb[0].mxu0 %v4570
  %v5824 = vpop.f32.mrb[0].mxu0
  %v5825 = vadd.f32 0.0, %v5824
  %v5826 = vpop.f32.mrb[0].mxu0
  %v5827 = vpop.f32.mrb[0].mxu0
  %v5828 = vadd.f32 0.0, %v5827
  %v5829 = vpop.f32.mrb[0].mxu0
  %5830 = vmatprep.mubr.bf16.mxu0 0
  %5831 = vmatmul.mubr.bf16.gmra.mrb[0].mxu0 %v4571
  %v5832 = vpop.f32.mrb[0].mxu0
  %v5833 = vadd.f32 0.0, %v5832
  %v5834 = vpop.f32.mrb[0].mxu0
  %v5835 = vpop.f32.mrb[0].mxu0
  %v5836 = vadd.f32 0.0, %v5835
  %v5837 = vpop.f32.mrb[0].mxu0
  %5838 = vmatprep.mubr.bf16.mxu0 0
  %5839 = vmatmul.mubr.bf16.gmra.mrb[0].mxu0 %v4572
  %v5840 = vpop.f32.mrb[0].mxu0
  %v5841 = vadd.f32 0.0, %v5840
  %v5842 = vpop.f32.mrb[0].mxu0
  %v5843 = vpop.f32.mrb[0].mxu0
  %v5844 = vadd.f32 0.0, %v5843
  %v5845 = vpop.f32.mrb[0].mxu0
  %5846 = vmatprep.mubr.bf16.mxu0 0
  %5847 = vmatmul.mubr.bf16.gmra.mrb[0].mxu0 %v4573
  %v5848 = vpop.f32.mrb[0].mxu0
  %v5849 = vadd.f32 0.0, %v5848
  %v5850 = vpop.f32.mrb[0].mxu0
  %v5851 = vpop.f32.mrb[0].mxu0
  %v5852 = vadd.f32 0.0, %v5851
  %v5853 = vpop.f32.mrb[0].mxu0
  %5854 = vmatprep.mubr.bf16.mxu0 0
  %5855 = vmatmul.mubr.bf16.gmra.mrb[0].mxu0 %v4574
  %v5856 = vpop.f32.mrb[0].mxu0
  %v5857 = vadd.f32 0.0, %v5856
  %v5858 = vpop.f32.mrb[0].mxu0
  %v5859 = vpop.f32.mrb[0].mxu0
  %v5860 = vadd.f32 0.0, %v5859
  %v5861 = vpop.f32.mrb[0].mxu0
  %5862 = vmatprep.mubr.bf16.mxu0 0
  %5863 = vmatmul.mubr.bf16.gmra.mrb[0].mxu0 %v4575
  %v5864 = vpop.f32.mrb[0].mxu0
  %v5865 = vadd.f32 0.0, %v5864
  %v5866 = vpop.f32.mrb[0].mxu0
  %v5867 = vpop.f32.mrb[0].mxu0
  %v5868 = vadd.f32 0.0, %v5867
  %v5869 = vpop.f32.mrb[0].mxu0
  %5870 = vmatprep.mubr.bf16.mxu0 0
  %5871 = vmatmul.mubr.bf16.gmra.mrb[0].mxu0 %v4576
  %v5872 = vpop.f32.mrb[0].mxu0
  %v5873 = vadd.f32 0.0, %v5872
  %v5874 = vpop.f32.mrb[0].mxu0
  %v5875 = vpop.f32.mrb[0].mxu0
  %v5876 = vadd.f32 0.0, %v5875
  %v5877 = vpop.f32.mrb[0].mxu0
  %5878 = vmatprep.mubr.bf16.mxu0 0
  %5879 = vmatmul.mubr.bf16.gmra.mrb[0].mxu0 %v4577
  %v5880 = vpop.f32.mrb[0].mxu0
  %v5881 = vadd.f32 0.0, %v5880
  %v5882 = vpop.f32.mrb[0].mxu0
  %v5883 = vpop.f32.mrb[0].mxu0
  %v5884 = vadd.f32 0.0, %v5883
  %v5885 = vpop.f32.mrb[0].mxu0
  %5886 = vmatprep.mubr.bf16.mxu0 0
  %5887 = vmatmul.mubr.bf16.gmra.mrb[0].mxu0 %v4578
  %v5888 = vpop.f32.mrb[0].mxu0
  %v5889 = vadd.f32 0.0, %v5888
  %v5890 = vpop.f32.mrb[0].mxu0
  %v5891 = vpop.f32.mrb[0].mxu0
  %v5892 = vadd.f32 0.0, %v5891
  %v5893 = vpop.f32.mrb[0].mxu0
  %5894 = vmatprep.mubr.bf16.mxu0 0
  %5895 = vmatmul.mubr.bf16.gmra.mrb[0].mxu0 %v4579
  %v5896 = vpop.f32.mrb[0].mxu0
  %v5897 = vadd.f32 0.0, %v5896
  %v5898 = vpop.f32.mrb[0].mxu0
  %v5899 = vpop.f32.mrb[0].mxu0
  %v5900 = vadd.f32 0.0, %v5899
  %v5901 = vpop.f32.mrb[0].mxu0
  %5902 = vmatprep.mubr.bf16.mxu0 0
  %5903 = vmatmul.mubr.bf16.gmra.mrb[0].mxu0 %v4580
  %v5904 = vpop.f32.mrb[0].mxu0
  %v5905 = vadd.f32 0.0, %v5904
  %v5906 = vpop.f32.mrb[0].mxu0
  %v5907 = vpop.f32.mrb[0].mxu0
  %v5908 = vadd.f32 0.0, %v5907
  %v5909 = vpop.f32.mrb[0].mxu0
  %5910 = vmatprep.mubr.bf16.mxu0 0
  %5911 = vmatmul.mubr.bf16.gmra.mrb[0].mxu0 %v4581
  %v5912 = vpop.f32.mrb[0].mxu0
  %v5913 = vadd.f32 0.0, %v5912
  %v5914 = vpop.f32.mrb[0].mxu0
  %v5915 = vpop.f32.mrb[0].mxu0
  %v5916 = vadd.f32 0.0, %v5915
  %v5917 = vpop.f32.mrb[0].mxu0
  %5918 = vdwg.mxu0
  %v5919 = vadd.f32 %v5661, %v5793
  %v5920 = vadd.f32 %v5662, %v5796
  %v5921 = vadd.f32 %v5663, %v5801
  %v5922 = vadd.f32 %v5664, %v5804
  %v5923 = vadd.f32 %v5665, %v5809
  %v5924 = vadd.f32 %v5666, %v5812
  %v5925 = vadd.f32 %v5667, %v5817
  %v5926 = vadd.f32 %v5668, %v5820
  %v5927 = vadd.f32 %v5669, %v5825
  %v5928 = vadd.f32 %v5670, %v5828
  %v5929 = vadd.f32 %v5671, %v5833
  %v5930 = vadd.f32 %v5672, %v5836
  %v5931 = vadd.f32 %v5673, %v5841
  %v5932 = vadd.f32 %v5674, %v5844
  %v5933 = vadd.f32 %v5675, %v5849
  %v5934 = vadd.f32 %v5676, %v5852
  %v5935 = vadd.f32 %v5677, %v5857
  %v5936 = vadd.f32 %v5678, %v5860
  %v5937 = vadd.f32 %v5679, %v5865
  %v5938 = vadd.f32 %v5680, %v5868
  %v5939 = vadd.f32 %v5681, %v5873
  %v5940 = vadd.f32 %v5682, %v5876
  %v5941 = vadd.f32 %v5683, %v5881
  %v5942 = vadd.f32 %v5684, %v5884
  %v5943 = vadd.f32 %v5685, %v5889
  %v5944 = vadd.f32 %v5686, %v5892
  %v5945 = vadd.f32 %v5687, %v5897
  %v5946 = vadd.f32 %v5688, %v5900
  %v5947 = vadd.f32 %v5689, %v5905
  %v5948 = vadd.f32 %v5690, %v5908
  %v5949 = vadd.f32 %v5691, %v5913
  %v5950 = vadd.f32 %v5692, %v5916
  %s5951 = scalar_lea.vmem %s10, 320
  %v5952 = vld [vmem:[%s5951] sm:$0xf]
  %v5953 = vld [vmem:[%s5951 + $0x4] sm:$0xf]
  %v5954 = vld [vmem:[%s5951 + $0x8] sm:$0xf]
  %v5955 = vld [vmem:[%s5951 + $0xc] sm:$0xf]
  %v5956 = vld [vmem:[%s5951 + $0x10] sm:$0xf]
  %v5957 = vld [vmem:[%s5951 + $0x14] sm:$0xf]
  %v5958 = vld [vmem:[%s5951 + $0x18] sm:$0xf]
  %v5959 = vld [vmem:[%s5951 + $0x1c] sm:$0xf]
  %v5960 = vld [vmem:[%s5951 + $0x20] sm:$0xf]
  %v5961 = vld [vmem:[%s5951 + $0x24] sm:$0xf]
  %v5962 = vld [vmem:[%s5951 + $0x28] sm:$0xf]
  %v5963 = vld [vmem:[%s5951 + $0x2c] sm:$0xf]
  %v5964 = vld [vmem:[%s5951 + $0x30] sm:$0xf]
  %v5965 = vld [vmem:[%s5951 + $0x34] sm:$0xf]
  %v5966 = vld [vmem:[%s5951 + $0x38] sm:$0xf]
  %v5967 = vld [vmem:[%s5951 + $0x3c] sm:$0xf]
  %v5984 = vunpack.c.l.b16 %v5952
  %v5985 = vunpack.c.l.b16 %v5953
  %v5986 = vunpack.c.l.b16 %v5954
  %v5987 = vunpack.c.l.b16 %v5955
  %v5988 = vunpack.c.l.b16 %v5956
  %v5989 = vunpack.c.l.b16 %v5957
  %v5990 = vunpack.c.l.b16 %v5958
  %v5991 = vunpack.c.l.b16 %v5959
  %v5992 = vunpack.c.l.b16 %v5960
  %v5993 = vunpack.c.l.b16 %v5961
  %v5994 = vunpack.c.l.b16 %v5962
  %v5995 = vunpack.c.l.b16 %v5963
  %v5996 = vunpack.c.l.b16 %v5964
  %v5997 = vunpack.c.l.b16 %v5965
  %v5998 = vunpack.c.l.b16 %v5966
  %v5999 = vunpack.c.l.b16 %v5967
  %v6000 = vpack.c.b16 %v5985, %v5984
  %v6001 = vpack.c.b16 %v5987, %v5986
  %v6002 = vpack.c.b16 %v5989, %v5988
  %v6003 = vpack.c.b16 %v5991, %v5990
  %v6004 = vpack.c.b16 %v5993, %v5992
  %v6005 = vpack.c.b16 %v5995, %v5994
  %v6006 = vpack.c.b16 %v5997, %v5996
  %v6007 = vpack.c.b16 %v5999, %v5998
  %6016 = vmatprep.subr.bf16.mxu0 0
  %6017 = vmatpush1.bf16.msra.mxu0 %v6000
  %6018 = vmatprep.subr.bf16.mxu0 0
  %6019 = vmatpush1.bf16.msra.mxu0 %v6001
  %6020 = vmatprep.subr.bf16.mxu0 0
  %6021 = vmatpush1.bf16.msra.mxu0 %v6002
  %6022 = vmatprep.subr.bf16.mxu0 0
  %6023 = vmatpush1.bf16.msra.mxu0 %v6003
  %6024 = vmatprep.subr.bf16.mxu0 0
  %6025 = vmatpush1.bf16.msra.mxu0 %v6004
  %6026 = vmatprep.subr.bf16.mxu0 0
  %6027 = vmatpush1.bf16.msra.mxu0 %v6005
  %6028 = vmatprep.subr.bf16.mxu0 0
  %6029 = vmatpush1.bf16.msra.mxu0 %v6006
  %6030 = vmatprep.subr.bf16.mxu0 0
  %6031 = vmatpush1.bf16.msra.mxu0 %v6007
  %6032 = vmatprep.subr.bf16.mxu0 0
  %6033 = vmatpush1.bf16.msra.mxu0 0
  %6034 = vmatprep.subr.bf16.mxu0 0
  %6035 = vmatpush1.bf16.msra.mxu0 0
  %6036 = vmatprep.subr.bf16.mxu0 0
  %6037 = vmatpush1.bf16.msra.mxu0 0
  %6038 = vmatprep.subr.bf16.mxu0 0
  %6039 = vmatpush1.bf16.msra.mxu0 0
  %6040 = vmatprep.subr.bf16.mxu0 0
  %6041 = vmatpush1.bf16.msra.mxu0 0
  %6042 = vmatprep.subr.bf16.mxu0 0
  %6043 = vmatpush1.bf16.msra.mxu0 0
  %6044 = vmatprep.subr.bf16.mxu0 0
  %6045 = vmatpush1.bf16.msra.mxu0 0
  %6046 = vmatprep.subr.bf16.mxu0 0
  %6047 = vmatpush1.bf16.msra.mxu0 0
  %6048 = vmatprep.mubr.bf16.mxu0 0
  %6049 = vmatmul.mubr.bf16.gmra.mrb[0].mxu0 %v4710
  %v6050 = vpop.f32.mrb[0].mxu0
  %v6051 = vadd.f32 0.0, %v6050
  %v6052 = vpop.f32.mrb[0].mxu0
  %v6053 = vpop.f32.mrb[0].mxu0
  %v6054 = vadd.f32 0.0, %v6053
  %v6055 = vpop.f32.mrb[0].mxu0
  %6056 = vmatprep.mubr.bf16.mxu0 0
  %6057 = vmatmul.mubr.bf16.gmra.mrb[0].mxu0 %v4711
  %v6058 = vpop.f32.mrb[0].mxu0
  %v6059 = vadd.f32 0.0, %v6058
  %v6060 = vpop.f32.mrb[0].mxu0
  %v6061 = vpop.f32.mrb[0].mxu0
  %v6062 = vadd.f32 0.0, %v6061
  %v6063 = vpop.f32.mrb[0].mxu0
  %6064 = vmatprep.mubr.bf16.mxu0 0
  %6065 = vmatmul.mubr.bf16.gmra.mrb[0].mxu0 %v4712
  %v6066 = vpop.f32.mrb[0].mxu0
  %v6067 = vadd.f32 0.0, %v6066
  %v6068 = vpop.f32.mrb[0].mxu0
  %v6069 = vpop.f32.mrb[0].mxu0
  %v6070 = vadd.f32 0.0, %v6069
  %v6071 = vpop.f32.mrb[0].mxu0
  %6072 = vmatprep.mubr.bf16.mxu0 0
  %6073 = vmatmul.mubr.bf16.gmra.mrb[0].mxu0 %v4713
  %v6074 = vpop.f32.mrb[0].mxu0
  %v6075 = vadd.f32 0.0, %v6074
  %v6076 = vpop.f32.mrb[0].mxu0
  %v6077 = vpop.f32.mrb[0].mxu0
  %v6078 = vadd.f32 0.0, %v6077
  %v6079 = vpop.f32.mrb[0].mxu0
  %6080 = vmatprep.mubr.bf16.mxu0 0
  %6081 = vmatmul.mubr.bf16.gmra.mrb[0].mxu0 %v4714
  %v6082 = vpop.f32.mrb[0].mxu0
  %v6083 = vadd.f32 0.0, %v6082
  %v6084 = vpop.f32.mrb[0].mxu0
  %v6085 = vpop.f32.mrb[0].mxu0
  %v6086 = vadd.f32 0.0, %v6085
  %v6087 = vpop.f32.mrb[0].mxu0
  %6088 = vmatprep.mubr.bf16.mxu0 0
  %6089 = vmatmul.mubr.bf16.gmra.mrb[0].mxu0 %v4715
  %v6090 = vpop.f32.mrb[0].mxu0
  %v6091 = vadd.f32 0.0, %v6090
  %v6092 = vpop.f32.mrb[0].mxu0
  %v6093 = vpop.f32.mrb[0].mxu0
  %v6094 = vadd.f32 0.0, %v6093
  %v6095 = vpop.f32.mrb[0].mxu0
  %6096 = vmatprep.mubr.bf16.mxu0 0
  %6097 = vmatmul.mubr.bf16.gmra.mrb[0].mxu0 %v4716
  %v6098 = vpop.f32.mrb[0].mxu0
  %v6099 = vadd.f32 0.0, %v6098
  %v6100 = vpop.f32.mrb[0].mxu0
  %v6101 = vpop.f32.mrb[0].mxu0
  %v6102 = vadd.f32 0.0, %v6101
  %v6103 = vpop.f32.mrb[0].mxu0
  %6104 = vmatprep.mubr.bf16.mxu0 0
  %6105 = vmatmul.mubr.bf16.gmra.mrb[0].mxu0 %v4717
  %v6106 = vpop.f32.mrb[0].mxu0
  %v6107 = vadd.f32 0.0, %v6106
  %v6108 = vpop.f32.mrb[0].mxu0
  %v6109 = vpop.f32.mrb[0].mxu0
  %v6110 = vadd.f32 0.0, %v6109
  %v6111 = vpop.f32.mrb[0].mxu0
  %6112 = vmatprep.mubr.bf16.mxu0 0
  %6113 = vmatmul.mubr.bf16.gmra.mrb[0].mxu0 %v4718
  %v6114 = vpop.f32.mrb[0].mxu0
  %v6115 = vadd.f32 0.0, %v6114
  %v6116 = vpop.f32.mrb[0].mxu0
  %v6117 = vpop.f32.mrb[0].mxu0
  %v6118 = vadd.f32 0.0, %v6117
  %v6119 = vpop.f32.mrb[0].mxu0
  %6120 = vmatprep.mubr.bf16.mxu0 0
  %6121 = vmatmul.mubr.bf16.gmra.mrb[0].mxu0 %v4719
  %v6122 = vpop.f32.mrb[0].mxu0
  %v6123 = vadd.f32 0.0, %v6122
  %v6124 = vpop.f32.mrb[0].mxu0
  %v6125 = vpop.f32.mrb[0].mxu0
  %v6126 = vadd.f32 0.0, %v6125
  %v6127 = vpop.f32.mrb[0].mxu0
  %6128 = vmatprep.mubr.bf16.mxu0 0
  %6129 = vmatmul.mubr.bf16.gmra.mrb[0].mxu0 %v4720
  %v6130 = vpop.f32.mrb[0].mxu0
  %v6131 = vadd.f32 0.0, %v6130
  %v6132 = vpop.f32.mrb[0].mxu0
  %v6133 = vpop.f32.mrb[0].mxu0
  %v6134 = vadd.f32 0.0, %v6133
  %v6135 = vpop.f32.mrb[0].mxu0
  %6136 = vmatprep.mubr.bf16.mxu0 0
  %6137 = vmatmul.mubr.bf16.gmra.mrb[0].mxu0 %v4721
  %v6138 = vpop.f32.mrb[0].mxu0
  %v6139 = vadd.f32 0.0, %v6138
  %v6140 = vpop.f32.mrb[0].mxu0
  %v6141 = vpop.f32.mrb[0].mxu0
  %v6142 = vadd.f32 0.0, %v6141
  %v6143 = vpop.f32.mrb[0].mxu0
  %6144 = vmatprep.mubr.bf16.mxu0 0
  %6145 = vmatmul.mubr.bf16.gmra.mrb[0].mxu0 %v4722
  %v6146 = vpop.f32.mrb[0].mxu0
  %v6147 = vadd.f32 0.0, %v6146
  %v6148 = vpop.f32.mrb[0].mxu0
  %v6149 = vpop.f32.mrb[0].mxu0
  %v6150 = vadd.f32 0.0, %v6149
  %v6151 = vpop.f32.mrb[0].mxu0
  %6152 = vmatprep.mubr.bf16.mxu0 0
  %6153 = vmatmul.mubr.bf16.gmra.mrb[0].mxu0 %v4723
  %v6154 = vpop.f32.mrb[0].mxu0
  %v6155 = vadd.f32 0.0, %v6154
  %v6156 = vpop.f32.mrb[0].mxu0
  %v6157 = vpop.f32.mrb[0].mxu0
  %v6158 = vadd.f32 0.0, %v6157
  %v6159 = vpop.f32.mrb[0].mxu0
  %6160 = vmatprep.mubr.bf16.mxu0 0
  %6161 = vmatmul.mubr.bf16.gmra.mrb[0].mxu0 %v4724
  %v6162 = vpop.f32.mrb[0].mxu0
  %v6163 = vadd.f32 0.0, %v6162
  %v6164 = vpop.f32.mrb[0].mxu0
  %v6165 = vpop.f32.mrb[0].mxu0
  %v6166 = vadd.f32 0.0, %v6165
  %v6167 = vpop.f32.mrb[0].mxu0
  %6168 = vmatprep.mubr.bf16.mxu0 0
  %6169 = vmatmul.mubr.bf16.gmra.mrb[0].mxu0 %v4725
  %v6170 = vpop.f32.mrb[0].mxu0
  %v6171 = vadd.f32 0.0, %v6170
  %v6172 = vpop.f32.mrb[0].mxu0
  %v6173 = vpop.f32.mrb[0].mxu0
  %v6174 = vadd.f32 0.0, %v6173
  %v6175 = vpop.f32.mrb[0].mxu0
  %6176 = vdwg.mxu0
  %v6177 = vadd.f32 %v5919, %v6051
  %v6178 = vadd.f32 %v5920, %v6054
  %v6179 = vadd.f32 %v5921, %v6059
  %v6180 = vadd.f32 %v5922, %v6062
  %v6181 = vadd.f32 %v5923, %v6067
  %v6182 = vadd.f32 %v5924, %v6070
  %v6183 = vadd.f32 %v5925, %v6075
  %v6184 = vadd.f32 %v5926, %v6078
  %v6185 = vadd.f32 %v5927, %v6083
  %v6186 = vadd.f32 %v5928, %v6086
  %v6187 = vadd.f32 %v5929, %v6091
  %v6188 = vadd.f32 %v5930, %v6094
  %v6189 = vadd.f32 %v5931, %v6099
  %v6190 = vadd.f32 %v5932, %v6102
  %v6191 = vadd.f32 %v5933, %v6107
  %v6192 = vadd.f32 %v5934, %v6110
  %v6193 = vadd.f32 %v5935, %v6115
  %v6194 = vadd.f32 %v5936, %v6118
  %v6195 = vadd.f32 %v5937, %v6123
  %v6196 = vadd.f32 %v5938, %v6126
  %v6197 = vadd.f32 %v5939, %v6131
  %v6198 = vadd.f32 %v5940, %v6134
  %v6199 = vadd.f32 %v5941, %v6139
  %v6200 = vadd.f32 %v5942, %v6142
  %v6201 = vadd.f32 %v5943, %v6147
  %v6202 = vadd.f32 %v5944, %v6150
  %v6203 = vadd.f32 %v5945, %v6155
  %v6204 = vadd.f32 %v5946, %v6158
  %v6205 = vadd.f32 %v5947, %v6163
  %v6206 = vadd.f32 %v5948, %v6166
  %v6207 = vadd.f32 %v5949, %v6171
  %v6208 = vadd.f32 %v5950, %v6174
  %s6209 = scalar_lea.vmem %s10, 384
  %v6210 = vld [vmem:[%s6209] sm:$0xf]
  %v6211 = vld [vmem:[%s6209 + $0x4] sm:$0xf]
  %v6212 = vld [vmem:[%s6209 + $0x8] sm:$0xf]
  %v6213 = vld [vmem:[%s6209 + $0xc] sm:$0xf]
  %v6214 = vld [vmem:[%s6209 + $0x10] sm:$0xf]
  %v6215 = vld [vmem:[%s6209 + $0x14] sm:$0xf]
  %v6216 = vld [vmem:[%s6209 + $0x18] sm:$0xf]
  %v6217 = vld [vmem:[%s6209 + $0x1c] sm:$0xf]
  %v6218 = vld [vmem:[%s6209 + $0x20] sm:$0xf]
  %v6219 = vld [vmem:[%s6209 + $0x24] sm:$0xf]
  %v6220 = vld [vmem:[%s6209 + $0x28] sm:$0xf]
  %v6221 = vld [vmem:[%s6209 + $0x2c] sm:$0xf]
  %v6222 = vld [vmem:[%s6209 + $0x30] sm:$0xf]
  %v6223 = vld [vmem:[%s6209 + $0x34] sm:$0xf]
  %v6224 = vld [vmem:[%s6209 + $0x38] sm:$0xf]
  %v6225 = vld [vmem:[%s6209 + $0x3c] sm:$0xf]
  %v6242 = vunpack.c.l.b16 %v6210
  %v6243 = vunpack.c.l.b16 %v6211
  %v6244 = vunpack.c.l.b16 %v6212
  %v6245 = vunpack.c.l.b16 %v6213
  %v6246 = vunpack.c.l.b16 %v6214
  %v6247 = vunpack.c.l.b16 %v6215
  %v6248 = vunpack.c.l.b16 %v6216
  %v6249 = vunpack.c.l.b16 %v6217
  %v6250 = vunpack.c.l.b16 %v6218
  %v6251 = vunpack.c.l.b16 %v6219
  %v6252 = vunpack.c.l.b16 %v6220
  %v6253 = vunpack.c.l.b16 %v6221
  %v6254 = vunpack.c.l.b16 %v6222
  %v6255 = vunpack.c.l.b16 %v6223
  %v6256 = vunpack.c.l.b16 %v6224
  %v6257 = vunpack.c.l.b16 %v6225
  %v6258 = vpack.c.b16 %v6243, %v6242
  %v6259 = vpack.c.b16 %v6245, %v6244
  %v6260 = vpack.c.b16 %v6247, %v6246
  %v6261 = vpack.c.b16 %v6249, %v6248
  %v6262 = vpack.c.b16 %v6251, %v6250
  %v6263 = vpack.c.b16 %v6253, %v6252
  %v6264 = vpack.c.b16 %v6255, %v6254
  %v6265 = vpack.c.b16 %v6257, %v6256
  %6274 = vmatprep.subr.bf16.mxu0 0
  %6275 = vmatpush1.bf16.msra.mxu0 %v6258
  %6276 = vmatprep.subr.bf16.mxu0 0
  %6277 = vmatpush1.bf16.msra.mxu0 %v6259
  %6278 = vmatprep.subr.bf16.mxu0 0
  %6279 = vmatpush1.bf16.msra.mxu0 %v6260
  %6280 = vmatprep.subr.bf16.mxu0 0
  %6281 = vmatpush1.bf16.msra.mxu0 %v6261
  %6282 = vmatprep.subr.bf16.mxu0 0
  %6283 = vmatpush1.bf16.msra.mxu0 %v6262
  %6284 = vmatprep.subr.bf16.mxu0 0
  %6285 = vmatpush1.bf16.msra.mxu0 %v6263
  %6286 = vmatprep.subr.bf16.mxu0 0
  %6287 = vmatpush1.bf16.msra.mxu0 %v6264
  %6288 = vmatprep.subr.bf16.mxu0 0
  %6289 = vmatpush1.bf16.msra.mxu0 %v6265
  %6290 = vmatprep.subr.bf16.mxu0 0
  %6291 = vmatpush1.bf16.msra.mxu0 0
  %6292 = vmatprep.subr.bf16.mxu0 0
  %6293 = vmatpush1.bf16.msra.mxu0 0
  %6294 = vmatprep.subr.bf16.mxu0 0
  %6295 = vmatpush1.bf16.msra.mxu0 0
  %6296 = vmatprep.subr.bf16.mxu0 0
  %6297 = vmatpush1.bf16.msra.mxu0 0
  %6298 = vmatprep.subr.bf16.mxu0 0
  %6299 = vmatpush1.bf16.msra.mxu0 0
  %6300 = vmatprep.subr.bf16.mxu0 0
  %6301 = vmatpush1.bf16.msra.mxu0 0
  %6302 = vmatprep.subr.bf16.mxu0 0
  %6303 = vmatpush1.bf16.msra.mxu0 0
  %6304 = vmatprep.subr.bf16.mxu0 0
  %6305 = vmatpush1.bf16.msra.mxu0 0
  %6306 = vmatprep.mubr.bf16.mxu0 0
  %6307 = vmatmul.mubr.bf16.gmra.mrb[0].mxu0 %v4551
  %v6308 = vpop.f32.mrb[0].mxu0
  %v6309 = vadd.f32 0.0, %v6308
  %v6310 = vpop.f32.mrb[0].mxu0
  %v6311 = vpop.f32.mrb[0].mxu0
  %v6312 = vadd.f32 0.0, %v6311
  %v6313 = vpop.f32.mrb[0].mxu0
  %6314 = vmatprep.mubr.bf16.mxu0 0
  %6315 = vmatmul.mubr.bf16.gmra.mrb[0].mxu0 %v4552
  %v6316 = vpop.f32.mrb[0].mxu0
  %v6317 = vadd.f32 0.0, %v6316
  %v6318 = vpop.f32.mrb[0].mxu0
  %v6319 = vpop.f32.mrb[0].mxu0
  %v6320 = vadd.f32 0.0, %v6319
  %v6321 = vpop.f32.mrb[0].mxu0
  %6322 = vmatprep.mubr.bf16.mxu0 0
  %6323 = vmatmul.mubr.bf16.gmra.mrb[0].mxu0 %v4553
  %v6324 = vpop.f32.mrb[0].mxu0
  %v6325 = vadd.f32 0.0, %v6324
  %v6326 = vpop.f32.mrb[0].mxu0
  %v6327 = vpop.f32.mrb[0].mxu0
  %v6328 = vadd.f32 0.0, %v6327
  %v6329 = vpop.f32.mrb[0].mxu0
  %6330 = vmatprep.mubr.bf16.mxu0 0
  %6331 = vmatmul.mubr.bf16.gmra.mrb[0].mxu0 %v4554
  %v6332 = vpop.f32.mrb[0].mxu0
  %v6333 = vadd.f32 0.0, %v6332
  %v6334 = vpop.f32.mrb[0].mxu0
  %v6335 = vpop.f32.mrb[0].mxu0
  %v6336 = vadd.f32 0.0, %v6335
  %v6337 = vpop.f32.mrb[0].mxu0
  %6338 = vmatprep.mubr.bf16.mxu0 0
  %6339 = vmatmul.mubr.bf16.gmra.mrb[0].mxu0 %v4555
  %v6340 = vpop.f32.mrb[0].mxu0
  %v6341 = vadd.f32 0.0, %v6340
  %v6342 = vpop.f32.mrb[0].mxu0
  %v6343 = vpop.f32.mrb[0].mxu0
  %v6344 = vadd.f32 0.0, %v6343
  %v6345 = vpop.f32.mrb[0].mxu0
  %6346 = vmatprep.mubr.bf16.mxu0 0
  %6347 = vmatmul.mubr.bf16.gmra.mrb[0].mxu0 %v4556
  %v6348 = vpop.f32.mrb[0].mxu0
  %v6349 = vadd.f32 0.0, %v6348
  %v6350 = vpop.f32.mrb[0].mxu0
  %v6351 = vpop.f32.mrb[0].mxu0
  %v6352 = vadd.f32 0.0, %v6351
  %v6353 = vpop.f32.mrb[0].mxu0
  %6354 = vmatprep.mubr.bf16.mxu0 0
  %6355 = vmatmul.mubr.bf16.gmra.mrb[0].mxu0 %v4557
  %v6356 = vpop.f32.mrb[0].mxu0
  %v6357 = vadd.f32 0.0, %v6356
  %v6358 = vpop.f32.mrb[0].mxu0
  %v6359 = vpop.f32.mrb[0].mxu0
  %v6360 = vadd.f32 0.0, %v6359
  %v6361 = vpop.f32.mrb[0].mxu0
  %6362 = vmatprep.mubr.bf16.mxu0 0
  %6363 = vmatmul.mubr.bf16.gmra.mrb[0].mxu0 %v4558
  %v6364 = vpop.f32.mrb[0].mxu0
  %v6365 = vadd.f32 0.0, %v6364
  %v6366 = vpop.f32.mrb[0].mxu0
  %v6367 = vpop.f32.mrb[0].mxu0
  %v6368 = vadd.f32 0.0, %v6367
  %v6369 = vpop.f32.mrb[0].mxu0
  %6370 = vmatprep.mubr.bf16.mxu0 0
  %6371 = vmatmul.mubr.bf16.gmra.mrb[0].mxu0 %v4559
  %v6372 = vpop.f32.mrb[0].mxu0
  %v6373 = vadd.f32 0.0, %v6372
  %v6374 = vpop.f32.mrb[0].mxu0
  %v6375 = vpop.f32.mrb[0].mxu0
  %v6376 = vadd.f32 0.0, %v6375
  %v6377 = vpop.f32.mrb[0].mxu0
  %6378 = vmatprep.mubr.bf16.mxu0 0
  %6379 = vmatmul.mubr.bf16.gmra.mrb[0].mxu0 %v4560
  %v6380 = vpop.f32.mrb[0].mxu0
  %v6381 = vadd.f32 0.0, %v6380
  %v6382 = vpop.f32.mrb[0].mxu0
  %v6383 = vpop.f32.mrb[0].mxu0
  %v6384 = vadd.f32 0.0, %v6383
  %v6385 = vpop.f32.mrb[0].mxu0
  %6386 = vmatprep.mubr.bf16.mxu0 0
  %6387 = vmatmul.mubr.bf16.gmra.mrb[0].mxu0 %v4561
  %v6388 = vpop.f32.mrb[0].mxu0
  %v6389 = vadd.f32 0.0, %v6388
  %v6390 = vpop.f32.mrb[0].mxu0
  %v6391 = vpop.f32.mrb[0].mxu0
  %v6392 = vadd.f32 0.0, %v6391
  %v6393 = vpop.f32.mrb[0].mxu0
  %6394 = vmatprep.mubr.bf16.mxu0 0
  %6395 = vmatmul.mubr.bf16.gmra.mrb[0].mxu0 %v4562
  %v6396 = vpop.f32.mrb[0].mxu0
  %v6397 = vadd.f32 0.0, %v6396
  %v6398 = vpop.f32.mrb[0].mxu0
  %v6399 = vpop.f32.mrb[0].mxu0
  %v6400 = vadd.f32 0.0, %v6399
  %v6401 = vpop.f32.mrb[0].mxu0
  %6402 = vmatprep.mubr.bf16.mxu0 0
  %6403 = vmatmul.mubr.bf16.gmra.mrb[0].mxu0 %v4563
  %v6404 = vpop.f32.mrb[0].mxu0
  %v6405 = vadd.f32 0.0, %v6404
  %v6406 = vpop.f32.mrb[0].mxu0
  %v6407 = vpop.f32.mrb[0].mxu0
  %v6408 = vadd.f32 0.0, %v6407
  %v6409 = vpop.f32.mrb[0].mxu0
  %6410 = vmatprep.mubr.bf16.mxu0 0
  %6411 = vmatmul.mubr.bf16.gmra.mrb[0].mxu0 %v4564
  %v6412 = vpop.f32.mrb[0].mxu0
  %v6413 = vadd.f32 0.0, %v6412
  %v6414 = vpop.f32.mrb[0].mxu0
  %v6415 = vpop.f32.mrb[0].mxu0
  %v6416 = vadd.f32 0.0, %v6415
  %v6417 = vpop.f32.mrb[0].mxu0
  %6418 = vmatprep.mubr.bf16.mxu0 0
  %6419 = vmatmul.mubr.bf16.gmra.mrb[0].mxu0 %v4565
  %v6420 = vpop.f32.mrb[0].mxu0
  %v6421 = vadd.f32 0.0, %v6420
  %v6422 = vpop.f32.mrb[0].mxu0
  %v6423 = vpop.f32.mrb[0].mxu0
  %v6424 = vadd.f32 0.0, %v6423
  %v6425 = vpop.f32.mrb[0].mxu0
  %6426 = vmatprep.mubr.bf16.mxu0 0
  %6427 = vmatmul.mubr.bf16.gmra.mrb[0].mxu0 0
  %v6428 = vpop.f32.mrb[0].mxu0
  %v6429 = vadd.f32 0.0, %v6428
  %v6430 = vpop.f32.mrb[0].mxu0
  %v6431 = vpop.f32.mrb[0].mxu0
  %v6432 = vadd.f32 0.0, %v6431
  %v6433 = vpop.f32.mrb[0].mxu0
  %6434 = vdwg.mxu0
  %v6435 = vadd.f32 %v6177, %v6309
  %v6436 = vadd.f32 %v6178, %v6312
  %v6437 = vadd.f32 %v6179, %v6317
  %v6438 = vadd.f32 %v6180, %v6320
  %v6439 = vadd.f32 %v6181, %v6325
  %v6440 = vadd.f32 %v6182, %v6328
  %v6441 = vadd.f32 %v6183, %v6333
  %v6442 = vadd.f32 %v6184, %v6336
  %v6443 = vadd.f32 %v6185, %v6341
  %v6444 = vadd.f32 %v6186, %v6344
  %v6445 = vadd.f32 %v6187, %v6349
  %v6446 = vadd.f32 %v6188, %v6352
  %v6447 = vadd.f32 %v6189, %v6357
  %v6448 = vadd.f32 %v6190, %v6360
  %v6449 = vadd.f32 %v6191, %v6365
  %v6450 = vadd.f32 %v6192, %v6368
  %v6451 = vadd.f32 %v6193, %v6373
  %v6452 = vadd.f32 %v6194, %v6376
  %v6453 = vadd.f32 %v6195, %v6381
  %v6454 = vadd.f32 %v6196, %v6384
  %v6455 = vadd.f32 %v6197, %v6389
  %v6456 = vadd.f32 %v6198, %v6392
  %v6457 = vadd.f32 %v6199, %v6397
  %v6458 = vadd.f32 %v6200, %v6400
  %v6459 = vadd.f32 %v6201, %v6405
  %v6460 = vadd.f32 %v6202, %v6408
  %v6461 = vadd.f32 %v6203, %v6413
  %v6462 = vadd.f32 %v6204, %v6416
  %v6463 = vadd.f32 %v6205, %v6421
  %v6464 = vadd.f32 %v6206, %v6424
  %v6465 = vadd.f32 %v6207, %v6429
  %v6466 = vadd.f32 %v6208, %v6432
  %s6467 = scalar_lea.vmem %s10, 448
  %v6468 = vld [vmem:[%s6467] sm:$0xf]
  %v6469 = vld [vmem:[%s6467 + $0x4] sm:$0xf]
  %v6470 = vld [vmem:[%s6467 + $0x8] sm:$0xf]
  %v6471 = vld [vmem:[%s6467 + $0xc] sm:$0xf]
  %v6472 = vld [vmem:[%s6467 + $0x10] sm:$0xf]
  %v6473 = vld [vmem:[%s6467 + $0x14] sm:$0xf]
  %v6474 = vld [vmem:[%s6467 + $0x18] sm:$0xf]
  %v6475 = vld [vmem:[%s6467 + $0x1c] sm:$0xf]
  %v6476 = vld [vmem:[%s6467 + $0x20] sm:$0xf]
  %v6477 = vld [vmem:[%s6467 + $0x24] sm:$0xf]
  %v6478 = vld [vmem:[%s6467 + $0x28] sm:$0xf]
  %v6479 = vld [vmem:[%s6467 + $0x2c] sm:$0xf]
  %v6480 = vld [vmem:[%s6467 + $0x30] sm:$0xf]
  %v6481 = vld [vmem:[%s6467 + $0x34] sm:$0xf]
  %v6482 = vld [vmem:[%s6467 + $0x38] sm:$0xf]
  %v6483 = vld [vmem:[%s6467 + $0x3c] sm:$0xf]
  %v6500 = vunpack.c.l.b16 %v6468
  %v6501 = vunpack.c.l.b16 %v6469
  %v6502 = vunpack.c.l.b16 %v6470
  %v6503 = vunpack.c.l.b16 %v6471
  %v6504 = vunpack.c.l.b16 %v6472
  %v6505 = vunpack.c.l.b16 %v6473
  %v6506 = vunpack.c.l.b16 %v6474
  %v6507 = vunpack.c.l.b16 %v6475
  %v6508 = vunpack.c.l.b16 %v6476
  %v6509 = vunpack.c.l.b16 %v6477
  %v6510 = vunpack.c.l.b16 %v6478
  %v6511 = vunpack.c.l.b16 %v6479
  %v6512 = vunpack.c.l.b16 %v6480
  %v6513 = vunpack.c.l.b16 %v6481
  %v6514 = vunpack.c.l.b16 %v6482
  %v6515 = vunpack.c.l.b16 %v6483
  %v6516 = vpack.c.b16 %v6501, %v6500
  %v6517 = vpack.c.b16 %v6503, %v6502
  %v6518 = vpack.c.b16 %v6505, %v6504
  %v6519 = vpack.c.b16 %v6507, %v6506
  %v6520 = vpack.c.b16 %v6509, %v6508
  %v6521 = vpack.c.b16 %v6511, %v6510
  %v6522 = vpack.c.b16 %v6513, %v6512
  %v6523 = vpack.c.b16 %v6515, %v6514
  %6532 = vmatprep.subr.bf16.mxu0 0
  %6533 = vmatpush1.bf16.msra.mxu0 %v6516
  %6534 = vmatprep.subr.bf16.mxu0 0
  %6535 = vmatpush1.bf16.msra.mxu0 %v6517
  %6536 = vmatprep.subr.bf16.mxu0 0
  %6537 = vmatpush1.bf16.msra.mxu0 %v6518
  %6538 = vmatprep.subr.bf16.mxu0 0
  %6539 = vmatpush1.bf16.msra.mxu0 %v6519
  %6540 = vmatprep.subr.bf16.mxu0 0
  %6541 = vmatpush1.bf16.msra.mxu0 %v6520
  %6542 = vmatprep.subr.bf16.mxu0 0
  %6543 = vmatpush1.bf16.msra.mxu0 %v6521
  %6544 = vmatprep.subr.bf16.mxu0 0
  %6545 = vmatpush1.bf16.msra.mxu0 %v6522
  %6546 = vmatprep.subr.bf16.mxu0 0
  %6547 = vmatpush1.bf16.msra.mxu0 %v6523
  %6548 = vmatprep.subr.bf16.mxu0 0
  %6549 = vmatpush1.bf16.msra.mxu0 0
  %6550 = vmatprep.subr.bf16.mxu0 0
  %6551 = vmatpush1.bf16.msra.mxu0 0
  %6552 = vmatprep.subr.bf16.mxu0 0
  %6553 = vmatpush1.bf16.msra.mxu0 0
  %6554 = vmatprep.subr.bf16.mxu0 0
  %6555 = vmatpush1.bf16.msra.mxu0 0
  %6556 = vmatprep.subr.bf16.mxu0 0
  %6557 = vmatpush1.bf16.msra.mxu0 0
  %6558 = vmatprep.subr.bf16.mxu0 0
  %6559 = vmatpush1.bf16.msra.mxu0 0
  %6560 = vmatprep.subr.bf16.mxu0 0
  %6561 = vmatpush1.bf16.msra.mxu0 0
  %6562 = vmatprep.subr.bf16.mxu0 0
  %6563 = vmatpush1.bf16.msra.mxu0 0
  %6564 = vmatprep.mubr.bf16.mxu0 0
  %6565 = vmatmul.mubr.bf16.gmra.mrb[0].mxu0 %v4567
  %v6566 = vpop.f32.mrb[0].mxu0
  %v6567 = vadd.f32 0.0, %v6566
  %v6568 = vpop.f32.mrb[0].mxu0
  %v6569 = vpop.f32.mrb[0].mxu0
  %v6570 = vadd.f32 0.0, %v6569
  %v6571 = vpop.f32.mrb[0].mxu0
  %6572 = vmatprep.mubr.bf16.mxu0 0
  %6573 = vmatmul.mubr.bf16.gmra.mrb[0].mxu0 %v4568
  %v6574 = vpop.f32.mrb[0].mxu0
  %v6575 = vadd.f32 0.0, %v6574
  %v6576 = vpop.f32.mrb[0].mxu0
  %v6577 = vpop.f32.mrb[0].mxu0
  %v6578 = vadd.f32 0.0, %v6577
  %v6579 = vpop.f32.mrb[0].mxu0
  %6580 = vmatprep.mubr.bf16.mxu0 0
  %6581 = vmatmul.mubr.bf16.gmra.mrb[0].mxu0 %v4569
  %v6582 = vpop.f32.mrb[0].mxu0
  %v6583 = vadd.f32 0.0, %v6582
  %v6584 = vpop.f32.mrb[0].mxu0
  %v6585 = vpop.f32.mrb[0].mxu0
  %v6586 = vadd.f32 0.0, %v6585
  %v6587 = vpop.f32.mrb[0].mxu0
  %6588 = vmatprep.mubr.bf16.mxu0 0
  %6589 = vmatmul.mubr.bf16.gmra.mrb[0].mxu0 %v4570
  %v6590 = vpop.f32.mrb[0].mxu0
  %v6591 = vadd.f32 0.0, %v6590
  %v6592 = vpop.f32.mrb[0].mxu0
  %v6593 = vpop.f32.mrb[0].mxu0
  %v6594 = vadd.f32 0.0, %v6593
  %v6595 = vpop.f32.mrb[0].mxu0
  %6596 = vmatprep.mubr.bf16.mxu0 0
  %6597 = vmatmul.mubr.bf16.gmra.mrb[0].mxu0 %v4571
  %v6598 = vpop.f32.mrb[0].mxu0
  %v6599 = vadd.f32 0.0, %v6598
  %v6600 = vpop.f32.mrb[0].mxu0
  %v6601 = vpop.f32.mrb[0].mxu0
  %v6602 = vadd.f32 0.0, %v6601
  %v6603 = vpop.f32.mrb[0].mxu0
  %6604 = vmatprep.mubr.bf16.mxu0 0
  %6605 = vmatmul.mubr.bf16.gmra.mrb[0].mxu0 %v4572
  %v6606 = vpop.f32.mrb[0].mxu0
  %v6607 = vadd.f32 0.0, %v6606
  %v6608 = vpop.f32.mrb[0].mxu0
  %v6609 = vpop.f32.mrb[0].mxu0
  %v6610 = vadd.f32 0.0, %v6609
  %v6611 = vpop.f32.mrb[0].mxu0
  %6612 = vmatprep.mubr.bf16.mxu0 0
  %6613 = vmatmul.mubr.bf16.gmra.mrb[0].mxu0 %v4573
  %v6614 = vpop.f32.mrb[0].mxu0
  %v6615 = vadd.f32 0.0, %v6614
  %v6616 = vpop.f32.mrb[0].mxu0
  %v6617 = vpop.f32.mrb[0].mxu0
  %v6618 = vadd.f32 0.0, %v6617
  %v6619 = vpop.f32.mrb[0].mxu0
  %6620 = vmatprep.mubr.bf16.mxu0 0
  %6621 = vmatmul.mubr.bf16.gmra.mrb[0].mxu0 %v4574
  %v6622 = vpop.f32.mrb[0].mxu0
  %v6623 = vadd.f32 0.0, %v6622
  %v6624 = vpop.f32.mrb[0].mxu0
  %v6625 = vpop.f32.mrb[0].mxu0
  %v6626 = vadd.f32 0.0, %v6625
  %v6627 = vpop.f32.mrb[0].mxu0
  %6628 = vmatprep.mubr.bf16.mxu0 0
  %6629 = vmatmul.mubr.bf16.gmra.mrb[0].mxu0 %v4575
  %v6630 = vpop.f32.mrb[0].mxu0
  %v6631 = vadd.f32 0.0, %v6630
  %v6632 = vpop.f32.mrb[0].mxu0
  %v6633 = vpop.f32.mrb[0].mxu0
  %v6634 = vadd.f32 0.0, %v6633
  %v6635 = vpop.f32.mrb[0].mxu0
  %6636 = vmatprep.mubr.bf16.mxu0 0
  %6637 = vmatmul.mubr.bf16.gmra.mrb[0].mxu0 %v4576
  %v6638 = vpop.f32.mrb[0].mxu0
  %v6639 = vadd.f32 0.0, %v6638
  %v6640 = vpop.f32.mrb[0].mxu0
  %v6641 = vpop.f32.mrb[0].mxu0
  %v6642 = vadd.f32 0.0, %v6641
  %v6643 = vpop.f32.mrb[0].mxu0
  %6644 = vmatprep.mubr.bf16.mxu0 0
  %6645 = vmatmul.mubr.bf16.gmra.mrb[0].mxu0 %v4577
  %v6646 = vpop.f32.mrb[0].mxu0
  %v6647 = vadd.f32 0.0, %v6646
  %v6648 = vpop.f32.mrb[0].mxu0
  %v6649 = vpop.f32.mrb[0].mxu0
  %v6650 = vadd.f32 0.0, %v6649
  %v6651 = vpop.f32.mrb[0].mxu0
  %6652 = vmatprep.mubr.bf16.mxu0 0
  %6653 = vmatmul.mubr.bf16.gmra.mrb[0].mxu0 %v4578
  %v6654 = vpop.f32.mrb[0].mxu0
  %v6655 = vadd.f32 0.0, %v6654
  %v6656 = vpop.f32.mrb[0].mxu0
  %v6657 = vpop.f32.mrb[0].mxu0
  %v6658 = vadd.f32 0.0, %v6657
  %v6659 = vpop.f32.mrb[0].mxu0
  %6660 = vmatprep.mubr.bf16.mxu0 0
  %6661 = vmatmul.mubr.bf16.gmra.mrb[0].mxu0 %v4579
  %v6662 = vpop.f32.mrb[0].mxu0
  %v6663 = vadd.f32 0.0, %v6662
  %v6664 = vpop.f32.mrb[0].mxu0
  %v6665 = vpop.f32.mrb[0].mxu0
  %v6666 = vadd.f32 0.0, %v6665
  %v6667 = vpop.f32.mrb[0].mxu0
  %6668 = vmatprep.mubr.bf16.mxu0 0
  %6669 = vmatmul.mubr.bf16.gmra.mrb[0].mxu0 %v4580
  %v6670 = vpop.f32.mrb[0].mxu0
  %v6671 = vadd.f32 0.0, %v6670
  %v6672 = vpop.f32.mrb[0].mxu0
  %v6673 = vpop.f32.mrb[0].mxu0
  %v6674 = vadd.f32 0.0, %v6673
  %v6675 = vpop.f32.mrb[0].mxu0
  %6676 = vmatprep.mubr.bf16.mxu0 0
  %6677 = vmatmul.mubr.bf16.gmra.mrb[0].mxu0 %v4581
  %v6678 = vpop.f32.mrb[0].mxu0
  %v6679 = vadd.f32 0.0, %v6678
  %v6680 = vpop.f32.mrb[0].mxu0
  %v6681 = vpop.f32.mrb[0].mxu0
  %v6682 = vadd.f32 0.0, %v6681
  %v6683 = vpop.f32.mrb[0].mxu0
  %6684 = vmatprep.mubr.bf16.mxu0 0
  %6685 = vmatmul.mubr.bf16.gmra.mrb[0].mxu0 0
  %v6686 = vpop.f32.mrb[0].mxu0
  %v6687 = vadd.f32 0.0, %v6686
  %v6688 = vpop.f32.mrb[0].mxu0
  %v6689 = vpop.f32.mrb[0].mxu0
  %v6690 = vadd.f32 0.0, %v6689
  %v6691 = vpop.f32.mrb[0].mxu0
  %6692 = vdwg.mxu0
  %v6693 = vadd.f32 %v6435, %v6567
  %v6694 = vadd.f32 %v6436, %v6570
  %v6695 = vadd.f32 %v6437, %v6575
  %v6696 = vadd.f32 %v6438, %v6578
  %v6697 = vadd.f32 %v6439, %v6583
  %v6698 = vadd.f32 %v6440, %v6586
  %v6699 = vadd.f32 %v6441, %v6591
  %v6700 = vadd.f32 %v6442, %v6594
  %v6701 = vadd.f32 %v6443, %v6599
  %v6702 = vadd.f32 %v6444, %v6602
  %v6703 = vadd.f32 %v6445, %v6607
  %v6704 = vadd.f32 %v6446, %v6610
  %v6705 = vadd.f32 %v6447, %v6615
  %v6706 = vadd.f32 %v6448, %v6618
  %v6707 = vadd.f32 %v6449, %v6623
  %v6708 = vadd.f32 %v6450, %v6626
  %v6709 = vadd.f32 %v6451, %v6631
  %v6710 = vadd.f32 %v6452, %v6634
  %v6711 = vadd.f32 %v6453, %v6639
  %v6712 = vadd.f32 %v6454, %v6642
  %v6713 = vadd.f32 %v6455, %v6647
  %v6714 = vadd.f32 %v6456, %v6650
  %v6715 = vadd.f32 %v6457, %v6655
  %v6716 = vadd.f32 %v6458, %v6658
  %v6717 = vadd.f32 %v6459, %v6663
  %v6718 = vadd.f32 %v6460, %v6666
  %v6719 = vadd.f32 %v6461, %v6671
  %v6720 = vadd.f32 %v6462, %v6674
  %v6721 = vadd.f32 %v6463, %v6679
  %v6722 = vadd.f32 %v6464, %v6682
  %v6723 = vadd.f32 %v6465, %v6687
  %v6724 = vadd.f32 %v6466, %v6690
  %s6725 = scalar_lea.vmem %s10, 512
  %v6726 = vld [vmem:[%s6725] sm:$0xf]
  %v6727 = vld [vmem:[%s6725 + $0x4] sm:$0xf]
  %v6728 = vld [vmem:[%s6725 + $0x8] sm:$0xf]
  %v6729 = vld [vmem:[%s6725 + $0xc] sm:$0xf]
  %v6730 = vld [vmem:[%s6725 + $0x10] sm:$0xf]
  %v6731 = vld [vmem:[%s6725 + $0x14] sm:$0xf]
  %v6732 = vld [vmem:[%s6725 + $0x18] sm:$0xf]
  %v6733 = vld [vmem:[%s6725 + $0x1c] sm:$0xf]
  %v6734 = vld [vmem:[%s6725 + $0x20] sm:$0xf]
  %v6735 = vld [vmem:[%s6725 + $0x24] sm:$0xf]
  %v6736 = vld [vmem:[%s6725 + $0x28] sm:$0xf]
  %v6737 = vld [vmem:[%s6725 + $0x2c] sm:$0xf]
  %v6738 = vld [vmem:[%s6725 + $0x30] sm:$0xf]
  %v6739 = vld [vmem:[%s6725 + $0x34] sm:$0xf]
  %v6740 = vld [vmem:[%s6725 + $0x38] sm:$0xf]
  %v6741 = vld [vmem:[%s6725 + $0x3c] sm:$0xf]
  %v6758 = vunpack.c.l.b16 %v6726
  %v6759 = vunpack.c.l.b16 %v6727
  %v6760 = vunpack.c.l.b16 %v6728
  %v6761 = vunpack.c.l.b16 %v6729
  %v6762 = vunpack.c.l.b16 %v6730
  %v6763 = vunpack.c.l.b16 %v6731
  %v6764 = vunpack.c.l.b16 %v6732
  %v6765 = vunpack.c.l.b16 %v6733
  %v6766 = vunpack.c.l.b16 %v6734
  %v6767 = vunpack.c.l.b16 %v6735
  %v6768 = vunpack.c.l.b16 %v6736
  %v6769 = vunpack.c.l.b16 %v6737
  %v6770 = vunpack.c.l.b16 %v6738
  %v6771 = vunpack.c.l.b16 %v6739
  %v6772 = vunpack.c.l.b16 %v6740
  %v6773 = vunpack.c.l.b16 %v6741
  %v6774 = vpack.c.b16 %v6759, %v6758
  %v6775 = vpack.c.b16 %v6761, %v6760
  %v6776 = vpack.c.b16 %v6763, %v6762
  %v6777 = vpack.c.b16 %v6765, %v6764
  %v6778 = vpack.c.b16 %v6767, %v6766
  %v6779 = vpack.c.b16 %v6769, %v6768
  %v6780 = vpack.c.b16 %v6771, %v6770
  %v6781 = vpack.c.b16 %v6773, %v6772
  %6790 = vmatprep.subr.bf16.mxu0 0
  %6791 = vmatpush1.bf16.msra.mxu0 %v6774
  %6792 = vmatprep.subr.bf16.mxu0 0
  %6793 = vmatpush1.bf16.msra.mxu0 %v6775
  %6794 = vmatprep.subr.bf16.mxu0 0
  %6795 = vmatpush1.bf16.msra.mxu0 %v6776
  %6796 = vmatprep.subr.bf16.mxu0 0
  %6797 = vmatpush1.bf16.msra.mxu0 %v6777
  %6798 = vmatprep.subr.bf16.mxu0 0
  %6799 = vmatpush1.bf16.msra.mxu0 %v6778
  %6800 = vmatprep.subr.bf16.mxu0 0
  %6801 = vmatpush1.bf16.msra.mxu0 %v6779
  %6802 = vmatprep.subr.bf16.mxu0 0
  %6803 = vmatpush1.bf16.msra.mxu0 %v6780
  %6804 = vmatprep.subr.bf16.mxu0 0
  %6805 = vmatpush1.bf16.msra.mxu0 %v6781
  %6806 = vmatprep.subr.bf16.mxu0 0
  %6807 = vmatpush1.bf16.msra.mxu0 0
  %6808 = vmatprep.subr.bf16.mxu0 0
  %6809 = vmatpush1.bf16.msra.mxu0 0
  %6810 = vmatprep.subr.bf16.mxu0 0
  %6811 = vmatpush1.bf16.msra.mxu0 0
  %6812 = vmatprep.subr.bf16.mxu0 0
  %6813 = vmatpush1.bf16.msra.mxu0 0
  %6814 = vmatprep.subr.bf16.mxu0 0
  %6815 = vmatpush1.bf16.msra.mxu0 0
  %6816 = vmatprep.subr.bf16.mxu0 0
  %6817 = vmatpush1.bf16.msra.mxu0 0
  %6818 = vmatprep.subr.bf16.mxu0 0
  %6819 = vmatpush1.bf16.msra.mxu0 0
  %6820 = vmatprep.subr.bf16.mxu0 0
  %6821 = vmatpush1.bf16.msra.mxu0 0
  %6822 = vmatprep.mubr.bf16.mxu0 0
  %6823 = vmatmul.mubr.bf16.gmra.mrb[0].mxu0 %v4711
  %v6824 = vpop.f32.mrb[0].mxu0
  %v6825 = vadd.f32 0.0, %v6824
  %v6826 = vpop.f32.mrb[0].mxu0
  %v6827 = vpop.f32.mrb[0].mxu0
  %v6828 = vadd.f32 0.0, %v6827
  %v6829 = vpop.f32.mrb[0].mxu0
  %6830 = vmatprep.mubr.bf16.mxu0 0
  %6831 = vmatmul.mubr.bf16.gmra.mrb[0].mxu0 %v4712
  %v6832 = vpop.f32.mrb[0].mxu0
  %v6833 = vadd.f32 0.0, %v6832
  %v6834 = vpop.f32.mrb[0].mxu0
  %v6835 = vpop.f32.mrb[0].mxu0
  %v6836 = vadd.f32 0.0, %v6835
  %v6837 = vpop.f32.mrb[0].mxu0
  %6838 = vmatprep.mubr.bf16.mxu0 0
  %6839 = vmatmul.mubr.bf16.gmra.mrb[0].mxu0 %v4713
  %v6840 = vpop.f32.mrb[0].mxu0
  %v6841 = vadd.f32 0.0, %v6840
  %v6842 = vpop.f32.mrb[0].mxu0
  %v6843 = vpop.f32.mrb[0].mxu0
  %v6844 = vadd.f32 0.0, %v6843
  %v6845 = vpop.f32.mrb[0].mxu0
  %6846 = vmatprep.mubr.bf16.mxu0 0
  %6847 = vmatmul.mubr.bf16.gmra.mrb[0].mxu0 %v4714
  %v6848 = vpop.f32.mrb[0].mxu0
  %v6849 = vadd.f32 0.0, %v6848
  %v6850 = vpop.f32.mrb[0].mxu0
  %v6851 = vpop.f32.mrb[0].mxu0
  %v6852 = vadd.f32 0.0, %v6851
  %v6853 = vpop.f32.mrb[0].mxu0
  %6854 = vmatprep.mubr.bf16.mxu0 0
  %6855 = vmatmul.mubr.bf16.gmra.mrb[0].mxu0 %v4715
  %v6856 = vpop.f32.mrb[0].mxu0
  %v6857 = vadd.f32 0.0, %v6856
  %v6858 = vpop.f32.mrb[0].mxu0
  %v6859 = vpop.f32.mrb[0].mxu0
  %v6860 = vadd.f32 0.0, %v6859
  %v6861 = vpop.f32.mrb[0].mxu0
  %6862 = vmatprep.mubr.bf16.mxu0 0
  %6863 = vmatmul.mubr.bf16.gmra.mrb[0].mxu0 %v4716
  %v6864 = vpop.f32.mrb[0].mxu0
  %v6865 = vadd.f32 0.0, %v6864
  %v6866 = vpop.f32.mrb[0].mxu0
  %v6867 = vpop.f32.mrb[0].mxu0
  %v6868 = vadd.f32 0.0, %v6867
  %v6869 = vpop.f32.mrb[0].mxu0
  %6870 = vmatprep.mubr.bf16.mxu0 0
  %6871 = vmatmul.mubr.bf16.gmra.mrb[0].mxu0 %v4717
  %v6872 = vpop.f32.mrb[0].mxu0
  %v6873 = vadd.f32 0.0, %v6872
  %v6874 = vpop.f32.mrb[0].mxu0
  %v6875 = vpop.f32.mrb[0].mxu0
  %v6876 = vadd.f32 0.0, %v6875
  %v6877 = vpop.f32.mrb[0].mxu0
  %6878 = vmatprep.mubr.bf16.mxu0 0
  %6879 = vmatmul.mubr.bf16.gmra.mrb[0].mxu0 %v4718
  %v6880 = vpop.f32.mrb[0].mxu0
  %v6881 = vadd.f32 0.0, %v6880
  %v6882 = vpop.f32.mrb[0].mxu0
  %v6883 = vpop.f32.mrb[0].mxu0
  %v6884 = vadd.f32 0.0, %v6883
  %v6885 = vpop.f32.mrb[0].mxu0
  %6886 = vmatprep.mubr.bf16.mxu0 0
  %6887 = vmatmul.mubr.bf16.gmra.mrb[0].mxu0 %v4719
  %v6888 = vpop.f32.mrb[0].mxu0
  %v6889 = vadd.f32 0.0, %v6888
  %v6890 = vpop.f32.mrb[0].mxu0
  %v6891 = vpop.f32.mrb[0].mxu0
  %v6892 = vadd.f32 0.0, %v6891
  %v6893 = vpop.f32.mrb[0].mxu0
  %6894 = vmatprep.mubr.bf16.mxu0 0
  %6895 = vmatmul.mubr.bf16.gmra.mrb[0].mxu0 %v4720
  %v6896 = vpop.f32.mrb[0].mxu0
  %v6897 = vadd.f32 0.0, %v6896
  %v6898 = vpop.f32.mrb[0].mxu0
  %v6899 = vpop.f32.mrb[0].mxu0
  %v6900 = vadd.f32 0.0, %v6899
  %v6901 = vpop.f32.mrb[0].mxu0
  %6902 = vmatprep.mubr.bf16.mxu0 0
  %6903 = vmatmul.mubr.bf16.gmra.mrb[0].mxu0 %v4721
  %v6904 = vpop.f32.mrb[0].mxu0
  %v6905 = vadd.f32 0.0, %v6904
  %v6906 = vpop.f32.mrb[0].mxu0
  %v6907 = vpop.f32.mrb[0].mxu0
  %v6908 = vadd.f32 0.0, %v6907
  %v6909 = vpop.f32.mrb[0].mxu0
  %6910 = vmatprep.mubr.bf16.mxu0 0
  %6911 = vmatmul.mubr.bf16.gmra.mrb[0].mxu0 %v4722
  %v6912 = vpop.f32.mrb[0].mxu0
  %v6913 = vadd.f32 0.0, %v6912
  %v6914 = vpop.f32.mrb[0].mxu0
  %v6915 = vpop.f32.mrb[0].mxu0
  %v6916 = vadd.f32 0.0, %v6915
  %v6917 = vpop.f32.mrb[0].mxu0
  %6918 = vmatprep.mubr.bf16.mxu0 0
  %6919 = vmatmul.mubr.bf16.gmra.mrb[0].mxu0 %v4723
  %v6920 = vpop.f32.mrb[0].mxu0
  %v6921 = vadd.f32 0.0, %v6920
  %v6922 = vpop.f32.mrb[0].mxu0
  %v6923 = vpop.f32.mrb[0].mxu0
  %v6924 = vadd.f32 0.0, %v6923
  %v6925 = vpop.f32.mrb[0].mxu0
  %6926 = vmatprep.mubr.bf16.mxu0 0
  %6927 = vmatmul.mubr.bf16.gmra.mrb[0].mxu0 %v4724
  %v6928 = vpop.f32.mrb[0].mxu0
  %v6929 = vadd.f32 0.0, %v6928
  %v6930 = vpop.f32.mrb[0].mxu0
  %v6931 = vpop.f32.mrb[0].mxu0
  %v6932 = vadd.f32 0.0, %v6931
  %v6933 = vpop.f32.mrb[0].mxu0
  %6934 = vmatprep.mubr.bf16.mxu0 0
  %6935 = vmatmul.mubr.bf16.gmra.mrb[0].mxu0 %v4725
  %v6936 = vpop.f32.mrb[0].mxu0
  %v6937 = vadd.f32 0.0, %v6936
  %v6938 = vpop.f32.mrb[0].mxu0
  %v6939 = vpop.f32.mrb[0].mxu0
  %v6940 = vadd.f32 0.0, %v6939
  %v6941 = vpop.f32.mrb[0].mxu0
  %6942 = vmatprep.mubr.bf16.mxu0 0
  %6943 = vmatmul.mubr.bf16.gmra.mrb[0].mxu0 0
  %v6944 = vpop.f32.mrb[0].mxu0
  %v6945 = vadd.f32 0.0, %v6944
  %v6946 = vpop.f32.mrb[0].mxu0
  %v6947 = vpop.f32.mrb[0].mxu0
  %v6948 = vadd.f32 0.0, %v6947
  %v6949 = vpop.f32.mrb[0].mxu0
  %6950 = vdwg.mxu0
  %v6951 = vadd.f32 %v6693, %v6825
  %v6952 = vadd.f32 %v6694, %v6828
  %v6953 = vadd.f32 %v6695, %v6833
  %v6954 = vadd.f32 %v6696, %v6836
  %v6955 = vadd.f32 %v6697, %v6841
  %v6956 = vadd.f32 %v6698, %v6844
  %v6957 = vadd.f32 %v6699, %v6849
  %v6958 = vadd.f32 %v6700, %v6852
  %v6959 = vadd.f32 %v6701, %v6857
  %v6960 = vadd.f32 %v6702, %v6860
  %v6961 = vadd.f32 %v6703, %v6865
  %v6962 = vadd.f32 %v6704, %v6868
  %v6963 = vadd.f32 %v6705, %v6873
  %v6964 = vadd.f32 %v6706, %v6876
  %v6965 = vadd.f32 %v6707, %v6881
  %v6966 = vadd.f32 %v6708, %v6884
  %v6967 = vadd.f32 %v6709, %v6889
  %v6968 = vadd.f32 %v6710, %v6892
  %v6969 = vadd.f32 %v6711, %v6897
  %v6970 = vadd.f32 %v6712, %v6900
  %v6971 = vadd.f32 %v6713, %v6905
  %v6972 = vadd.f32 %v6714, %v6908
  %v6973 = vadd.f32 %v6715, %v6913
  %v6974 = vadd.f32 %v6716, %v6916
  %v6975 = vadd.f32 %v6717, %v6921
  %v6976 = vadd.f32 %v6718, %v6924
  %v6977 = vadd.f32 %v6719, %v6929
  %v6978 = vadd.f32 %v6720, %v6932
  %v6979 = vadd.f32 %v6721, %v6937
  %v6980 = vadd.f32 %v6722, %v6940
  %v6981 = vadd.f32 %v6723, %v6945
  %v6982 = vadd.f32 %v6724, %v6948
  %v6984 = vlaneseq
  %v6985 = vshrl.u32 %v6984, 7
  %v6986 = vsub.s32 0, %v6985
  %v6987 = vrot.slane %v4389, %v6986
  %v6989 = vadd.f32 %v6951, %v6987
  %v6990 = vadd.f32 %v6952, %v6987
  %v6991 = vadd.f32 %v6953, %v6987
  %v6992 = vadd.f32 %v6954, %v6987
  %v6993 = vadd.f32 %v6955, %v6987
  %v6994 = vadd.f32 %v6956, %v6987
  %v6995 = vadd.f32 %v6957, %v6987
  %v6996 = vadd.f32 %v6958, %v6987
  %v6997 = vadd.f32 %v6959, %v6987
  %v6998 = vadd.f32 %v6960, %v6987
  %v6999 = vadd.f32 %v6961, %v6987
  %v7000 = vadd.f32 %v6962, %v6987
  %v7001 = vadd.f32 %v6963, %v6987
  %v7002 = vadd.f32 %v6964, %v6987
  %v7003 = vadd.f32 %v6965, %v6987
  %v7004 = vadd.f32 %v6966, %v6987
  %v7005 = vadd.f32 %v6967, %v6987
  %v7006 = vadd.f32 %v6968, %v6987
  %v7007 = vadd.f32 %v6969, %v6987
  %v7008 = vadd.f32 %v6970, %v6987
  %v7009 = vadd.f32 %v6971, %v6987
  %v7010 = vadd.f32 %v6972, %v6987
  %v7011 = vadd.f32 %v6973, %v6987
  %v7012 = vadd.f32 %v6974, %v6987
  %v7013 = vadd.f32 %v6975, %v6987
  %v7014 = vadd.f32 %v6976, %v6987
  %v7015 = vadd.f32 %v6977, %v6987
  %v7016 = vadd.f32 %v6978, %v6987
  %v7017 = vadd.f32 %v6979, %v6987
  %v7018 = vadd.f32 %v6980, %v6987
  %v7019 = vadd.f32 %v6981, %v6987
  %v7020 = vadd.f32 %v6982, %v6987
  %v7021 = vadd.f32 %v538, %v6989
  %v7022 = vadd.f32 %v539, %v6990
  %v7023 = vadd.f32 %v540, %v6991
  %v7024 = vadd.f32 %v541, %v6992
  %v7025 = vadd.f32 %v542, %v6993
  %v7026 = vadd.f32 %v543, %v6994
  %v7027 = vadd.f32 %v544, %v6995
  %v7028 = vadd.f32 %v545, %v6996
  %v7029 = vadd.f32 %v546, %v6997
  %v7030 = vadd.f32 %v547, %v6998
  %v7031 = vadd.f32 %v548, %v6999
  %v7032 = vadd.f32 %v549, %v7000
  %v7033 = vadd.f32 %v550, %v7001
  %v7034 = vadd.f32 %v551, %v7002
  %v7035 = vadd.f32 %v552, %v7003
  %v7036 = vadd.f32 %v553, %v7004
  %v7037 = vadd.f32 %v554, %v7005
  %v7038 = vadd.f32 %v555, %v7006
  %v7039 = vadd.f32 %v556, %v7007
  %v7040 = vadd.f32 %v557, %v7008
  %v7041 = vadd.f32 %v558, %v7009
  %v7042 = vadd.f32 %v559, %v7010
  %v7043 = vadd.f32 %v560, %v7011
  %v7044 = vadd.f32 %v561, %v7012
  %v7045 = vadd.f32 %v562, %v7013
  %v7046 = vadd.f32 %v563, %v7014
  %v7047 = vadd.f32 %v564, %v7015
  %v7048 = vadd.f32 %v565, %v7016
  %v7049 = vadd.f32 %v566, %v7017
  %v7050 = vadd.f32 %v567, %v7018
  %v7051 = vadd.f32 %v568, %v7019
  %v7052 = vadd.f32 %v569, %v7020
  %7053 = vst [vmem:[%s12] sm:$0xff] %v7021
  %7054 = vst [vmem:[%s12 + $0x8] sm:$0xff] %v7022
  %7055 = vst [vmem:[%s12 + $0x10] sm:$0xff] %v7023
  %7056 = vst [vmem:[%s12 + $0x18] sm:$0xff] %v7024
  %7057 = vst [vmem:[%s12 + $0x20] sm:$0xff] %v7025
  %7058 = vst [vmem:[%s12 + $0x28] sm:$0xff] %v7026
  %7059 = vst [vmem:[%s12 + $0x30] sm:$0xff] %v7027
  %7060 = vst [vmem:[%s12 + $0x38] sm:$0xff] %v7028
  %7061 = vst [vmem:[%s12 + $0x40] sm:$0xff] %v7029
  %7062 = vst [vmem:[%s12 + $0x48] sm:$0xff] %v7030
  %7063 = vst [vmem:[%s12 + $0x50] sm:$0xff] %v7031
  %7064 = vst [vmem:[%s12 + $0x58] sm:$0xff] %v7032
  %7065 = vst [vmem:[%s12 + $0x60] sm:$0xff] %v7033
  %7066 = vst [vmem:[%s12 + $0x68] sm:$0xff] %v7034
  %7067 = vst [vmem:[%s12 + $0x70] sm:$0xff] %v7035
  %7068 = vst [vmem:[%s12 + $0x78] sm:$0xff] %v7036
  %7069 = vst [vmem:[%s12 + $0x80] sm:$0xff] %v7037
  %7070 = vst [vmem:[%s12 + $0x88] sm:$0xff] %v7038
  %7071 = vst [vmem:[%s12 + $0x90] sm:$0xff] %v7039
  %7072 = vst [vmem:[%s12 + $0x98] sm:$0xff] %v7040
  %7073 = vst [vmem:[%s12 + $0xa0] sm:$0xff] %v7041
  %7074 = vst [vmem:[%s12 + $0xa8] sm:$0xff] %v7042
  %7075 = vst [vmem:[%s12 + $0xb0] sm:$0xff] %v7043
  %7076 = vst [vmem:[%s12 + $0xb8] sm:$0xff] %v7044
  %7077 = vst [vmem:[%s12 + $0xc0] sm:$0xff] %v7045
  %7078 = vst [vmem:[%s12 + $0xc8] sm:$0xff] %v7046
  %7079 = vst [vmem:[%s12 + $0xd0] sm:$0xff] %v7047
  %7080 = vst [vmem:[%s12 + $0xd8] sm:$0xff] %v7048
  %7081 = vst [vmem:[%s12 + $0xe0] sm:$0xff] %v7049
  %7082 = vst [vmem:[%s12 + $0xe8] sm:$0xff] %v7050
  %7083 = vst [vmem:[%s12 + $0xf0] sm:$0xff] %v7051
  %7084 = vst [vmem:[%s12 + $0xf8] sm:$0xff] %v7052
  // Predicated region
  $region50: #{resblock_pallas.1} parent=0 // pred_check
    _
  $region51: #{resblock_pallas.1} parent=0 // pred_check_branch
    %7086 = sbr.rel (0) target = $region53
  $region52: #{resblock_pallas.1} parent=0 // pred_region
    _
  $region53: #{resblock_pallas.1} parent=0 // pred_fallthru
    _
  // Predicated region
  $region54: #{resblock_pallas.1} parent=0 // pred_check
    _
  $region55: #{resblock_pallas.1} parent=0 // pred_check_branch
    %7088 = sbr.rel (0) target = $region57
  $region56: #{resblock_pallas.1} parent=0 // pred_region
    _
  $region57: #{resblock_pallas.1} parent=0 // pred_fallthru
    _

</llo_original>
